<compile_context>
chip_gen: v7x
topology: tpu7x:2x2x1
jax: 0.10.0
libtpu: 0.0.40
codegen_flags: <defaults>
</compile_context>

<pallas_src>
import functools

import numpy as np
import jax
import jax.numpy as jnp
from jax import lax
from jax.experimental import pallas as pl
from jax.experimental.pallas import tpu as pltpu

BN_EPS = 1e-5


# --------------- ConvTranspose2d via 4-parity decomposition ----------------- #
# Output parities (a, c index the input pixel grid; W[kh, kw] is the torch tap):
#   out[2a  , 2c  ] = x[a,c]   W[1,1]
#   out[2a  , 2c+1] = x[a,c]   W[1,2] + x[a,c+1]   W[1,0]
#   out[2a+1, 2c  ] = x[a,c]   W[2,1] + x[a+1,c]   W[0,1]
#   out[2a+1, 2c+1] = x[a,c]   W[2,2] + x[a,c+1]   W[2,0]
#                   + x[a+1,c] W[0,2] + x[a+1,c+1] W[0,0]
# Taps are packed per input shift into full-width (CI, 4*CO) matrices (zero
# columns where a shift does not contribute), so each shift is exactly one
# dense matmul and the combine is a plain elementwise add.
def _deconv_kernel(*refs, wp1, nb, use_bn):
    if use_bn:
        (x_ref, w00_ref, w01_ref, w10_ref, w11_ref, b_ref, mask_ref,
         o_ref, stats_ref) = refs
    else:
        x_ref, w00_ref, w01_ref, w10_ref, w11_ref, b_ref, o_ref = refs

    # Shifted views of the single padded flat activation (no HBM shift stack).
    x00 = x_ref[0, pl.ds(0, nb), :].astype(jnp.bfloat16)        # x[a,   c  ]
    x01 = x_ref[0, pl.ds(1, nb), :].astype(jnp.bfloat16)        # x[a,   c+1]
    x10 = x_ref[0, pl.ds(wp1, nb), :].astype(jnp.bfloat16)      # x[a+1, c  ]
    x11 = x_ref[0, pl.ds(wp1 + 1, nb), :].astype(jnp.bfloat16)  # x[a+1, c+1]

    y = (jnp.dot(x00, w00_ref[...], preferred_element_type=jnp.float32)
         + jnp.dot(x01, w01_ref[...], preferred_element_type=jnp.float32)
         + jnp.dot(x10, w10_ref[...], preferred_element_type=jnp.float32)
         + jnp.dot(x11, w11_ref[...], preferred_element_type=jnp.float32)
         + b_ref[...])

    if use_bn:
        o_ref[0] = y                                  # raw conv + bias (f32)
        ym = y * mask_ref[...]                        # drop pad-column rows
        s = jnp.sum(ym, axis=0, keepdims=True)
        sq = jnp.sum(ym * ym, axis=0, keepdims=True)
        stats_ref[0] = jnp.concatenate([s, sq], axis=0)
    else:
        # Exact sigmoid: always in (0, 1); clip only guards exp overflow.
        e = jnp.exp(-jnp.clip(y, -30.0, 30.0))
        o_ref[0] = 1.0 / (1.0 + e)


def deconv_parity_layer(act_flat, layer):
    """act_flat: (B, (H+2)*(W+1), CI) f32, zero-padded row-flattened activation.
    Returns a tuple: parity output (B, H*(W+1), 4*CO) f32
    [plus (B, 2, 4*CO) BN partial stats when the layer has BatchNorm]."""
    bsz, rows, ci = act_flat.shape
    wp1, nb, co4 = layer["wp1"], layer["nb"], 4 * layer["co"]
    use_bn = layer["use_bn"]
    w00, w01, w10, w11 = layer["wp"]

    in_specs = [
        pl.BlockSpec((1, rows, ci), lambda b: (b, 0, 0)),
        pl.BlockSpec((ci, co4), lambda b: (0, 0)),
        pl.BlockSpec((ci, co4), lambda b: (0, 0)),
        pl.BlockSpec((ci, co4), lambda b: (0, 0)),
        pl.BlockSpec((ci, co4), lambda b: (0, 0)),
        pl.BlockSpec((1, co4), lambda b: (0, 0)),
    ]
    args = [act_flat, w00, w01, w10, w11, layer["bias4"]]
    out_shape = [jax.ShapeDtypeStruct((bsz, nb, co4), jnp.float32)]
    out_specs = [pl.BlockSpec((1, nb, co4), lambda b: (b, 0, 0))]
    if use_bn:
        in_specs.append(pl.BlockSpec((nb, 1), lambda b: (0, 0)))
        args.append(layer["mask"])
        out_shape.append(jax.ShapeDtypeStruct((bsz, 2, co4), jnp.float32))
        out_specs.append(pl.BlockSpec((1, 2, co4), lambda b: (b, 0, 0)))

    return pl.pallas_call(
        functools.partial(_deconv_kernel, wp1=wp1, nb=nb, use_bn=use_bn),
        out_shape=tuple(out_shape),
        grid=(bsz,),
        in_specs=in_specs,
        out_specs=tuple(out_specs),
        compiler_params=pltpu.CompilerParams(
            dimension_semantics=("parallel",)),   # B=2 steps -> v7x megacore
    )(*args)


# ------------------------------ XLA glue ------------------------------------ #
def _pad_flat(act):
    """(B, H, W, C) -> (B, (H+2)*(W+1), C): 2 zero rows below, 1 zero col right,
    rows flattened so the +1 / +(W+1) / +(W+2) shifts are plain row offsets."""
    b, h, w, c = act.shape
    ap = jnp.pad(act, ((0, 0), (0, 2), (0, 1), (0, 0)))
    return ap.reshape(b, (h + 2) * (w + 1), c)


def _parity_to_nhwc(y_flat, b, h, w, co):
    """(B, H*(W+1), 4*CO) parity layout -> (B, 2H, 2W, CO); drops pad-col rows."""
    y6 = y_flat.reshape(b, h, w + 1, 2, 2, co)[:, :, :w]
    return y6.transpose(0, 1, 3, 2, 4, 5).reshape(b, 2 * h, 2 * w, co)


def _bn_scale_shift(stats, gamma, beta, co, count):
    """Finalize per-image partials into BN scale/shift (biased var, eps=1e-5)."""
    s = stats[:, 0, :].sum(axis=0).reshape(4, co).sum(axis=0)
    sq = stats[:, 1, :].sum(axis=0).reshape(4, co).sum(axis=0)
    mean = s / count
    var = jnp.maximum(sq / count - mean * mean, 0.0)
    scale = gamma * lax.rsqrt(var + BN_EPS)
    shift = beta - mean * scale
    return scale, shift


# ------------------------------ Parameters ---------------------------------- #
def init_decoder_params(key, latent_size):
    chans = [256, 128, 64, 32, 3]
    k = key

    def nxt():
        nonlocal k
        k, sub = jax.random.split(k)
        return sub

    din, dout = latent_size + 1, 256 * 4 * 4
    params = {
        "fc_w": jax.random.normal(nxt(), (din, dout), jnp.float32) / jnp.sqrt(din),
        "fc_b": 0.01 * jax.random.normal(nxt(), (dout,), jnp.float32),
        "deconv": [],
    }
    for li in range(4):
        ci, co = chans[li], chans[li + 1]
        w = jax.random.normal(nxt(), (ci, co, 3, 3), jnp.float32) / jnp.sqrt(ci * 9.0)
        b = 0.01 * jax.random.normal(nxt(), (co,), jnp.float32)
        gamma = 1.0 + 0.1 * jax.random.normal(nxt(), (co,), jnp.float32)
        beta = 0.1 * jax.random.normal(nxt(), (co,), jnp.float32)
        params["deconv"].append((w, b, gamma, beta))
    return params


def prepare_decoder_params(p):
    """One-time preprocessing hoisted out of the forward pass:
       * reorder the FC weight/bias so the linear output is NHWC-flattened,
       * pack ConvTranspose taps into zero-padded (CI, 4*CO) bf16 parity mats,
       * pad the final 3 output channels to 32 (4*CO = 128, lane-dense),
       * precompute the static BN row mask that drops pad-column rows."""
    din = p["fc_w"].shape[0]
    fc_w = p["fc_w"].reshape(din, 256, 4, 4).transpose(0, 2, 3, 1).reshape(din, -1)
    fc_b = p["fc_b"].reshape(256, 4, 4).transpose(1, 2, 0).reshape(1, -1)

    layers = []
    hh = ww = 4
    for li, (w, b, gamma, beta) in enumerate(p["deconv"]):
        ci, co = w.shape[0], w.shape[1]
        co_pad = co if li < 3 else 32         # final layer: 4*CO = 128 lanes
        if co_pad != co:
            w = jnp.pad(w, ((0, 0), (0, co_pad - co), (0, 0), (0, 0)))
            b = jnp.pad(b, (0, co_pad - co))
        z = jnp.zeros((ci, co_pad), jnp.float32)
        tap = lambda kh, kw: w[:, :, kh, kw]                  # (CI, CO)  # noqa: E731
        # Parity column blocks: [ee | eo | oe | oo]; zero blocks where a shift
        # does not contribute -> kernel combine is a plain add (no slicing).
        w00 = jnp.concatenate([tap(1, 1), tap(1, 2), tap(2, 1), tap(2, 2)], axis=1)
        w01 = jnp.concatenate([z,         tap(1, 0), z,         tap(2, 0)], axis=1)
        w10 = jnp.concatenate([z,         z,         tap(0, 1), tap(0, 2)], axis=1)
        w11 = jnp.concatenate([z,         z,         z,         tap(0, 0)], axis=1)
        wp = tuple(m.astype(jnp.bfloat16) for m in (w00, w01, w10, w11))
        bias4 = jnp.tile(b, 4).reshape(1, 4 * co_pad).astype(jnp.float32)

        wp1 = ww + 1                           # padded row length (W + 1)
        nb = hh * wp1                          # base rows computed per image
        mask = np.ones((nb, 1), np.float32)    # 0.0 on pad-column rows
        mask[np.arange(nb) % wp1 == ww] = 0.0

        layers.append(dict(wp=wp, bias4=bias4, gamma=gamma, beta=beta,
                           co=co_pad, co_true=co, use_bn=(li < 3),
                           h=hh, w=ww, wp1=wp1, nb=nb,
                           mask=jnp.asarray(mask)))
        hh, ww = 2 * hh, 2 * ww
    return {"fc_w": fc_w, "fc_b": fc_b, "layers": layers}


# ------------------------------ Forward pass -------------------------------- #
def decoder_forward(params, y, z):
    # x = torch.cat([y.type_as(z), z], dim=1);  Linear + ReLU.
    # The FC is ~0.27 MFLOP -> plain XLA dot (fuses with the padding glue);
    # a dedicated pallas_call here would be pure launch overhead.
    x = jnp.concatenate([y.astype(z.dtype), z], axis=1)
    h = jnp.maximum(jnp.dot(x, params["fc_w"]) + params["fc_b"], 0.0)
    bsz = z.shape[0]
    act = h.reshape(bsz, 4, 4, 256)            # NHWC (fc_w pre-reordered)

    out_nhwc = None
    for layer in params["layers"]:
        hh, ww, co = layer["h"], layer["w"], layer["co"]
        act_flat = _pad_flat(act)              # (B, (H+2)*(W+1), CI), f32
        if layer["use_bn"]:
            y_flat, stats = deconv_parity_layer(act_flat, layer)
            count = float(bsz * 4 * hh * ww)   # B * 2H * 2W output pixels
            scale, shift = _bn_scale_shift(stats, layer["gamma"], layer["beta"],
                                           co, count)
            y_sp = _parity_to_nhwc(y_flat, bsz, hh, ww, co)
            # BN affine + ReLU fuse (in XLA) with the next layer's pad/flatten.
            act = jnp.maximum(y_sp * scale + shift, 0.0)
        else:
            (y_flat,) = deconv_parity_layer(act_flat, layer)
            y_sp = _parity_to_nhwc(y_flat, bsz, hh, ww, co)   # sigmoid in-kernel
            out_nhwc = y_sp[..., :layer["co_true"]]
    # TODO(synk): BatchNorm running_mean/var/num_batches_tracked buffer updates
    # are not reproduced (forward output matches training-mode normalization).
    return jnp.transpose(out_nhwc, (0, 3, 1, 2))   # NCHW (B, 3, 64, 64)


if __name__ == "__main__":
    latent_size, num_labels, B = 32, 10, 2
    key = jax.random.PRNGKey(0)
    kp, ky, kz = jax.random.split(key, 3)

    raw_params = init_decoder_params(kp, latent_size)
    params = prepare_decoder_params(raw_params)   # one-time weight packing

    y = jax.random.randint(ky, (B, 1), 0, num_labels).astype(jnp.float32)  # label
    z = jax.random.normal(kz, (B, latent_size), jnp.float32)

    out = jax.jit(functools.partial(decoder_forward, params))(y, z)
    out = jax.block_until_ready(out)

    assert out.shape == (B, 3, 64, 64), out.shape
    assert bool(jnp.all(jnp.isfinite(out)))
    assert bool(jnp.all((out >= 0.0) & (out <= 1.0)))  # Sigmoid output range
    print("KERNEL_OK")
</pallas_src>

<mosaic_0001>
module attributes {stable_mosaic.version = 11 : i64} {
  func.func @_deconv_kernel(%arg0: i32, %arg1: memref<1x30x256xf32, #tpu.memory_space<vmem>>, %arg2: memref<256x512xbf16, #tpu.memory_space<vmem>>, %arg3: memref<256x512xbf16, #tpu.memory_space<vmem>>, %arg4: memref<256x512xbf16, #tpu.memory_space<vmem>>, %arg5: memref<256x512xbf16, #tpu.memory_space<vmem>>, %arg6: memref<1x512xf32, #tpu.memory_space<vmem>>, %arg7: memref<20x1xf32, #tpu.memory_space<vmem>>, %arg8: memref<1x20x512xf32, #tpu.memory_space<vmem>>, %arg9: memref<1x2x512xf32, #tpu.memory_space<vmem>>) attributes {dimension_semantics = [#tpu.dimension_semantics<parallel>], iteration_bounds = array<i64: 2>, scalar_prefetch = 0 : i64, scratch_operands = 0 : i64, tpu.core_type = #tpu.core_type<tc>, window_params = [{transform_indices = @transform_0, window_bounds = array<i64: 1, 30, 256>}, {pipeline_mode = #tpu.pipeline_mode<synchronous>, transform_indices = @transform_1, window_bounds = array<i64: 256, 512>}, {pipeline_mode = #tpu.pipeline_mode<synchronous>, transform_indices = @transform_2, window_bounds = array<i64: 256, 512>}, {pipeline_mode = #tpu.pipeline_mode<synchronous>, transform_indices = @transform_3, window_bounds = array<i64: 256, 512>}, {pipeline_mode = #tpu.pipeline_mode<synchronous>, transform_indices = @transform_4, window_bounds = array<i64: 256, 512>}, {pipeline_mode = #tpu.pipeline_mode<synchronous>, transform_indices = @transform_5, window_bounds = array<i64: 1, 512>}, {pipeline_mode = #tpu.pipeline_mode<synchronous>, transform_indices = @transform_6, window_bounds = array<i64: 20, 1>}, {transform_indices = @transform_7, window_bounds = array<i64: 1, 20, 512>}, {transform_indices = @transform_8, window_bounds = array<i64: 1, 2, 512>}]} {
    %c0 = arith.constant 0 : index
    %c0_0 = arith.constant 0 : index
    %c0_1 = arith.constant 0 : index
    %0 = vector.load %arg1[%c0, %c0_0, %c0_1] : memref<1x30x256xf32, #tpu.memory_space<vmem>>, vector<1x20x256xf32>
    %1 = vector.shape_cast %0 : vector<1x20x256xf32> to vector<20x256xf32>
    %2 = arith.truncf %1 : vector<20x256xf32> to vector<20x256xbf16>
    %c0_2 = arith.constant 0 : index
    %c1 = arith.constant 1 : index
    %c0_3 = arith.constant 0 : index
    %3 = vector.load %arg1[%c0_2, %c1, %c0_3] : memref<1x30x256xf32, #tpu.memory_space<vmem>>, vector<1x20x256xf32>
    %4 = vector.shape_cast %3 : vector<1x20x256xf32> to vector<20x256xf32>
    %5 = arith.truncf %4 : vector<20x256xf32> to vector<20x256xbf16>
    %c0_4 = arith.constant 0 : index
    %c5 = arith.constant 5 : index
    %c0_5 = arith.constant 0 : index
    %6 = vector.load %arg1[%c0_4, %c5, %c0_5] : memref<1x30x256xf32, #tpu.memory_space<vmem>>, vector<1x20x256xf32>
    %7 = vector.shape_cast %6 : vector<1x20x256xf32> to vector<20x256xf32>
    %8 = arith.truncf %7 : vector<20x256xf32> to vector<20x256xbf16>
    %c0_6 = arith.constant 0 : index
    %c6 = arith.constant 6 : index
    %c0_7 = arith.constant 0 : index
    %9 = vector.load %arg1[%c0_6, %c6, %c0_7] : memref<1x30x256xf32, #tpu.memory_space<vmem>>, vector<1x20x256xf32>
    %10 = vector.shape_cast %9 : vector<1x20x256xf32> to vector<20x256xf32>
    %11 = arith.truncf %10 : vector<20x256xf32> to vector<20x256xbf16>
    %c0_8 = arith.constant 0 : index
    %c0_9 = arith.constant 0 : index
    %12 = vector.load %arg2[%c0_8, %c0_9] : memref<256x512xbf16, #tpu.memory_space<vmem>>, vector<256x512xbf16>
    %cst = arith.constant dense<0.000000e+00> : vector<20x512xf32>
    %13 = tpu.matmul %2, %12, %cst {dimension_numbers = #tpu.dot_dimension_numbers<[1], [0], [0], [1], [0, 0, 1, 1], [], []>} : vector<20x256xbf16>, vector<256x512xbf16>, vector<20x512xf32> -> vector<20x512xf32>
    %c0_10 = arith.constant 0 : index
    %c0_11 = arith.constant 0 : index
    %14 = vector.load %arg3[%c0_10, %c0_11] : memref<256x512xbf16, #tpu.memory_space<vmem>>, vector<256x512xbf16>
    %cst_12 = arith.constant dense<0.000000e+00> : vector<20x512xf32>
    %15 = tpu.matmul %5, %14, %cst_12 {dimension_numbers = #tpu.dot_dimension_numbers<[1], [0], [0], [1], [0, 0, 1, 1], [], []>} : vector<20x256xbf16>, vector<256x512xbf16>, vector<20x512xf32> -> vector<20x512xf32>
    %16 = arith.addf %13, %15 : vector<20x512xf32>
    %c0_13 = arith.constant 0 : index
    %c0_14 = arith.constant 0 : index
    %17 = vector.load %arg4[%c0_13, %c0_14] : memref<256x512xbf16, #tpu.memory_space<vmem>>, vector<256x512xbf16>
    %cst_15 = arith.constant dense<0.000000e+00> : vector<20x512xf32>
    %18 = tpu.matmul %8, %17, %cst_15 {dimension_numbers = #tpu.dot_dimension_numbers<[1], [0], [0], [1], [0, 0, 1, 1], [], []>} : vector<20x256xbf16>, vector<256x512xbf16>, vector<20x512xf32> -> vector<20x512xf32>
    %19 = arith.addf %16, %18 : vector<20x512xf32>
    %c0_16 = arith.constant 0 : index
    %c0_17 = arith.constant 0 : index
    %20 = vector.load %arg5[%c0_16, %c0_17] : memref<256x512xbf16, #tpu.memory_space<vmem>>, vector<256x512xbf16>
    %cst_18 = arith.constant dense<0.000000e+00> : vector<20x512xf32>
    %21 = tpu.matmul %11, %20, %cst_18 {dimension_numbers = #tpu.dot_dimension_numbers<[1], [0], [0], [1], [0, 0, 1, 1], [], []>} : vector<20x256xbf16>, vector<256x512xbf16>, vector<20x512xf32> -> vector<20x512xf32>
    %22 = arith.addf %19, %21 : vector<20x512xf32>
    %c0_19 = arith.constant 0 : index
    %c0_20 = arith.constant 0 : index
    %23 = vector.load %arg6[%c0_19, %c0_20] : memref<1x512xf32, #tpu.memory_space<vmem>>, vector<1x512xf32>
    %24 = vector.broadcast %23 : vector<1x512xf32> to vector<20x512xf32>
    %25 = arith.addf %22, %24 : vector<20x512xf32>
    %c0_21 = arith.constant 0 : index
    %c0_22 = arith.constant 0 : index
    %c0_23 = arith.constant 0 : index
    %26 = vector.load %arg8[%c0_21, %c0_22, %c0_23] : memref<1x20x512xf32, #tpu.memory_space<vmem>>, vector<1x20x512xf32>
    %27 = vector.shape_cast %26 : vector<1x20x512xf32> to vector<20x512xf32>
    %28 = vector.shape_cast %25 : vector<20x512xf32> to vector<1x20x512xf32>
    tpu.vector_store %arg8[%c0_21, %c0_22, %c0_23], %28 {strides = array<i32>} : memref<1x20x512xf32, #tpu.memory_space<vmem>>, vector<1x20x512xf32>,
    %c0_24 = arith.constant 0 : index
    %c0_25 = arith.constant 0 : index
    %29 = vector.load %arg7[%c0_24, %c0_25] : memref<20x1xf32, #tpu.memory_space<vmem>>, vector<20x1xf32>
    %30 = vector.broadcast %29 : vector<20x1xf32> to vector<20x512xf32>
    %31 = arith.mulf %25, %30 : vector<20x512xf32>
    %cst_26 = arith.constant dense<0.000000e+00> : vector<512xf32>
    %32 = vector.multi_reduction <add>, %31, %cst_26 [0] : vector<20x512xf32> to vector<512xf32>
    %33 = vector.shape_cast %32 : vector<512xf32> to vector<1x512xf32>
    %34 = arith.mulf %31, %31 : vector<20x512xf32>
    %cst_27 = arith.constant dense<0.000000e+00> : vector<512xf32>
    %35 = vector.multi_reduction <add>, %34, %cst_27 [0] : vector<20x512xf32> to vector<512xf32>
    %36 = vector.shape_cast %35 : vector<512xf32> to vector<1x512xf32>
    %37 = tpu.concatenate %33, %36 in 0 : vector<1x512xf32>, vector<1x512xf32> -> vector<2x512xf32>
    %c0_28 = arith.constant 0 : index
    %c0_29 = arith.constant 0 : index
    %c0_30 = arith.constant 0 : index
    %38 = vector.load %arg9[%c0_28, %c0_29, %c0_30] : memref<1x2x512xf32, #tpu.memory_space<vmem>>, vector<1x2x512xf32>
    %39 = vector.shape_cast %38 : vector<1x2x512xf32> to vector<2x512xf32>
    %40 = vector.shape_cast %37 : vector<2x512xf32> to vector<1x2x512xf32>
    tpu.vector_store %arg9[%c0_28, %c0_29, %c0_30], %40 {strides = array<i32>} : memref<1x2x512xf32, #tpu.memory_space<vmem>>, vector<1x2x512xf32>,
    return
  }
  func.func @transform_0(%arg0: i32) -> (i32, i32, i32) {
    %c0_i32 = arith.constant 0 : i32
    %c0_i32_0 = arith.constant 0 : i32
    %c0_i32_1 = arith.constant 0 : i32
    return %arg0, %c0_i32, %c0_i32_0 : i32, i32, i32
  }
  func.func @transform_1(%arg0: i32) -> (i32, i32) {
    %c0_i32 = arith.constant 0 : i32
    %c0_i32_0 = arith.constant 0 : i32
    %c0_i32_1 = arith.constant 0 : i32
    return %c0_i32, %c0_i32_0 : i32, i32
  }
  func.func @transform_2(%arg0: i32) -> (i32, i32) {
    %c0_i32 = arith.constant 0 : i32
    %c0_i32_0 = arith.constant 0 : i32
    %c0_i32_1 = arith.constant 0 : i32
    return %c0_i32, %c0_i32_0 : i32, i32
  }
  func.func @transform_3(%arg0: i32) -> (i32, i32) {
    %c0_i32 = arith.constant 0 : i32
    %c0_i32_0 = arith.constant 0 : i32
    %c0_i32_1 = arith.constant 0 : i32
    return %c0_i32, %c0_i32_0 : i32, i32
  }
  func.func @transform_4(%arg0: i32) -> (i32, i32) {
    %c0_i32 = arith.constant 0 : i32
    %c0_i32_0 = arith.constant 0 : i32
    %c0_i32_1 = arith.constant 0 : i32
    return %c0_i32, %c0_i32_0 : i32, i32
  }
  func.func @transform_5(%arg0: i32) -> (i32, i32) {
    %c0_i32 = arith.constant 0 : i32
    %c0_i32_0 = arith.constant 0 : i32
    %c0_i32_1 = arith.constant 0 : i32
    return %c0_i32, %c0_i32_0 : i32, i32
  }
  func.func @transform_6(%arg0: i32) -> (i32, i32) {
    %c0_i32 = arith.constant 0 : i32
    %c0_i32_0 = arith.constant 0 : i32
    %c0_i32_1 = arith.constant 0 : i32
    return %c0_i32, %c0_i32_0 : i32, i32
  }
  func.func @transform_7(%arg0: i32) -> (i32, i32, i32) {
    %c0_i32 = arith.constant 0 : i32
    %c0_i32_0 = arith.constant 0 : i32
    %c0_i32_1 = arith.constant 0 : i32
    return %arg0, %c0_i32, %c0_i32_0 : i32, i32, i32
  }
  func.func @transform_8(%arg0: i32) -> (i32, i32, i32) {
    %c0_i32 = arith.constant 0 : i32
    %c0_i32_0 = arith.constant 0 : i32
    %c0_i32_1 = arith.constant 0 : i32
    return %arg0, %c0_i32, %c0_i32_0 : i32, i32, i32
  }
}

module attributes {stable_mosaic.version = 11 : i64} {
  func.func @_deconv_kernel(%arg0: i32, %arg1: memref<1x90x128xf32, #tpu.memory_space<vmem>>, %arg2: memref<128x256xbf16, #tpu.memory_space<vmem>>, %arg3: memref<128x256xbf16, #tpu.memory_space<vmem>>, %arg4: memref<128x256xbf16, #tpu.memory_space<vmem>>, %arg5: memref<128x256xbf16, #tpu.memory_space<vmem>>, %arg6: memref<1x256xf32, #tpu.memory_space<vmem>>, %arg7: memref<72x1xf32, #tpu.memory_space<vmem>>, %arg8: memref<1x72x256xf32, #tpu.memory_space<vmem>>, %arg9: memref<1x2x256xf32, #tpu.memory_space<vmem>>) attributes {dimension_semantics = [#tpu.dimension_semantics<parallel>], iteration_bounds = array<i64: 2>, scalar_prefetch = 0 : i64, scratch_operands = 0 : i64, tpu.core_type = #tpu.core_type<tc>, window_params = [{transform_indices = @transform_0, window_bounds = array<i64: 1, 90, 128>}, {pipeline_mode = #tpu.pipeline_mode<synchronous>, transform_indices = @transform_1, window_bounds = array<i64: 128, 256>}, {pipeline_mode = #tpu.pipeline_mode<synchronous>, transform_indices = @transform_2, window_bounds = array<i64: 128, 256>}, {pipeline_mode = #tpu.pipeline_mode<synchronous>, transform_indices = @transform_3, window_bounds = array<i64: 128, 256>}, {pipeline_mode = #tpu.pipeline_mode<synchronous>, transform_indices = @transform_4, window_bounds = array<i64: 128, 256>}, {pipeline_mode = #tpu.pipeline_mode<synchronous>, transform_indices = @transform_5, window_bounds = array<i64: 1, 256>}, {pipeline_mode = #tpu.pipeline_mode<synchronous>, transform_indices = @transform_6, window_bounds = array<i64: 72, 1>}, {transform_indices = @transform_7, window_bounds = array<i64: 1, 72, 256>}, {transform_indices = @transform_8, window_bounds = array<i64: 1, 2, 256>}]} {
    %c0 = arith.constant 0 : index
    %c0_0 = arith.constant 0 : index
    %c0_1 = arith.constant 0 : index
    %0 = vector.load %arg1[%c0, %c0_0, %c0_1] : memref<1x90x128xf32, #tpu.memory_space<vmem>>, vector<1x72x128xf32>
    %1 = vector.shape_cast %0 : vector<1x72x128xf32> to vector<72x128xf32>
    %2 = arith.truncf %1 : vector<72x128xf32> to vector<72x128xbf16>
    %c0_2 = arith.constant 0 : index
    %c1 = arith.constant 1 : index
    %c0_3 = arith.constant 0 : index
    %3 = vector.load %arg1[%c0_2, %c1, %c0_3] : memref<1x90x128xf32, #tpu.memory_space<vmem>>, vector<1x72x128xf32>
    %4 = vector.shape_cast %3 : vector<1x72x128xf32> to vector<72x128xf32>
    %5 = arith.truncf %4 : vector<72x128xf32> to vector<72x128xbf16>
    %c0_4 = arith.constant 0 : index
    %c9 = arith.constant 9 : index
    %c0_5 = arith.constant 0 : index
    %6 = vector.load %arg1[%c0_4, %c9, %c0_5] : memref<1x90x128xf32, #tpu.memory_space<vmem>>, vector<1x72x128xf32>
    %7 = vector.shape_cast %6 : vector<1x72x128xf32> to vector<72x128xf32>
    %8 = arith.truncf %7 : vector<72x128xf32> to vector<72x128xbf16>
    %c0_6 = arith.constant 0 : index
    %c10 = arith.constant 10 : index
    %c0_7 = arith.constant 0 : index
    %9 = vector.load %arg1[%c0_6, %c10, %c0_7] : memref<1x90x128xf32, #tpu.memory_space<vmem>>, vector<1x72x128xf32>
    %10 = vector.shape_cast %9 : vector<1x72x128xf32> to vector<72x128xf32>
    %11 = arith.truncf %10 : vector<72x128xf32> to vector<72x128xbf16>
    %c0_8 = arith.constant 0 : index
    %c0_9 = arith.constant 0 : index
    %12 = vector.load %arg2[%c0_8, %c0_9] : memref<128x256xbf16, #tpu.memory_space<vmem>>, vector<128x256xbf16>
    %cst = arith.constant dense<0.000000e+00> : vector<72x256xf32>
    %13 = tpu.matmul %2, %12, %cst {dimension_numbers = #tpu.dot_dimension_numbers<[1], [0], [0], [1], [0, 0, 1, 1], [], []>} : vector<72x128xbf16>, vector<128x256xbf16>, vector<72x256xf32> -> vector<72x256xf32>
    %c0_10 = arith.constant 0 : index
    %c0_11 = arith.constant 0 : index
    %14 = vector.load %arg3[%c0_10, %c0_11] : memref<128x256xbf16, #tpu.memory_space<vmem>>, vector<128x256xbf16>
    %cst_12 = arith.constant dense<0.000000e+00> : vector<72x256xf32>
    %15 = tpu.matmul %5, %14, %cst_12 {dimension_numbers = #tpu.dot_dimension_numbers<[1], [0], [0], [1], [0, 0, 1, 1], [], []>} : vector<72x128xbf16>, vector<128x256xbf16>, vector<72x256xf32> -> vector<72x256xf32>
    %16 = arith.addf %13, %15 : vector<72x256xf32>
    %c0_13 = arith.constant 0 : index
    %c0_14 = arith.constant 0 : index
    %17 = vector.load %arg4[%c0_13, %c0_14] : memref<128x256xbf16, #tpu.memory_space<vmem>>, vector<128x256xbf16>
    %cst_15 = arith.constant dense<0.000000e+00> : vector<72x256xf32>
    %18 = tpu.matmul %8, %17, %cst_15 {dimension_numbers = #tpu.dot_dimension_numbers<[1], [0], [0], [1], [0, 0, 1, 1], [], []>} : vector<72x128xbf16>, vector<128x256xbf16>, vector<72x256xf32> -> vector<72x256xf32>
    %19 = arith.addf %16, %18 : vector<72x256xf32>
    %c0_16 = arith.constant 0 : index
    %c0_17 = arith.constant 0 : index
    %20 = vector.load %arg5[%c0_16, %c0_17] : memref<128x256xbf16, #tpu.memory_space<vmem>>, vector<128x256xbf16>
    %cst_18 = arith.constant dense<0.000000e+00> : vector<72x256xf32>
    %21 = tpu.matmul %11, %20, %cst_18 {dimension_numbers = #tpu.dot_dimension_numbers<[1], [0], [0], [1], [0, 0, 1, 1], [], []>} : vector<72x128xbf16>, vector<128x256xbf16>, vector<72x256xf32> -> vector<72x256xf32>
    %22 = arith.addf %19, %21 : vector<72x256xf32>
    %c0_19 = arith.constant 0 : index
    %c0_20 = arith.constant 0 : index
    %23 = vector.load %arg6[%c0_19, %c0_20] : memref<1x256xf32, #tpu.memory_space<vmem>>, vector<1x256xf32>
    %24 = vector.broadcast %23 : vector<1x256xf32> to vector<72x256xf32>
    %25 = arith.addf %22, %24 : vector<72x256xf32>
    %c0_21 = arith.constant 0 : index
    %c0_22 = arith.constant 0 : index
    %c0_23 = arith.constant 0 : index
    %26 = vector.load %arg8[%c0_21, %c0_22, %c0_23] : memref<1x72x256xf32, #tpu.memory_space<vmem>>, vector<1x72x256xf32>
    %27 = vector.shape_cast %26 : vector<1x72x256xf32> to vector<72x256xf32>
    %28 = vector.shape_cast %25 : vector<72x256xf32> to vector<1x72x256xf32>
    tpu.vector_store %arg8[%c0_21, %c0_22, %c0_23], %28 {strides = array<i32>} : memref<1x72x256xf32, #tpu.memory_space<vmem>>, vector<1x72x256xf32>,
    %c0_24 = arith.constant 0 : index
    %c0_25 = arith.constant 0 : index
    %29 = vector.load %arg7[%c0_24, %c0_25] : memref<72x1xf32, #tpu.memory_space<vmem>>, vector<72x1xf32>
    %30 = vector.broadcast %29 : vector<72x1xf32> to vector<72x256xf32>
    %31 = arith.mulf %25, %30 : vector<72x256xf32>
    %cst_26 = arith.constant dense<0.000000e+00> : vector<256xf32>
    %32 = vector.multi_reduction <add>, %31, %cst_26 [0] : vector<72x256xf32> to vector<256xf32>
    %33 = vector.shape_cast %32 : vector<256xf32> to vector<1x256xf32>
    %34 = arith.mulf %31, %31 : vector<72x256xf32>
    %cst_27 = arith.constant dense<0.000000e+00> : vector<256xf32>
    %35 = vector.multi_reduction <add>, %34, %cst_27 [0] : vector<72x256xf32> to vector<256xf32>
    %36 = vector.shape_cast %35 : vector<256xf32> to vector<1x256xf32>
    %37 = tpu.concatenate %33, %36 in 0 : vector<1x256xf32>, vector<1x256xf32> -> vector<2x256xf32>
    %c0_28 = arith.constant 0 : index
    %c0_29 = arith.constant 0 : index
    %c0_30 = arith.constant 0 : index
    %38 = vector.load %arg9[%c0_28, %c0_29, %c0_30] : memref<1x2x256xf32, #tpu.memory_space<vmem>>, vector<1x2x256xf32>
    %39 = vector.shape_cast %38 : vector<1x2x256xf32> to vector<2x256xf32>
    %40 = vector.shape_cast %37 : vector<2x256xf32> to vector<1x2x256xf32>
    tpu.vector_store %arg9[%c0_28, %c0_29, %c0_30], %40 {strides = array<i32>} : memref<1x2x256xf32, #tpu.memory_space<vmem>>, vector<1x2x256xf32>,
    return
  }
  func.func @transform_0(%arg0: i32) -> (i32, i32, i32) {
    %c0_i32 = arith.constant 0 : i32
    %c0_i32_0 = arith.constant 0 : i32
    %c0_i32_1 = arith.constant 0 : i32
    return %arg0, %c0_i32, %c0_i32_0 : i32, i32, i32
  }
  func.func @transform_1(%arg0: i32) -> (i32, i32) {
    %c0_i32 = arith.constant 0 : i32
    %c0_i32_0 = arith.constant 0 : i32
    %c0_i32_1 = arith.constant 0 : i32
    return %c0_i32, %c0_i32_0 : i32, i32
  }
  func.func @transform_2(%arg0: i32) -> (i32, i32) {
    %c0_i32 = arith.constant 0 : i32
    %c0_i32_0 = arith.constant 0 : i32
    %c0_i32_1 = arith.constant 0 : i32
    return %c0_i32, %c0_i32_0 : i32, i32
  }
  func.func @transform_3(%arg0: i32) -> (i32, i32) {
    %c0_i32 = arith.constant 0 : i32
    %c0_i32_0 = arith.constant 0 : i32
    %c0_i32_1 = arith.constant 0 : i32
    return %c0_i32, %c0_i32_0 : i32, i32
  }
  func.func @transform_4(%arg0: i32) -> (i32, i32) {
    %c0_i32 = arith.constant 0 : i32
    %c0_i32_0 = arith.constant 0 : i32
    %c0_i32_1 = arith.constant 0 : i32
    return %c0_i32, %c0_i32_0 : i32, i32
  }
  func.func @transform_5(%arg0: i32) -> (i32, i32) {
    %c0_i32 = arith.constant 0 : i32
    %c0_i32_0 = arith.constant 0 : i32
    %c0_i32_1 = arith.constant 0 : i32
    return %c0_i32, %c0_i32_0 : i32, i32
  }
  func.func @transform_6(%arg0: i32) -> (i32, i32) {
    %c0_i32 = arith.constant 0 : i32
    %c0_i32_0 = arith.constant 0 : i32
    %c0_i32_1 = arith.constant 0 : i32
    return %c0_i32, %c0_i32_0 : i32, i32
  }
  func.func @transform_7(%arg0: i32) -> (i32, i32, i32) {
    %c0_i32 = arith.constant 0 : i32
    %c0_i32_0 = arith.constant 0 : i32
    %c0_i32_1 = arith.constant 0 : i32
    return %arg0, %c0_i32, %c0_i32_0 : i32, i32, i32
  }
  func.func @transform_8(%arg0: i32) -> (i32, i32, i32) {
    %c0_i32 = arith.constant 0 : i32
    %c0_i32_0 = arith.constant 0 : i32
    %c0_i32_1 = arith.constant 0 : i32
    return %arg0, %c0_i32, %c0_i32_0 : i32, i32, i32
  }
}

module attributes {stable_mosaic.version = 11 : i64} {
  func.func @_deconv_kernel(%arg0: i32, %arg1: memref<1x306x64xf32, #tpu.memory_space<vmem>>, %arg2: memref<64x128xbf16, #tpu.memory_space<vmem>>, %arg3: memref<64x128xbf16, #tpu.memory_space<vmem>>, %arg4: memref<64x128xbf16, #tpu.memory_space<vmem>>, %arg5: memref<64x128xbf16, #tpu.memory_space<vmem>>, %arg6: memref<1x128xf32, #tpu.memory_space<vmem>>, %arg7: memref<272x1xf32, #tpu.memory_space<vmem>>, %arg8: memref<1x272x128xf32, #tpu.memory_space<vmem>>, %arg9: memref<1x2x128xf32, #tpu.memory_space<vmem>>) attributes {dimension_semantics = [#tpu.dimension_semantics<parallel>], iteration_bounds = array<i64: 2>, scalar_prefetch = 0 : i64, scratch_operands = 0 : i64, tpu.core_type = #tpu.core_type<tc>, window_params = [{transform_indices = @transform_0, window_bounds = array<i64: 1, 306, 64>}, {pipeline_mode = #tpu.pipeline_mode<synchronous>, transform_indices = @transform_1, window_bounds = array<i64: 64, 128>}, {pipeline_mode = #tpu.pipeline_mode<synchronous>, transform_indices = @transform_2, window_bounds = array<i64: 64, 128>}, {pipeline_mode = #tpu.pipeline_mode<synchronous>, transform_indices = @transform_3, window_bounds = array<i64: 64, 128>}, {pipeline_mode = #tpu.pipeline_mode<synchronous>, transform_indices = @transform_4, window_bounds = array<i64: 64, 128>}, {pipeline_mode = #tpu.pipeline_mode<synchronous>, transform_indices = @transform_5, window_bounds = array<i64: 1, 128>}, {pipeline_mode = #tpu.pipeline_mode<synchronous>, transform_indices = @transform_6, window_bounds = array<i64: 272, 1>}, {transform_indices = @transform_7, window_bounds = array<i64: 1, 272, 128>}, {transform_indices = @transform_8, window_bounds = array<i64: 1, 2, 128>}]} {
    %c0 = arith.constant 0 : index
    %c0_0 = arith.constant 0 : index
    %c0_1 = arith.constant 0 : index
    %0 = vector.load %arg1[%c0, %c0_0, %c0_1] : memref<1x306x64xf32, #tpu.memory_space<vmem>>, vector<1x272x64xf32>
    %1 = vector.shape_cast %0 : vector<1x272x64xf32> to vector<272x64xf32>
    %2 = arith.truncf %1 : vector<272x64xf32> to vector<272x64xbf16>
    %c0_2 = arith.constant 0 : index
    %c1 = arith.constant 1 : index
    %c0_3 = arith.constant 0 : index
    %3 = vector.load %arg1[%c0_2, %c1, %c0_3] : memref<1x306x64xf32, #tpu.memory_space<vmem>>, vector<1x272x64xf32>
    %4 = vector.shape_cast %3 : vector<1x272x64xf32> to vector<272x64xf32>
    %5 = arith.truncf %4 : vector<272x64xf32> to vector<272x64xbf16>
    %c0_4 = arith.constant 0 : index
    %c17 = arith.constant 17 : index
    %c0_5 = arith.constant 0 : index
    %6 = vector.load %arg1[%c0_4, %c17, %c0_5] : memref<1x306x64xf32, #tpu.memory_space<vmem>>, vector<1x272x64xf32>
    %7 = vector.shape_cast %6 : vector<1x272x64xf32> to vector<272x64xf32>
    %8 = arith.truncf %7 : vector<272x64xf32> to vector<272x64xbf16>
    %c0_6 = arith.constant 0 : index
    %c18 = arith.constant 18 : index
    %c0_7 = arith.constant 0 : index
    %9 = vector.load %arg1[%c0_6, %c18, %c0_7] : memref<1x306x64xf32, #tpu.memory_space<vmem>>, vector<1x272x64xf32>
    %10 = vector.shape_cast %9 : vector<1x272x64xf32> to vector<272x64xf32>
    %11 = arith.truncf %10 : vector<272x64xf32> to vector<272x64xbf16>
    %c0_8 = arith.constant 0 : index
    %c0_9 = arith.constant 0 : index
    %12 = vector.load %arg2[%c0_8, %c0_9] : memref<64x128xbf16, #tpu.memory_space<vmem>>, vector<64x128xbf16>
    %cst = arith.constant dense<0.000000e+00> : vector<272x128xf32>
    %13 = tpu.matmul %2, %12, %cst {dimension_numbers = #tpu.dot_dimension_numbers<[1], [0], [0], [1], [0, 0, 1, 1], [], []>} : vector<272x64xbf16>, vector<64x128xbf16>, vector<272x128xf32> -> vector<272x128xf32>
    %c0_10 = arith.constant 0 : index
    %c0_11 = arith.constant 0 : index
    %14 = vector.load %arg3[%c0_10, %c0_11] : memref<64x128xbf16, #tpu.memory_space<vmem>>, vector<64x128xbf16>
    %cst_12 = arith.constant dense<0.000000e+00> : vector<272x128xf32>
    %15 = tpu.matmul %5, %14, %cst_12 {dimension_numbers = #tpu.dot_dimension_numbers<[1], [0], [0], [1], [0, 0, 1, 1], [], []>} : vector<272x64xbf16>, vector<64x128xbf16>, vector<272x128xf32> -> vector<272x128xf32>
    %16 = arith.addf %13, %15 : vector<272x128xf32>
    %c0_13 = arith.constant 0 : index
    %c0_14 = arith.constant 0 : index
    %17 = vector.load %arg4[%c0_13, %c0_14] : memref<64x128xbf16, #tpu.memory_space<vmem>>, vector<64x128xbf16>
    %cst_15 = arith.constant dense<0.000000e+00> : vector<272x128xf32>
    %18 = tpu.matmul %8, %17, %cst_15 {dimension_numbers = #tpu.dot_dimension_numbers<[1], [0], [0], [1], [0, 0, 1, 1], [], []>} : vector<272x64xbf16>, vector<64x128xbf16>, vector<272x128xf32> -> vector<272x128xf32>
    %19 = arith.addf %16, %18 : vector<272x128xf32>
    %c0_16 = arith.constant 0 : index
    %c0_17 = arith.constant 0 : index
    %20 = vector.load %arg5[%c0_16, %c0_17] : memref<64x128xbf16, #tpu.memory_space<vmem>>, vector<64x128xbf16>
    %cst_18 = arith.constant dense<0.000000e+00> : vector<272x128xf32>
    %21 = tpu.matmul %11, %20, %cst_18 {dimension_numbers = #tpu.dot_dimension_numbers<[1], [0], [0], [1], [0, 0, 1, 1], [], []>} : vector<272x64xbf16>, vector<64x128xbf16>, vector<272x128xf32> -> vector<272x128xf32>
    %22 = arith.addf %19, %21 : vector<272x128xf32>
    %c0_19 = arith.constant 0 : index
    %c0_20 = arith.constant 0 : index
    %23 = vector.load %arg6[%c0_19, %c0_20] : memref<1x128xf32, #tpu.memory_space<vmem>>, vector<1x128xf32>
    %24 = vector.broadcast %23 : vector<1x128xf32> to vector<272x128xf32>
    %25 = arith.addf %22, %24 : vector<272x128xf32>
    %c0_21 = arith.constant 0 : index
    %c0_22 = arith.constant 0 : index
    %c0_23 = arith.constant 0 : index
    %26 = vector.load %arg8[%c0_21, %c0_22, %c0_23] : memref<1x272x128xf32, #tpu.memory_space<vmem>>, vector<1x272x128xf32>
    %27 = vector.shape_cast %26 : vector<1x272x128xf32> to vector<272x128xf32>
    %28 = vector.shape_cast %25 : vector<272x128xf32> to vector<1x272x128xf32>
    tpu.vector_store %arg8[%c0_21, %c0_22, %c0_23], %28 {strides = array<i32>} : memref<1x272x128xf32, #tpu.memory_space<vmem>>, vector<1x272x128xf32>,
    %c0_24 = arith.constant 0 : index
    %c0_25 = arith.constant 0 : index
    %29 = vector.load %arg7[%c0_24, %c0_25] : memref<272x1xf32, #tpu.memory_space<vmem>>, vector<272x1xf32>
    %30 = vector.broadcast %29 : vector<272x1xf32> to vector<272x128xf32>
    %31 = arith.mulf %25, %30 : vector<272x128xf32>
    %cst_26 = arith.constant dense<0.000000e+00> : vector<128xf32>
    %32 = vector.multi_reduction <add>, %31, %cst_26 [0] : vector<272x128xf32> to vector<128xf32>
    %33 = vector.shape_cast %32 : vector<128xf32> to vector<1x128xf32>
    %34 = arith.mulf %31, %31 : vector<272x128xf32>
    %cst_27 = arith.constant dense<0.000000e+00> : vector<128xf32>
    %35 = vector.multi_reduction <add>, %34, %cst_27 [0] : vector<272x128xf32> to vector<128xf32>
    %36 = vector.shape_cast %35 : vector<128xf32> to vector<1x128xf32>
    %37 = tpu.concatenate %33, %36 in 0 : vector<1x128xf32>, vector<1x128xf32> -> vector<2x128xf32>
    %c0_28 = arith.constant 0 : index
    %c0_29 = arith.constant 0 : index
    %c0_30 = arith.constant 0 : index
    %38 = vector.load %arg9[%c0_28, %c0_29, %c0_30] : memref<1x2x128xf32, #tpu.memory_space<vmem>>, vector<1x2x128xf32>
    %39 = vector.shape_cast %38 : vector<1x2x128xf32> to vector<2x128xf32>
    %40 = vector.shape_cast %37 : vector<2x128xf32> to vector<1x2x128xf32>
    tpu.vector_store %arg9[%c0_28, %c0_29, %c0_30], %40 {strides = array<i32>} : memref<1x2x128xf32, #tpu.memory_space<vmem>>, vector<1x2x128xf32>,
    return
  }
  func.func @transform_0(%arg0: i32) -> (i32, i32, i32) {
    %c0_i32 = arith.constant 0 : i32
    %c0_i32_0 = arith.constant 0 : i32
    %c0_i32_1 = arith.constant 0 : i32
    return %arg0, %c0_i32, %c0_i32_0 : i32, i32, i32
  }
  func.func @transform_1(%arg0: i32) -> (i32, i32) {
    %c0_i32 = arith.constant 0 : i32
    %c0_i32_0 = arith.constant 0 : i32
    %c0_i32_1 = arith.constant 0 : i32
    return %c0_i32, %c0_i32_0 : i32, i32
  }
  func.func @transform_2(%arg0: i32) -> (i32, i32) {
    %c0_i32 = arith.constant 0 : i32
    %c0_i32_0 = arith.constant 0 : i32
    %c0_i32_1 = arith.constant 0 : i32
    return %c0_i32, %c0_i32_0 : i32, i32
  }
  func.func @transform_3(%arg0: i32) -> (i32, i32) {
    %c0_i32 = arith.constant 0 : i32
    %c0_i32_0 = arith.constant 0 : i32
    %c0_i32_1 = arith.constant 0 : i32
    return %c0_i32, %c0_i32_0 : i32, i32
  }
  func.func @transform_4(%arg0: i32) -> (i32, i32) {
    %c0_i32 = arith.constant 0 : i32
    %c0_i32_0 = arith.constant 0 : i32
    %c0_i32_1 = arith.constant 0 : i32
    return %c0_i32, %c0_i32_0 : i32, i32
  }
  func.func @transform_5(%arg0: i32) -> (i32, i32) {
    %c0_i32 = arith.constant 0 : i32
    %c0_i32_0 = arith.constant 0 : i32
    %c0_i32_1 = arith.constant 0 : i32
    return %c0_i32, %c0_i32_0 : i32, i32
  }
  func.func @transform_6(%arg0: i32) -> (i32, i32) {
    %c0_i32 = arith.constant 0 : i32
    %c0_i32_0 = arith.constant 0 : i32
    %c0_i32_1 = arith.constant 0 : i32
    return %c0_i32, %c0_i32_0 : i32, i32
  }
  func.func @transform_7(%arg0: i32) -> (i32, i32, i32) {
    %c0_i32 = arith.constant 0 : i32
    %c0_i32_0 = arith.constant 0 : i32
    %c0_i32_1 = arith.constant 0 : i32
    return %arg0, %c0_i32, %c0_i32_0 : i32, i32, i32
  }
  func.func @transform_8(%arg0: i32) -> (i32, i32, i32) {
    %c0_i32 = arith.constant 0 : i32
    %c0_i32_0 = arith.constant 0 : i32
    %c0_i32_1 = arith.constant 0 : i32
    return %arg0, %c0_i32, %c0_i32_0 : i32, i32, i32
  }
}

module attributes {stable_mosaic.version = 11 : i64} {
  func.func @_deconv_kernel(%arg0: i32, %arg1: memref<1x1122x32xf32, #tpu.memory_space<vmem>>, %arg2: memref<32x128xbf16, #tpu.memory_space<vmem>>, %arg3: memref<32x128xbf16, #tpu.memory_space<vmem>>, %arg4: memref<32x128xbf16, #tpu.memory_space<vmem>>, %arg5: memref<32x128xbf16, #tpu.memory_space<vmem>>, %arg6: memref<1x128xf32, #tpu.memory_space<vmem>>, %arg7: memref<1x1056x128xf32, #tpu.memory_space<vmem>>) attributes {dimension_semantics = [#tpu.dimension_semantics<parallel>], iteration_bounds = array<i64: 2>, scalar_prefetch = 0 : i64, scratch_operands = 0 : i64, tpu.core_type = #tpu.core_type<tc>, window_params = [{transform_indices = @transform_0, window_bounds = array<i64: 1, 1122, 32>}, {pipeline_mode = #tpu.pipeline_mode<synchronous>, transform_indices = @transform_1, window_bounds = array<i64: 32, 128>}, {pipeline_mode = #tpu.pipeline_mode<synchronous>, transform_indices = @transform_2, window_bounds = array<i64: 32, 128>}, {pipeline_mode = #tpu.pipeline_mode<synchronous>, transform_indices = @transform_3, window_bounds = array<i64: 32, 128>}, {pipeline_mode = #tpu.pipeline_mode<synchronous>, transform_indices = @transform_4, window_bounds = array<i64: 32, 128>}, {pipeline_mode = #tpu.pipeline_mode<synchronous>, transform_indices = @transform_5, window_bounds = array<i64: 1, 128>}, {transform_indices = @transform_6, window_bounds = array<i64: 1, 1056, 128>}]} {
    %c0 = arith.constant 0 : index
    %c0_0 = arith.constant 0 : index
    %c0_1 = arith.constant 0 : index
    %0 = vector.load %arg1[%c0, %c0_0, %c0_1] : memref<1x1122x32xf32, #tpu.memory_space<vmem>>, vector<1x1056x32xf32>
    %1 = vector.shape_cast %0 : vector<1x1056x32xf32> to vector<1056x32xf32>
    %2 = arith.truncf %1 : vector<1056x32xf32> to vector<1056x32xbf16>
    %c0_2 = arith.constant 0 : index
    %c1 = arith.constant 1 : index
    %c0_3 = arith.constant 0 : index
    %3 = vector.load %arg1[%c0_2, %c1, %c0_3] : memref<1x1122x32xf32, #tpu.memory_space<vmem>>, vector<1x1056x32xf32>
    %4 = vector.shape_cast %3 : vector<1x1056x32xf32> to vector<1056x32xf32>
    %5 = arith.truncf %4 : vector<1056x32xf32> to vector<1056x32xbf16>
    %c0_4 = arith.constant 0 : index
    %c33 = arith.constant 33 : index
    %c0_5 = arith.constant 0 : index
    %6 = vector.load %arg1[%c0_4, %c33, %c0_5] : memref<1x1122x32xf32, #tpu.memory_space<vmem>>, vector<1x1056x32xf32>
    %7 = vector.shape_cast %6 : vector<1x1056x32xf32> to vector<1056x32xf32>
    %8 = arith.truncf %7 : vector<1056x32xf32> to vector<1056x32xbf16>
    %c0_6 = arith.constant 0 : index
    %c34 = arith.constant 34 : index
    %c0_7 = arith.constant 0 : index
    %9 = vector.load %arg1[%c0_6, %c34, %c0_7] : memref<1x1122x32xf32, #tpu.memory_space<vmem>>, vector<1x1056x32xf32>
    %10 = vector.shape_cast %9 : vector<1x1056x32xf32> to vector<1056x32xf32>
    %11 = arith.truncf %10 : vector<1056x32xf32> to vector<1056x32xbf16>
    %c0_8 = arith.constant 0 : index
    %c0_9 = arith.constant 0 : index
    %12 = vector.load %arg2[%c0_8, %c0_9] : memref<32x128xbf16, #tpu.memory_space<vmem>>, vector<32x128xbf16>
    %cst = arith.constant dense<0.000000e+00> : vector<1056x128xf32>
    %13 = tpu.matmul %2, %12, %cst {dimension_numbers = #tpu.dot_dimension_numbers<[1], [0], [0], [1], [0, 0, 1, 1], [], []>} : vector<1056x32xbf16>, vector<32x128xbf16>, vector<1056x128xf32> -> vector<1056x128xf32>
    %c0_10 = arith.constant 0 : index
    %c0_11 = arith.constant 0 : index
    %14 = vector.load %arg3[%c0_10, %c0_11] : memref<32x128xbf16, #tpu.memory_space<vmem>>, vector<32x128xbf16>
    %cst_12 = arith.constant dense<0.000000e+00> : vector<1056x128xf32>
    %15 = tpu.matmul %5, %14, %cst_12 {dimension_numbers = #tpu.dot_dimension_numbers<[1], [0], [0], [1], [0, 0, 1, 1], [], []>} : vector<1056x32xbf16>, vector<32x128xbf16>, vector<1056x128xf32> -> vector<1056x128xf32>
    %16 = arith.addf %13, %15 : vector<1056x128xf32>
    %c0_13 = arith.constant 0 : index
    %c0_14 = arith.constant 0 : index
    %17 = vector.load %arg4[%c0_13, %c0_14] : memref<32x128xbf16, #tpu.memory_space<vmem>>, vector<32x128xbf16>
    %cst_15 = arith.constant dense<0.000000e+00> : vector<1056x128xf32>
    %18 = tpu.matmul %8, %17, %cst_15 {dimension_numbers = #tpu.dot_dimension_numbers<[1], [0], [0], [1], [0, 0, 1, 1], [], []>} : vector<1056x32xbf16>, vector<32x128xbf16>, vector<1056x128xf32> -> vector<1056x128xf32>
    %19 = arith.addf %16, %18 : vector<1056x128xf32>
    %c0_16 = arith.constant 0 : index
    %c0_17 = arith.constant 0 : index
    %20 = vector.load %arg5[%c0_16, %c0_17] : memref<32x128xbf16, #tpu.memory_space<vmem>>, vector<32x128xbf16>
    %cst_18 = arith.constant dense<0.000000e+00> : vector<1056x128xf32>
    %21 = tpu.matmul %11, %20, %cst_18 {dimension_numbers = #tpu.dot_dimension_numbers<[1], [0], [0], [1], [0, 0, 1, 1], [], []>} : vector<1056x32xbf16>, vector<32x128xbf16>, vector<1056x128xf32> -> vector<1056x128xf32>
    %22 = arith.addf %19, %21 : vector<1056x128xf32>
    %c0_19 = arith.constant 0 : index
    %c0_20 = arith.constant 0 : index
    %23 = vector.load %arg6[%c0_19, %c0_20] : memref<1x128xf32, #tpu.memory_space<vmem>>, vector<1x128xf32>
    %24 = vector.broadcast %23 : vector<1x128xf32> to vector<1056x128xf32>
    %25 = arith.addf %22, %24 : vector<1056x128xf32>
    %cst_21 = arith.constant -3.000000e+01 : f32
    %cst_22 = arith.constant 3.000000e+01 : f32
    %26 = vector.broadcast %cst_21 : f32 to vector<1056x128xf32>
    %27 = arith.maximumf %26, %25 : vector<1056x128xf32>
    %28 = vector.broadcast %cst_22 : f32 to vector<1056x128xf32>
    %29 = arith.minimumf %28, %27 : vector<1056x128xf32>
    %cst_23 = arith.constant 0.000000e+00 : f32
    %30 = vector.broadcast %cst_23 : f32 to vector<1056x128xf32>
    %31 = arith.subf %30, %29 : vector<1056x128xf32>
    %32 = math.exp %31 : vector<1056x128xf32>
    %cst_24 = arith.constant 1.000000e+00 : f32
    %33 = vector.broadcast %cst_24 : f32 to vector<1056x128xf32>
    %34 = arith.addf %33, %32 : vector<1056x128xf32>
    %cst_25 = arith.constant 1.000000e+00 : f32
    %35 = vector.broadcast %cst_25 : f32 to vector<1056x128xf32>
    %36 = arith.divf %35, %34 : vector<1056x128xf32>
    %c0_26 = arith.constant 0 : index
    %c0_27 = arith.constant 0 : index
    %c0_28 = arith.constant 0 : index
    %37 = vector.load %arg7[%c0_26, %c0_27, %c0_28] : memref<1x1056x128xf32, #tpu.memory_space<vmem>>, vector<1x1056x128xf32>
    %38 = vector.shape_cast %37 : vector<1x1056x128xf32> to vector<1056x128xf32>
    %39 = vector.shape_cast %36 : vector<1056x128xf32> to vector<1x1056x128xf32>
    tpu.vector_store %arg7[%c0_26, %c0_27, %c0_28], %39 {strides = array<i32>} : memref<1x1056x128xf32, #tpu.memory_space<vmem>>, vector<1x1056x128xf32>,
    return
  }
  func.func @transform_0(%arg0: i32) -> (i32, i32, i32) {
    %c0_i32 = arith.constant 0 : i32
    %c0_i32_0 = arith.constant 0 : i32
    %c0_i32_1 = arith.constant 0 : i32
    return %arg0, %c0_i32, %c0_i32_0 : i32, i32, i32
  }
  func.func @transform_1(%arg0: i32) -> (i32, i32) {
    %c0_i32 = arith.constant 0 : i32
    %c0_i32_0 = arith.constant 0 : i32
    %c0_i32_1 = arith.constant 0 : i32
    return %c0_i32, %c0_i32_0 : i32, i32
  }
  func.func @transform_2(%arg0: i32) -> (i32, i32) {
    %c0_i32 = arith.constant 0 : i32
    %c0_i32_0 = arith.constant 0 : i32
    %c0_i32_1 = arith.constant 0 : i32
    return %c0_i32, %c0_i32_0 : i32, i32
  }
  func.func @transform_3(%arg0: i32) -> (i32, i32) {
    %c0_i32 = arith.constant 0 : i32
    %c0_i32_0 = arith.constant 0 : i32
    %c0_i32_1 = arith.constant 0 : i32
    return %c0_i32, %c0_i32_0 : i32, i32
  }
  func.func @transform_4(%arg0: i32) -> (i32, i32) {
    %c0_i32 = arith.constant 0 : i32
    %c0_i32_0 = arith.constant 0 : i32
    %c0_i32_1 = arith.constant 0 : i32
    return %c0_i32, %c0_i32_0 : i32, i32
  }
  func.func @transform_5(%arg0: i32) -> (i32, i32) {
    %c0_i32 = arith.constant 0 : i32
    %c0_i32_0 = arith.constant 0 : i32
    %c0_i32_1 = arith.constant 0 : i32
    return %c0_i32, %c0_i32_0 : i32, i32
  }
  func.func @transform_6(%arg0: i32) -> (i32, i32, i32) {
    %c0_i32 = arith.constant 0 : i32
    %c0_i32_0 = arith.constant 0 : i32
    %c0_i32_1 = arith.constant 0 : i32
    return %arg0, %c0_i32, %c0_i32_0 : i32, i32, i32
  }
}

</mosaic_0001>

<llo_original>
// kernel: decoder_forward.5
$region0: #{decoder_forward.5}
  #allocation0 [shape = 'u32[]', space=smem, size = 0x4, offset = 0x4, fixed_abs, tag = 'smem constant byte address 0x4 - core index']
  #allocation1 [shape = 'u32[144,128]{1,0:T(1,128)}', space=vmem, size = 0x12000, scoped, tag = 'internal scratch']
  %s0 = inlined_call_operand.vmem [shape: f32[2,90,128], index: 0, kind: input, shape index: {}]
  %s1 = inlined_call_operand.vmem [shape: bf16[128,256], index: 1, kind: input, shape index: {}]
  %s2 = inlined_call_operand.vmem [shape: bf16[128,256], index: 2, kind: input, shape index: {}]
  %s3 = inlined_call_operand.vmem [shape: bf16[128,256], index: 3, kind: input, shape index: {}]
  %s4 = inlined_call_operand.vmem [shape: bf16[128,256], index: 4, kind: input, shape index: {}]
  %s5 = inlined_call_operand.vmem [shape: f32[1,256], index: 5, kind: input, shape index: {}]
  %s6 = inlined_call_operand.vmem [shape: f32[72,1], index: 6, kind: input, shape index: {}]
  %s7 = inlined_call_operand.vmem [shape: f32[2,72,256], index: 7, kind: output, shape index: {0}]
  %s8 = inlined_call_operand.vmem [shape: f32[2,2,256], index: 8, kind: output, shape index: {1}]
  %9 = xla_tuple %s7, %s8
  %s10 = sld [smem:[#allocation0]]
  $region69: #{decoder_forward.5} parent=0
    _
  %s12 = ssub.s32 1, %s10
  %s13 = scalar_select 0, %s12, %s10
  loop: start=0, step=1, limit=4
  $region2: #{decoder_forward.5} parent=0 // loop_pre_header
    _
  $region3: #{decoder_forward.5} parent=0 // loop_header
    %s15 = sphi 0, %s19
    %p16 = scmp.ge.s32.totalorder %s15, 4
    %s25 = sphi 0, %s27
    %s28 = sphi 0, %s25
    %s29 = sphi 0, %s28
    %s45 = sphi 0, %s29
    %s49 = sphi 0, %s49
    %s51 = sphi 0, %s49
    %s52 = sphi 0, %s51
    %s66 = sphi 0, %s52
    %s70 = sphi 0, %s70
    %s72 = sphi 0, %s70
    %s73 = sphi 0, %s72
    %s87 = sphi 0, %s73
    %s91 = sphi 0, %s91
    %s93 = sphi 0, %s91
    %s94 = sphi 0, %s93
    %s108 = sphi 0, %s94
    %s112 = sphi 0, %s112
    %s114 = sphi 0, %s112
    %s115 = sphi 0, %s114
    %s129 = sphi 0, %s115
    %s133 = sphi 0, %s133
    %s135 = sphi 0, %s133
    %s136 = sphi 0, %s135
    %s150 = sphi 0, %s136
    %s154 = sphi 0, %s154
    %s156 = sphi 0, %s154
    %s157 = sphi 0, %s156
    %s171 = sphi 0, %s157
    %s177 = sphi 0, %s179
    %s180 = sphi 0, %s177
    %s181 = sphi 0, %s180
    %s197 = sphi 0, %s181
    %s203 = sphi 0, %s205
    %s206 = sphi 0, %s203
    %s207 = sphi 0, %s206
    %s223 = sphi 0, %s207
  $region4: #{decoder_forward.5} parent=0 // loop_header_branch
    %18 = sbr.rel (%p16) target = $region8
  $region5: #{decoder_forward.5} parent=0 // loop_body
    %s20 = ssub.s32 %s15, 1
    %s21 = ssub.s32 %s15, 2
    %s22 = sadd.s32 %s15, 1
    %s23 = ssub.s32 %s15, %s22
    %p24 = scmp.eq.s32.totalorder %s23, 0
    %s26 = sadd.s32 %s25, 1
    %s27 = scalar_select %p24, %s25, %s26
    %p30 = pneg %p24
    %p31 = scmp.eq.s32.totalorder %s15, 1
    %p32 = por %p30, %p31
    %p33 = scmp.ne.s32.totalorder %s25, %s28
    %p34 = scmp.eq.s32.totalorder %s15, 0
    %p35 = por %p33, %p34
    %p36 = scmp.ne.s32.totalorder %s25, %s28
    %p37 = scmp.eq.s32.totalorder %s20, 1
    %p38 = por %p36, %p37
    %p39 = scmp.ne.s32.totalorder %s28, %s29
    %p40 = scmp.eq.s32.totalorder %s20, 0
    %p41 = por %p39, %p40
    %p42 = scmp.ne.s32.totalorder %s28, %s29
    %p43 = scmp.eq.s32.totalorder %s21, 1
    %p44 = por %p42, %p43
    %p46 = scmp.ne.s32.totalorder %s29, %s45
    %p47 = scmp.eq.s32.totalorder %s21, 0
    %p48 = por %p46, %p47
    %s50 = sadd.s32 %s49, 1
    %p53 = scmp.eq.s32.totalorder %s15, 1
    %p54 = scmp.ne.s32.totalorder %s49, %s51
    %p55 = scmp.eq.s32.totalorder %s15, 0
    %p56 = por %p54, %p55
    %p57 = scmp.ne.s32.totalorder %s49, %s51
    %p58 = scmp.eq.s32.totalorder %s20, 1
    %p59 = por %p57, %p58
    %p60 = scmp.ne.s32.totalorder %s51, %s52
    %p61 = scmp.eq.s32.totalorder %s20, 0
    %p62 = por %p60, %p61
    %p63 = scmp.ne.s32.totalorder %s51, %s52
    %p64 = scmp.eq.s32.totalorder %s21, 1
    %p65 = por %p63, %p64
    %p67 = scmp.ne.s32.totalorder %s52, %s66
    %p68 = scmp.eq.s32.totalorder %s21, 0
    %p69 = por %p67, %p68
    %s71 = sadd.s32 %s70, 1
    %p74 = scmp.eq.s32.totalorder %s15, 1
    %p75 = scmp.ne.s32.totalorder %s70, %s72
    %p76 = scmp.eq.s32.totalorder %s15, 0
    %p77 = por %p75, %p76
    %p78 = scmp.ne.s32.totalorder %s70, %s72
    %p79 = scmp.eq.s32.totalorder %s20, 1
    %p80 = por %p78, %p79
    %p81 = scmp.ne.s32.totalorder %s72, %s73
    %p82 = scmp.eq.s32.totalorder %s20, 0
    %p83 = por %p81, %p82
    %p84 = scmp.ne.s32.totalorder %s72, %s73
    %p85 = scmp.eq.s32.totalorder %s21, 1
    %p86 = por %p84, %p85
    %p88 = scmp.ne.s32.totalorder %s73, %s87
    %p89 = scmp.eq.s32.totalorder %s21, 0
    %p90 = por %p88, %p89
    %s92 = sadd.s32 %s91, 1
    %p95 = scmp.eq.s32.totalorder %s15, 1
    %p96 = scmp.ne.s32.totalorder %s91, %s93
    %p97 = scmp.eq.s32.totalorder %s15, 0
    %p98 = por %p96, %p97
    %p99 = scmp.ne.s32.totalorder %s91, %s93
    %p100 = scmp.eq.s32.totalorder %s20, 1
    %p101 = por %p99, %p100
    %p102 = scmp.ne.s32.totalorder %s93, %s94
    %p103 = scmp.eq.s32.totalorder %s20, 0
    %p104 = por %p102, %p103
    %p105 = scmp.ne.s32.totalorder %s93, %s94
    %p106 = scmp.eq.s32.totalorder %s21, 1
    %p107 = por %p105, %p106
    %p109 = scmp.ne.s32.totalorder %s94, %s108
    %p110 = scmp.eq.s32.totalorder %s21, 0
    %p111 = por %p109, %p110
    %s113 = sadd.s32 %s112, 1
    %p116 = scmp.eq.s32.totalorder %s15, 1
    %p117 = scmp.ne.s32.totalorder %s112, %s114
    %p118 = scmp.eq.s32.totalorder %s15, 0
    %p119 = por %p117, %p118
    %p120 = scmp.ne.s32.totalorder %s112, %s114
    %p121 = scmp.eq.s32.totalorder %s20, 1
    %p122 = por %p120, %p121
    %p123 = scmp.ne.s32.totalorder %s114, %s115
    %p124 = scmp.eq.s32.totalorder %s20, 0
    %p125 = por %p123, %p124
    %p126 = scmp.ne.s32.totalorder %s114, %s115
    %p127 = scmp.eq.s32.totalorder %s21, 1
    %p128 = por %p126, %p127
    %p130 = scmp.ne.s32.totalorder %s115, %s129
    %p131 = scmp.eq.s32.totalorder %s21, 0
    %p132 = por %p130, %p131
    %s134 = sadd.s32 %s133, 1
    %p137 = scmp.eq.s32.totalorder %s15, 1
    %p138 = scmp.ne.s32.totalorder %s133, %s135
    %p139 = scmp.eq.s32.totalorder %s15, 0
    %p140 = por %p138, %p139
    %p141 = scmp.ne.s32.totalorder %s133, %s135
    %p142 = scmp.eq.s32.totalorder %s20, 1
    %p143 = por %p141, %p142
    %p144 = scmp.ne.s32.totalorder %s135, %s136
    %p145 = scmp.eq.s32.totalorder %s20, 0
    %p146 = por %p144, %p145
    %p147 = scmp.ne.s32.totalorder %s135, %s136
    %p148 = scmp.eq.s32.totalorder %s21, 1
    %p149 = por %p147, %p148
    %p151 = scmp.ne.s32.totalorder %s136, %s150
    %p152 = scmp.eq.s32.totalorder %s21, 0
    %p153 = por %p151, %p152
    %s155 = sadd.s32 %s154, 1
    %p158 = scmp.eq.s32.totalorder %s15, 1
    %p159 = scmp.ne.s32.totalorder %s154, %s156
    %p160 = scmp.eq.s32.totalorder %s15, 0
    %p161 = por %p159, %p160
    %p162 = scmp.ne.s32.totalorder %s154, %s156
    %p163 = scmp.eq.s32.totalorder %s20, 1
    %p164 = por %p162, %p163
    %p165 = scmp.ne.s32.totalorder %s156, %s157
    %p166 = scmp.eq.s32.totalorder %s20, 0
    %p167 = por %p165, %p166
    %p168 = scmp.ne.s32.totalorder %s156, %s157
    %p169 = scmp.eq.s32.totalorder %s21, 1
    %p170 = por %p168, %p169
    %p172 = scmp.ne.s32.totalorder %s157, %s171
    %p173 = scmp.eq.s32.totalorder %s21, 0
    %p174 = por %p172, %p173
    %s175 = ssub.s32 %s15, %s22
    %p176 = scmp.eq.s32.totalorder %s175, 0
    %s178 = sadd.s32 %s177, 1
    %s179 = scalar_select %p176, %s177, %s178
    %p182 = pneg %p176
    %p183 = scmp.eq.s32.totalorder %s15, 1
    %p184 = por %p182, %p183
    %p185 = scmp.ne.s32.totalorder %s177, %s180
    %p186 = scmp.eq.s32.totalorder %s15, 0
    %p187 = por %p185, %p186
    %p188 = scmp.ne.s32.totalorder %s177, %s180
    %p189 = scmp.eq.s32.totalorder %s20, 1
    %p190 = por %p188, %p189
    %p191 = scmp.ne.s32.totalorder %s180, %s181
    %p192 = scmp.eq.s32.totalorder %s20, 0
    %p193 = por %p191, %p192
    %p194 = scmp.ne.s32.totalorder %s180, %s181
    %p195 = scmp.eq.s32.totalorder %s21, 1
    %p196 = por %p194, %p195
    %p198 = scmp.ne.s32.totalorder %s181, %s197
    %p199 = scmp.eq.s32.totalorder %s21, 0
    %p200 = por %p198, %p199
    %s201 = ssub.s32 %s15, %s22
    %p202 = scmp.eq.s32.totalorder %s201, 0
    %s204 = sadd.s32 %s203, 1
    %s205 = scalar_select %p202, %s203, %s204
    %p208 = pneg %p202
    %p209 = scmp.eq.s32.totalorder %s15, 1
    %p210 = por %p208, %p209
    %p211 = scmp.ne.s32.totalorder %s203, %s206
    %p212 = scmp.eq.s32.totalorder %s15, 0
    %p213 = por %p211, %p212
    %p214 = scmp.ne.s32.totalorder %s203, %s206
    %p215 = scmp.eq.s32.totalorder %s20, 1
    %p216 = por %p214, %p215
    %p217 = scmp.ne.s32.totalorder %s206, %s207
    %p218 = scmp.eq.s32.totalorder %s20, 0
    %p219 = por %p217, %p218
    %p220 = scmp.ne.s32.totalorder %s206, %s207
    %p221 = scmp.eq.s32.totalorder %s21, 1
    %p222 = por %p220, %p221
    %p224 = scmp.ne.s32.totalorder %s207, %s223
    %p225 = scmp.eq.s32.totalorder %s21, 0
    %p226 = por %p224, %p225
    %p227 = scmp.le.s32.totalorder 1, %s15
    %p228 = scmp.lt.s32.totalorder %s15, 3
    %p229 = pnand %p227, %p228
    %p230 = pneg %p229
    // Predicated region
    $region9: #{decoder_forward.5} parent=5 // pred_check
      _
    $region10: #{decoder_forward.5} parent=5 // pred_check_branch
      %232 = sbr.rel (%p229) target = $region12
    $region11: #{decoder_forward.5} parent=5 // pred_region
      %s233 = ssub.s32 %s15, 1
      // Predicated region
      $region13: #{decoder_forward.5} parent=11 // pred_check
        %p234 = pneg %p62
      $region14: #{decoder_forward.5} parent=11 // pred_check_branch
        %236 = sbr.rel (%p234) target = $region16
      $region15: #{decoder_forward.5} parent=11 // pred_region
        _
      $region16: #{decoder_forward.5} parent=11 // pred_fallthru
        _
      // Predicated region
      $region17: #{decoder_forward.5} parent=11 // pred_check
        %p237 = pneg %p83
      $region18: #{decoder_forward.5} parent=11 // pred_check_branch
        %239 = sbr.rel (%p237) target = $region20
      $region19: #{decoder_forward.5} parent=11 // pred_region
        _
      $region20: #{decoder_forward.5} parent=11 // pred_fallthru
        _
      // Predicated region
      $region21: #{decoder_forward.5} parent=11 // pred_check
        %p240 = pneg %p104
      $region22: #{decoder_forward.5} parent=11 // pred_check_branch
        %242 = sbr.rel (%p240) target = $region24
      $region23: #{decoder_forward.5} parent=11 // pred_region
        _
      $region24: #{decoder_forward.5} parent=11 // pred_fallthru
        _
      // Predicated region
      $region25: #{decoder_forward.5} parent=11 // pred_check
        %p243 = pneg %p125
      $region26: #{decoder_forward.5} parent=11 // pred_check_branch
        %245 = sbr.rel (%p243) target = $region28
      $region27: #{decoder_forward.5} parent=11 // pred_region
        _
      $region28: #{decoder_forward.5} parent=11 // pred_fallthru
        _
      // Predicated region
      $region29: #{decoder_forward.5} parent=11 // pred_check
        %p246 = pneg %p146
      $region30: #{decoder_forward.5} parent=11 // pred_check_branch
        %248 = sbr.rel (%p246) target = $region32
      $region31: #{decoder_forward.5} parent=11 // pred_region
        _
      $region32: #{decoder_forward.5} parent=11 // pred_fallthru
        _
      // Predicated region
      $region33: #{decoder_forward.5} parent=11 // pred_check
        %p249 = pneg %p167
      $region34: #{decoder_forward.5} parent=11 // pred_check_branch
        %251 = sbr.rel (%p249) target = $region36
      $region35: #{decoder_forward.5} parent=11 // pred_region
        _
      $region36: #{decoder_forward.5} parent=11 // pred_fallthru
        _
    $region12: #{decoder_forward.5} parent=5 // pred_fallthru
      _
    %p252 = scmp.lt.s32.totalorder %s15, 2
    // Predicated region
    $region37: #{decoder_forward.5} parent=5 // pred_check
      %p253 = pneg %p252
    $region38: #{decoder_forward.5} parent=5 // pred_check_branch
      %255 = sbr.rel (%p253) target = $region40
    $region39: #{decoder_forward.5} parent=5 // pred_region
      // Predicated region
      $region41: #{decoder_forward.5} parent=39 // pred_check
        %p256 = pneg %p35
      $region42: #{decoder_forward.5} parent=39 // pred_check_branch
        %258 = sbr.rel (%p256) target = $region44
      $region43: #{decoder_forward.5} parent=39 // pred_region
        %p259 = scmp.lt.s32.totalorder %s15, 1
        %s260 = scalar_select %p259, %s15, 1
        %s261 = smul.addr %s260, 12
        %s262 = smul.addr %s261, 8
        %s263 = scalar_lea.vmem %s0, %s262
      $region44: #{decoder_forward.5} parent=39 // pred_fallthru
        _
    $region40: #{decoder_forward.5} parent=5 // pred_fallthru
      _
    %p264 = scmp.le.s32.totalorder 1, %s15
    %p265 = scmp.lt.s32.totalorder %s15, 3
    %p266 = pnand %p264, %p265
    %p267 = pneg %p266
    // Predicated region
    $region45: #{decoder_forward.5} parent=5 // pred_check
      _
    $region46: #{decoder_forward.5} parent=5 // pred_check_branch
      %269 = sbr.rel (%p266) target = $region48
    $region47: #{decoder_forward.5} parent=5 // pred_region
      %s270 = ssub.s32 %s15, 1
      %p271 = scmp.lt.s32.totalorder %s20, 1
      %s272 = scalar_select %p271, %s20, 1
      %s273 = smul.addr %s272, 12
      %s274 = smul.addr %s273, 8
      %s275 = scalar_lea.vmem %s0, %s274
      %p276 = pneg %p41
      %p277 = pneg %p38
      %p278 = pneg %p62
      %p279 = pneg %p59
      %p280 = pneg %p83
      %p281 = pneg %p80
      %p282 = pneg %p104
      %p283 = pneg %p101
      %p284 = pneg %p125
      %p285 = pneg %p122
      %p286 = pneg %p146
      %p287 = pneg %p143
      %p288 = pneg %p167
      %p289 = pneg %p164
      %p290 = pneg %p193
      %p291 = pneg %p190
      %p292 = scmp.lt.s32.totalorder %s20, 1
      %s293 = scalar_select %p292, %s20, 1
      %s294 = smul.addr %s293, 18
      %s295 = smul.addr %s294, 8
      %s296 = scalar_lea.vmem %s7, %s295
      %p297 = pneg %p219
      %p298 = pneg %p216
      %p299 = scmp.lt.s32.totalorder %s20, 1
      %s300 = scalar_select %p299, %s20, 1
      %s301 = smul.addr %s300, 2
      %s302 = smul.addr %s301, 2
      %s303 = scalar_lea.vmem %s8, %s302
      %p304 = scmp.lt.s32.totalorder %s20, 1
      %s305 = scalar_select %p304, %s20, 1
      %s306 = smul.addr %s305, 12
      %s307 = smul.addr %s306, 8
      %s308 = scalar_lea.vmem %s0, %s307
      %p309 = scmp.lt.s32.totalorder %s20, 1
      %s310 = scalar_select %p309, %s20, 1
      %s311 = smul.addr %s310, 18
      %s312 = smul.addr %s311, 8
      %s313 = scalar_lea.vmem %s7, %s312
      %p314 = scmp.lt.s32.totalorder %s20, 1
      %s315 = scalar_select %p314, %s20, 1
      %s316 = smul.addr %s315, 2
      %s317 = smul.addr %s316, 2
      %s318 = scalar_lea.vmem %s8, %s317
      %v320 = vld [vmem:[%s308] sm:$0xff]
      %v321 = vld [vmem:[%s308 + $0x8] sm:$0xff]
      %v322 = vld [vmem:[%s308 + $0x10] sm:$0xff]
      %v323 = vld [vmem:[%s308 + $0x18] sm:$0xff]
      %v324 = vld [vmem:[%s308 + $0x20] sm:$0xff]
      %v325 = vld [vmem:[%s308 + $0x28] sm:$0xff]
      %v326 = vld [vmem:[%s308 + $0x30] sm:$0xff]
      %v327 = vld [vmem:[%s308 + $0x38] sm:$0xff]
      %v328 = vld [vmem:[%s308 + $0x40] sm:$0xff]
      %v329 = vpack.c.bf16 %v321, %v320
      %v330 = vpack.c.bf16 %v323, %v322
      %v331 = vpack.c.bf16 %v325, %v324
      %v332 = vpack.c.bf16 %v327, %v326
      %v333 = vpack.c.bf16 %v328, %v328
      %v334 = vld [vmem:[%s308 + $0x1] sm:$0xff]
      %v335 = vld [vmem:[%s308 + $0x9] sm:$0xff]
      %v336 = vld [vmem:[%s308 + $0x11] sm:$0xff]
      %v337 = vld [vmem:[%s308 + $0x19] sm:$0xff]
      %v338 = vld [vmem:[%s308 + $0x21] sm:$0xff]
      %v339 = vld [vmem:[%s308 + $0x29] sm:$0xff]
      %v340 = vld [vmem:[%s308 + $0x31] sm:$0xff]
      %v341 = vld [vmem:[%s308 + $0x39] sm:$0xff]
      %v342 = vld [vmem:[%s308 + $0x41] sm:$0xff]
      %v343 = vpack.c.bf16 %v335, %v334
      %v344 = vpack.c.bf16 %v337, %v336
      %v345 = vpack.c.bf16 %v339, %v338
      %v346 = vpack.c.bf16 %v341, %v340
      %v347 = vpack.c.bf16 %v342, %v342
      %v348 = vld [vmem:[%s308 + $0x49] sm:$0xff]
      %v349 = vpack.c.bf16 %v336, %v335
      %v350 = vpack.c.bf16 %v338, %v337
      %v351 = vpack.c.bf16 %v340, %v339
      %v352 = vpack.c.bf16 %v342, %v341
      %v353 = vpack.c.bf16 %v348, %v348
      %v354 = vld [vmem:[%s308 + $0xa] sm:$0xff]
      %v355 = vld [vmem:[%s308 + $0x12] sm:$0xff]
      %v356 = vld [vmem:[%s308 + $0x1a] sm:$0xff]
      %v357 = vld [vmem:[%s308 + $0x22] sm:$0xff]
      %v358 = vld [vmem:[%s308 + $0x2a] sm:$0xff]
      %v359 = vld [vmem:[%s308 + $0x32] sm:$0xff]
      %v360 = vld [vmem:[%s308 + $0x3a] sm:$0xff]
      %v361 = vld [vmem:[%s308 + $0x42] sm:$0xff]
      %v362 = vld [vmem:[%s308 + $0x4a] sm:$0xff]
      %v363 = vpack.c.bf16 %v355, %v354
      %v364 = vpack.c.bf16 %v357, %v356
      %v365 = vpack.c.bf16 %v359, %v358
      %v366 = vpack.c.bf16 %v361, %v360
      %v367 = vpack.c.bf16 %v362, %v362
      %v368 = vld [vmem:[%s1] sm:$0xff]
      %v369 = vld [vmem:[%s1 + $0x8] sm:$0xff]
      %v370 = vld [vmem:[%s1 + $0x10] sm:$0xff]
      %v371 = vld [vmem:[%s1 + $0x18] sm:$0xff]
      %v372 = vld [vmem:[%s1 + $0x20] sm:$0xff]
      %v373 = vld [vmem:[%s1 + $0x28] sm:$0xff]
      %v374 = vld [vmem:[%s1 + $0x30] sm:$0xff]
      %v375 = vld [vmem:[%s1 + $0x38] sm:$0xff]
      %v376 = vld [vmem:[%s1 + $0x40] sm:$0xff]
      %v377 = vld [vmem:[%s1 + $0x48] sm:$0xff]
      %v378 = vld [vmem:[%s1 + $0x50] sm:$0xff]
      %v379 = vld [vmem:[%s1 + $0x58] sm:$0xff]
      %v380 = vld [vmem:[%s1 + $0x60] sm:$0xff]
      %v381 = vld [vmem:[%s1 + $0x68] sm:$0xff]
      %v382 = vld [vmem:[%s1 + $0x70] sm:$0xff]
      %v383 = vld [vmem:[%s1 + $0x78] sm:$0xff]
      %v384 = vld [vmem:[%s2] sm:$0xff]
      %v385 = vld [vmem:[%s2 + $0x8] sm:$0xff]
      %v386 = vld [vmem:[%s2 + $0x10] sm:$0xff]
      %v387 = vld [vmem:[%s2 + $0x18] sm:$0xff]
      %v388 = vld [vmem:[%s2 + $0x20] sm:$0xff]
      %v389 = vld [vmem:[%s2 + $0x28] sm:$0xff]
      %v390 = vld [vmem:[%s2 + $0x30] sm:$0xff]
      %v391 = vld [vmem:[%s2 + $0x38] sm:$0xff]
      %v392 = vld [vmem:[%s2 + $0x40] sm:$0xff]
      %v393 = vld [vmem:[%s2 + $0x48] sm:$0xff]
      %v394 = vld [vmem:[%s2 + $0x50] sm:$0xff]
      %v395 = vld [vmem:[%s2 + $0x58] sm:$0xff]
      %v396 = vld [vmem:[%s2 + $0x60] sm:$0xff]
      %v397 = vld [vmem:[%s2 + $0x68] sm:$0xff]
      %v398 = vld [vmem:[%s2 + $0x70] sm:$0xff]
      %v399 = vld [vmem:[%s2 + $0x78] sm:$0xff]
      %v416 = vunpack.c.l.b16 %v384
      %v417 = vunpack.c.h.b16 %v384
      %v418 = vunpack.c.l.b16 %v385
      %v419 = vunpack.c.h.b16 %v385
      %v420 = vunpack.c.l.b16 %v386
      %v421 = vunpack.c.h.b16 %v386
      %v422 = vunpack.c.l.b16 %v387
      %v423 = vunpack.c.h.b16 %v387
      %v424 = vunpack.c.l.b16 %v388
      %v425 = vunpack.c.h.b16 %v388
      %v426 = vunpack.c.l.b16 %v389
      %v427 = vunpack.c.h.b16 %v389
      %v428 = vunpack.c.l.b16 %v390
      %v429 = vunpack.c.h.b16 %v390
      %v430 = vunpack.c.l.b16 %v391
      %v431 = vunpack.c.h.b16 %v391
      %v432 = vunpack.c.l.b16 %v392
      %v433 = vunpack.c.h.b16 %v392
      %v434 = vunpack.c.l.b16 %v393
      %v435 = vunpack.c.h.b16 %v393
      %v436 = vunpack.c.l.b16 %v394
      %v437 = vunpack.c.h.b16 %v394
      %v438 = vunpack.c.l.b16 %v395
      %v439 = vunpack.c.h.b16 %v395
      %v440 = vunpack.c.l.b16 %v396
      %v441 = vunpack.c.h.b16 %v396
      %v442 = vunpack.c.l.b16 %v397
      %v443 = vunpack.c.h.b16 %v397
      %v444 = vunpack.c.l.b16 %v398
      %v445 = vunpack.c.h.b16 %v398
      %v446 = vunpack.c.l.b16 %v399
      %v447 = vunpack.c.h.b16 %v399
      %v448 = vpack.c.b16 %v418, %v416
      %v449 = vpack.c.b16 %v419, %v417
      %v450 = vpack.c.b16 %v422, %v420
      %v451 = vpack.c.b16 %v423, %v421
      %v452 = vpack.c.b16 %v426, %v424
      %v453 = vpack.c.b16 %v427, %v425
      %v454 = vpack.c.b16 %v430, %v428
      %v455 = vpack.c.b16 %v431, %v429
      %v456 = vpack.c.b16 %v434, %v432
      %v457 = vpack.c.b16 %v435, %v433
      %v458 = vpack.c.b16 %v438, %v436
      %v459 = vpack.c.b16 %v439, %v437
      %v460 = vpack.c.b16 %v442, %v440
      %v461 = vpack.c.b16 %v443, %v441
      %v462 = vpack.c.b16 %v446, %v444
      %v463 = vpack.c.b16 %v447, %v445
      %480 = vmatprep.subr.bf16.mxu0 %v449
      %481 = vmatpush1.bf16.msra.mxu0 %v448
      %482 = vmatprep.subr.bf16.mxu0 %v451
      %483 = vmatpush1.bf16.msra.mxu0 %v450
      %484 = vmatprep.subr.bf16.mxu0 %v453
      %485 = vmatpush1.bf16.msra.mxu0 %v452
      %486 = vmatprep.subr.bf16.mxu0 %v455
      %487 = vmatpush1.bf16.msra.mxu0 %v454
      %488 = vmatprep.subr.bf16.mxu0 %v457
      %489 = vmatpush1.bf16.msra.mxu0 %v456
      %490 = vmatprep.subr.bf16.mxu0 %v459
      %491 = vmatpush1.bf16.msra.mxu0 %v458
      %492 = vmatprep.subr.bf16.mxu0 %v461
      %493 = vmatpush1.bf16.msra.mxu0 %v460
      %494 = vmatprep.subr.bf16.mxu0 %v463
      %495 = vmatpush1.bf16.msra.mxu0 %v462
      %496 = vmatprep.subr.bf16.mxu0 0
      %497 = vmatpush1.bf16.msra.mxu0 0
      %498 = vmatprep.subr.bf16.mxu0 0
      %499 = vmatpush1.bf16.msra.mxu0 0
      %500 = vmatprep.subr.bf16.mxu0 0
      %501 = vmatpush1.bf16.msra.mxu0 0
      %502 = vmatprep.subr.bf16.mxu0 0
      %503 = vmatpush1.bf16.msra.mxu0 0
      %504 = vmatprep.subr.bf16.mxu0 0
      %505 = vmatpush1.bf16.msra.mxu0 0
      %506 = vmatprep.subr.bf16.mxu0 0
      %507 = vmatpush1.bf16.msra.mxu0 0
      %508 = vmatprep.subr.bf16.mxu0 0
      %509 = vmatpush1.bf16.msra.mxu0 0
      %510 = vmatprep.subr.bf16.mxu0 0
      %511 = vmatpush1.bf16.msra.mxu0 0
      %512 = vmatprep.mubr.bf16.mxu0 0
      %513 = vmatmul.mubr.bf16.gmra.mrb[0].mxu0 %v343
      %v514 = vpop.f32.mrb[0].mxu0
      %v515 = vadd.f32 0.0, %v514
      %v516 = vpop.f32.mrb[0].mxu0
      %v517 = vadd.f32 0.0, %v516
      %v518 = vpop.f32.mrb[0].mxu0
      %v519 = vadd.f32 0.0, %v518
      %v520 = vpop.f32.mrb[0].mxu0
      %v521 = vadd.f32 0.0, %v520
      %522 = vmatprep.mubr.bf16.mxu0 0
      %523 = vmatmul.mubr.bf16.gmra.mrb[0].mxu0 %v344
      %v524 = vpop.f32.mrb[0].mxu0
      %v525 = vadd.f32 0.0, %v524
      %v526 = vpop.f32.mrb[0].mxu0
      %v527 = vadd.f32 0.0, %v526
      %v528 = vpop.f32.mrb[0].mxu0
      %v529 = vadd.f32 0.0, %v528
      %v530 = vpop.f32.mrb[0].mxu0
      %v531 = vadd.f32 0.0, %v530
      %532 = vmatprep.mubr.bf16.mxu0 0
      %533 = vmatmul.mubr.bf16.gmra.mrb[0].mxu0 %v345
      %v534 = vpop.f32.mrb[0].mxu0
      %v535 = vadd.f32 0.0, %v534
      %v536 = vpop.f32.mrb[0].mxu0
      %v537 = vadd.f32 0.0, %v536
      %v538 = vpop.f32.mrb[0].mxu0
      %v539 = vadd.f32 0.0, %v538
      %v540 = vpop.f32.mrb[0].mxu0
      %v541 = vadd.f32 0.0, %v540
      %542 = vmatprep.mubr.bf16.mxu0 0
      %543 = vmatmul.mubr.bf16.gmra.mrb[0].mxu0 %v346
      %v544 = vpop.f32.mrb[0].mxu0
      %v545 = vadd.f32 0.0, %v544
      %v546 = vpop.f32.mrb[0].mxu0
      %v547 = vadd.f32 0.0, %v546
      %v548 = vpop.f32.mrb[0].mxu0
      %v549 = vadd.f32 0.0, %v548
      %v550 = vpop.f32.mrb[0].mxu0
      %v551 = vadd.f32 0.0, %v550
      %552 = vmatprep.mubr.bf16.mxu0 0
      %553 = vmatmul.mubr.bf16.gmra.mrb[0].mxu0 %v347
      %v554 = vpop.f32.mrb[0].mxu0
      %v555 = vadd.f32 0.0, %v554
      %v556 = vpop.f32.mrb[0].mxu0
      %v557 = vadd.f32 0.0, %v556
      %v558 = vpop.f32.mrb[0].mxu0
      %v559 = vpop.f32.mrb[0].mxu0
      %560 = vdwg.mxu0
      %v577 = vunpack.c.l.b16 %v368
      %v578 = vunpack.c.h.b16 %v368
      %v579 = vunpack.c.l.b16 %v369
      %v580 = vunpack.c.h.b16 %v369
      %v581 = vunpack.c.l.b16 %v370
      %v582 = vunpack.c.h.b16 %v370
      %v583 = vunpack.c.l.b16 %v371
      %v584 = vunpack.c.h.b16 %v371
      %v585 = vunpack.c.l.b16 %v372
      %v586 = vunpack.c.h.b16 %v372
      %v587 = vunpack.c.l.b16 %v373
      %v588 = vunpack.c.h.b16 %v373
      %v589 = vunpack.c.l.b16 %v374
      %v590 = vunpack.c.h.b16 %v374
      %v591 = vunpack.c.l.b16 %v375
      %v592 = vunpack.c.h.b16 %v375
      %v593 = vunpack.c.l.b16 %v376
      %v594 = vunpack.c.h.b16 %v376
      %v595 = vunpack.c.l.b16 %v377
      %v596 = vunpack.c.h.b16 %v377
      %v597 = vunpack.c.l.b16 %v378
      %v598 = vunpack.c.h.b16 %v378
      %v599 = vunpack.c.l.b16 %v379
      %v600 = vunpack.c.h.b16 %v379
      %v601 = vunpack.c.l.b16 %v380
      %v602 = vunpack.c.h.b16 %v380
      %v603 = vunpack.c.l.b16 %v381
      %v604 = vunpack.c.h.b16 %v381
      %v605 = vunpack.c.l.b16 %v382
      %v606 = vunpack.c.h.b16 %v382
      %v607 = vunpack.c.l.b16 %v383
      %v608 = vunpack.c.h.b16 %v383
      %v609 = vpack.c.b16 %v579, %v577
      %v610 = vpack.c.b16 %v580, %v578
      %v611 = vpack.c.b16 %v583, %v581
      %v612 = vpack.c.b16 %v584, %v582
      %v613 = vpack.c.b16 %v587, %v585
      %v614 = vpack.c.b16 %v588, %v586
      %v615 = vpack.c.b16 %v591, %v589
      %v616 = vpack.c.b16 %v592, %v590
      %v617 = vpack.c.b16 %v595, %v593
      %v618 = vpack.c.b16 %v596, %v594
      %v619 = vpack.c.b16 %v599, %v597
      %v620 = vpack.c.b16 %v600, %v598
      %v621 = vpack.c.b16 %v603, %v601
      %v622 = vpack.c.b16 %v604, %v602
      %v623 = vpack.c.b16 %v607, %v605
      %v624 = vpack.c.b16 %v608, %v606
      %641 = vmatprep.subr.bf16.mxu0 %v610
      %642 = vmatpush1.bf16.msra.mxu0 %v609
      %643 = vmatprep.subr.bf16.mxu0 %v612
      %644 = vmatpush1.bf16.msra.mxu0 %v611
      %645 = vmatprep.subr.bf16.mxu0 %v614
      %646 = vmatpush1.bf16.msra.mxu0 %v613
      %647 = vmatprep.subr.bf16.mxu0 %v616
      %648 = vmatpush1.bf16.msra.mxu0 %v615
      %649 = vmatprep.subr.bf16.mxu0 %v618
      %650 = vmatpush1.bf16.msra.mxu0 %v617
      %651 = vmatprep.subr.bf16.mxu0 %v620
      %652 = vmatpush1.bf16.msra.mxu0 %v619
      %653 = vmatprep.subr.bf16.mxu0 %v622
      %654 = vmatpush1.bf16.msra.mxu0 %v621
      %655 = vmatprep.subr.bf16.mxu0 %v624
      %656 = vmatpush1.bf16.msra.mxu0 %v623
      %657 = vmatprep.subr.bf16.mxu0 0
      %658 = vmatpush1.bf16.msra.mxu0 0
      %659 = vmatprep.subr.bf16.mxu0 0
      %660 = vmatpush1.bf16.msra.mxu0 0
      %661 = vmatprep.subr.bf16.mxu0 0
      %662 = vmatpush1.bf16.msra.mxu0 0
      %663 = vmatprep.subr.bf16.mxu0 0
      %664 = vmatpush1.bf16.msra.mxu0 0
      %665 = vmatprep.subr.bf16.mxu0 0
      %666 = vmatpush1.bf16.msra.mxu0 0
      %667 = vmatprep.subr.bf16.mxu0 0
      %668 = vmatpush1.bf16.msra.mxu0 0
      %669 = vmatprep.subr.bf16.mxu0 0
      %670 = vmatpush1.bf16.msra.mxu0 0
      %671 = vmatprep.subr.bf16.mxu0 0
      %672 = vmatpush1.bf16.msra.mxu0 0
      %673 = vmatprep.mubr.bf16.mxu0 0
      %674 = vmatmul.mubr.bf16.gmra.mrb[0].mxu0 %v329
      %v675 = vpop.f32.mrb[0].mxu0
      %v676 = vadd.f32 %v515, %v675
      %v677 = vpop.f32.mrb[0].mxu0
      %v678 = vadd.f32 %v517, %v677
      %v679 = vpop.f32.mrb[0].mxu0
      %v680 = vadd.f32 %v519, %v679
      %v681 = vpop.f32.mrb[0].mxu0
      %v682 = vadd.f32 %v521, %v681
      %683 = vmatprep.mubr.bf16.mxu0 0
      %684 = vmatmul.mubr.bf16.gmra.mrb[0].mxu0 %v330
      %v685 = vpop.f32.mrb[0].mxu0
      %v686 = vadd.f32 %v525, %v685
      %v687 = vpop.f32.mrb[0].mxu0
      %v688 = vadd.f32 %v527, %v687
      %v689 = vpop.f32.mrb[0].mxu0
      %v690 = vadd.f32 %v529, %v689
      %v691 = vpop.f32.mrb[0].mxu0
      %v692 = vadd.f32 %v531, %v691
      %693 = vmatprep.mubr.bf16.mxu0 0
      %694 = vmatmul.mubr.bf16.gmra.mrb[0].mxu0 %v331
      %v695 = vpop.f32.mrb[0].mxu0
      %v696 = vadd.f32 %v535, %v695
      %v697 = vpop.f32.mrb[0].mxu0
      %v698 = vadd.f32 %v537, %v697
      %v699 = vpop.f32.mrb[0].mxu0
      %v700 = vadd.f32 %v539, %v699
      %v701 = vpop.f32.mrb[0].mxu0
      %v702 = vadd.f32 %v541, %v701
      %703 = vmatprep.mubr.bf16.mxu0 0
      %704 = vmatmul.mubr.bf16.gmra.mrb[0].mxu0 %v332
      %v705 = vpop.f32.mrb[0].mxu0
      %v706 = vadd.f32 %v545, %v705
      %v707 = vpop.f32.mrb[0].mxu0
      %v708 = vadd.f32 %v547, %v707
      %v709 = vpop.f32.mrb[0].mxu0
      %v710 = vadd.f32 %v549, %v709
      %v711 = vpop.f32.mrb[0].mxu0
      %v712 = vadd.f32 %v551, %v711
      %713 = vmatprep.mubr.bf16.mxu0 0
      %714 = vmatmul.mubr.bf16.gmra.mrb[0].mxu0 %v333
      %v715 = vpop.f32.mrb[0].mxu0
      %v716 = vadd.f32 %v555, %v715
      %v717 = vpop.f32.mrb[0].mxu0
      %v718 = vadd.f32 %v557, %v717
      %v719 = vpop.f32.mrb[0].mxu0
      %v720 = vpop.f32.mrb[0].mxu0
      %721 = vdwg.mxu0
      %v722 = vld [vmem:[%s3] sm:$0xff]
      %v723 = vld [vmem:[%s3 + $0x8] sm:$0xff]
      %v724 = vld [vmem:[%s3 + $0x10] sm:$0xff]
      %v725 = vld [vmem:[%s3 + $0x18] sm:$0xff]
      %v726 = vld [vmem:[%s3 + $0x20] sm:$0xff]
      %v727 = vld [vmem:[%s3 + $0x28] sm:$0xff]
      %v728 = vld [vmem:[%s3 + $0x30] sm:$0xff]
      %v729 = vld [vmem:[%s3 + $0x38] sm:$0xff]
      %v730 = vld [vmem:[%s3 + $0x40] sm:$0xff]
      %v731 = vld [vmem:[%s3 + $0x48] sm:$0xff]
      %v732 = vld [vmem:[%s3 + $0x50] sm:$0xff]
      %v733 = vld [vmem:[%s3 + $0x58] sm:$0xff]
      %v734 = vld [vmem:[%s3 + $0x60] sm:$0xff]
      %v735 = vld [vmem:[%s3 + $0x68] sm:$0xff]
      %v736 = vld [vmem:[%s3 + $0x70] sm:$0xff]
      %v737 = vld [vmem:[%s3 + $0x78] sm:$0xff]
      %v754 = vunpack.c.l.b16 %v722
      %v755 = vunpack.c.h.b16 %v722
      %v756 = vunpack.c.l.b16 %v723
      %v757 = vunpack.c.h.b16 %v723
      %v758 = vunpack.c.l.b16 %v724
      %v759 = vunpack.c.h.b16 %v724
      %v760 = vunpack.c.l.b16 %v725
      %v761 = vunpack.c.h.b16 %v725
      %v762 = vunpack.c.l.b16 %v726
      %v763 = vunpack.c.h.b16 %v726
      %v764 = vunpack.c.l.b16 %v727
      %v765 = vunpack.c.h.b16 %v727
      %v766 = vunpack.c.l.b16 %v728
      %v767 = vunpack.c.h.b16 %v728
      %v768 = vunpack.c.l.b16 %v729
      %v769 = vunpack.c.h.b16 %v729
      %v770 = vunpack.c.l.b16 %v730
      %v771 = vunpack.c.h.b16 %v730
      %v772 = vunpack.c.l.b16 %v731
      %v773 = vunpack.c.h.b16 %v731
      %v774 = vunpack.c.l.b16 %v732
      %v775 = vunpack.c.h.b16 %v732
      %v776 = vunpack.c.l.b16 %v733
      %v777 = vunpack.c.h.b16 %v733
      %v778 = vunpack.c.l.b16 %v734
      %v779 = vunpack.c.h.b16 %v734
      %v780 = vunpack.c.l.b16 %v735
      %v781 = vunpack.c.h.b16 %v735
      %v782 = vunpack.c.l.b16 %v736
      %v783 = vunpack.c.h.b16 %v736
      %v784 = vunpack.c.l.b16 %v737
      %v785 = vunpack.c.h.b16 %v737
      %v786 = vpack.c.b16 %v756, %v754
      %v787 = vpack.c.b16 %v757, %v755
      %v788 = vpack.c.b16 %v760, %v758
      %v789 = vpack.c.b16 %v761, %v759
      %v790 = vpack.c.b16 %v764, %v762
      %v791 = vpack.c.b16 %v765, %v763
      %v792 = vpack.c.b16 %v768, %v766
      %v793 = vpack.c.b16 %v769, %v767
      %v794 = vpack.c.b16 %v772, %v770
      %v795 = vpack.c.b16 %v773, %v771
      %v796 = vpack.c.b16 %v776, %v774
      %v797 = vpack.c.b16 %v777, %v775
      %v798 = vpack.c.b16 %v780, %v778
      %v799 = vpack.c.b16 %v781, %v779
      %v800 = vpack.c.b16 %v784, %v782
      %v801 = vpack.c.b16 %v785, %v783
      %818 = vmatprep.subr.bf16.mxu0 %v787
      %819 = vmatpush1.bf16.msra.mxu0 %v786
      %820 = vmatprep.subr.bf16.mxu0 %v789
      %821 = vmatpush1.bf16.msra.mxu0 %v788
      %822 = vmatprep.subr.bf16.mxu0 %v791
      %823 = vmatpush1.bf16.msra.mxu0 %v790
      %824 = vmatprep.subr.bf16.mxu0 %v793
      %825 = vmatpush1.bf16.msra.mxu0 %v792
      %826 = vmatprep.subr.bf16.mxu0 %v795
      %827 = vmatpush1.bf16.msra.mxu0 %v794
      %828 = vmatprep.subr.bf16.mxu0 %v797
      %829 = vmatpush1.bf16.msra.mxu0 %v796
      %830 = vmatprep.subr.bf16.mxu0 %v799
      %831 = vmatpush1.bf16.msra.mxu0 %v798
      %832 = vmatprep.subr.bf16.mxu0 %v801
      %833 = vmatpush1.bf16.msra.mxu0 %v800
      %834 = vmatprep.subr.bf16.mxu0 0
      %835 = vmatpush1.bf16.msra.mxu0 0
      %836 = vmatprep.subr.bf16.mxu0 0
      %837 = vmatpush1.bf16.msra.mxu0 0
      %838 = vmatprep.subr.bf16.mxu0 0
      %839 = vmatpush1.bf16.msra.mxu0 0
      %840 = vmatprep.subr.bf16.mxu0 0
      %841 = vmatpush1.bf16.msra.mxu0 0
      %842 = vmatprep.subr.bf16.mxu0 0
      %843 = vmatpush1.bf16.msra.mxu0 0
      %844 = vmatprep.subr.bf16.mxu0 0
      %845 = vmatpush1.bf16.msra.mxu0 0
      %846 = vmatprep.subr.bf16.mxu0 0
      %847 = vmatpush1.bf16.msra.mxu0 0
      %848 = vmatprep.subr.bf16.mxu0 0
      %849 = vmatpush1.bf16.msra.mxu0 0
      %850 = vmatprep.mubr.bf16.mxu0 0
      %851 = vmatmul.mubr.bf16.gmra.mrb[0].mxu0 %v349
      %v852 = vpop.f32.mrb[0].mxu0
      %v853 = vadd.f32 0.0, %v852
      %v854 = vpop.f32.mrb[0].mxu0
      %v855 = vadd.f32 0.0, %v854
      %v856 = vpop.f32.mrb[0].mxu0
      %v857 = vadd.f32 0.0, %v856
      %v858 = vpop.f32.mrb[0].mxu0
      %v859 = vadd.f32 0.0, %v858
      %860 = vmatprep.mubr.bf16.mxu0 0
      %861 = vmatmul.mubr.bf16.gmra.mrb[0].mxu0 %v350
      %v862 = vpop.f32.mrb[0].mxu0
      %v863 = vadd.f32 0.0, %v862
      %v864 = vpop.f32.mrb[0].mxu0
      %v865 = vadd.f32 0.0, %v864
      %v866 = vpop.f32.mrb[0].mxu0
      %v867 = vadd.f32 0.0, %v866
      %v868 = vpop.f32.mrb[0].mxu0
      %v869 = vadd.f32 0.0, %v868
      %870 = vmatprep.mubr.bf16.mxu0 0
      %871 = vmatmul.mubr.bf16.gmra.mrb[0].mxu0 %v351
      %v872 = vpop.f32.mrb[0].mxu0
      %v873 = vadd.f32 0.0, %v872
      %v874 = vpop.f32.mrb[0].mxu0
      %v875 = vadd.f32 0.0, %v874
      %v876 = vpop.f32.mrb[0].mxu0
      %v877 = vadd.f32 0.0, %v876
      %v878 = vpop.f32.mrb[0].mxu0
      %v879 = vadd.f32 0.0, %v878
      %880 = vmatprep.mubr.bf16.mxu0 0
      %881 = vmatmul.mubr.bf16.gmra.mrb[0].mxu0 %v352
      %v882 = vpop.f32.mrb[0].mxu0
      %v883 = vadd.f32 0.0, %v882
      %v884 = vpop.f32.mrb[0].mxu0
      %v885 = vadd.f32 0.0, %v884
      %v886 = vpop.f32.mrb[0].mxu0
      %v887 = vadd.f32 0.0, %v886
      %v888 = vpop.f32.mrb[0].mxu0
      %v889 = vadd.f32 0.0, %v888
      %890 = vmatprep.mubr.bf16.mxu0 0
      %891 = vmatmul.mubr.bf16.gmra.mrb[0].mxu0 %v353
      %v892 = vpop.f32.mrb[0].mxu0
      %v893 = vadd.f32 0.0, %v892
      %v894 = vpop.f32.mrb[0].mxu0
      %v895 = vadd.f32 0.0, %v894
      %v896 = vpop.f32.mrb[0].mxu0
      %v897 = vpop.f32.mrb[0].mxu0
      %898 = vdwg.mxu0
      %v899 = vadd.f32 %v676, %v853
      %v900 = vadd.f32 %v678, %v855
      %v901 = vadd.f32 %v680, %v857
      %v902 = vadd.f32 %v682, %v859
      %v903 = vadd.f32 %v686, %v863
      %v904 = vadd.f32 %v688, %v865
      %v905 = vadd.f32 %v690, %v867
      %v906 = vadd.f32 %v692, %v869
      %v907 = vadd.f32 %v696, %v873
      %v908 = vadd.f32 %v698, %v875
      %v909 = vadd.f32 %v700, %v877
      %v910 = vadd.f32 %v702, %v879
      %v911 = vadd.f32 %v706, %v883
      %v912 = vadd.f32 %v708, %v885
      %v913 = vadd.f32 %v710, %v887
      %v914 = vadd.f32 %v712, %v889
      %v915 = vadd.f32 %v716, %v893
      %v916 = vadd.f32 %v718, %v895
      %v917 = vld [vmem:[%s4] sm:$0xff]
      %v918 = vld [vmem:[%s4 + $0x8] sm:$0xff]
      %v919 = vld [vmem:[%s4 + $0x10] sm:$0xff]
      %v920 = vld [vmem:[%s4 + $0x18] sm:$0xff]
      %v921 = vld [vmem:[%s4 + $0x20] sm:$0xff]
      %v922 = vld [vmem:[%s4 + $0x28] sm:$0xff]
      %v923 = vld [vmem:[%s4 + $0x30] sm:$0xff]
      %v924 = vld [vmem:[%s4 + $0x38] sm:$0xff]
      %v925 = vld [vmem:[%s4 + $0x40] sm:$0xff]
      %v926 = vld [vmem:[%s4 + $0x48] sm:$0xff]
      %v927 = vld [vmem:[%s4 + $0x50] sm:$0xff]
      %v928 = vld [vmem:[%s4 + $0x58] sm:$0xff]
      %v929 = vld [vmem:[%s4 + $0x60] sm:$0xff]
      %v930 = vld [vmem:[%s4 + $0x68] sm:$0xff]
      %v931 = vld [vmem:[%s4 + $0x70] sm:$0xff]
      %v932 = vld [vmem:[%s4 + $0x78] sm:$0xff]
      %v949 = vunpack.c.l.b16 %v917
      %v950 = vunpack.c.h.b16 %v917
      %v951 = vunpack.c.l.b16 %v918
      %v952 = vunpack.c.h.b16 %v918
      %v953 = vunpack.c.l.b16 %v919
      %v954 = vunpack.c.h.b16 %v919
      %v955 = vunpack.c.l.b16 %v920
      %v956 = vunpack.c.h.b16 %v920
      %v957 = vunpack.c.l.b16 %v921
      %v958 = vunpack.c.h.b16 %v921
      %v959 = vunpack.c.l.b16 %v922
      %v960 = vunpack.c.h.b16 %v922
      %v961 = vunpack.c.l.b16 %v923
      %v962 = vunpack.c.h.b16 %v923
      %v963 = vunpack.c.l.b16 %v924
      %v964 = vunpack.c.h.b16 %v924
      %v965 = vunpack.c.l.b16 %v925
      %v966 = vunpack.c.h.b16 %v925
      %v967 = vunpack.c.l.b16 %v926
      %v968 = vunpack.c.h.b16 %v926
      %v969 = vunpack.c.l.b16 %v927
      %v970 = vunpack.c.h.b16 %v927
      %v971 = vunpack.c.l.b16 %v928
      %v972 = vunpack.c.h.b16 %v928
      %v973 = vunpack.c.l.b16 %v929
      %v974 = vunpack.c.h.b16 %v929
      %v975 = vunpack.c.l.b16 %v930
      %v976 = vunpack.c.h.b16 %v930
      %v977 = vunpack.c.l.b16 %v931
      %v978 = vunpack.c.h.b16 %v931
      %v979 = vunpack.c.l.b16 %v932
      %v980 = vunpack.c.h.b16 %v932
      %v981 = vpack.c.b16 %v951, %v949
      %v982 = vpack.c.b16 %v952, %v950
      %v983 = vpack.c.b16 %v955, %v953
      %v984 = vpack.c.b16 %v956, %v954
      %v985 = vpack.c.b16 %v959, %v957
      %v986 = vpack.c.b16 %v960, %v958
      %v987 = vpack.c.b16 %v963, %v961
      %v988 = vpack.c.b16 %v964, %v962
      %v989 = vpack.c.b16 %v967, %v965
      %v990 = vpack.c.b16 %v968, %v966
      %v991 = vpack.c.b16 %v971, %v969
      %v992 = vpack.c.b16 %v972, %v970
      %v993 = vpack.c.b16 %v975, %v973
      %v994 = vpack.c.b16 %v976, %v974
      %v995 = vpack.c.b16 %v979, %v977
      %v996 = vpack.c.b16 %v980, %v978
      %1013 = vmatprep.subr.bf16.mxu0 %v982
      %1014 = vmatpush1.bf16.msra.mxu0 %v981
      %1015 = vmatprep.subr.bf16.mxu0 %v984
      %1016 = vmatpush1.bf16.msra.mxu0 %v983
      %1017 = vmatprep.subr.bf16.mxu0 %v986
      %1018 = vmatpush1.bf16.msra.mxu0 %v985
      %1019 = vmatprep.subr.bf16.mxu0 %v988
      %1020 = vmatpush1.bf16.msra.mxu0 %v987
      %1021 = vmatprep.subr.bf16.mxu0 %v990
      %1022 = vmatpush1.bf16.msra.mxu0 %v989
      %1023 = vmatprep.subr.bf16.mxu0 %v992
      %1024 = vmatpush1.bf16.msra.mxu0 %v991
      %1025 = vmatprep.subr.bf16.mxu0 %v994
      %1026 = vmatpush1.bf16.msra.mxu0 %v993
      %1027 = vmatprep.subr.bf16.mxu0 %v996
      %1028 = vmatpush1.bf16.msra.mxu0 %v995
      %1029 = vmatprep.subr.bf16.mxu0 0
      %1030 = vmatpush1.bf16.msra.mxu0 0
      %1031 = vmatprep.subr.bf16.mxu0 0
      %1032 = vmatpush1.bf16.msra.mxu0 0
      %1033 = vmatprep.subr.bf16.mxu0 0
      %1034 = vmatpush1.bf16.msra.mxu0 0
      %1035 = vmatprep.subr.bf16.mxu0 0
      %1036 = vmatpush1.bf16.msra.mxu0 0
      %1037 = vmatprep.subr.bf16.mxu0 0
      %1038 = vmatpush1.bf16.msra.mxu0 0
      %1039 = vmatprep.subr.bf16.mxu0 0
      %1040 = vmatpush1.bf16.msra.mxu0 0
      %1041 = vmatprep.subr.bf16.mxu0 0
      %1042 = vmatpush1.bf16.msra.mxu0 0
      %1043 = vmatprep.subr.bf16.mxu0 0
      %1044 = vmatpush1.bf16.msra.mxu0 0
      %1045 = vmatprep.mubr.bf16.mxu0 0
      %1046 = vmatmul.mubr.bf16.gmra.mrb[0].mxu0 %v363
      %v1047 = vpop.f32.mrb[0].mxu0
      %v1048 = vadd.f32 0.0, %v1047
      %v1049 = vpop.f32.mrb[0].mxu0
      %v1050 = vadd.f32 0.0, %v1049
      %v1051 = vpop.f32.mrb[0].mxu0
      %v1052 = vadd.f32 0.0, %v1051
      %v1053 = vpop.f32.mrb[0].mxu0
      %v1054 = vadd.f32 0.0, %v1053
      %1055 = vmatprep.mubr.bf16.mxu0 0
      %1056 = vmatmul.mubr.bf16.gmra.mrb[0].mxu0 %v364
      %v1057 = vpop.f32.mrb[0].mxu0
      %v1058 = vadd.f32 0.0, %v1057
      %v1059 = vpop.f32.mrb[0].mxu0
      %v1060 = vadd.f32 0.0, %v1059
      %v1061 = vpop.f32.mrb[0].mxu0
      %v1062 = vadd.f32 0.0, %v1061
      %v1063 = vpop.f32.mrb[0].mxu0
      %v1064 = vadd.f32 0.0, %v1063
      %1065 = vmatprep.mubr.bf16.mxu0 0
      %1066 = vmatmul.mubr.bf16.gmra.mrb[0].mxu0 %v365
      %v1067 = vpop.f32.mrb[0].mxu0
      %v1068 = vadd.f32 0.0, %v1067
      %v1069 = vpop.f32.mrb[0].mxu0
      %v1070 = vadd.f32 0.0, %v1069
      %v1071 = vpop.f32.mrb[0].mxu0
      %v1072 = vadd.f32 0.0, %v1071
      %v1073 = vpop.f32.mrb[0].mxu0
      %v1074 = vadd.f32 0.0, %v1073
      %1075 = vmatprep.mubr.bf16.mxu0 0
      %1076 = vmatmul.mubr.bf16.gmra.mrb[0].mxu0 %v366
      %v1077 = vpop.f32.mrb[0].mxu0
      %v1078 = vadd.f32 0.0, %v1077
      %v1079 = vpop.f32.mrb[0].mxu0
      %v1080 = vadd.f32 0.0, %v1079
      %v1081 = vpop.f32.mrb[0].mxu0
      %v1082 = vadd.f32 0.0, %v1081
      %v1083 = vpop.f32.mrb[0].mxu0
      %v1084 = vadd.f32 0.0, %v1083
      %1085 = vmatprep.mubr.bf16.mxu0 0
      %1086 = vmatmul.mubr.bf16.gmra.mrb[0].mxu0 %v367
      %v1087 = vpop.f32.mrb[0].mxu0
      %v1088 = vadd.f32 0.0, %v1087
      %v1089 = vpop.f32.mrb[0].mxu0
      %v1090 = vadd.f32 0.0, %v1089
      %v1091 = vpop.f32.mrb[0].mxu0
      %v1092 = vpop.f32.mrb[0].mxu0
      %1093 = vdwg.mxu0
      %v1094 = vadd.f32 %v899, %v1048
      %v1095 = vadd.f32 %v900, %v1050
      %v1096 = vadd.f32 %v901, %v1052
      %v1097 = vadd.f32 %v902, %v1054
      %v1098 = vadd.f32 %v903, %v1058
      %v1099 = vadd.f32 %v904, %v1060
      %v1100 = vadd.f32 %v905, %v1062
      %v1101 = vadd.f32 %v906, %v1064
      %v1102 = vadd.f32 %v907, %v1068
      %v1103 = vadd.f32 %v908, %v1070
      %v1104 = vadd.f32 %v909, %v1072
      %v1105 = vadd.f32 %v910, %v1074
      %v1106 = vadd.f32 %v911, %v1078
      %v1107 = vadd.f32 %v912, %v1080
      %v1108 = vadd.f32 %v913, %v1082
      %v1109 = vadd.f32 %v914, %v1084
      %v1110 = vadd.f32 %v915, %v1088
      %v1111 = vadd.f32 %v916, %v1090
      %v1112 = vld [vmem:[%s5] sm:$0x3]
      %v1114 = vlaneseq
      %v1115 = vshrl.u32 %v1114, 7
      %v1116 = vsub.s32 0, %v1115
      %v1117 = vrot.slane %v1112, %v1116
      %v1118 = vlaneseq
      %v1119 = vshrl.u32 %v1118, 7
      %v1120 = vsub.s32 1, %v1119
      %v1121 = vrot.slane %v1112, %v1120
      %v1124 = vadd.f32 %v1094, %v1117
      %v1125 = vadd.f32 %v1095, %v1121
      %v1126 = vadd.f32 %v1096, %v1117
      %v1127 = vadd.f32 %v1097, %v1121
      %v1128 = vadd.f32 %v1098, %v1117
      %v1129 = vadd.f32 %v1099, %v1121
      %v1130 = vadd.f32 %v1100, %v1117
      %v1131 = vadd.f32 %v1101, %v1121
      %v1132 = vadd.f32 %v1102, %v1117
      %v1133 = vadd.f32 %v1103, %v1121
      %v1134 = vadd.f32 %v1104, %v1117
      %v1135 = vadd.f32 %v1105, %v1121
      %v1136 = vadd.f32 %v1106, %v1117
      %v1137 = vadd.f32 %v1107, %v1121
      %v1138 = vadd.f32 %v1108, %v1117
      %v1139 = vadd.f32 %v1109, %v1121
      %v1140 = vadd.f32 %v1110, %v1117
      %v1141 = vadd.f32 %v1111, %v1121
      %1142 = vst [vmem:[%s313] sm:$0xff] %v1124
      %1143 = vst [vmem:[%s313 + $0x8] sm:$0xff] %v1125
      %1144 = vst [vmem:[%s313 + $0x10] sm:$0xff] %v1126
      %1145 = vst [vmem:[%s313 + $0x18] sm:$0xff] %v1127
      %1146 = vst [vmem:[%s313 + $0x20] sm:$0xff] %v1128
      %1147 = vst [vmem:[%s313 + $0x28] sm:$0xff] %v1129
      %1148 = vst [vmem:[%s313 + $0x30] sm:$0xff] %v1130
      %1149 = vst [vmem:[%s313 + $0x38] sm:$0xff] %v1131
      %1150 = vst [vmem:[%s313 + $0x40] sm:$0xff] %v1132
      %1151 = vst [vmem:[%s313 + $0x48] sm:$0xff] %v1133
      %1152 = vst [vmem:[%s313 + $0x50] sm:$0xff] %v1134
      %1153 = vst [vmem:[%s313 + $0x58] sm:$0xff] %v1135
      %1154 = vst [vmem:[%s313 + $0x60] sm:$0xff] %v1136
      %1155 = vst [vmem:[%s313 + $0x68] sm:$0xff] %v1137
      %1156 = vst [vmem:[%s313 + $0x70] sm:$0xff] %v1138
      %1157 = vst [vmem:[%s313 + $0x78] sm:$0xff] %v1139
      %1158 = vst [vmem:[%s313 + $0x80] sm:$0xff] %v1140
      %1159 = vst [vmem:[%s313 + $0x88] sm:$0xff] %v1141
      %v1160 = vld [vmem:[%s6] sm:$0xff]
      %v1161 = vld [vmem:[%s6 + $0x8] sm:$0xff]
      %v1162 = vld [vmem:[%s6 + $0x10] sm:$0xff]
      %v1163 = vld [vmem:[%s6 + $0x18] sm:$0xff]
      %v1164 = vld [vmem:[%s6 + $0x20] sm:$0xff]
      %v1165 = vld [vmem:[%s6 + $0x28] sm:$0xff]
      %v1166 = vld [vmem:[%s6 + $0x30] sm:$0xff]
      %v1167 = vld [vmem:[%s6 + $0x38] sm:$0xff]
      %v1168 = vld [vmem:[%s6 + $0x40] sm:$0xff]
      %1170 = vset.pattern.permute.xlu0 0
      %1171 = vperm.xlu0 %1170, %v1160
      %v1172 = vpop.permute.xlu0 %1171
      %1175 = vset.pattern.permute.xlu0 0
      %1176 = vperm.xlu0 %1175, %v1161
      %v1177 = vpop.permute.xlu0 %1176
      %1180 = vset.pattern.permute.xlu0 0
      %1181 = vperm.xlu0 %1180, %v1162
      %v1182 = vpop.permute.xlu0 %1181
      %1185 = vset.pattern.permute.xlu0 0
      %1186 = vperm.xlu0 %1185, %v1163
      %v1187 = vpop.permute.xlu0 %1186
      %1190 = vset.pattern.permute.xlu0 0
      %1191 = vperm.xlu0 %1190, %v1164
      %v1192 = vpop.permute.xlu0 %1191
      %1195 = vset.pattern.permute.xlu0 0
      %1196 = vperm.xlu0 %1195, %v1165
      %v1197 = vpop.permute.xlu0 %1196
      %1200 = vset.pattern.permute.xlu0 0
      %1201 = vperm.xlu0 %1200, %v1166
      %v1202 = vpop.permute.xlu0 %1201
      %1205 = vset.pattern.permute.xlu0 0
      %1206 = vperm.xlu0 %1205, %v1167
      %v1207 = vpop.permute.xlu0 %1206
      %1210 = vset.pattern.permute.xlu0 0
      %1211 = vperm.xlu0 %1210, %v1168
      %v1212 = vpop.permute.xlu0 %1211
      %v1214 = vmul.f32 %v1124, %v1172
      %v1215 = vmul.f32 %v1125, %v1172
      %v1216 = vmul.f32 %v1126, %v1177
      %v1217 = vmul.f32 %v1127, %v1177
      %v1218 = vmul.f32 %v1128, %v1182
      %v1219 = vmul.f32 %v1129, %v1182
      %v1220 = vmul.f32 %v1130, %v1187
      %v1221 = vmul.f32 %v1131, %v1187
      %v1222 = vmul.f32 %v1132, %v1192
      %v1223 = vmul.f32 %v1133, %v1192
      %v1224 = vmul.f32 %v1134, %v1197
      %v1225 = vmul.f32 %v1135, %v1197
      %v1226 = vmul.f32 %v1136, %v1202
      %v1227 = vmul.f32 %v1137, %v1202
      %v1228 = vmul.f32 %v1138, %v1207
      %v1229 = vmul.f32 %v1139, %v1207
      %v1230 = vmul.f32 %v1140, %v1212
      %v1231 = vmul.f32 %v1141, %v1212
      %v1232 = vadd.f32 %v1214, %v1216
      %v1233 = vadd.f32 %v1232, %v1218
      %v1234 = vadd.f32 %v1233, %v1220
      %v1235 = vadd.f32 %v1234, %v1222
      %v1236 = vadd.f32 %v1235, %v1224
      %v1237 = vadd.f32 %v1236, %v1226
      %v1238 = vadd.f32 %v1237, %v1228
      %v1239 = vadd.f32 %v1238, %v1230
      %v1240 = vrot.slane %v1239, 4
      %v1241 = vadd.f32 %v1239, %v1240
      %v1242 = vrot.slane %v1241, 2
      %v1243 = vadd.f32 %v1241, %v1242
      %v1244 = vrot.slane %v1243, 1
      %v1245 = vadd.f32 %v1243, %v1244
      %v1246 = vadd.f32 %v1215, %v1217
      %v1247 = vadd.f32 %v1246, %v1219
      %v1248 = vadd.f32 %v1247, %v1221
      %v1249 = vadd.f32 %v1248, %v1223
      %v1250 = vadd.f32 %v1249, %v1225
      %v1251 = vadd.f32 %v1250, %v1227
      %v1252 = vadd.f32 %v1251, %v1229
      %v1253 = vadd.f32 %v1252, %v1231
      %v1254 = vrot.slane %v1253, 4
      %v1255 = vadd.f32 %v1253, %v1254
      %v1256 = vrot.slane %v1255, 2
      %v1257 = vadd.f32 %v1255, %v1256
      %v1258 = vrot.slane %v1257, 1
      %v1259 = vadd.f32 %v1257, %v1258
      %v1260 = vmul.f32 %v1214, %v1214
      %v1261 = vmul.f32 %v1215, %v1215
      %v1262 = vmul.f32 %v1216, %v1216
      %v1263 = vmul.f32 %v1217, %v1217
      %v1264 = vmul.f32 %v1218, %v1218
      %v1265 = vmul.f32 %v1219, %v1219
      %v1266 = vmul.f32 %v1220, %v1220
      %v1267 = vmul.f32 %v1221, %v1221
      %v1268 = vmul.f32 %v1222, %v1222
      %v1269 = vmul.f32 %v1223, %v1223
      %v1270 = vmul.f32 %v1224, %v1224
      %v1271 = vmul.f32 %v1225, %v1225
      %v1272 = vmul.f32 %v1226, %v1226
      %v1273 = vmul.f32 %v1227, %v1227
      %v1274 = vmul.f32 %v1228, %v1228
      %v1275 = vmul.f32 %v1229, %v1229
      %v1276 = vmul.f32 %v1230, %v1230
      %v1277 = vmul.f32 %v1231, %v1231
      %v1278 = vadd.f32 %v1260, %v1262
      %v1279 = vadd.f32 %v1278, %v1264
      %v1280 = vadd.f32 %v1279, %v1266
      %v1281 = vadd.f32 %v1280, %v1268
      %v1282 = vadd.f32 %v1281, %v1270
      %v1283 = vadd.f32 %v1282, %v1272
      %v1284 = vadd.f32 %v1283, %v1274
      %v1285 = vadd.f32 %v1284, %v1276
      %v1286 = vrot.slane %v1285, 4
      %v1287 = vadd.f32 %v1285, %v1286
      %v1288 = vrot.slane %v1287, 2
      %v1289 = vadd.f32 %v1287, %v1288
      %v1290 = vrot.slane %v1289, 1
      %v1291 = vadd.f32 %v1289, %v1290
      %v1292 = vadd.f32 %v1261, %v1263
      %v1293 = vadd.f32 %v1292, %v1265
      %v1294 = vadd.f32 %v1293, %v1267
      %v1295 = vadd.f32 %v1294, %v1269
      %v1296 = vadd.f32 %v1295, %v1271
      %v1297 = vadd.f32 %v1296, %v1273
      %v1298 = vadd.f32 %v1297, %v1275
      %v1299 = vadd.f32 %v1298, %v1277
      %v1300 = vrot.slane %v1299, 4
      %v1301 = vadd.f32 %v1299, %v1300
      %v1302 = vrot.slane %v1301, 2
      %v1303 = vadd.f32 %v1301, %v1302
      %v1304 = vrot.slane %v1303, 1
      %v1305 = vadd.f32 %v1303, %v1304
      %vm1306 = vcmask 1040384
      %v1307 = vsel %vm1306, %v1245, %v1291
      %v1308 = vsel %vm1306, %v1259, %v1305
      %v1311 = vcombine.low %v1307, %v1308
      %v1313 = vunpack.c.l.s4 1983009808
      %v1314 = vunpack.c.0.s8 %v1313
      %v1315 = vlaneseq
      %v1316 = vshrl.u32 %v1315, 7
      %v1317 = vsub.s32 %v1314, %v1316
      %v1318 = vrot.slane %v1311, %v1317
      %1320 = vst [vmem:[%s318] sm:$0xf] %v1318
      %p1321 = scmp.lt.s32.totalorder %s20, 1
      %s1322 = scalar_select %p1321, %s20, 1
      %s1323 = smul.addr %s1322, 18
      %s1324 = smul.addr %s1323, 8
      %s1325 = scalar_lea.vmem %s7, %s1324
      %p1326 = scmp.lt.s32.totalorder %s20, 1
      %s1327 = scalar_select %p1326, %s20, 1
      %s1328 = smul.addr %s1327, 2
      %s1329 = smul.addr %s1328, 2
      %s1330 = scalar_lea.vmem %s8, %s1329
      // Predicated region
      $region49: #{decoder_forward.5} parent=47 // pred_check
        %p1331 = pneg %p190
      $region50: #{decoder_forward.5} parent=47 // pred_check_branch
        %1333 = sbr.rel (%p1331) target = $region52
      $region51: #{decoder_forward.5} parent=47 // pred_region
        _
      $region52: #{decoder_forward.5} parent=47 // pred_fallthru
        _
      // Predicated region
      $region53: #{decoder_forward.5} parent=47 // pred_check
        %p1334 = pneg %p216
      $region54: #{decoder_forward.5} parent=47 // pred_check_branch
        %1336 = sbr.rel (%p1334) target = $region56
      $region55: #{decoder_forward.5} parent=47 // pred_region
        _
      $region56: #{decoder_forward.5} parent=47 // pred_fallthru
        _
    $region48: #{decoder_forward.5} parent=5 // pred_fallthru
      _
    %p1337 = scmp.le.s32.totalorder 2, %s15
    // Predicated region
    $region57: #{decoder_forward.5} parent=5 // pred_check
      %p1338 = pneg %p1337
    $region58: #{decoder_forward.5} parent=5 // pred_check_branch
      %1340 = sbr.rel (%p1338) target = $region60
    $region59: #{decoder_forward.5} parent=5 // pred_region
      %s1341 = ssub.s32 %s15, 2
      // Predicated region
      $region61: #{decoder_forward.5} parent=59 // pred_check
        %p1342 = pneg %p196
      $region62: #{decoder_forward.5} parent=59 // pred_check_branch
        %1344 = sbr.rel (%p1342) target = $region64
      $region63: #{decoder_forward.5} parent=59 // pred_region
        %p1345 = scmp.lt.s32.totalorder %s21, 1
        %s1346 = scalar_select %p1345, %s21, 1
        %s1347 = smul.addr %s1346, 18
        %s1348 = smul.addr %s1347, 8
        %s1349 = scalar_lea.vmem %s7, %s1348
      $region64: #{decoder_forward.5} parent=59 // pred_fallthru
        _
      // Predicated region
      $region65: #{decoder_forward.5} parent=59 // pred_check
        %p1350 = pneg %p222
      $region66: #{decoder_forward.5} parent=59 // pred_check_branch
        %1352 = sbr.rel (%p1350) target = $region68
      $region67: #{decoder_forward.5} parent=59 // pred_region
        %p1353 = scmp.lt.s32.totalorder %s21, 1
        %s1354 = scalar_select %p1353, %s21, 1
        %s1355 = smul.addr %s1354, 2
        %s1356 = smul.addr %s1355, 2
        %s1357 = scalar_lea.vmem %s8, %s1356
      $region68: #{decoder_forward.5} parent=59 // pred_fallthru
        _
    $region60: #{decoder_forward.5} parent=5 // pred_fallthru
      _
  $region6: #{decoder_forward.5} parent=0 // loop_footer
    %s19 = sadd.s32 1, %s15
  $region7: #{decoder_forward.5} parent=0 // loop_footer_branch
    %14 = sbr.rel target = $region3
  $region8: #{decoder_forward.5} parent=0 // loop_exit
    _

// kernel: decoder_forward.4
$region0: #{decoder_forward.4}
  #allocation0 [shape = 'u32[]', space=smem, size = 0x4, offset = 0x4, fixed_abs, tag = 'smem constant byte address 0x4 - core index']
  #allocation1 [shape = 'u32[144,128]{1,0:T(1,128)}', space=vmem, size = 0x12000, scoped, tag = 'internal scratch']
  %s0 = inlined_call_operand.vmem [shape: f32[2,30,256], index: 0, kind: input, shape index: {}]
  %s1 = inlined_call_operand.vmem [shape: bf16[256,512], index: 1, kind: input, shape index: {}]
  %s2 = inlined_call_operand.vmem [shape: bf16[256,512], index: 2, kind: input, shape index: {}]
  %s3 = inlined_call_operand.vmem [shape: bf16[256,512], index: 3, kind: input, shape index: {}]
  %s4 = inlined_call_operand.vmem [shape: bf16[256,512], index: 4, kind: input, shape index: {}]
  %s5 = inlined_call_operand.hbm [shape: f32[1,512], index: 5, kind: input, shape index: {}]
  %s6 = inlined_call_operand.hbm [shape: f32[20,1], index: 6, kind: input, shape index: {}]
  %s7 = inlined_call_operand.vmem [shape: f32[2,20,512], index: 7, kind: output, shape index: {0}]
  %s8 = inlined_call_operand.vmem [shape: f32[2,2,512], index: 8, kind: output, shape index: {1}]
  %9 = xla_tuple %s7, %s8
  %s10 = sld [smem:[#allocation0]]
  $region77: #{decoder_forward.4} parent=0
    _
  %s12 = ssub.s32 1, %s10
  %s13 = scalar_select 0, %s12, %s10
  $region1: #{decoder_forward.4} parent=0
    #allocation2 [shape = 'u8[2048]{0}', space=vmem, size = 0x800, scoped, tag = 'input window, operand 5, single buffered']
    #allocation3 [shape = 's32[2]{0}', space=sflag, size = 0x8, scoped, tag = 'scoped memory for decoder_forward.4']
    #allocation4 [shape = 'u8[12288]{0}', space=vmem, size = 0x3000, scoped, tag = 'input window, operand 6, single buffered']
    #allocation5 [shape = 's32[1]{0}', space=sflag, size = 0x4, scoped, tag = 'scoped memory for decoder_forward.4']
    %14 = vsyncpa [#allocation3], 0
    %15 = vsyncpa [#allocation5], 0
    loop: start=0, step=1, limit=4
    $region2: #{decoder_forward.4} parent=1 // loop_pre_header
      _
    $region3: #{decoder_forward.4} parent=1 // loop_header
      %s17 = sphi 0, %s21
      %p18 = scmp.ge.s32.totalorder %s17, 4
      %s27 = sphi 0, %s29
      %s30 = sphi 0, %s27
      %s31 = sphi 0, %s30
      %s47 = sphi 0, %s31
      %s51 = sphi 0, %s51
      %s53 = sphi 0, %s51
      %s54 = sphi 0, %s53
      %s68 = sphi 0, %s54
      %s72 = sphi 0, %s72
      %s74 = sphi 0, %s72
      %s75 = sphi 0, %s74
      %s89 = sphi 0, %s75
      %s93 = sphi 0, %s93
      %s95 = sphi 0, %s93
      %s96 = sphi 0, %s95
      %s110 = sphi 0, %s96
      %s114 = sphi 0, %s114
      %s116 = sphi 0, %s114
      %s117 = sphi 0, %s116
      %s131 = sphi 0, %s117
      %s135 = sphi 0, %s135
      %s137 = sphi 0, %s135
      %s138 = sphi 0, %s137
      %s152 = sphi 0, %s138
      %s156 = sphi 0, %s156
      %s158 = sphi 0, %s156
      %s159 = sphi 0, %s158
      %s173 = sphi 0, %s159
      %s179 = sphi 0, %s181
      %s182 = sphi 0, %s179
      %s183 = sphi 0, %s182
      %s199 = sphi 0, %s183
      %s205 = sphi 0, %s207
      %s208 = sphi 0, %s205
      %s209 = sphi 0, %s208
      %s225 = sphi 0, %s209
    $region4: #{decoder_forward.4} parent=1 // loop_header_branch
      %20 = sbr.rel (%p18) target = $region8
    $region5: #{decoder_forward.4} parent=1 // loop_body
      %s22 = ssub.s32 %s17, 1
      %s23 = ssub.s32 %s17, 2
      %s24 = sadd.s32 %s17, 1
      %s25 = ssub.s32 %s17, %s24
      %p26 = scmp.eq.s32.totalorder %s25, 0
      %s28 = sadd.s32 %s27, 1
      %s29 = scalar_select %p26, %s27, %s28
      %p32 = pneg %p26
      %p33 = scmp.eq.s32.totalorder %s17, 1
      %p34 = por %p32, %p33
      %p35 = scmp.ne.s32.totalorder %s27, %s30
      %p36 = scmp.eq.s32.totalorder %s17, 0
      %p37 = por %p35, %p36
      %p38 = scmp.ne.s32.totalorder %s27, %s30
      %p39 = scmp.eq.s32.totalorder %s22, 1
      %p40 = por %p38, %p39
      %p41 = scmp.ne.s32.totalorder %s30, %s31
      %p42 = scmp.eq.s32.totalorder %s22, 0
      %p43 = por %p41, %p42
      %p44 = scmp.ne.s32.totalorder %s30, %s31
      %p45 = scmp.eq.s32.totalorder %s23, 1
      %p46 = por %p44, %p45
      %p48 = scmp.ne.s32.totalorder %s31, %s47
      %p49 = scmp.eq.s32.totalorder %s23, 0
      %p50 = por %p48, %p49
      %s52 = sadd.s32 %s51, 1
      %p55 = scmp.eq.s32.totalorder %s17, 1
      %p56 = scmp.ne.s32.totalorder %s51, %s53
      %p57 = scmp.eq.s32.totalorder %s17, 0
      %p58 = por %p56, %p57
      %p59 = scmp.ne.s32.totalorder %s51, %s53
      %p60 = scmp.eq.s32.totalorder %s22, 1
      %p61 = por %p59, %p60
      %p62 = scmp.ne.s32.totalorder %s53, %s54
      %p63 = scmp.eq.s32.totalorder %s22, 0
      %p64 = por %p62, %p63
      %p65 = scmp.ne.s32.totalorder %s53, %s54
      %p66 = scmp.eq.s32.totalorder %s23, 1
      %p67 = por %p65, %p66
      %p69 = scmp.ne.s32.totalorder %s54, %s68
      %p70 = scmp.eq.s32.totalorder %s23, 0
      %p71 = por %p69, %p70
      %s73 = sadd.s32 %s72, 1
      %p76 = scmp.eq.s32.totalorder %s17, 1
      %p77 = scmp.ne.s32.totalorder %s72, %s74
      %p78 = scmp.eq.s32.totalorder %s17, 0
      %p79 = por %p77, %p78
      %p80 = scmp.ne.s32.totalorder %s72, %s74
      %p81 = scmp.eq.s32.totalorder %s22, 1
      %p82 = por %p80, %p81
      %p83 = scmp.ne.s32.totalorder %s74, %s75
      %p84 = scmp.eq.s32.totalorder %s22, 0
      %p85 = por %p83, %p84
      %p86 = scmp.ne.s32.totalorder %s74, %s75
      %p87 = scmp.eq.s32.totalorder %s23, 1
      %p88 = por %p86, %p87
      %p90 = scmp.ne.s32.totalorder %s75, %s89
      %p91 = scmp.eq.s32.totalorder %s23, 0
      %p92 = por %p90, %p91
      %s94 = sadd.s32 %s93, 1
      %p97 = scmp.eq.s32.totalorder %s17, 1
      %p98 = scmp.ne.s32.totalorder %s93, %s95
      %p99 = scmp.eq.s32.totalorder %s17, 0
      %p100 = por %p98, %p99
      %p101 = scmp.ne.s32.totalorder %s93, %s95
      %p102 = scmp.eq.s32.totalorder %s22, 1
      %p103 = por %p101, %p102
      %p104 = scmp.ne.s32.totalorder %s95, %s96
      %p105 = scmp.eq.s32.totalorder %s22, 0
      %p106 = por %p104, %p105
      %p107 = scmp.ne.s32.totalorder %s95, %s96
      %p108 = scmp.eq.s32.totalorder %s23, 1
      %p109 = por %p107, %p108
      %p111 = scmp.ne.s32.totalorder %s96, %s110
      %p112 = scmp.eq.s32.totalorder %s23, 0
      %p113 = por %p111, %p112
      %s115 = sadd.s32 %s114, 1
      %p118 = scmp.eq.s32.totalorder %s17, 1
      %p119 = scmp.ne.s32.totalorder %s114, %s116
      %p120 = scmp.eq.s32.totalorder %s17, 0
      %p121 = por %p119, %p120
      %p122 = scmp.ne.s32.totalorder %s114, %s116
      %p123 = scmp.eq.s32.totalorder %s22, 1
      %p124 = por %p122, %p123
      %p125 = scmp.ne.s32.totalorder %s116, %s117
      %p126 = scmp.eq.s32.totalorder %s22, 0
      %p127 = por %p125, %p126
      %p128 = scmp.ne.s32.totalorder %s116, %s117
      %p129 = scmp.eq.s32.totalorder %s23, 1
      %p130 = por %p128, %p129
      %p132 = scmp.ne.s32.totalorder %s117, %s131
      %p133 = scmp.eq.s32.totalorder %s23, 0
      %p134 = por %p132, %p133
      %s136 = sadd.s32 %s135, 1
      %p139 = scmp.eq.s32.totalorder %s17, 1
      %p140 = scmp.ne.s32.totalorder %s135, %s137
      %p141 = scmp.eq.s32.totalorder %s17, 0
      %p142 = por %p140, %p141
      %p143 = scmp.ne.s32.totalorder %s135, %s137
      %p144 = scmp.eq.s32.totalorder %s22, 1
      %p145 = por %p143, %p144
      %p146 = scmp.ne.s32.totalorder %s137, %s138
      %p147 = scmp.eq.s32.totalorder %s22, 0
      %p148 = por %p146, %p147
      %p149 = scmp.ne.s32.totalorder %s137, %s138
      %p150 = scmp.eq.s32.totalorder %s23, 1
      %p151 = por %p149, %p150
      %p153 = scmp.ne.s32.totalorder %s138, %s152
      %p154 = scmp.eq.s32.totalorder %s23, 0
      %p155 = por %p153, %p154
      %s157 = sadd.s32 %s156, 1
      %p160 = scmp.eq.s32.totalorder %s17, 1
      %p161 = scmp.ne.s32.totalorder %s156, %s158
      %p162 = scmp.eq.s32.totalorder %s17, 0
      %p163 = por %p161, %p162
      %p164 = scmp.ne.s32.totalorder %s156, %s158
      %p165 = scmp.eq.s32.totalorder %s22, 1
      %p166 = por %p164, %p165
      %p167 = scmp.ne.s32.totalorder %s158, %s159
      %p168 = scmp.eq.s32.totalorder %s22, 0
      %p169 = por %p167, %p168
      %p170 = scmp.ne.s32.totalorder %s158, %s159
      %p171 = scmp.eq.s32.totalorder %s23, 1
      %p172 = por %p170, %p171
      %p174 = scmp.ne.s32.totalorder %s159, %s173
      %p175 = scmp.eq.s32.totalorder %s23, 0
      %p176 = por %p174, %p175
      %s177 = ssub.s32 %s17, %s24
      %p178 = scmp.eq.s32.totalorder %s177, 0
      %s180 = sadd.s32 %s179, 1
      %s181 = scalar_select %p178, %s179, %s180
      %p184 = pneg %p178
      %p185 = scmp.eq.s32.totalorder %s17, 1
      %p186 = por %p184, %p185
      %p187 = scmp.ne.s32.totalorder %s179, %s182
      %p188 = scmp.eq.s32.totalorder %s17, 0
      %p189 = por %p187, %p188
      %p190 = scmp.ne.s32.totalorder %s179, %s182
      %p191 = scmp.eq.s32.totalorder %s22, 1
      %p192 = por %p190, %p191
      %p193 = scmp.ne.s32.totalorder %s182, %s183
      %p194 = scmp.eq.s32.totalorder %s22, 0
      %p195 = por %p193, %p194
      %p196 = scmp.ne.s32.totalorder %s182, %s183
      %p197 = scmp.eq.s32.totalorder %s23, 1
      %p198 = por %p196, %p197
      %p200 = scmp.ne.s32.totalorder %s183, %s199
      %p201 = scmp.eq.s32.totalorder %s23, 0
      %p202 = por %p200, %p201
      %s203 = ssub.s32 %s17, %s24
      %p204 = scmp.eq.s32.totalorder %s203, 0
      %s206 = sadd.s32 %s205, 1
      %s207 = scalar_select %p204, %s205, %s206
      %p210 = pneg %p204
      %p211 = scmp.eq.s32.totalorder %s17, 1
      %p212 = por %p210, %p211
      %p213 = scmp.ne.s32.totalorder %s205, %s208
      %p214 = scmp.eq.s32.totalorder %s17, 0
      %p215 = por %p213, %p214
      %p216 = scmp.ne.s32.totalorder %s205, %s208
      %p217 = scmp.eq.s32.totalorder %s22, 1
      %p218 = por %p216, %p217
      %p219 = scmp.ne.s32.totalorder %s208, %s209
      %p220 = scmp.eq.s32.totalorder %s22, 0
      %p221 = por %p219, %p220
      %p222 = scmp.ne.s32.totalorder %s208, %s209
      %p223 = scmp.eq.s32.totalorder %s23, 1
      %p224 = por %p222, %p223
      %p226 = scmp.ne.s32.totalorder %s209, %s225
      %p227 = scmp.eq.s32.totalorder %s23, 0
      %p228 = por %p226, %p227
      %p229 = scmp.le.s32.totalorder 1, %s17
      %p230 = scmp.lt.s32.totalorder %s17, 3
      %p231 = pnand %p229, %p230
      %p232 = pneg %p231
      // Predicated region
      $region9: #{decoder_forward.4} parent=5 // pred_check
        _
      $region10: #{decoder_forward.4} parent=5 // pred_check_branch
        %234 = sbr.rel (%p231) target = $region12
      $region11: #{decoder_forward.4} parent=5 // pred_region
        %s235 = ssub.s32 %s17, 1
        // Predicated region
        $region13: #{decoder_forward.4} parent=11 // pred_check
          %p236 = pneg %p64
        $region14: #{decoder_forward.4} parent=11 // pred_check_branch
          %238 = sbr.rel (%p236) target = $region16
        $region15: #{decoder_forward.4} parent=11 // pred_region
          _
        $region16: #{decoder_forward.4} parent=11 // pred_fallthru
          _
        // Predicated region
        $region17: #{decoder_forward.4} parent=11 // pred_check
          %p239 = pneg %p85
        $region18: #{decoder_forward.4} parent=11 // pred_check_branch
          %241 = sbr.rel (%p239) target = $region20
        $region19: #{decoder_forward.4} parent=11 // pred_region
          _
        $region20: #{decoder_forward.4} parent=11 // pred_fallthru
          _
        // Predicated region
        $region21: #{decoder_forward.4} parent=11 // pred_check
          %p242 = pneg %p106
        $region22: #{decoder_forward.4} parent=11 // pred_check_branch
          %244 = sbr.rel (%p242) target = $region24
        $region23: #{decoder_forward.4} parent=11 // pred_region
          _
        $region24: #{decoder_forward.4} parent=11 // pred_fallthru
          _
        // Predicated region
        $region25: #{decoder_forward.4} parent=11 // pred_check
          %p245 = pneg %p127
        $region26: #{decoder_forward.4} parent=11 // pred_check_branch
          %247 = sbr.rel (%p245) target = $region28
        $region27: #{decoder_forward.4} parent=11 // pred_region
          _
        $region28: #{decoder_forward.4} parent=11 // pred_fallthru
          _
        // Predicated region
        $region29: #{decoder_forward.4} parent=11 // pred_check
          %p248 = pneg %p148
        $region30: #{decoder_forward.4} parent=11 // pred_check_branch
          %250 = sbr.rel (%p248) target = $region32
        $region31: #{decoder_forward.4} parent=11 // pred_region
          %s252 = ssub.s32 64, 64
          %253 = vsyncadd [#allocation3], %s252
          %s255 = sshll.u32 [#allocation2], 4
          %s256 = int_to_ptr.vmem [resolvable:$true] %s255
          %258 = dma.hbm_to_vmem [thread:$0]  %s5, 64, %s256, [#allocation3]
        $region32: #{decoder_forward.4} parent=11 // pred_fallthru
          _
        // Predicated region
        $region33: #{decoder_forward.4} parent=11 // pred_check
          %p259 = pneg %p169
        $region34: #{decoder_forward.4} parent=11 // pred_check_branch
          %261 = sbr.rel (%p259) target = $region36
        $region35: #{decoder_forward.4} parent=11 // pred_region
          %s263 = ssub.s32 384, 384
          %264 = vsyncadd [#allocation5], %s263
          %s265 = sshll.u32 [#allocation4], 4
          %s266 = int_to_ptr.vmem [resolvable:$true] %s265
          %271 = dma.hbm_to_vmem [thread:$0]  %s6, 384, %s266, [#allocation5], 128, 128, 8
        $region36: #{decoder_forward.4} parent=11 // pred_fallthru
          _
      $region12: #{decoder_forward.4} parent=5 // pred_fallthru
        _
      %p272 = scmp.lt.s32.totalorder %s17, 2
      // Predicated region
      $region37: #{decoder_forward.4} parent=5 // pred_check
        %p273 = pneg %p272
      $region38: #{decoder_forward.4} parent=5 // pred_check_branch
        %275 = sbr.rel (%p273) target = $region40
      $region39: #{decoder_forward.4} parent=5 // pred_region
        // Predicated region
        $region41: #{decoder_forward.4} parent=39 // pred_check
          %p276 = pneg %p37
        $region42: #{decoder_forward.4} parent=39 // pred_check_branch
          %278 = sbr.rel (%p276) target = $region44
        $region43: #{decoder_forward.4} parent=39 // pred_region
          %p279 = scmp.lt.s32.totalorder %s17, 1
          %s280 = scalar_select %p279, %s17, 1
          %s281 = smul.addr %s280, 8
          %s282 = smul.addr %s281, 8
          %s283 = scalar_lea.vmem %s0, %s282
        $region44: #{decoder_forward.4} parent=39 // pred_fallthru
          _
      $region40: #{decoder_forward.4} parent=5 // pred_fallthru
        _
      %p284 = scmp.le.s32.totalorder 1, %s17
      %p285 = scmp.lt.s32.totalorder %s17, 3
      %p286 = pnand %p284, %p285
      %p287 = pneg %p286
      // Predicated region
      $region45: #{decoder_forward.4} parent=5 // pred_check
        _
      $region46: #{decoder_forward.4} parent=5 // pred_check_branch
        %289 = sbr.rel (%p286) target = $region48
      $region47: #{decoder_forward.4} parent=5 // pred_region
        %s290 = ssub.s32 %s17, 1
        // Predicated region
        $region49: #{decoder_forward.4} parent=47 // pred_check
          %p291 = pneg %p148
        $region50: #{decoder_forward.4} parent=47 // pred_check_branch
          %293 = sbr.rel (%p291) target = $region52
        $region51: #{decoder_forward.4} parent=47 // pred_region
          %294 = dma.done [#allocation3], 64
        $region52: #{decoder_forward.4} parent=47 // pred_fallthru
          _
        // Predicated region
        $region53: #{decoder_forward.4} parent=47 // pred_check
          %p295 = pneg %p169
        $region54: #{decoder_forward.4} parent=47 // pred_check_branch
          %297 = sbr.rel (%p295) target = $region56
        $region55: #{decoder_forward.4} parent=47 // pred_region
          %298 = dma.done [#allocation5], 384
        $region56: #{decoder_forward.4} parent=47 // pred_fallthru
          _
        %p299 = scmp.lt.s32.totalorder %s22, 1
        %s300 = scalar_select %p299, %s22, 1
        %s301 = smul.addr %s300, 8
        %s302 = smul.addr %s301, 8
        %s303 = scalar_lea.vmem %s0, %s302
        %p304 = pneg %p43
        %p305 = pneg %p40
        %p306 = pneg %p64
        %p307 = pneg %p61
        %p308 = pneg %p85
        %p309 = pneg %p82
        %p310 = pneg %p106
        %p311 = pneg %p103
        %p312 = pneg %p127
        %p313 = pneg %p124
        %p314 = pneg %p148
        %p315 = pneg %p145
        %p316 = pneg %p169
        %p317 = pneg %p166
        %p318 = pneg %p195
        %p319 = pneg %p192
        %p320 = scmp.lt.s32.totalorder %s22, 1
        %s321 = scalar_select %p320, %s22, 1
        %s322 = smul.addr %s321, 12
        %s323 = smul.addr %s322, 8
        %s324 = scalar_lea.vmem %s7, %s323
        %p325 = pneg %p221
        %p326 = pneg %p218
        %p327 = scmp.lt.s32.totalorder %s22, 1
        %s328 = scalar_select %p327, %s22, 1
        %s329 = smul.addr %s328, 4
        %s330 = smul.addr %s329, 2
        %s331 = scalar_lea.vmem %s8, %s330
        %p332 = scmp.lt.s32.totalorder %s22, 1
        %s333 = scalar_select %p332, %s22, 1
        %s334 = smul.addr %s333, 8
        %s335 = smul.addr %s334, 8
        %s336 = scalar_lea.vmem %s0, %s335
        %p337 = scmp.lt.s32.totalorder %s22, 1
        %s338 = scalar_select %p337, %s22, 1
        %s339 = smul.addr %s338, 12
        %s340 = smul.addr %s339, 8
        %s341 = scalar_lea.vmem %s7, %s340
        %p342 = scmp.lt.s32.totalorder %s22, 1
        %s343 = scalar_select %p342, %s22, 1
        %s344 = smul.addr %s343, 4
        %s345 = smul.addr %s344, 2
        %s346 = scalar_lea.vmem %s8, %s345
        %v347 = vld [vmem:[%s336] sm:$0xff]
        %v348 = vld [vmem:[%s336 + $0x8] sm:$0xff]
        %v349 = vld [vmem:[%s336 + $0x10] sm:$0xff]
        %v350 = vld [vmem:[%s336 + $0x18] sm:$0xff]
        %v351 = vld [vmem:[%s336 + $0x20] sm:$0xf]
        %v352 = vld [vmem:[%s336 + $0x28] sm:$0xf]
        %v353 = vpack.c.bf16 %v349, %v347
        %v354 = vpack.c.bf16 %v350, %v348
        %v355 = vpack.c.bf16 %v351, %v351
        %v356 = vpack.c.bf16 %v352, %v352
        %v357 = vld [vmem:[%s336] sm:$0xfe]
        %v358 = vld [vmem:[%s336 + $0x8] sm:$0xfe]
        %v359 = vld [vmem:[%s336 + $0x20] sm:$0x1f]
        %v360 = vld [vmem:[%s336 + $0x28] sm:$0x1f]
        %v361 = vpack.c.bf16 %v349, %v357
        %v362 = vpack.c.bf16 %v350, %v358
        %v363 = vpack.c.bf16 %v359, %v359
        %v364 = vpack.c.bf16 %v360, %v360
        %v365 = vld [vmem:[%s336] sm:$0xe0]
        %v366 = vld [vmem:[%s336 + $0x8] sm:$0xe0]
        %v367 = vld [vmem:[%s336 + $0x20] sm:$0xff]
        %v368 = vld [vmem:[%s336 + $0x28] sm:$0xff]
        %v369 = vld [vmem:[%s336 + $0x30] sm:$0x1]
        %v370 = vld [vmem:[%s336 + $0x38] sm:$0x1]
        %v371 = vpack.c.bf16 %v349, %v365
        %v372 = vpack.c.bf16 %v350, %v366
        %v373 = vpack.c.bf16 %v369, %v367
        %v374 = vpack.c.bf16 %v370, %v368
        %v375 = vld [vmem:[%s336] sm:$0xc0]
        %v376 = vld [vmem:[%s336 + $0x8] sm:$0xc0]
        %v377 = vld [vmem:[%s336 + $0x30] sm:$0x3]
        %v378 = vld [vmem:[%s336 + $0x38] sm:$0x3]
        %v379 = vpack.c.bf16 %v349, %v375
        %v380 = vpack.c.bf16 %v350, %v376
        %v381 = vpack.c.bf16 %v377, %v367
        %v382 = vpack.c.bf16 %v378, %v368
        %v383 = vld [vmem:[%s1] sm:$0xff]
        %v384 = vld [vmem:[%s1 + $0x8] sm:$0xff]
        %v385 = vld [vmem:[%s1 + $0x10] sm:$0xff]
        %v386 = vld [vmem:[%s1 + $0x18] sm:$0xff]
        %v387 = vld [vmem:[%s1 + $0x20] sm:$0xff]
        %v388 = vld [vmem:[%s1 + $0x28] sm:$0xff]
        %v389 = vld [vmem:[%s1 + $0x30] sm:$0xff]
        %v390 = vld [vmem:[%s1 + $0x38] sm:$0xff]
        %v391 = vld [vmem:[%s1 + $0x40] sm:$0xff]
        %v392 = vld [vmem:[%s1 + $0x48] sm:$0xff]
        %v393 = vld [vmem:[%s1 + $0x50] sm:$0xff]
        %v394 = vld [vmem:[%s1 + $0x58] sm:$0xff]
        %v395 = vld [vmem:[%s1 + $0x60] sm:$0xff]
        %v396 = vld [vmem:[%s1 + $0x68] sm:$0xff]
        %v397 = vld [vmem:[%s1 + $0x70] sm:$0xff]
        %v398 = vld [vmem:[%s1 + $0x78] sm:$0xff]
        %v399 = vld [vmem:[%s1 + $0x80] sm:$0xff]
        %v400 = vld [vmem:[%s1 + $0x88] sm:$0xff]
        %v401 = vld [vmem:[%s1 + $0x90] sm:$0xff]
        %v402 = vld [vmem:[%s1 + $0x98] sm:$0xff]
        %v403 = vld [vmem:[%s1 + $0xa0] sm:$0xff]
        %v404 = vld [vmem:[%s1 + $0xa8] sm:$0xff]
        %v405 = vld [vmem:[%s1 + $0xb0] sm:$0xff]
        %v406 = vld [vmem:[%s1 + $0xb8] sm:$0xff]
        %v407 = vld [vmem:[%s1 + $0xc0] sm:$0xff]
        %v408 = vld [vmem:[%s1 + $0xc8] sm:$0xff]
        %v409 = vld [vmem:[%s1 + $0xd0] sm:$0xff]
        %v410 = vld [vmem:[%s1 + $0xd8] sm:$0xff]
        %v411 = vld [vmem:[%s1 + $0xe0] sm:$0xff]
        %v412 = vld [vmem:[%s1 + $0xe8] sm:$0xff]
        %v413 = vld [vmem:[%s1 + $0xf0] sm:$0xff]
        %v414 = vld [vmem:[%s1 + $0xf8] sm:$0xff]
        %v415 = vld [vmem:[%s1 + $0x100] sm:$0xff]
        %v416 = vld [vmem:[%s1 + $0x108] sm:$0xff]
        %v417 = vld [vmem:[%s1 + $0x110] sm:$0xff]
        %v418 = vld [vmem:[%s1 + $0x118] sm:$0xff]
        %v419 = vld [vmem:[%s1 + $0x120] sm:$0xff]
        %v420 = vld [vmem:[%s1 + $0x128] sm:$0xff]
        %v421 = vld [vmem:[%s1 + $0x130] sm:$0xff]
        %v422 = vld [vmem:[%s1 + $0x138] sm:$0xff]
        %v423 = vld [vmem:[%s1 + $0x140] sm:$0xff]
        %v424 = vld [vmem:[%s1 + $0x148] sm:$0xff]
        %v425 = vld [vmem:[%s1 + $0x150] sm:$0xff]
        %v426 = vld [vmem:[%s1 + $0x158] sm:$0xff]
        %v427 = vld [vmem:[%s1 + $0x160] sm:$0xff]
        %v428 = vld [vmem:[%s1 + $0x168] sm:$0xff]
        %v429 = vld [vmem:[%s1 + $0x170] sm:$0xff]
        %v430 = vld [vmem:[%s1 + $0x178] sm:$0xff]
        %v431 = vld [vmem:[%s1 + $0x180] sm:$0xff]
        %v432 = vld [vmem:[%s1 + $0x188] sm:$0xff]
        %v433 = vld [vmem:[%s1 + $0x190] sm:$0xff]
        %v434 = vld [vmem:[%s1 + $0x198] sm:$0xff]
        %v435 = vld [vmem:[%s1 + $0x1a0] sm:$0xff]
        %v436 = vld [vmem:[%s1 + $0x1a8] sm:$0xff]
        %v437 = vld [vmem:[%s1 + $0x1b0] sm:$0xff]
        %v438 = vld [vmem:[%s1 + $0x1b8] sm:$0xff]
        %v439 = vld [vmem:[%s1 + $0x1c0] sm:$0xff]
        %v440 = vld [vmem:[%s1 + $0x1c8] sm:$0xff]
        %v441 = vld [vmem:[%s1 + $0x1d0] sm:$0xff]
        %v442 = vld [vmem:[%s1 + $0x1d8] sm:$0xff]
        %v443 = vld [vmem:[%s1 + $0x1e0] sm:$0xff]
        %v444 = vld [vmem:[%s1 + $0x1e8] sm:$0xff]
        %v445 = vld [vmem:[%s1 + $0x1f0] sm:$0xff]
        %v446 = vld [vmem:[%s1 + $0x1f8] sm:$0xff]
        %v447 = vld [vmem:[%s2] sm:$0xff]
        %v448 = vld [vmem:[%s2 + $0x8] sm:$0xff]
        %v449 = vld [vmem:[%s2 + $0x10] sm:$0xff]
        %v450 = vld [vmem:[%s2 + $0x18] sm:$0xff]
        %v451 = vld [vmem:[%s2 + $0x20] sm:$0xff]
        %v452 = vld [vmem:[%s2 + $0x28] sm:$0xff]
        %v453 = vld [vmem:[%s2 + $0x30] sm:$0xff]
        %v454 = vld [vmem:[%s2 + $0x38] sm:$0xff]
        %v455 = vld [vmem:[%s2 + $0x40] sm:$0xff]
        %v456 = vld [vmem:[%s2 + $0x48] sm:$0xff]
        %v457 = vld [vmem:[%s2 + $0x50] sm:$0xff]
        %v458 = vld [vmem:[%s2 + $0x58] sm:$0xff]
        %v459 = vld [vmem:[%s2 + $0x60] sm:$0xff]
        %v460 = vld [vmem:[%s2 + $0x68] sm:$0xff]
        %v461 = vld [vmem:[%s2 + $0x70] sm:$0xff]
        %v462 = vld [vmem:[%s2 + $0x78] sm:$0xff]
        %v463 = vld [vmem:[%s2 + $0x80] sm:$0xff]
        %v464 = vld [vmem:[%s2 + $0x88] sm:$0xff]
        %v465 = vld [vmem:[%s2 + $0x90] sm:$0xff]
        %v466 = vld [vmem:[%s2 + $0x98] sm:$0xff]
        %v467 = vld [vmem:[%s2 + $0xa0] sm:$0xff]
        %v468 = vld [vmem:[%s2 + $0xa8] sm:$0xff]
        %v469 = vld [vmem:[%s2 + $0xb0] sm:$0xff]
        %v470 = vld [vmem:[%s2 + $0xb8] sm:$0xff]
        %v471 = vld [vmem:[%s2 + $0xc0] sm:$0xff]
        %v472 = vld [vmem:[%s2 + $0xc8] sm:$0xff]
        %v473 = vld [vmem:[%s2 + $0xd0] sm:$0xff]
        %v474 = vld [vmem:[%s2 + $0xd8] sm:$0xff]
        %v475 = vld [vmem:[%s2 + $0xe0] sm:$0xff]
        %v476 = vld [vmem:[%s2 + $0xe8] sm:$0xff]
        %v477 = vld [vmem:[%s2 + $0xf0] sm:$0xff]
        %v478 = vld [vmem:[%s2 + $0xf8] sm:$0xff]
        %v479 = vld [vmem:[%s2 + $0x100] sm:$0xff]
        %v480 = vld [vmem:[%s2 + $0x108] sm:$0xff]
        %v481 = vld [vmem:[%s2 + $0x110] sm:$0xff]
        %v482 = vld [vmem:[%s2 + $0x118] sm:$0xff]
        %v483 = vld [vmem:[%s2 + $0x120] sm:$0xff]
        %v484 = vld [vmem:[%s2 + $0x128] sm:$0xff]
        %v485 = vld [vmem:[%s2 + $0x130] sm:$0xff]
        %v486 = vld [vmem:[%s2 + $0x138] sm:$0xff]
        %v487 = vld [vmem:[%s2 + $0x140] sm:$0xff]
        %v488 = vld [vmem:[%s2 + $0x148] sm:$0xff]
        %v489 = vld [vmem:[%s2 + $0x150] sm:$0xff]
        %v490 = vld [vmem:[%s2 + $0x158] sm:$0xff]
        %v491 = vld [vmem:[%s2 + $0x160] sm:$0xff]
        %v492 = vld [vmem:[%s2 + $0x168] sm:$0xff]
        %v493 = vld [vmem:[%s2 + $0x170] sm:$0xff]
        %v494 = vld [vmem:[%s2 + $0x178] sm:$0xff]
        %v495 = vld [vmem:[%s2 + $0x180] sm:$0xff]
        %v496 = vld [vmem:[%s2 + $0x188] sm:$0xff]
        %v497 = vld [vmem:[%s2 + $0x190] sm:$0xff]
        %v498 = vld [vmem:[%s2 + $0x198] sm:$0xff]
        %v499 = vld [vmem:[%s2 + $0x1a0] sm:$0xff]
        %v500 = vld [vmem:[%s2 + $0x1a8] sm:$0xff]
        %v501 = vld [vmem:[%s2 + $0x1b0] sm:$0xff]
        %v502 = vld [vmem:[%s2 + $0x1b8] sm:$0xff]
        %v503 = vld [vmem:[%s2 + $0x1c0] sm:$0xff]
        %v504 = vld [vmem:[%s2 + $0x1c8] sm:$0xff]
        %v505 = vld [vmem:[%s2 + $0x1d0] sm:$0xff]
        %v506 = vld [vmem:[%s2 + $0x1d8] sm:$0xff]
        %v507 = vld [vmem:[%s2 + $0x1e0] sm:$0xff]
        %v508 = vld [vmem:[%s2 + $0x1e8] sm:$0xff]
        %v509 = vld [vmem:[%s2 + $0x1f0] sm:$0xff]
        %v510 = vld [vmem:[%s2 + $0x1f8] sm:$0xff]
        %vm511 = vsmask.f32 7424
        %v513 = vshrl.u32 %v361, 16
        %v515 = vshll.u32 %v361, 16
        %v517 = vrot.slane %v515, 1
        %v518 = vor.u32 %v513, %v517
        %v520 = vshll.u32 %v363, 16
        %v522 = vrot.slane %v520, 1
        %v523 = vsel %vm511, %v518, %v522
        %v525 = vshrl.u32 %v362, 16
        %v527 = vshll.u32 %v362, 16
        %v529 = vrot.slane %v527, 1
        %v530 = vor.u32 %v525, %v529
        %v532 = vshll.u32 %v364, 16
        %v534 = vrot.slane %v532, 1
        %v535 = vsel %vm511, %v530, %v534
        %v536 = vshrl.u32 %v363, 16
        %v538 = vor.u32 %v536, %v522
        %v539 = vshrl.u32 %v364, 16
        %v541 = vor.u32 %v539, %v534
        %v610 = vunpack.c.l.b16 %v447
        %v611 = vunpack.c.h.b16 %v447
        %v612 = vunpack.c.l.b16 %v448
        %v613 = vunpack.c.h.b16 %v448
        %v614 = vunpack.c.l.b16 %v449
        %v615 = vunpack.c.h.b16 %v449
        %v616 = vunpack.c.l.b16 %v450
        %v617 = vunpack.c.h.b16 %v450
        %v618 = vunpack.c.l.b16 %v451
        %v619 = vunpack.c.h.b16 %v451
        %v620 = vunpack.c.l.b16 %v452
        %v621 = vunpack.c.h.b16 %v452
        %v622 = vunpack.c.l.b16 %v453
        %v623 = vunpack.c.h.b16 %v453
        %v624 = vunpack.c.l.b16 %v454
        %v625 = vunpack.c.h.b16 %v454
        %v626 = vunpack.c.l.b16 %v455
        %v627 = vunpack.c.h.b16 %v455
        %v628 = vunpack.c.l.b16 %v456
        %v629 = vunpack.c.h.b16 %v456
        %v630 = vunpack.c.l.b16 %v457
        %v631 = vunpack.c.h.b16 %v457
        %v632 = vunpack.c.l.b16 %v458
        %v633 = vunpack.c.h.b16 %v458
        %v634 = vunpack.c.l.b16 %v459
        %v635 = vunpack.c.h.b16 %v459
        %v636 = vunpack.c.l.b16 %v460
        %v637 = vunpack.c.h.b16 %v460
        %v638 = vunpack.c.l.b16 %v461
        %v639 = vunpack.c.h.b16 %v461
        %v640 = vunpack.c.l.b16 %v462
        %v641 = vunpack.c.h.b16 %v462
        %v642 = vunpack.c.l.b16 %v463
        %v643 = vunpack.c.h.b16 %v463
        %v644 = vunpack.c.l.b16 %v464
        %v645 = vunpack.c.h.b16 %v464
        %v646 = vunpack.c.l.b16 %v465
        %v647 = vunpack.c.h.b16 %v465
        %v648 = vunpack.c.l.b16 %v466
        %v649 = vunpack.c.h.b16 %v466
        %v650 = vunpack.c.l.b16 %v467
        %v651 = vunpack.c.h.b16 %v467
        %v652 = vunpack.c.l.b16 %v468
        %v653 = vunpack.c.h.b16 %v468
        %v654 = vunpack.c.l.b16 %v469
        %v655 = vunpack.c.h.b16 %v469
        %v656 = vunpack.c.l.b16 %v470
        %v657 = vunpack.c.h.b16 %v470
        %v658 = vunpack.c.l.b16 %v471
        %v659 = vunpack.c.h.b16 %v471
        %v660 = vunpack.c.l.b16 %v472
        %v661 = vunpack.c.h.b16 %v472
        %v662 = vunpack.c.l.b16 %v473
        %v663 = vunpack.c.h.b16 %v473
        %v664 = vunpack.c.l.b16 %v474
        %v665 = vunpack.c.h.b16 %v474
        %v666 = vunpack.c.l.b16 %v475
        %v667 = vunpack.c.h.b16 %v475
        %v668 = vunpack.c.l.b16 %v476
        %v669 = vunpack.c.h.b16 %v476
        %v670 = vunpack.c.l.b16 %v477
        %v671 = vunpack.c.h.b16 %v477
        %v672 = vunpack.c.l.b16 %v478
        %v673 = vunpack.c.h.b16 %v478
        %v674 = vunpack.c.l.b16 %v479
        %v675 = vunpack.c.h.b16 %v479
        %v676 = vunpack.c.l.b16 %v480
        %v677 = vunpack.c.h.b16 %v480
        %v678 = vunpack.c.l.b16 %v481
        %v679 = vunpack.c.h.b16 %v481
        %v680 = vunpack.c.l.b16 %v482
        %v681 = vunpack.c.h.b16 %v482
        %v682 = vunpack.c.l.b16 %v483
        %v683 = vunpack.c.h.b16 %v483
        %v684 = vunpack.c.l.b16 %v484
        %v685 = vunpack.c.h.b16 %v484
        %v686 = vunpack.c.l.b16 %v485
        %v687 = vunpack.c.h.b16 %v485
        %v688 = vunpack.c.l.b16 %v486
        %v689 = vunpack.c.h.b16 %v486
        %v690 = vunpack.c.l.b16 %v487
        %v691 = vunpack.c.h.b16 %v487
        %v692 = vunpack.c.l.b16 %v488
        %v693 = vunpack.c.h.b16 %v488
        %v694 = vunpack.c.l.b16 %v489
        %v695 = vunpack.c.h.b16 %v489
        %v696 = vunpack.c.l.b16 %v490
        %v697 = vunpack.c.h.b16 %v490
        %v698 = vunpack.c.l.b16 %v491
        %v699 = vunpack.c.h.b16 %v491
        %v700 = vunpack.c.l.b16 %v492
        %v701 = vunpack.c.h.b16 %v492
        %v702 = vunpack.c.l.b16 %v493
        %v703 = vunpack.c.h.b16 %v493
        %v704 = vunpack.c.l.b16 %v494
        %v705 = vunpack.c.h.b16 %v494
        %v706 = vunpack.c.l.b16 %v495
        %v707 = vunpack.c.h.b16 %v495
        %v708 = vunpack.c.l.b16 %v496
        %v709 = vunpack.c.h.b16 %v496
        %v710 = vunpack.c.l.b16 %v497
        %v711 = vunpack.c.h.b16 %v497
        %v712 = vunpack.c.l.b16 %v498
        %v713 = vunpack.c.h.b16 %v498
        %v714 = vunpack.c.l.b16 %v499
        %v715 = vunpack.c.h.b16 %v499
        %v716 = vunpack.c.l.b16 %v500
        %v717 = vunpack.c.h.b16 %v500
        %v718 = vunpack.c.l.b16 %v501
        %v719 = vunpack.c.h.b16 %v501
        %v720 = vunpack.c.l.b16 %v502
        %v721 = vunpack.c.h.b16 %v502
        %v722 = vunpack.c.l.b16 %v503
        %v723 = vunpack.c.h.b16 %v503
        %v724 = vunpack.c.l.b16 %v504
        %v725 = vunpack.c.h.b16 %v504
        %v726 = vunpack.c.l.b16 %v505
        %v727 = vunpack.c.h.b16 %v505
        %v728 = vunpack.c.l.b16 %v506
        %v729 = vunpack.c.h.b16 %v506
        %v730 = vunpack.c.l.b16 %v507
        %v731 = vunpack.c.h.b16 %v507
        %v732 = vunpack.c.l.b16 %v508
        %v733 = vunpack.c.h.b16 %v508
        %v734 = vunpack.c.l.b16 %v509
        %v735 = vunpack.c.h.b16 %v509
        %v736 = vunpack.c.l.b16 %v510
        %v737 = vunpack.c.h.b16 %v510
        %v738 = vpack.c.b16 %v614, %v610
        %v739 = vpack.c.b16 %v615, %v611
        %v740 = vpack.c.b16 %v616, %v612
        %v741 = vpack.c.b16 %v617, %v613
        %v742 = vpack.c.b16 %v622, %v618
        %v743 = vpack.c.b16 %v623, %v619
        %v744 = vpack.c.b16 %v624, %v620
        %v745 = vpack.c.b16 %v625, %v621
        %v746 = vpack.c.b16 %v630, %v626
        %v747 = vpack.c.b16 %v631, %v627
        %v748 = vpack.c.b16 %v632, %v628
        %v749 = vpack.c.b16 %v633, %v629
        %v750 = vpack.c.b16 %v638, %v634
        %v751 = vpack.c.b16 %v639, %v635
        %v752 = vpack.c.b16 %v640, %v636
        %v753 = vpack.c.b16 %v641, %v637
        %v754 = vpack.c.b16 %v646, %v642
        %v755 = vpack.c.b16 %v647, %v643
        %v756 = vpack.c.b16 %v648, %v644
        %v757 = vpack.c.b16 %v649, %v645
        %v758 = vpack.c.b16 %v654, %v650
        %v759 = vpack.c.b16 %v655, %v651
        %v760 = vpack.c.b16 %v656, %v652
        %v761 = vpack.c.b16 %v657, %v653
        %v762 = vpack.c.b16 %v662, %v658
        %v763 = vpack.c.b16 %v663, %v659
        %v764 = vpack.c.b16 %v664, %v660
        %v765 = vpack.c.b16 %v665, %v661
        %v766 = vpack.c.b16 %v670, %v666
        %v767 = vpack.c.b16 %v671, %v667
        %v768 = vpack.c.b16 %v672, %v668
        %v769 = vpack.c.b16 %v673, %v669
        %v770 = vpack.c.b16 %v678, %v674
        %v771 = vpack.c.b16 %v679, %v675
        %v772 = vpack.c.b16 %v680, %v676
        %v773 = vpack.c.b16 %v681, %v677
        %v774 = vpack.c.b16 %v686, %v682
        %v775 = vpack.c.b16 %v687, %v683
        %v776 = vpack.c.b16 %v688, %v684
        %v777 = vpack.c.b16 %v689, %v685
        %v778 = vpack.c.b16 %v694, %v690
        %v779 = vpack.c.b16 %v695, %v691
        %v780 = vpack.c.b16 %v696, %v692
        %v781 = vpack.c.b16 %v697, %v693
        %v782 = vpack.c.b16 %v702, %v698
        %v783 = vpack.c.b16 %v703, %v699
        %v784 = vpack.c.b16 %v704, %v700
        %v785 = vpack.c.b16 %v705, %v701
        %v786 = vpack.c.b16 %v710, %v706
        %v787 = vpack.c.b16 %v711, %v707
        %v788 = vpack.c.b16 %v712, %v708
        %v789 = vpack.c.b16 %v713, %v709
        %v790 = vpack.c.b16 %v718, %v714
        %v791 = vpack.c.b16 %v719, %v715
        %v792 = vpack.c.b16 %v720, %v716
        %v793 = vpack.c.b16 %v721, %v717
        %v794 = vpack.c.b16 %v726, %v722
        %v795 = vpack.c.b16 %v727, %v723
        %v796 = vpack.c.b16 %v728, %v724
        %v797 = vpack.c.b16 %v729, %v725
        %v798 = vpack.c.b16 %v734, %v730
        %v799 = vpack.c.b16 %v735, %v731
        %v800 = vpack.c.b16 %v736, %v732
        %v801 = vpack.c.b16 %v737, %v733
        %866 = vmatprep.subr.bf16.mxu0 %v739
        %867 = vmatpush1.bf16.msra.mxu0 %v738
        %868 = vmatprep.subr.bf16.mxu0 %v743
        %869 = vmatpush1.bf16.msra.mxu0 %v742
        %870 = vmatprep.subr.bf16.mxu0 %v747
        %871 = vmatpush1.bf16.msra.mxu0 %v746
        %872 = vmatprep.subr.bf16.mxu0 %v751
        %873 = vmatpush1.bf16.msra.mxu0 %v750
        %874 = vmatprep.subr.bf16.mxu0 %v755
        %875 = vmatpush1.bf16.msra.mxu0 %v754
        %876 = vmatprep.subr.bf16.mxu0 %v759
        %877 = vmatpush1.bf16.msra.mxu0 %v758
        %878 = vmatprep.subr.bf16.mxu0 %v763
        %879 = vmatpush1.bf16.msra.mxu0 %v762
        %880 = vmatprep.subr.bf16.mxu0 %v767
        %881 = vmatpush1.bf16.msra.mxu0 %v766
        %882 = vmatprep.subr.bf16.mxu0 %v771
        %883 = vmatpush1.bf16.msra.mxu0 %v770
        %884 = vmatprep.subr.bf16.mxu0 %v775
        %885 = vmatpush1.bf16.msra.mxu0 %v774
        %886 = vmatprep.subr.bf16.mxu0 %v779
        %887 = vmatpush1.bf16.msra.mxu0 %v778
        %888 = vmatprep.subr.bf16.mxu0 %v783
        %889 = vmatpush1.bf16.msra.mxu0 %v782
        %890 = vmatprep.subr.bf16.mxu0 %v787
        %891 = vmatpush1.bf16.msra.mxu0 %v786
        %892 = vmatprep.subr.bf16.mxu0 %v791
        %893 = vmatpush1.bf16.msra.mxu0 %v790
        %894 = vmatprep.subr.bf16.mxu0 %v795
        %895 = vmatpush1.bf16.msra.mxu0 %v794
        %896 = vmatprep.subr.bf16.mxu0 %v799
        %897 = vmatpush1.bf16.msra.mxu0 %v798
        %898 = vmatprep.mubr.bf16.mxu0 %v535
        %899 = vmatmul.mubr.bf16.gmra.mrb[0].mxu0 %v523
        %v900 = vpop.f32.mrb[0].mxu0
        %v901 = vadd.f32 0.0, %v900
        %v902 = vpop.f32.mrb[0].mxu0
        %v903 = vadd.f32 0.0, %v902
        %v904 = vpop.f32.mrb[0].mxu0
        %v905 = vadd.f32 0.0, %v904
        %v906 = vpop.f32.mrb[0].mxu0
        %v907 = vadd.f32 0.0, %v906
        %908 = vmatprep.mubr.bf16.mxu0 %v541
        %909 = vmatmul.mubr.bf16.gmra.mrb[0].mxu0 %v538
        %v910 = vpop.f32.mrb[0].mxu0
        %v911 = vadd.f32 0.0, %v910
        %v912 = vpop.f32.mrb[0].mxu0
        %v913 = vadd.f32 0.0, %v912
        %v914 = vpop.f32.mrb[0].mxu0
        %v915 = vpop.f32.mrb[0].mxu0
        %916 = vdwg.mxu0
        %917 = vmatprep.subr.bf16.mxu0 %v741
        %918 = vmatpush1.bf16.msra.mxu0 %v740
        %919 = vmatprep.subr.bf16.mxu0 %v745
        %920 = vmatpush1.bf16.msra.mxu0 %v744
        %921 = vmatprep.subr.bf16.mxu0 %v749
        %922 = vmatpush1.bf16.msra.mxu0 %v748
        %923 = vmatprep.subr.bf16.mxu0 %v753
        %924 = vmatpush1.bf16.msra.mxu0 %v752
        %925 = vmatprep.subr.bf16.mxu0 %v757
        %926 = vmatpush1.bf16.msra.mxu0 %v756
        %927 = vmatprep.subr.bf16.mxu0 %v761
        %928 = vmatpush1.bf16.msra.mxu0 %v760
        %929 = vmatprep.subr.bf16.mxu0 %v765
        %930 = vmatpush1.bf16.msra.mxu0 %v764
        %931 = vmatprep.subr.bf16.mxu0 %v769
        %932 = vmatpush1.bf16.msra.mxu0 %v768
        %933 = vmatprep.subr.bf16.mxu0 %v773
        %934 = vmatpush1.bf16.msra.mxu0 %v772
        %935 = vmatprep.subr.bf16.mxu0 %v777
        %936 = vmatpush1.bf16.msra.mxu0 %v776
        %937 = vmatprep.subr.bf16.mxu0 %v781
        %938 = vmatpush1.bf16.msra.mxu0 %v780
        %939 = vmatprep.subr.bf16.mxu0 %v785
        %940 = vmatpush1.bf16.msra.mxu0 %v784
        %941 = vmatprep.subr.bf16.mxu0 %v789
        %942 = vmatpush1.bf16.msra.mxu0 %v788
        %943 = vmatprep.subr.bf16.mxu0 %v793
        %944 = vmatpush1.bf16.msra.mxu0 %v792
        %945 = vmatprep.subr.bf16.mxu0 %v797
        %946 = vmatpush1.bf16.msra.mxu0 %v796
        %947 = vmatprep.subr.bf16.mxu0 %v801
        %948 = vmatpush1.bf16.msra.mxu0 %v800
        %949 = vmatprep.mubr.bf16.mxu0 %v535
        %950 = vmatmul.mubr.bf16.gmra.mrb[0].mxu0 %v523
        %v951 = vpop.f32.mrb[0].mxu0
        %v952 = vadd.f32 0.0, %v951
        %v953 = vpop.f32.mrb[0].mxu0
        %v954 = vadd.f32 0.0, %v953
        %v955 = vpop.f32.mrb[0].mxu0
        %v956 = vadd.f32 0.0, %v955
        %v957 = vpop.f32.mrb[0].mxu0
        %v958 = vadd.f32 0.0, %v957
        %959 = vmatprep.mubr.bf16.mxu0 %v541
        %960 = vmatmul.mubr.bf16.gmra.mrb[0].mxu0 %v538
        %v961 = vpop.f32.mrb[0].mxu0
        %v962 = vadd.f32 0.0, %v961
        %v963 = vpop.f32.mrb[0].mxu0
        %v964 = vadd.f32 0.0, %v963
        %v965 = vpop.f32.mrb[0].mxu0
        %v966 = vpop.f32.mrb[0].mxu0
        %967 = vdwg.mxu0
        %v1032 = vunpack.c.l.b16 %v383
        %v1033 = vunpack.c.h.b16 %v383
        %v1034 = vunpack.c.l.b16 %v384
        %v1035 = vunpack.c.h.b16 %v384
        %v1036 = vunpack.c.l.b16 %v385
        %v1037 = vunpack.c.h.b16 %v385
        %v1038 = vunpack.c.l.b16 %v386
        %v1039 = vunpack.c.h.b16 %v386
        %v1040 = vunpack.c.l.b16 %v387
        %v1041 = vunpack.c.h.b16 %v387
        %v1042 = vunpack.c.l.b16 %v388
        %v1043 = vunpack.c.h.b16 %v388
        %v1044 = vunpack.c.l.b16 %v389
        %v1045 = vunpack.c.h.b16 %v389
        %v1046 = vunpack.c.l.b16 %v390
        %v1047 = vunpack.c.h.b16 %v390
        %v1048 = vunpack.c.l.b16 %v391
        %v1049 = vunpack.c.h.b16 %v391
        %v1050 = vunpack.c.l.b16 %v392
        %v1051 = vunpack.c.h.b16 %v392
        %v1052 = vunpack.c.l.b16 %v393
        %v1053 = vunpack.c.h.b16 %v393
        %v1054 = vunpack.c.l.b16 %v394
        %v1055 = vunpack.c.h.b16 %v394
        %v1056 = vunpack.c.l.b16 %v395
        %v1057 = vunpack.c.h.b16 %v395
        %v1058 = vunpack.c.l.b16 %v396
        %v1059 = vunpack.c.h.b16 %v396
        %v1060 = vunpack.c.l.b16 %v397
        %v1061 = vunpack.c.h.b16 %v397
        %v1062 = vunpack.c.l.b16 %v398
        %v1063 = vunpack.c.h.b16 %v398
        %v1064 = vunpack.c.l.b16 %v399
        %v1065 = vunpack.c.h.b16 %v399
        %v1066 = vunpack.c.l.b16 %v400
        %v1067 = vunpack.c.h.b16 %v400
        %v1068 = vunpack.c.l.b16 %v401
        %v1069 = vunpack.c.h.b16 %v401
        %v1070 = vunpack.c.l.b16 %v402
        %v1071 = vunpack.c.h.b16 %v402
        %v1072 = vunpack.c.l.b16 %v403
        %v1073 = vunpack.c.h.b16 %v403
        %v1074 = vunpack.c.l.b16 %v404
        %v1075 = vunpack.c.h.b16 %v404
        %v1076 = vunpack.c.l.b16 %v405
        %v1077 = vunpack.c.h.b16 %v405
        %v1078 = vunpack.c.l.b16 %v406
        %v1079 = vunpack.c.h.b16 %v406
        %v1080 = vunpack.c.l.b16 %v407
        %v1081 = vunpack.c.h.b16 %v407
        %v1082 = vunpack.c.l.b16 %v408
        %v1083 = vunpack.c.h.b16 %v408
        %v1084 = vunpack.c.l.b16 %v409
        %v1085 = vunpack.c.h.b16 %v409
        %v1086 = vunpack.c.l.b16 %v410
        %v1087 = vunpack.c.h.b16 %v410
        %v1088 = vunpack.c.l.b16 %v411
        %v1089 = vunpack.c.h.b16 %v411
        %v1090 = vunpack.c.l.b16 %v412
        %v1091 = vunpack.c.h.b16 %v412
        %v1092 = vunpack.c.l.b16 %v413
        %v1093 = vunpack.c.h.b16 %v413
        %v1094 = vunpack.c.l.b16 %v414
        %v1095 = vunpack.c.h.b16 %v414
        %v1096 = vunpack.c.l.b16 %v415
        %v1097 = vunpack.c.h.b16 %v415
        %v1098 = vunpack.c.l.b16 %v416
        %v1099 = vunpack.c.h.b16 %v416
        %v1100 = vunpack.c.l.b16 %v417
        %v1101 = vunpack.c.h.b16 %v417
        %v1102 = vunpack.c.l.b16 %v418
        %v1103 = vunpack.c.h.b16 %v418
        %v1104 = vunpack.c.l.b16 %v419
        %v1105 = vunpack.c.h.b16 %v419
        %v1106 = vunpack.c.l.b16 %v420
        %v1107 = vunpack.c.h.b16 %v420
        %v1108 = vunpack.c.l.b16 %v421
        %v1109 = vunpack.c.h.b16 %v421
        %v1110 = vunpack.c.l.b16 %v422
        %v1111 = vunpack.c.h.b16 %v422
        %v1112 = vunpack.c.l.b16 %v423
        %v1113 = vunpack.c.h.b16 %v423
        %v1114 = vunpack.c.l.b16 %v424
        %v1115 = vunpack.c.h.b16 %v424
        %v1116 = vunpack.c.l.b16 %v425
        %v1117 = vunpack.c.h.b16 %v425
        %v1118 = vunpack.c.l.b16 %v426
        %v1119 = vunpack.c.h.b16 %v426
        %v1120 = vunpack.c.l.b16 %v427
        %v1121 = vunpack.c.h.b16 %v427
        %v1122 = vunpack.c.l.b16 %v428
        %v1123 = vunpack.c.h.b16 %v428
        %v1124 = vunpack.c.l.b16 %v429
        %v1125 = vunpack.c.h.b16 %v429
        %v1126 = vunpack.c.l.b16 %v430
        %v1127 = vunpack.c.h.b16 %v430
        %v1128 = vunpack.c.l.b16 %v431
        %v1129 = vunpack.c.h.b16 %v431
        %v1130 = vunpack.c.l.b16 %v432
        %v1131 = vunpack.c.h.b16 %v432
        %v1132 = vunpack.c.l.b16 %v433
        %v1133 = vunpack.c.h.b16 %v433
        %v1134 = vunpack.c.l.b16 %v434
        %v1135 = vunpack.c.h.b16 %v434
        %v1136 = vunpack.c.l.b16 %v435
        %v1137 = vunpack.c.h.b16 %v435
        %v1138 = vunpack.c.l.b16 %v436
        %v1139 = vunpack.c.h.b16 %v436
        %v1140 = vunpack.c.l.b16 %v437
        %v1141 = vunpack.c.h.b16 %v437
        %v1142 = vunpack.c.l.b16 %v438
        %v1143 = vunpack.c.h.b16 %v438
        %v1144 = vunpack.c.l.b16 %v439
        %v1145 = vunpack.c.h.b16 %v439
        %v1146 = vunpack.c.l.b16 %v440
        %v1147 = vunpack.c.h.b16 %v440
        %v1148 = vunpack.c.l.b16 %v441
        %v1149 = vunpack.c.h.b16 %v441
        %v1150 = vunpack.c.l.b16 %v442
        %v1151 = vunpack.c.h.b16 %v442
        %v1152 = vunpack.c.l.b16 %v443
        %v1153 = vunpack.c.h.b16 %v443
        %v1154 = vunpack.c.l.b16 %v444
        %v1155 = vunpack.c.h.b16 %v444
        %v1156 = vunpack.c.l.b16 %v445
        %v1157 = vunpack.c.h.b16 %v445
        %v1158 = vunpack.c.l.b16 %v446
        %v1159 = vunpack.c.h.b16 %v446
        %v1160 = vpack.c.b16 %v1036, %v1032
        %v1161 = vpack.c.b16 %v1037, %v1033
        %v1162 = vpack.c.b16 %v1038, %v1034
        %v1163 = vpack.c.b16 %v1039, %v1035
        %v1164 = vpack.c.b16 %v1044, %v1040
        %v1165 = vpack.c.b16 %v1045, %v1041
        %v1166 = vpack.c.b16 %v1046, %v1042
        %v1167 = vpack.c.b16 %v1047, %v1043
        %v1168 = vpack.c.b16 %v1052, %v1048
        %v1169 = vpack.c.b16 %v1053, %v1049
        %v1170 = vpack.c.b16 %v1054, %v1050
        %v1171 = vpack.c.b16 %v1055, %v1051
        %v1172 = vpack.c.b16 %v1060, %v1056
        %v1173 = vpack.c.b16 %v1061, %v1057
        %v1174 = vpack.c.b16 %v1062, %v1058
        %v1175 = vpack.c.b16 %v1063, %v1059
        %v1176 = vpack.c.b16 %v1068, %v1064
        %v1177 = vpack.c.b16 %v1069, %v1065
        %v1178 = vpack.c.b16 %v1070, %v1066
        %v1179 = vpack.c.b16 %v1071, %v1067
        %v1180 = vpack.c.b16 %v1076, %v1072
        %v1181 = vpack.c.b16 %v1077, %v1073
        %v1182 = vpack.c.b16 %v1078, %v1074
        %v1183 = vpack.c.b16 %v1079, %v1075
        %v1184 = vpack.c.b16 %v1084, %v1080
        %v1185 = vpack.c.b16 %v1085, %v1081
        %v1186 = vpack.c.b16 %v1086, %v1082
        %v1187 = vpack.c.b16 %v1087, %v1083
        %v1188 = vpack.c.b16 %v1092, %v1088
        %v1189 = vpack.c.b16 %v1093, %v1089
        %v1190 = vpack.c.b16 %v1094, %v1090
        %v1191 = vpack.c.b16 %v1095, %v1091
        %v1192 = vpack.c.b16 %v1100, %v1096
        %v1193 = vpack.c.b16 %v1101, %v1097
        %v1194 = vpack.c.b16 %v1102, %v1098
        %v1195 = vpack.c.b16 %v1103, %v1099
        %v1196 = vpack.c.b16 %v1108, %v1104
        %v1197 = vpack.c.b16 %v1109, %v1105
        %v1198 = vpack.c.b16 %v1110, %v1106
        %v1199 = vpack.c.b16 %v1111, %v1107
        %v1200 = vpack.c.b16 %v1116, %v1112
        %v1201 = vpack.c.b16 %v1117, %v1113
        %v1202 = vpack.c.b16 %v1118, %v1114
        %v1203 = vpack.c.b16 %v1119, %v1115
        %v1204 = vpack.c.b16 %v1124, %v1120
        %v1205 = vpack.c.b16 %v1125, %v1121
        %v1206 = vpack.c.b16 %v1126, %v1122
        %v1207 = vpack.c.b16 %v1127, %v1123
        %v1208 = vpack.c.b16 %v1132, %v1128
        %v1209 = vpack.c.b16 %v1133, %v1129
        %v1210 = vpack.c.b16 %v1134, %v1130
        %v1211 = vpack.c.b16 %v1135, %v1131
        %v1212 = vpack.c.b16 %v1140, %v1136
        %v1213 = vpack.c.b16 %v1141, %v1137
        %v1214 = vpack.c.b16 %v1142, %v1138
        %v1215 = vpack.c.b16 %v1143, %v1139
        %v1216 = vpack.c.b16 %v1148, %v1144
        %v1217 = vpack.c.b16 %v1149, %v1145
        %v1218 = vpack.c.b16 %v1150, %v1146
        %v1219 = vpack.c.b16 %v1151, %v1147
        %v1220 = vpack.c.b16 %v1156, %v1152
        %v1221 = vpack.c.b16 %v1157, %v1153
        %v1222 = vpack.c.b16 %v1158, %v1154
        %v1223 = vpack.c.b16 %v1159, %v1155
        %1288 = vmatprep.subr.bf16.mxu0 %v1161
        %1289 = vmatpush1.bf16.msra.mxu0 %v1160
        %1290 = vmatprep.subr.bf16.mxu0 %v1165
        %1291 = vmatpush1.bf16.msra.mxu0 %v1164
        %1292 = vmatprep.subr.bf16.mxu0 %v1169
        %1293 = vmatpush1.bf16.msra.mxu0 %v1168
        %1294 = vmatprep.subr.bf16.mxu0 %v1173
        %1295 = vmatpush1.bf16.msra.mxu0 %v1172
        %1296 = vmatprep.subr.bf16.mxu0 %v1177
        %1297 = vmatpush1.bf16.msra.mxu0 %v1176
        %1298 = vmatprep.subr.bf16.mxu0 %v1181
        %1299 = vmatpush1.bf16.msra.mxu0 %v1180
        %1300 = vmatprep.subr.bf16.mxu0 %v1185
        %1301 = vmatpush1.bf16.msra.mxu0 %v1184
        %1302 = vmatprep.subr.bf16.mxu0 %v1189
        %1303 = vmatpush1.bf16.msra.mxu0 %v1188
        %1304 = vmatprep.subr.bf16.mxu0 %v1193
        %1305 = vmatpush1.bf16.msra.mxu0 %v1192
        %1306 = vmatprep.subr.bf16.mxu0 %v1197
        %1307 = vmatpush1.bf16.msra.mxu0 %v1196
        %1308 = vmatprep.subr.bf16.mxu0 %v1201
        %1309 = vmatpush1.bf16.msra.mxu0 %v1200
        %1310 = vmatprep.subr.bf16.mxu0 %v1205
        %1311 = vmatpush1.bf16.msra.mxu0 %v1204
        %1312 = vmatprep.subr.bf16.mxu0 %v1209
        %1313 = vmatpush1.bf16.msra.mxu0 %v1208
        %1314 = vmatprep.subr.bf16.mxu0 %v1213
        %1315 = vmatpush1.bf16.msra.mxu0 %v1212
        %1316 = vmatprep.subr.bf16.mxu0 %v1217
        %1317 = vmatpush1.bf16.msra.mxu0 %v1216
        %1318 = vmatprep.subr.bf16.mxu0 %v1221
        %1319 = vmatpush1.bf16.msra.mxu0 %v1220
        %1320 = vmatprep.mubr.bf16.mxu0 %v354
        %1321 = vmatmul.mubr.bf16.gmra.mrb[0].mxu0 %v353
        %v1322 = vpop.f32.mrb[0].mxu0
        %v1323 = vadd.f32 %v901, %v1322
        %v1324 = vpop.f32.mrb[0].mxu0
        %v1325 = vadd.f32 %v903, %v1324
        %v1326 = vpop.f32.mrb[0].mxu0
        %v1327 = vadd.f32 %v905, %v1326
        %v1328 = vpop.f32.mrb[0].mxu0
        %v1329 = vadd.f32 %v907, %v1328
        %1330 = vmatprep.mubr.bf16.mxu0 %v356
        %1331 = vmatmul.mubr.bf16.gmra.mrb[0].mxu0 %v355
        %v1332 = vpop.f32.mrb[0].mxu0
        %v1333 = vadd.f32 %v911, %v1332
        %v1334 = vpop.f32.mrb[0].mxu0
        %v1335 = vadd.f32 %v913, %v1334
        %v1336 = vpop.f32.mrb[0].mxu0
        %v1337 = vpop.f32.mrb[0].mxu0
        %1338 = vdwg.mxu0
        %1339 = vmatprep.subr.bf16.mxu0 %v1163
        %1340 = vmatpush1.bf16.msra.mxu0 %v1162
        %1341 = vmatprep.subr.bf16.mxu0 %v1167
        %1342 = vmatpush1.bf16.msra.mxu0 %v1166
        %1343 = vmatprep.subr.bf16.mxu0 %v1171
        %1344 = vmatpush1.bf16.msra.mxu0 %v1170
        %1345 = vmatprep.subr.bf16.mxu0 %v1175
        %1346 = vmatpush1.bf16.msra.mxu0 %v1174
        %1347 = vmatprep.subr.bf16.mxu0 %v1179
        %1348 = vmatpush1.bf16.msra.mxu0 %v1178
        %1349 = vmatprep.subr.bf16.mxu0 %v1183
        %1350 = vmatpush1.bf16.msra.mxu0 %v1182
        %1351 = vmatprep.subr.bf16.mxu0 %v1187
        %1352 = vmatpush1.bf16.msra.mxu0 %v1186
        %1353 = vmatprep.subr.bf16.mxu0 %v1191
        %1354 = vmatpush1.bf16.msra.mxu0 %v1190
        %1355 = vmatprep.subr.bf16.mxu0 %v1195
        %1356 = vmatpush1.bf16.msra.mxu0 %v1194
        %1357 = vmatprep.subr.bf16.mxu0 %v1199
        %1358 = vmatpush1.bf16.msra.mxu0 %v1198
        %1359 = vmatprep.subr.bf16.mxu0 %v1203
        %1360 = vmatpush1.bf16.msra.mxu0 %v1202
        %1361 = vmatprep.subr.bf16.mxu0 %v1207
        %1362 = vmatpush1.bf16.msra.mxu0 %v1206
        %1363 = vmatprep.subr.bf16.mxu0 %v1211
        %1364 = vmatpush1.bf16.msra.mxu0 %v1210
        %1365 = vmatprep.subr.bf16.mxu0 %v1215
        %1366 = vmatpush1.bf16.msra.mxu0 %v1214
        %1367 = vmatprep.subr.bf16.mxu0 %v1219
        %1368 = vmatpush1.bf16.msra.mxu0 %v1218
        %1369 = vmatprep.subr.bf16.mxu0 %v1223
        %1370 = vmatpush1.bf16.msra.mxu0 %v1222
        %1371 = vmatprep.mubr.bf16.mxu0 %v354
        %1372 = vmatmul.mubr.bf16.gmra.mrb[0].mxu0 %v353
        %v1373 = vpop.f32.mrb[0].mxu0
        %v1374 = vadd.f32 %v952, %v1373
        %v1375 = vpop.f32.mrb[0].mxu0
        %v1376 = vadd.f32 %v954, %v1375
        %v1377 = vpop.f32.mrb[0].mxu0
        %v1378 = vadd.f32 %v956, %v1377
        %v1379 = vpop.f32.mrb[0].mxu0
        %v1380 = vadd.f32 %v958, %v1379
        %1381 = vmatprep.mubr.bf16.mxu0 %v356
        %1382 = vmatmul.mubr.bf16.gmra.mrb[0].mxu0 %v355
        %v1383 = vpop.f32.mrb[0].mxu0
        %v1384 = vadd.f32 %v962, %v1383
        %v1385 = vpop.f32.mrb[0].mxu0
        %v1386 = vadd.f32 %v964, %v1385
        %v1387 = vpop.f32.mrb[0].mxu0
        %v1388 = vpop.f32.mrb[0].mxu0
        %1389 = vdwg.mxu0
        %v1390 = vld [vmem:[%s3] sm:$0xff]
        %v1391 = vld [vmem:[%s3 + $0x8] sm:$0xff]
        %v1392 = vld [vmem:[%s3 + $0x10] sm:$0xff]
        %v1393 = vld [vmem:[%s3 + $0x18] sm:$0xff]
        %v1394 = vld [vmem:[%s3 + $0x20] sm:$0xff]
        %v1395 = vld [vmem:[%s3 + $0x28] sm:$0xff]
        %v1396 = vld [vmem:[%s3 + $0x30] sm:$0xff]
        %v1397 = vld [vmem:[%s3 + $0x38] sm:$0xff]
        %v1398 = vld [vmem:[%s3 + $0x40] sm:$0xff]
        %v1399 = vld [vmem:[%s3 + $0x48] sm:$0xff]
        %v1400 = vld [vmem:[%s3 + $0x50] sm:$0xff]
        %v1401 = vld [vmem:[%s3 + $0x58] sm:$0xff]
        %v1402 = vld [vmem:[%s3 + $0x60] sm:$0xff]
        %v1403 = vld [vmem:[%s3 + $0x68] sm:$0xff]
        %v1404 = vld [vmem:[%s3 + $0x70] sm:$0xff]
        %v1405 = vld [vmem:[%s3 + $0x78] sm:$0xff]
        %v1406 = vld [vmem:[%s3 + $0x80] sm:$0xff]
        %v1407 = vld [vmem:[%s3 + $0x88] sm:$0xff]
        %v1408 = vld [vmem:[%s3 + $0x90] sm:$0xff]
        %v1409 = vld [vmem:[%s3 + $0x98] sm:$0xff]
        %v1410 = vld [vmem:[%s3 + $0xa0] sm:$0xff]
        %v1411 = vld [vmem:[%s3 + $0xa8] sm:$0xff]
        %v1412 = vld [vmem:[%s3 + $0xb0] sm:$0xff]
        %v1413 = vld [vmem:[%s3 + $0xb8] sm:$0xff]
        %v1414 = vld [vmem:[%s3 + $0xc0] sm:$0xff]
        %v1415 = vld [vmem:[%s3 + $0xc8] sm:$0xff]
        %v1416 = vld [vmem:[%s3 + $0xd0] sm:$0xff]
        %v1417 = vld [vmem:[%s3 + $0xd8] sm:$0xff]
        %v1418 = vld [vmem:[%s3 + $0xe0] sm:$0xff]
        %v1419 = vld [vmem:[%s3 + $0xe8] sm:$0xff]
        %v1420 = vld [vmem:[%s3 + $0xf0] sm:$0xff]
        %v1421 = vld [vmem:[%s3 + $0xf8] sm:$0xff]
        %v1422 = vld [vmem:[%s3 + $0x100] sm:$0xff]
        %v1423 = vld [vmem:[%s3 + $0x108] sm:$0xff]
        %v1424 = vld [vmem:[%s3 + $0x110] sm:$0xff]
        %v1425 = vld [vmem:[%s3 + $0x118] sm:$0xff]
        %v1426 = vld [vmem:[%s3 + $0x120] sm:$0xff]
        %v1427 = vld [vmem:[%s3 + $0x128] sm:$0xff]
        %v1428 = vld [vmem:[%s3 + $0x130] sm:$0xff]
        %v1429 = vld [vmem:[%s3 + $0x138] sm:$0xff]
        %v1430 = vld [vmem:[%s3 + $0x140] sm:$0xff]
        %v1431 = vld [vmem:[%s3 + $0x148] sm:$0xff]
        %v1432 = vld [vmem:[%s3 + $0x150] sm:$0xff]
        %v1433 = vld [vmem:[%s3 + $0x158] sm:$0xff]
        %v1434 = vld [vmem:[%s3 + $0x160] sm:$0xff]
        %v1435 = vld [vmem:[%s3 + $0x168] sm:$0xff]
        %v1436 = vld [vmem:[%s3 + $0x170] sm:$0xff]
        %v1437 = vld [vmem:[%s3 + $0x178] sm:$0xff]
        %v1438 = vld [vmem:[%s3 + $0x180] sm:$0xff]
        %v1439 = vld [vmem:[%s3 + $0x188] sm:$0xff]
        %v1440 = vld [vmem:[%s3 + $0x190] sm:$0xff]
        %v1441 = vld [vmem:[%s3 + $0x198] sm:$0xff]
        %v1442 = vld [vmem:[%s3 + $0x1a0] sm:$0xff]
        %v1443 = vld [vmem:[%s3 + $0x1a8] sm:$0xff]
        %v1444 = vld [vmem:[%s3 + $0x1b0] sm:$0xff]
        %v1445 = vld [vmem:[%s3 + $0x1b8] sm:$0xff]
        %v1446 = vld [vmem:[%s3 + $0x1c0] sm:$0xff]
        %v1447 = vld [vmem:[%s3 + $0x1c8] sm:$0xff]
        %v1448 = vld [vmem:[%s3 + $0x1d0] sm:$0xff]
        %v1449 = vld [vmem:[%s3 + $0x1d8] sm:$0xff]
        %v1450 = vld [vmem:[%s3 + $0x1e0] sm:$0xff]
        %v1451 = vld [vmem:[%s3 + $0x1e8] sm:$0xff]
        %v1452 = vld [vmem:[%s3 + $0x1f0] sm:$0xff]
        %v1453 = vld [vmem:[%s3 + $0x1f8] sm:$0xff]
        %vm1454 = vsmask.f32 5376
        %v1456 = vshrl.u32 %v371, 16
        %v1458 = vrot.slane %v1456, 2
        %v1459 = vshll.u32 %v371, 16
        %v1461 = vrot.slane %v1459, 3
        %v1462 = vor.u32 %v1458, %v1461
        %v1464 = vshrl.u32 %v373, 16
        %v1466 = vrot.slane %v1464, 2
        %v1467 = vshll.u32 %v373, 16
        %v1469 = vrot.slane %v1467, 3
        %v1470 = vor.u32 %v1466, %v1469
        %v1471 = vsel %vm1454, %v1462, %v1470
        %v1473 = vshrl.u32 %v372, 16
        %v1475 = vrot.slane %v1473, 2
        %v1476 = vshll.u32 %v372, 16
        %v1478 = vrot.slane %v1476, 3
        %v1479 = vor.u32 %v1475, %v1478
        %v1481 = vshrl.u32 %v374, 16
        %v1483 = vrot.slane %v1481, 2
        %v1484 = vshll.u32 %v374, 16
        %v1486 = vrot.slane %v1484, 3
        %v1487 = vor.u32 %v1483, %v1486
        %v1488 = vsel %vm1454, %v1479, %v1487
        %v1557 = vunpack.c.l.b16 %v1390
        %v1558 = vunpack.c.h.b16 %v1390
        %v1559 = vunpack.c.l.b16 %v1391
        %v1560 = vunpack.c.h.b16 %v1391
        %v1561 = vunpack.c.l.b16 %v1392
        %v1562 = vunpack.c.h.b16 %v1392
        %v1563 = vunpack.c.l.b16 %v1393
        %v1564 = vunpack.c.h.b16 %v1393
        %v1565 = vunpack.c.l.b16 %v1394
        %v1566 = vunpack.c.h.b16 %v1394
        %v1567 = vunpack.c.l.b16 %v1395
        %v1568 = vunpack.c.h.b16 %v1395
        %v1569 = vunpack.c.l.b16 %v1396
        %v1570 = vunpack.c.h.b16 %v1396
        %v1571 = vunpack.c.l.b16 %v1397
        %v1572 = vunpack.c.h.b16 %v1397
        %v1573 = vunpack.c.l.b16 %v1398
        %v1574 = vunpack.c.h.b16 %v1398
        %v1575 = vunpack.c.l.b16 %v1399
        %v1576 = vunpack.c.h.b16 %v1399
        %v1577 = vunpack.c.l.b16 %v1400
        %v1578 = vunpack.c.h.b16 %v1400
        %v1579 = vunpack.c.l.b16 %v1401
        %v1580 = vunpack.c.h.b16 %v1401
        %v1581 = vunpack.c.l.b16 %v1402
        %v1582 = vunpack.c.h.b16 %v1402
        %v1583 = vunpack.c.l.b16 %v1403
        %v1584 = vunpack.c.h.b16 %v1403
        %v1585 = vunpack.c.l.b16 %v1404
        %v1586 = vunpack.c.h.b16 %v1404
        %v1587 = vunpack.c.l.b16 %v1405
        %v1588 = vunpack.c.h.b16 %v1405
        %v1589 = vunpack.c.l.b16 %v1406
        %v1590 = vunpack.c.h.b16 %v1406
        %v1591 = vunpack.c.l.b16 %v1407
        %v1592 = vunpack.c.h.b16 %v1407
        %v1593 = vunpack.c.l.b16 %v1408
        %v1594 = vunpack.c.h.b16 %v1408
        %v1595 = vunpack.c.l.b16 %v1409
        %v1596 = vunpack.c.h.b16 %v1409
        %v1597 = vunpack.c.l.b16 %v1410
        %v1598 = vunpack.c.h.b16 %v1410
        %v1599 = vunpack.c.l.b16 %v1411
        %v1600 = vunpack.c.h.b16 %v1411
        %v1601 = vunpack.c.l.b16 %v1412
        %v1602 = vunpack.c.h.b16 %v1412
        %v1603 = vunpack.c.l.b16 %v1413
        %v1604 = vunpack.c.h.b16 %v1413
        %v1605 = vunpack.c.l.b16 %v1414
        %v1606 = vunpack.c.h.b16 %v1414
        %v1607 = vunpack.c.l.b16 %v1415
        %v1608 = vunpack.c.h.b16 %v1415
        %v1609 = vunpack.c.l.b16 %v1416
        %v1610 = vunpack.c.h.b16 %v1416
        %v1611 = vunpack.c.l.b16 %v1417
        %v1612 = vunpack.c.h.b16 %v1417
        %v1613 = vunpack.c.l.b16 %v1418
        %v1614 = vunpack.c.h.b16 %v1418
        %v1615 = vunpack.c.l.b16 %v1419
        %v1616 = vunpack.c.h.b16 %v1419
        %v1617 = vunpack.c.l.b16 %v1420
        %v1618 = vunpack.c.h.b16 %v1420
        %v1619 = vunpack.c.l.b16 %v1421
        %v1620 = vunpack.c.h.b16 %v1421
        %v1621 = vunpack.c.l.b16 %v1422
        %v1622 = vunpack.c.h.b16 %v1422
        %v1623 = vunpack.c.l.b16 %v1423
        %v1624 = vunpack.c.h.b16 %v1423
        %v1625 = vunpack.c.l.b16 %v1424
        %v1626 = vunpack.c.h.b16 %v1424
        %v1627 = vunpack.c.l.b16 %v1425
        %v1628 = vunpack.c.h.b16 %v1425
        %v1629 = vunpack.c.l.b16 %v1426
        %v1630 = vunpack.c.h.b16 %v1426
        %v1631 = vunpack.c.l.b16 %v1427
        %v1632 = vunpack.c.h.b16 %v1427
        %v1633 = vunpack.c.l.b16 %v1428
        %v1634 = vunpack.c.h.b16 %v1428
        %v1635 = vunpack.c.l.b16 %v1429
        %v1636 = vunpack.c.h.b16 %v1429
        %v1637 = vunpack.c.l.b16 %v1430
        %v1638 = vunpack.c.h.b16 %v1430
        %v1639 = vunpack.c.l.b16 %v1431
        %v1640 = vunpack.c.h.b16 %v1431
        %v1641 = vunpack.c.l.b16 %v1432
        %v1642 = vunpack.c.h.b16 %v1432
        %v1643 = vunpack.c.l.b16 %v1433
        %v1644 = vunpack.c.h.b16 %v1433
        %v1645 = vunpack.c.l.b16 %v1434
        %v1646 = vunpack.c.h.b16 %v1434
        %v1647 = vunpack.c.l.b16 %v1435
        %v1648 = vunpack.c.h.b16 %v1435
        %v1649 = vunpack.c.l.b16 %v1436
        %v1650 = vunpack.c.h.b16 %v1436
        %v1651 = vunpack.c.l.b16 %v1437
        %v1652 = vunpack.c.h.b16 %v1437
        %v1653 = vunpack.c.l.b16 %v1438
        %v1654 = vunpack.c.h.b16 %v1438
        %v1655 = vunpack.c.l.b16 %v1439
        %v1656 = vunpack.c.h.b16 %v1439
        %v1657 = vunpack.c.l.b16 %v1440
        %v1658 = vunpack.c.h.b16 %v1440
        %v1659 = vunpack.c.l.b16 %v1441
        %v1660 = vunpack.c.h.b16 %v1441
        %v1661 = vunpack.c.l.b16 %v1442
        %v1662 = vunpack.c.h.b16 %v1442
        %v1663 = vunpack.c.l.b16 %v1443
        %v1664 = vunpack.c.h.b16 %v1443
        %v1665 = vunpack.c.l.b16 %v1444
        %v1666 = vunpack.c.h.b16 %v1444
        %v1667 = vunpack.c.l.b16 %v1445
        %v1668 = vunpack.c.h.b16 %v1445
        %v1669 = vunpack.c.l.b16 %v1446
        %v1670 = vunpack.c.h.b16 %v1446
        %v1671 = vunpack.c.l.b16 %v1447
        %v1672 = vunpack.c.h.b16 %v1447
        %v1673 = vunpack.c.l.b16 %v1448
        %v1674 = vunpack.c.h.b16 %v1448
        %v1675 = vunpack.c.l.b16 %v1449
        %v1676 = vunpack.c.h.b16 %v1449
        %v1677 = vunpack.c.l.b16 %v1450
        %v1678 = vunpack.c.h.b16 %v1450
        %v1679 = vunpack.c.l.b16 %v1451
        %v1680 = vunpack.c.h.b16 %v1451
        %v1681 = vunpack.c.l.b16 %v1452
        %v1682 = vunpack.c.h.b16 %v1452
        %v1683 = vunpack.c.l.b16 %v1453
        %v1684 = vunpack.c.h.b16 %v1453
        %v1685 = vpack.c.b16 %v1561, %v1557
        %v1686 = vpack.c.b16 %v1562, %v1558
        %v1687 = vpack.c.b16 %v1563, %v1559
        %v1688 = vpack.c.b16 %v1564, %v1560
        %v1689 = vpack.c.b16 %v1569, %v1565
        %v1690 = vpack.c.b16 %v1570, %v1566
        %v1691 = vpack.c.b16 %v1571, %v1567
        %v1692 = vpack.c.b16 %v1572, %v1568
        %v1693 = vpack.c.b16 %v1577, %v1573
        %v1694 = vpack.c.b16 %v1578, %v1574
        %v1695 = vpack.c.b16 %v1579, %v1575
        %v1696 = vpack.c.b16 %v1580, %v1576
        %v1697 = vpack.c.b16 %v1585, %v1581
        %v1698 = vpack.c.b16 %v1586, %v1582
        %v1699 = vpack.c.b16 %v1587, %v1583
        %v1700 = vpack.c.b16 %v1588, %v1584
        %v1701 = vpack.c.b16 %v1593, %v1589
        %v1702 = vpack.c.b16 %v1594, %v1590
        %v1703 = vpack.c.b16 %v1595, %v1591
        %v1704 = vpack.c.b16 %v1596, %v1592
        %v1705 = vpack.c.b16 %v1601, %v1597
        %v1706 = vpack.c.b16 %v1602, %v1598
        %v1707 = vpack.c.b16 %v1603, %v1599
        %v1708 = vpack.c.b16 %v1604, %v1600
        %v1709 = vpack.c.b16 %v1609, %v1605
        %v1710 = vpack.c.b16 %v1610, %v1606
        %v1711 = vpack.c.b16 %v1611, %v1607
        %v1712 = vpack.c.b16 %v1612, %v1608
        %v1713 = vpack.c.b16 %v1617, %v1613
        %v1714 = vpack.c.b16 %v1618, %v1614
        %v1715 = vpack.c.b16 %v1619, %v1615
        %v1716 = vpack.c.b16 %v1620, %v1616
        %v1717 = vpack.c.b16 %v1625, %v1621
        %v1718 = vpack.c.b16 %v1626, %v1622
        %v1719 = vpack.c.b16 %v1627, %v1623
        %v1720 = vpack.c.b16 %v1628, %v1624
        %v1721 = vpack.c.b16 %v1633, %v1629
        %v1722 = vpack.c.b16 %v1634, %v1630
        %v1723 = vpack.c.b16 %v1635, %v1631
        %v1724 = vpack.c.b16 %v1636, %v1632
        %v1725 = vpack.c.b16 %v1641, %v1637
        %v1726 = vpack.c.b16 %v1642, %v1638
        %v1727 = vpack.c.b16 %v1643, %v1639
        %v1728 = vpack.c.b16 %v1644, %v1640
        %v1729 = vpack.c.b16 %v1649, %v1645
        %v1730 = vpack.c.b16 %v1650, %v1646
        %v1731 = vpack.c.b16 %v1651, %v1647
        %v1732 = vpack.c.b16 %v1652, %v1648
        %v1733 = vpack.c.b16 %v1657, %v1653
        %v1734 = vpack.c.b16 %v1658, %v1654
        %v1735 = vpack.c.b16 %v1659, %v1655
        %v1736 = vpack.c.b16 %v1660, %v1656
        %v1737 = vpack.c.b16 %v1665, %v1661
        %v1738 = vpack.c.b16 %v1666, %v1662
        %v1739 = vpack.c.b16 %v1667, %v1663
        %v1740 = vpack.c.b16 %v1668, %v1664
        %v1741 = vpack.c.b16 %v1673, %v1669
        %v1742 = vpack.c.b16 %v1674, %v1670
        %v1743 = vpack.c.b16 %v1675, %v1671
        %v1744 = vpack.c.b16 %v1676, %v1672
        %v1745 = vpack.c.b16 %v1681, %v1677
        %v1746 = vpack.c.b16 %v1682, %v1678
        %v1747 = vpack.c.b16 %v1683, %v1679
        %v1748 = vpack.c.b16 %v1684, %v1680
        %1813 = vmatprep.subr.bf16.mxu0 %v1686
        %1814 = vmatpush1.bf16.msra.mxu0 %v1685
        %1815 = vmatprep.subr.bf16.mxu0 %v1690
        %1816 = vmatpush1.bf16.msra.mxu0 %v1689
        %1817 = vmatprep.subr.bf16.mxu0 %v1694
        %1818 = vmatpush1.bf16.msra.mxu0 %v1693
        %1819 = vmatprep.subr.bf16.mxu0 %v1698
        %1820 = vmatpush1.bf16.msra.mxu0 %v1697
        %1821 = vmatprep.subr.bf16.mxu0 %v1702
        %1822 = vmatpush1.bf16.msra.mxu0 %v1701
        %1823 = vmatprep.subr.bf16.mxu0 %v1706
        %1824 = vmatpush1.bf16.msra.mxu0 %v1705
        %1825 = vmatprep.subr.bf16.mxu0 %v1710
        %1826 = vmatpush1.bf16.msra.mxu0 %v1709
        %1827 = vmatprep.subr.bf16.mxu0 %v1714
        %1828 = vmatpush1.bf16.msra.mxu0 %v1713
        %1829 = vmatprep.subr.bf16.mxu0 %v1718
        %1830 = vmatpush1.bf16.msra.mxu0 %v1717
        %1831 = vmatprep.subr.bf16.mxu0 %v1722
        %1832 = vmatpush1.bf16.msra.mxu0 %v1721
        %1833 = vmatprep.subr.bf16.mxu0 %v1726
        %1834 = vmatpush1.bf16.msra.mxu0 %v1725
        %1835 = vmatprep.subr.bf16.mxu0 %v1730
        %1836 = vmatpush1.bf16.msra.mxu0 %v1729
        %1837 = vmatprep.subr.bf16.mxu0 %v1734
        %1838 = vmatpush1.bf16.msra.mxu0 %v1733
        %1839 = vmatprep.subr.bf16.mxu0 %v1738
        %1840 = vmatpush1.bf16.msra.mxu0 %v1737
        %1841 = vmatprep.subr.bf16.mxu0 %v1742
        %1842 = vmatpush1.bf16.msra.mxu0 %v1741
        %1843 = vmatprep.subr.bf16.mxu0 %v1746
        %1844 = vmatpush1.bf16.msra.mxu0 %v1745
        %1845 = vmatprep.mubr.bf16.mxu0 %v1488
        %1846 = vmatmul.mubr.bf16.gmra.mrb[0].mxu0 %v1471
        %v1847 = vpop.f32.mrb[0].mxu0
        %v1848 = vadd.f32 0.0, %v1847
        %v1849 = vpop.f32.mrb[0].mxu0
        %v1850 = vadd.f32 0.0, %v1849
        %v1851 = vpop.f32.mrb[0].mxu0
        %v1852 = vadd.f32 0.0, %v1851
        %v1853 = vpop.f32.mrb[0].mxu0
        %v1854 = vadd.f32 0.0, %v1853
        %1855 = vmatprep.mubr.bf16.mxu0 %v1487
        %1856 = vmatmul.mubr.bf16.gmra.mrb[0].mxu0 %v1470
        %v1857 = vpop.f32.mrb[0].mxu0
        %v1858 = vadd.f32 0.0, %v1857
        %v1859 = vpop.f32.mrb[0].mxu0
        %v1860 = vadd.f32 0.0, %v1859
        %v1861 = vpop.f32.mrb[0].mxu0
        %v1862 = vpop.f32.mrb[0].mxu0
        %1863 = vdwg.mxu0
        %1864 = vmatprep.subr.bf16.mxu0 %v1688
        %1865 = vmatpush1.bf16.msra.mxu0 %v1687
        %1866 = vmatprep.subr.bf16.mxu0 %v1692
        %1867 = vmatpush1.bf16.msra.mxu0 %v1691
        %1868 = vmatprep.subr.bf16.mxu0 %v1696
        %1869 = vmatpush1.bf16.msra.mxu0 %v1695
        %1870 = vmatprep.subr.bf16.mxu0 %v1700
        %1871 = vmatpush1.bf16.msra.mxu0 %v1699
        %1872 = vmatprep.subr.bf16.mxu0 %v1704
        %1873 = vmatpush1.bf16.msra.mxu0 %v1703
        %1874 = vmatprep.subr.bf16.mxu0 %v1708
        %1875 = vmatpush1.bf16.msra.mxu0 %v1707
        %1876 = vmatprep.subr.bf16.mxu0 %v1712
        %1877 = vmatpush1.bf16.msra.mxu0 %v1711
        %1878 = vmatprep.subr.bf16.mxu0 %v1716
        %1879 = vmatpush1.bf16.msra.mxu0 %v1715
        %1880 = vmatprep.subr.bf16.mxu0 %v1720
        %1881 = vmatpush1.bf16.msra.mxu0 %v1719
        %1882 = vmatprep.subr.bf16.mxu0 %v1724
        %1883 = vmatpush1.bf16.msra.mxu0 %v1723
        %1884 = vmatprep.subr.bf16.mxu0 %v1728
        %1885 = vmatpush1.bf16.msra.mxu0 %v1727
        %1886 = vmatprep.subr.bf16.mxu0 %v1732
        %1887 = vmatpush1.bf16.msra.mxu0 %v1731
        %1888 = vmatprep.subr.bf16.mxu0 %v1736
        %1889 = vmatpush1.bf16.msra.mxu0 %v1735
        %1890 = vmatprep.subr.bf16.mxu0 %v1740
        %1891 = vmatpush1.bf16.msra.mxu0 %v1739
        %1892 = vmatprep.subr.bf16.mxu0 %v1744
        %1893 = vmatpush1.bf16.msra.mxu0 %v1743
        %1894 = vmatprep.subr.bf16.mxu0 %v1748
        %1895 = vmatpush1.bf16.msra.mxu0 %v1747
        %1896 = vmatprep.mubr.bf16.mxu0 %v1488
        %1897 = vmatmul.mubr.bf16.gmra.mrb[0].mxu0 %v1471
        %v1898 = vpop.f32.mrb[0].mxu0
        %v1899 = vadd.f32 0.0, %v1898
        %v1900 = vpop.f32.mrb[0].mxu0
        %v1901 = vadd.f32 0.0, %v1900
        %v1902 = vpop.f32.mrb[0].mxu0
        %v1903 = vadd.f32 0.0, %v1902
        %v1904 = vpop.f32.mrb[0].mxu0
        %v1905 = vadd.f32 0.0, %v1904
        %1906 = vmatprep.mubr.bf16.mxu0 %v1487
        %1907 = vmatmul.mubr.bf16.gmra.mrb[0].mxu0 %v1470
        %v1908 = vpop.f32.mrb[0].mxu0
        %v1909 = vadd.f32 0.0, %v1908
        %v1910 = vpop.f32.mrb[0].mxu0
        %v1911 = vadd.f32 0.0, %v1910
        %v1912 = vpop.f32.mrb[0].mxu0
        %v1913 = vpop.f32.mrb[0].mxu0
        %1914 = vdwg.mxu0
        %v1915 = vadd.f32 %v1323, %v1848
        %v1916 = vadd.f32 %v1325, %v1850
        %v1917 = vadd.f32 %v1374, %v1899
        %v1918 = vadd.f32 %v1376, %v1901
        %v1919 = vadd.f32 %v1327, %v1852
        %v1920 = vadd.f32 %v1329, %v1854
        %v1921 = vadd.f32 %v1378, %v1903
        %v1922 = vadd.f32 %v1380, %v1905
        %v1923 = vadd.f32 %v1333, %v1858
        %v1924 = vadd.f32 %v1335, %v1860
        %v1925 = vadd.f32 %v1384, %v1909
        %v1926 = vadd.f32 %v1386, %v1911
        %v1927 = vld [vmem:[%s4] sm:$0xff]
        %v1928 = vld [vmem:[%s4 + $0x8] sm:$0xff]
        %v1929 = vld [vmem:[%s4 + $0x10] sm:$0xff]
        %v1930 = vld [vmem:[%s4 + $0x18] sm:$0xff]
        %v1931 = vld [vmem:[%s4 + $0x20] sm:$0xff]
        %v1932 = vld [vmem:[%s4 + $0x28] sm:$0xff]
        %v1933 = vld [vmem:[%s4 + $0x30] sm:$0xff]
        %v1934 = vld [vmem:[%s4 + $0x38] sm:$0xff]
        %v1935 = vld [vmem:[%s4 + $0x40] sm:$0xff]
        %v1936 = vld [vmem:[%s4 + $0x48] sm:$0xff]
        %v1937 = vld [vmem:[%s4 + $0x50] sm:$0xff]
        %v1938 = vld [vmem:[%s4 + $0x58] sm:$0xff]
        %v1939 = vld [vmem:[%s4 + $0x60] sm:$0xff]
        %v1940 = vld [vmem:[%s4 + $0x68] sm:$0xff]
        %v1941 = vld [vmem:[%s4 + $0x70] sm:$0xff]
        %v1942 = vld [vmem:[%s4 + $0x78] sm:$0xff]
        %v1943 = vld [vmem:[%s4 + $0x80] sm:$0xff]
        %v1944 = vld [vmem:[%s4 + $0x88] sm:$0xff]
        %v1945 = vld [vmem:[%s4 + $0x90] sm:$0xff]
        %v1946 = vld [vmem:[%s4 + $0x98] sm:$0xff]
        %v1947 = vld [vmem:[%s4 + $0xa0] sm:$0xff]
        %v1948 = vld [vmem:[%s4 + $0xa8] sm:$0xff]
        %v1949 = vld [vmem:[%s4 + $0xb0] sm:$0xff]
        %v1950 = vld [vmem:[%s4 + $0xb8] sm:$0xff]
        %v1951 = vld [vmem:[%s4 + $0xc0] sm:$0xff]
        %v1952 = vld [vmem:[%s4 + $0xc8] sm:$0xff]
        %v1953 = vld [vmem:[%s4 + $0xd0] sm:$0xff]
        %v1954 = vld [vmem:[%s4 + $0xd8] sm:$0xff]
        %v1955 = vld [vmem:[%s4 + $0xe0] sm:$0xff]
        %v1956 = vld [vmem:[%s4 + $0xe8] sm:$0xff]
        %v1957 = vld [vmem:[%s4 + $0xf0] sm:$0xff]
        %v1958 = vld [vmem:[%s4 + $0xf8] sm:$0xff]
        %v1959 = vld [vmem:[%s4 + $0x100] sm:$0xff]
        %v1960 = vld [vmem:[%s4 + $0x108] sm:$0xff]
        %v1961 = vld [vmem:[%s4 + $0x110] sm:$0xff]
        %v1962 = vld [vmem:[%s4 + $0x118] sm:$0xff]
        %v1963 = vld [vmem:[%s4 + $0x120] sm:$0xff]
        %v1964 = vld [vmem:[%s4 + $0x128] sm:$0xff]
        %v1965 = vld [vmem:[%s4 + $0x130] sm:$0xff]
        %v1966 = vld [vmem:[%s4 + $0x138] sm:$0xff]
        %v1967 = vld [vmem:[%s4 + $0x140] sm:$0xff]
        %v1968 = vld [vmem:[%s4 + $0x148] sm:$0xff]
        %v1969 = vld [vmem:[%s4 + $0x150] sm:$0xff]
        %v1970 = vld [vmem:[%s4 + $0x158] sm:$0xff]
        %v1971 = vld [vmem:[%s4 + $0x160] sm:$0xff]
        %v1972 = vld [vmem:[%s4 + $0x168] sm:$0xff]
        %v1973 = vld [vmem:[%s4 + $0x170] sm:$0xff]
        %v1974 = vld [vmem:[%s4 + $0x178] sm:$0xff]
        %v1975 = vld [vmem:[%s4 + $0x180] sm:$0xff]
        %v1976 = vld [vmem:[%s4 + $0x188] sm:$0xff]
        %v1977 = vld [vmem:[%s4 + $0x190] sm:$0xff]
        %v1978 = vld [vmem:[%s4 + $0x198] sm:$0xff]
        %v1979 = vld [vmem:[%s4 + $0x1a0] sm:$0xff]
        %v1980 = vld [vmem:[%s4 + $0x1a8] sm:$0xff]
        %v1981 = vld [vmem:[%s4 + $0x1b0] sm:$0xff]
        %v1982 = vld [vmem:[%s4 + $0x1b8] sm:$0xff]
        %v1983 = vld [vmem:[%s4 + $0x1c0] sm:$0xff]
        %v1984 = vld [vmem:[%s4 + $0x1c8] sm:$0xff]
        %v1985 = vld [vmem:[%s4 + $0x1d0] sm:$0xff]
        %v1986 = vld [vmem:[%s4 + $0x1d8] sm:$0xff]
        %v1987 = vld [vmem:[%s4 + $0x1e0] sm:$0xff]
        %v1988 = vld [vmem:[%s4 + $0x1e8] sm:$0xff]
        %v1989 = vld [vmem:[%s4 + $0x1f0] sm:$0xff]
        %v1990 = vld [vmem:[%s4 + $0x1f8] sm:$0xff]
        %vm1995 = vcmask 1044480
        %v1996 = vrot.slane %v379, 3
        %v1997 = vrot.slane %v381, 3
        %v1998 = vsel %vm1995, %v1996, %v1997
        %v1999 = vrot.slane %v380, 3
        %v2000 = vrot.slane %v382, 3
        %v2001 = vsel %vm1995, %v1999, %v2000
        %v2070 = vunpack.c.l.b16 %v1927
        %v2071 = vunpack.c.h.b16 %v1927
        %v2072 = vunpack.c.l.b16 %v1928
        %v2073 = vunpack.c.h.b16 %v1928
        %v2074 = vunpack.c.l.b16 %v1929
        %v2075 = vunpack.c.h.b16 %v1929
        %v2076 = vunpack.c.l.b16 %v1930
        %v2077 = vunpack.c.h.b16 %v1930
        %v2078 = vunpack.c.l.b16 %v1931
        %v2079 = vunpack.c.h.b16 %v1931
        %v2080 = vunpack.c.l.b16 %v1932
        %v2081 = vunpack.c.h.b16 %v1932
        %v2082 = vunpack.c.l.b16 %v1933
        %v2083 = vunpack.c.h.b16 %v1933
        %v2084 = vunpack.c.l.b16 %v1934
        %v2085 = vunpack.c.h.b16 %v1934
        %v2086 = vunpack.c.l.b16 %v1935
        %v2087 = vunpack.c.h.b16 %v1935
        %v2088 = vunpack.c.l.b16 %v1936
        %v2089 = vunpack.c.h.b16 %v1936
        %v2090 = vunpack.c.l.b16 %v1937
        %v2091 = vunpack.c.h.b16 %v1937
        %v2092 = vunpack.c.l.b16 %v1938
        %v2093 = vunpack.c.h.b16 %v1938
        %v2094 = vunpack.c.l.b16 %v1939
        %v2095 = vunpack.c.h.b16 %v1939
        %v2096 = vunpack.c.l.b16 %v1940
        %v2097 = vunpack.c.h.b16 %v1940
        %v2098 = vunpack.c.l.b16 %v1941
        %v2099 = vunpack.c.h.b16 %v1941
        %v2100 = vunpack.c.l.b16 %v1942
        %v2101 = vunpack.c.h.b16 %v1942
        %v2102 = vunpack.c.l.b16 %v1943
        %v2103 = vunpack.c.h.b16 %v1943
        %v2104 = vunpack.c.l.b16 %v1944
        %v2105 = vunpack.c.h.b16 %v1944
        %v2106 = vunpack.c.l.b16 %v1945
        %v2107 = vunpack.c.h.b16 %v1945
        %v2108 = vunpack.c.l.b16 %v1946
        %v2109 = vunpack.c.h.b16 %v1946
        %v2110 = vunpack.c.l.b16 %v1947
        %v2111 = vunpack.c.h.b16 %v1947
        %v2112 = vunpack.c.l.b16 %v1948
        %v2113 = vunpack.c.h.b16 %v1948
        %v2114 = vunpack.c.l.b16 %v1949
        %v2115 = vunpack.c.h.b16 %v1949
        %v2116 = vunpack.c.l.b16 %v1950
        %v2117 = vunpack.c.h.b16 %v1950
        %v2118 = vunpack.c.l.b16 %v1951
        %v2119 = vunpack.c.h.b16 %v1951
        %v2120 = vunpack.c.l.b16 %v1952
        %v2121 = vunpack.c.h.b16 %v1952
        %v2122 = vunpack.c.l.b16 %v1953
        %v2123 = vunpack.c.h.b16 %v1953
        %v2124 = vunpack.c.l.b16 %v1954
        %v2125 = vunpack.c.h.b16 %v1954
        %v2126 = vunpack.c.l.b16 %v1955
        %v2127 = vunpack.c.h.b16 %v1955
        %v2128 = vunpack.c.l.b16 %v1956
        %v2129 = vunpack.c.h.b16 %v1956
        %v2130 = vunpack.c.l.b16 %v1957
        %v2131 = vunpack.c.h.b16 %v1957
        %v2132 = vunpack.c.l.b16 %v1958
        %v2133 = vunpack.c.h.b16 %v1958
        %v2134 = vunpack.c.l.b16 %v1959
        %v2135 = vunpack.c.h.b16 %v1959
        %v2136 = vunpack.c.l.b16 %v1960
        %v2137 = vunpack.c.h.b16 %v1960
        %v2138 = vunpack.c.l.b16 %v1961
        %v2139 = vunpack.c.h.b16 %v1961
        %v2140 = vunpack.c.l.b16 %v1962
        %v2141 = vunpack.c.h.b16 %v1962
        %v2142 = vunpack.c.l.b16 %v1963
        %v2143 = vunpack.c.h.b16 %v1963
        %v2144 = vunpack.c.l.b16 %v1964
        %v2145 = vunpack.c.h.b16 %v1964
        %v2146 = vunpack.c.l.b16 %v1965
        %v2147 = vunpack.c.h.b16 %v1965
        %v2148 = vunpack.c.l.b16 %v1966
        %v2149 = vunpack.c.h.b16 %v1966
        %v2150 = vunpack.c.l.b16 %v1967
        %v2151 = vunpack.c.h.b16 %v1967
        %v2152 = vunpack.c.l.b16 %v1968
        %v2153 = vunpack.c.h.b16 %v1968
        %v2154 = vunpack.c.l.b16 %v1969
        %v2155 = vunpack.c.h.b16 %v1969
        %v2156 = vunpack.c.l.b16 %v1970
        %v2157 = vunpack.c.h.b16 %v1970
        %v2158 = vunpack.c.l.b16 %v1971
        %v2159 = vunpack.c.h.b16 %v1971
        %v2160 = vunpack.c.l.b16 %v1972
        %v2161 = vunpack.c.h.b16 %v1972
        %v2162 = vunpack.c.l.b16 %v1973
        %v2163 = vunpack.c.h.b16 %v1973
        %v2164 = vunpack.c.l.b16 %v1974
        %v2165 = vunpack.c.h.b16 %v1974
        %v2166 = vunpack.c.l.b16 %v1975
        %v2167 = vunpack.c.h.b16 %v1975
        %v2168 = vunpack.c.l.b16 %v1976
        %v2169 = vunpack.c.h.b16 %v1976
        %v2170 = vunpack.c.l.b16 %v1977
        %v2171 = vunpack.c.h.b16 %v1977
        %v2172 = vunpack.c.l.b16 %v1978
        %v2173 = vunpack.c.h.b16 %v1978
        %v2174 = vunpack.c.l.b16 %v1979
        %v2175 = vunpack.c.h.b16 %v1979
        %v2176 = vunpack.c.l.b16 %v1980
        %v2177 = vunpack.c.h.b16 %v1980
        %v2178 = vunpack.c.l.b16 %v1981
        %v2179 = vunpack.c.h.b16 %v1981
        %v2180 = vunpack.c.l.b16 %v1982
        %v2181 = vunpack.c.h.b16 %v1982
        %v2182 = vunpack.c.l.b16 %v1983
        %v2183 = vunpack.c.h.b16 %v1983
        %v2184 = vunpack.c.l.b16 %v1984
        %v2185 = vunpack.c.h.b16 %v1984
        %v2186 = vunpack.c.l.b16 %v1985
        %v2187 = vunpack.c.h.b16 %v1985
        %v2188 = vunpack.c.l.b16 %v1986
        %v2189 = vunpack.c.h.b16 %v1986
        %v2190 = vunpack.c.l.b16 %v1987
        %v2191 = vunpack.c.h.b16 %v1987
        %v2192 = vunpack.c.l.b16 %v1988
        %v2193 = vunpack.c.h.b16 %v1988
        %v2194 = vunpack.c.l.b16 %v1989
        %v2195 = vunpack.c.h.b16 %v1989
        %v2196 = vunpack.c.l.b16 %v1990
        %v2197 = vunpack.c.h.b16 %v1990
        %v2198 = vpack.c.b16 %v2074, %v2070
        %v2199 = vpack.c.b16 %v2075, %v2071
        %v2200 = vpack.c.b16 %v2076, %v2072
        %v2201 = vpack.c.b16 %v2077, %v2073
        %v2202 = vpack.c.b16 %v2082, %v2078
        %v2203 = vpack.c.b16 %v2083, %v2079
        %v2204 = vpack.c.b16 %v2084, %v2080
        %v2205 = vpack.c.b16 %v2085, %v2081
        %v2206 = vpack.c.b16 %v2090, %v2086
        %v2207 = vpack.c.b16 %v2091, %v2087
        %v2208 = vpack.c.b16 %v2092, %v2088
        %v2209 = vpack.c.b16 %v2093, %v2089
        %v2210 = vpack.c.b16 %v2098, %v2094
        %v2211 = vpack.c.b16 %v2099, %v2095
        %v2212 = vpack.c.b16 %v2100, %v2096
        %v2213 = vpack.c.b16 %v2101, %v2097
        %v2214 = vpack.c.b16 %v2106, %v2102
        %v2215 = vpack.c.b16 %v2107, %v2103
        %v2216 = vpack.c.b16 %v2108, %v2104
        %v2217 = vpack.c.b16 %v2109, %v2105
        %v2218 = vpack.c.b16 %v2114, %v2110
        %v2219 = vpack.c.b16 %v2115, %v2111
        %v2220 = vpack.c.b16 %v2116, %v2112
        %v2221 = vpack.c.b16 %v2117, %v2113
        %v2222 = vpack.c.b16 %v2122, %v2118
        %v2223 = vpack.c.b16 %v2123, %v2119
        %v2224 = vpack.c.b16 %v2124, %v2120
        %v2225 = vpack.c.b16 %v2125, %v2121
        %v2226 = vpack.c.b16 %v2130, %v2126
        %v2227 = vpack.c.b16 %v2131, %v2127
        %v2228 = vpack.c.b16 %v2132, %v2128
        %v2229 = vpack.c.b16 %v2133, %v2129
        %v2230 = vpack.c.b16 %v2138, %v2134
        %v2231 = vpack.c.b16 %v2139, %v2135
        %v2232 = vpack.c.b16 %v2140, %v2136
        %v2233 = vpack.c.b16 %v2141, %v2137
        %v2234 = vpack.c.b16 %v2146, %v2142
        %v2235 = vpack.c.b16 %v2147, %v2143
        %v2236 = vpack.c.b16 %v2148, %v2144
        %v2237 = vpack.c.b16 %v2149, %v2145
        %v2238 = vpack.c.b16 %v2154, %v2150
        %v2239 = vpack.c.b16 %v2155, %v2151
        %v2240 = vpack.c.b16 %v2156, %v2152
        %v2241 = vpack.c.b16 %v2157, %v2153
        %v2242 = vpack.c.b16 %v2162, %v2158
        %v2243 = vpack.c.b16 %v2163, %v2159
        %v2244 = vpack.c.b16 %v2164, %v2160
        %v2245 = vpack.c.b16 %v2165, %v2161
        %v2246 = vpack.c.b16 %v2170, %v2166
        %v2247 = vpack.c.b16 %v2171, %v2167
        %v2248 = vpack.c.b16 %v2172, %v2168
        %v2249 = vpack.c.b16 %v2173, %v2169
        %v2250 = vpack.c.b16 %v2178, %v2174
        %v2251 = vpack.c.b16 %v2179, %v2175
        %v2252 = vpack.c.b16 %v2180, %v2176
        %v2253 = vpack.c.b16 %v2181, %v2177
        %v2254 = vpack.c.b16 %v2186, %v2182
        %v2255 = vpack.c.b16 %v2187, %v2183
        %v2256 = vpack.c.b16 %v2188, %v2184
        %v2257 = vpack.c.b16 %v2189, %v2185
        %v2258 = vpack.c.b16 %v2194, %v2190
        %v2259 = vpack.c.b16 %v2195, %v2191
        %v2260 = vpack.c.b16 %v2196, %v2192
        %v2261 = vpack.c.b16 %v2197, %v2193
        %2326 = vmatprep.subr.bf16.mxu0 %v2199
        %2327 = vmatpush1.bf16.msra.mxu0 %v2198
        %2328 = vmatprep.subr.bf16.mxu0 %v2203
        %2329 = vmatpush1.bf16.msra.mxu0 %v2202
        %2330 = vmatprep.subr.bf16.mxu0 %v2207
        %2331 = vmatpush1.bf16.msra.mxu0 %v2206
        %2332 = vmatprep.subr.bf16.mxu0 %v2211
        %2333 = vmatpush1.bf16.msra.mxu0 %v2210
        %2334 = vmatprep.subr.bf16.mxu0 %v2215
        %2335 = vmatpush1.bf16.msra.mxu0 %v2214
        %2336 = vmatprep.subr.bf16.mxu0 %v2219
        %2337 = vmatpush1.bf16.msra.mxu0 %v2218
        %2338 = vmatprep.subr.bf16.mxu0 %v2223
        %2339 = vmatpush1.bf16.msra.mxu0 %v2222
        %2340 = vmatprep.subr.bf16.mxu0 %v2227
        %2341 = vmatpush1.bf16.msra.mxu0 %v2226
        %2342 = vmatprep.subr.bf16.mxu0 %v2231
        %2343 = vmatpush1.bf16.msra.mxu0 %v2230
        %2344 = vmatprep.subr.bf16.mxu0 %v2235
        %2345 = vmatpush1.bf16.msra.mxu0 %v2234
        %2346 = vmatprep.subr.bf16.mxu0 %v2239
        %2347 = vmatpush1.bf16.msra.mxu0 %v2238
        %2348 = vmatprep.subr.bf16.mxu0 %v2243
        %2349 = vmatpush1.bf16.msra.mxu0 %v2242
        %2350 = vmatprep.subr.bf16.mxu0 %v2247
        %2351 = vmatpush1.bf16.msra.mxu0 %v2246
        %2352 = vmatprep.subr.bf16.mxu0 %v2251
        %2353 = vmatpush1.bf16.msra.mxu0 %v2250
        %2354 = vmatprep.subr.bf16.mxu0 %v2255
        %2355 = vmatpush1.bf16.msra.mxu0 %v2254
        %2356 = vmatprep.subr.bf16.mxu0 %v2259
        %2357 = vmatpush1.bf16.msra.mxu0 %v2258
        %2358 = vmatprep.mubr.bf16.mxu0 %v2001
        %2359 = vmatmul.mubr.bf16.gmra.mrb[0].mxu0 %v1998
        %v2360 = vpop.f32.mrb[0].mxu0
        %v2361 = vadd.f32 0.0, %v2360
        %v2362 = vpop.f32.mrb[0].mxu0
        %v2363 = vadd.f32 0.0, %v2362
        %v2364 = vpop.f32.mrb[0].mxu0
        %v2365 = vadd.f32 0.0, %v2364
        %v2366 = vpop.f32.mrb[0].mxu0
        %v2367 = vadd.f32 0.0, %v2366
        %2368 = vmatprep.mubr.bf16.mxu0 %v2000
        %2369 = vmatmul.mubr.bf16.gmra.mrb[0].mxu0 %v1997
        %v2370 = vpop.f32.mrb[0].mxu0
        %v2371 = vadd.f32 0.0, %v2370
        %v2372 = vpop.f32.mrb[0].mxu0
        %v2373 = vadd.f32 0.0, %v2372
        %v2374 = vpop.f32.mrb[0].mxu0
        %v2375 = vpop.f32.mrb[0].mxu0
        %2376 = vdwg.mxu0
        %2377 = vmatprep.subr.bf16.mxu0 %v2201
        %2378 = vmatpush1.bf16.msra.mxu0 %v2200
        %2379 = vmatprep.subr.bf16.mxu0 %v2205
        %2380 = vmatpush1.bf16.msra.mxu0 %v2204
        %2381 = vmatprep.subr.bf16.mxu0 %v2209
        %2382 = vmatpush1.bf16.msra.mxu0 %v2208
        %2383 = vmatprep.subr.bf16.mxu0 %v2213
        %2384 = vmatpush1.bf16.msra.mxu0 %v2212
        %2385 = vmatprep.subr.bf16.mxu0 %v2217
        %2386 = vmatpush1.bf16.msra.mxu0 %v2216
        %2387 = vmatprep.subr.bf16.mxu0 %v2221
        %2388 = vmatpush1.bf16.msra.mxu0 %v2220
        %2389 = vmatprep.subr.bf16.mxu0 %v2225
        %2390 = vmatpush1.bf16.msra.mxu0 %v2224
        %2391 = vmatprep.subr.bf16.mxu0 %v2229
        %2392 = vmatpush1.bf16.msra.mxu0 %v2228
        %2393 = vmatprep.subr.bf16.mxu0 %v2233
        %2394 = vmatpush1.bf16.msra.mxu0 %v2232
        %2395 = vmatprep.subr.bf16.mxu0 %v2237
        %2396 = vmatpush1.bf16.msra.mxu0 %v2236
        %2397 = vmatprep.subr.bf16.mxu0 %v2241
        %2398 = vmatpush1.bf16.msra.mxu0 %v2240
        %2399 = vmatprep.subr.bf16.mxu0 %v2245
        %2400 = vmatpush1.bf16.msra.mxu0 %v2244
        %2401 = vmatprep.subr.bf16.mxu0 %v2249
        %2402 = vmatpush1.bf16.msra.mxu0 %v2248
        %2403 = vmatprep.subr.bf16.mxu0 %v2253
        %2404 = vmatpush1.bf16.msra.mxu0 %v2252
        %2405 = vmatprep.subr.bf16.mxu0 %v2257
        %2406 = vmatpush1.bf16.msra.mxu0 %v2256
        %2407 = vmatprep.subr.bf16.mxu0 %v2261
        %2408 = vmatpush1.bf16.msra.mxu0 %v2260
        %2409 = vmatprep.mubr.bf16.mxu0 %v2001
        %2410 = vmatmul.mubr.bf16.gmra.mrb[0].mxu0 %v1998
        %v2411 = vpop.f32.mrb[0].mxu0
        %v2412 = vadd.f32 0.0, %v2411
        %v2413 = vpop.f32.mrb[0].mxu0
        %v2414 = vadd.f32 0.0, %v2413
        %v2415 = vpop.f32.mrb[0].mxu0
        %v2416 = vadd.f32 0.0, %v2415
        %v2417 = vpop.f32.mrb[0].mxu0
        %v2418 = vadd.f32 0.0, %v2417
        %2419 = vmatprep.mubr.bf16.mxu0 %v2000
        %2420 = vmatmul.mubr.bf16.gmra.mrb[0].mxu0 %v1997
        %v2421 = vpop.f32.mrb[0].mxu0
        %v2422 = vadd.f32 0.0, %v2421
        %v2423 = vpop.f32.mrb[0].mxu0
        %v2424 = vadd.f32 0.0, %v2423
        %v2425 = vpop.f32.mrb[0].mxu0
        %v2426 = vpop.f32.mrb[0].mxu0
        %2427 = vdwg.mxu0
        %v2428 = vadd.f32 %v1915, %v2361
        %v2429 = vadd.f32 %v1916, %v2363
        %v2430 = vadd.f32 %v1917, %v2412
        %v2431 = vadd.f32 %v1918, %v2414
        %v2432 = vadd.f32 %v1919, %v2365
        %v2433 = vadd.f32 %v1920, %v2367
        %v2434 = vadd.f32 %v1921, %v2416
        %v2435 = vadd.f32 %v1922, %v2418
        %v2436 = vadd.f32 %v1923, %v2371
        %v2437 = vadd.f32 %v1924, %v2373
        %v2438 = vadd.f32 %v1925, %v2422
        %v2439 = vadd.f32 %v1926, %v2424
        %v2440 = vld [vmem:[#allocation2] sm:$0xf]
        %v2442 = vlaneseq
        %v2443 = vshrl.u32 %v2442, 7
        %v2444 = vsub.s32 0, %v2443
        %v2445 = vrot.slane %v2440, %v2444
        %v2446 = vlaneseq
        %v2447 = vshrl.u32 %v2446, 7
        %v2448 = vsub.s32 1, %v2447
        %v2449 = vrot.slane %v2440, %v2448
        %v2450 = vlaneseq
        %v2451 = vshrl.u32 %v2450, 7
        %v2452 = vsub.s32 2, %v2451
        %v2453 = vrot.slane %v2440, %v2452
        %v2454 = vlaneseq
        %v2455 = vshrl.u32 %v2454, 7
        %v2456 = vsub.s32 3, %v2455
        %v2457 = vrot.slane %v2440, %v2456
        %v2462 = vadd.f32 %v2428, %v2445
        %v2463 = vadd.f32 %v2429, %v2449
        %v2464 = vadd.f32 %v2430, %v2453
        %v2465 = vadd.f32 %v2431, %v2457
        %v2466 = vadd.f32 %v2432, %v2445
        %v2467 = vadd.f32 %v2433, %v2449
        %v2468 = vadd.f32 %v2434, %v2453
        %v2469 = vadd.f32 %v2435, %v2457
        %v2470 = vadd.f32 %v2436, %v2445
        %v2471 = vadd.f32 %v2437, %v2449
        %v2472 = vadd.f32 %v2438, %v2453
        %v2473 = vadd.f32 %v2439, %v2457
        %2474 = vst [vmem:[%s341] sm:$0xff] %v2462
        %2475 = vst [vmem:[%s341 + $0x8] sm:$0xff] %v2463
        %2476 = vst [vmem:[%s341 + $0x10] sm:$0xff] %v2464
        %2477 = vst [vmem:[%s341 + $0x18] sm:$0xff] %v2465
        %2478 = vst [vmem:[%s341 + $0x20] sm:$0xff] %v2466
        %2479 = vst [vmem:[%s341 + $0x28] sm:$0xff] %v2467
        %2480 = vst [vmem:[%s341 + $0x30] sm:$0xff] %v2468
        %2481 = vst [vmem:[%s341 + $0x38] sm:$0xff] %v2469
        %2482 = vst [vmem:[%s341 + $0x40] sm:$0xf] %v2470
        %2483 = vst [vmem:[%s341 + $0x48] sm:$0xf] %v2471
        %2484 = vst [vmem:[%s341 + $0x50] sm:$0xf] %v2472
        %2485 = vst [vmem:[%s341 + $0x58] sm:$0xf] %v2473
        %v2486 = vld [vmem:[#allocation4] sm:$0xff]
        %v2487 = vld [vmem:[#allocation4 + $0x8] sm:$0xff]
        %v2488 = vld [vmem:[#allocation4 + $0x10] sm:$0xf]
        %2490 = vset.pattern.permute.xlu0 0
        %2491 = vperm.xlu0 %2490, %v2486
        %v2492 = vpop.permute.xlu0 %2491
        %2495 = vset.pattern.permute.xlu0 0
        %2496 = vperm.xlu0 %2495, %v2487
        %v2497 = vpop.permute.xlu0 %2496
        %2500 = vset.pattern.permute.xlu0 0
        %2501 = vperm.xlu0 %2500, %v2488
        %v2502 = vpop.permute.xlu0 %2501
        %v2504 = vmul.f32 %v2462, %v2492
        %v2505 = vmul.f32 %v2463, %v2492
        %v2506 = vmul.f32 %v2464, %v2492
        %v2507 = vmul.f32 %v2465, %v2492
        %v2508 = vmul.f32 %v2466, %v2497
        %v2509 = vmul.f32 %v2467, %v2497
        %v2510 = vmul.f32 %v2468, %v2497
        %v2511 = vmul.f32 %v2469, %v2497
        %v2512 = vmul.f32 %v2470, %v2502
        %v2513 = vmul.f32 %v2471, %v2502
        %v2514 = vmul.f32 %v2472, %v2502
        %v2515 = vmul.f32 %v2473, %v2502
        %v2516 = vadd.f32 %v2504, %v2508
        %vm2517 = vcmask 1043456
        %v2518 = vsel %vm2517, %v2512, 0.0
        %v2519 = vadd.f32 %v2516, %v2518
        %v2520 = vrot.slane %v2519, 4
        %v2521 = vadd.f32 %v2519, %v2520
        %v2522 = vrot.slane %v2521, 2
        %v2523 = vadd.f32 %v2521, %v2522
        %v2524 = vrot.slane %v2523, 1
        %v2525 = vadd.f32 %v2523, %v2524
        %v2526 = vadd.f32 %v2505, %v2509
        %v2527 = vsel %vm2517, %v2513, 0.0
        %v2528 = vadd.f32 %v2526, %v2527
        %v2529 = vrot.slane %v2528, 4
        %v2530 = vadd.f32 %v2528, %v2529
        %v2531 = vrot.slane %v2530, 2
        %v2532 = vadd.f32 %v2530, %v2531
        %v2533 = vrot.slane %v2532, 1
        %v2534 = vadd.f32 %v2532, %v2533
        %v2535 = vadd.f32 %v2506, %v2510
        %v2536 = vsel %vm2517, %v2514, 0.0
        %v2537 = vadd.f32 %v2535, %v2536
        %v2538 = vrot.slane %v2537, 4
        %v2539 = vadd.f32 %v2537, %v2538
        %v2540 = vrot.slane %v2539, 2
        %v2541 = vadd.f32 %v2539, %v2540
        %v2542 = vrot.slane %v2541, 1
        %v2543 = vadd.f32 %v2541, %v2542
        %v2544 = vadd.f32 %v2507, %v2511
        %v2545 = vsel %vm2517, %v2515, 0.0
        %v2546 = vadd.f32 %v2544, %v2545
        %v2547 = vrot.slane %v2546, 4
        %v2548 = vadd.f32 %v2546, %v2547
        %v2549 = vrot.slane %v2548, 2
        %v2550 = vadd.f32 %v2548, %v2549
        %v2551 = vrot.slane %v2550, 1
        %v2552 = vadd.f32 %v2550, %v2551
        %v2553 = vmul.f32 %v2504, %v2504
        %v2554 = vmul.f32 %v2505, %v2505
        %v2555 = vmul.f32 %v2506, %v2506
        %v2556 = vmul.f32 %v2507, %v2507
        %v2557 = vmul.f32 %v2508, %v2508
        %v2558 = vmul.f32 %v2509, %v2509
        %v2559 = vmul.f32 %v2510, %v2510
        %v2560 = vmul.f32 %v2511, %v2511
        %v2561 = vmul.f32 %v2512, %v2512
        %v2562 = vmul.f32 %v2513, %v2513
        %v2563 = vmul.f32 %v2514, %v2514
        %v2564 = vmul.f32 %v2515, %v2515
        %v2565 = vadd.f32 %v2553, %v2557
        %v2566 = vsel %vm2517, %v2561, 0.0
        %v2567 = vadd.f32 %v2565, %v2566
        %v2568 = vrot.slane %v2567, 4
        %v2569 = vadd.f32 %v2567, %v2568
        %v2570 = vrot.slane %v2569, 2
        %v2571 = vadd.f32 %v2569, %v2570
        %v2572 = vrot.slane %v2571, 1
        %v2573 = vadd.f32 %v2571, %v2572
        %v2574 = vadd.f32 %v2554, %v2558
        %v2575 = vsel %vm2517, %v2562, 0.0
        %v2576 = vadd.f32 %v2574, %v2575
        %v2577 = vrot.slane %v2576, 4
        %v2578 = vadd.f32 %v2576, %v2577
        %v2579 = vrot.slane %v2578, 2
        %v2580 = vadd.f32 %v2578, %v2579
        %v2581 = vrot.slane %v2580, 1
        %v2582 = vadd.f32 %v2580, %v2581
        %v2583 = vadd.f32 %v2555, %v2559
        %v2584 = vsel %vm2517, %v2563, 0.0
        %v2585 = vadd.f32 %v2583, %v2584
        %v2586 = vrot.slane %v2585, 4
        %v2587 = vadd.f32 %v2585, %v2586
        %v2588 = vrot.slane %v2587, 2
        %v2589 = vadd.f32 %v2587, %v2588
        %v2590 = vrot.slane %v2589, 1
        %v2591 = vadd.f32 %v2589, %v2590
        %v2592 = vadd.f32 %v2556, %v2560
        %v2593 = vsel %vm2517, %v2564, 0.0
        %v2594 = vadd.f32 %v2592, %v2593
        %v2595 = vrot.slane %v2594, 4
        %v2596 = vadd.f32 %v2594, %v2595
        %v2597 = vrot.slane %v2596, 2
        %v2598 = vadd.f32 %v2596, %v2597
        %v2599 = vrot.slane %v2598, 1
        %v2600 = vadd.f32 %v2598, %v2599
        %vm2601 = vcmask 1040384
        %v2602 = vsel %vm2601, %v2525, %v2573
        %v2603 = vsel %vm2601, %v2534, %v2582
        %v2604 = vsel %vm2601, %v2543, %v2591
        %v2605 = vsel %vm2601, %v2552, %v2600
        %v2610 = vcombine.low %v2602, %v2603
        %v2611 = vcombine.low %v2604, %v2605
        %v2613 = vunpack.c.l.s4 1983009808
        %v2614 = vunpack.c.0.s8 %v2613
        %v2615 = vlaneseq
        %v2616 = vshrl.u32 %v2615, 7
        %v2617 = vsub.s32 %v2614, %v2616
        %v2618 = vrot.slane %v2610, %v2617
        %v2620 = vunpack.c.l.s4 1983009808
        %v2621 = vunpack.c.0.s8 %v2620
        %v2622 = vlaneseq
        %v2623 = vshrl.u32 %v2622, 7
        %v2624 = vsub.s32 %v2621, %v2623
        %v2625 = vrot.slane %v2611, %v2624
        %v2626 = vcombine.low %v2618, %v2625
        %2628 = vst [vmem:[%s346] sm:$0xff] %v2626
        %p2629 = scmp.lt.s32.totalorder %s22, 1
        %s2630 = scalar_select %p2629, %s22, 1
        %s2631 = smul.addr %s2630, 12
        %s2632 = smul.addr %s2631, 8
        %s2633 = scalar_lea.vmem %s7, %s2632
        %p2634 = scmp.lt.s32.totalorder %s22, 1
        %s2635 = scalar_select %p2634, %s22, 1
        %s2636 = smul.addr %s2635, 4
        %s2637 = smul.addr %s2636, 2
        %s2638 = scalar_lea.vmem %s8, %s2637
        // Predicated region
        $region57: #{decoder_forward.4} parent=47 // pred_check
          %p2639 = pneg %p192
        $region58: #{decoder_forward.4} parent=47 // pred_check_branch
          %2641 = sbr.rel (%p2639) target = $region60
        $region59: #{decoder_forward.4} parent=47 // pred_region
          _
        $region60: #{decoder_forward.4} parent=47 // pred_fallthru
          _
        // Predicated region
        $region61: #{decoder_forward.4} parent=47 // pred_check
          %p2642 = pneg %p218
        $region62: #{decoder_forward.4} parent=47 // pred_check_branch
          %2644 = sbr.rel (%p2642) target = $region64
        $region63: #{decoder_forward.4} parent=47 // pred_region
          _
        $region64: #{decoder_forward.4} parent=47 // pred_fallthru
          _
      $region48: #{decoder_forward.4} parent=5 // pred_fallthru
        _
      %p2645 = scmp.le.s32.totalorder 2, %s17
      // Predicated region
      $region65: #{decoder_forward.4} parent=5 // pred_check
        %p2646 = pneg %p2645
      $region66: #{decoder_forward.4} parent=5 // pred_check_branch
        %2648 = sbr.rel (%p2646) target = $region68
      $region67: #{decoder_forward.4} parent=5 // pred_region
        %s2649 = ssub.s32 %s17, 2
        // Predicated region
        $region69: #{decoder_forward.4} parent=67 // pred_check
          %p2650 = pneg %p198
        $region70: #{decoder_forward.4} parent=67 // pred_check_branch
          %2652 = sbr.rel (%p2650) target = $region72
        $region71: #{decoder_forward.4} parent=67 // pred_region
          %p2653 = scmp.lt.s32.totalorder %s23, 1
          %s2654 = scalar_select %p2653, %s23, 1
          %s2655 = smul.addr %s2654, 12
          %s2656 = smul.addr %s2655, 8
          %s2657 = scalar_lea.vmem %s7, %s2656
        $region72: #{decoder_forward.4} parent=67 // pred_fallthru
          _
        // Predicated region
        $region73: #{decoder_forward.4} parent=67 // pred_check
          %p2658 = pneg %p224
        $region74: #{decoder_forward.4} parent=67 // pred_check_branch
          %2660 = sbr.rel (%p2658) target = $region76
        $region75: #{decoder_forward.4} parent=67 // pred_region
          %p2661 = scmp.lt.s32.totalorder %s23, 1
          %s2662 = scalar_select %p2661, %s23, 1
          %s2663 = smul.addr %s2662, 4
          %s2664 = smul.addr %s2663, 2
          %s2665 = scalar_lea.vmem %s8, %s2664
        $region76: #{decoder_forward.4} parent=67 // pred_fallthru
          _
      $region68: #{decoder_forward.4} parent=5 // pred_fallthru
        _
    $region6: #{decoder_forward.4} parent=1 // loop_footer
      %s21 = sadd.s32 1, %s17
    $region7: #{decoder_forward.4} parent=1 // loop_footer_branch
      %16 = sbr.rel target = $region3
    $region8: #{decoder_forward.4} parent=1 // loop_exit
      _
    %2666 = vsyncpa [#allocation3], 1
    %s2667 = scalar_lea.sflag [#allocation3], 1
    %2668 = vsyncpa %s2667, 1
    %2669 = vsyncpa [#allocation5], 1

// kernel: decoder_forward.6
$region0: #{decoder_forward.6}
  #allocation0 [shape = 'u32[]', space=smem, size = 0x4, offset = 0x4, fixed_abs, tag = 'smem constant byte address 0x4 - core index']
  #allocation1 [shape = 'u32[144,128]{1,0:T(1,128)}', space=vmem, size = 0x12000, scoped, tag = 'internal scratch']
  %s0 = inlined_call_operand.vmem [shape: f32[2,306,64], index: 0, kind: input, shape index: {}]
  %s1 = inlined_call_operand.vmem [shape: bf16[64,128], index: 1, kind: input, shape index: {}]
  %s2 = inlined_call_operand.vmem [shape: bf16[64,128], index: 2, kind: input, shape index: {}]
  %s3 = inlined_call_operand.vmem [shape: bf16[64,128], index: 3, kind: input, shape index: {}]
  %s4 = inlined_call_operand.vmem [shape: bf16[64,128], index: 4, kind: input, shape index: {}]
  %s5 = inlined_call_operand.vmem [shape: f32[1,128], index: 5, kind: input, shape index: {}]
  %s6 = inlined_call_operand.vmem [shape: f32[272,1], index: 6, kind: input, shape index: {}]
  %s7 = inlined_call_operand.vmem [shape: f32[2,272,128], index: 7, kind: output, shape index: {0}]
  %s8 = inlined_call_operand.vmem [shape: f32[2,2,128], index: 8, kind: output, shape index: {1}]
  %9 = xla_tuple %s7, %s8
  %s10 = sld [smem:[#allocation0]]
  $region69: #{decoder_forward.6} parent=0
    _
  %s12 = ssub.s32 1, %s10
  %s13 = scalar_select 0, %s12, %s10
  loop: start=0, step=1, limit=4
  $region2: #{decoder_forward.6} parent=0 // loop_pre_header
    _
  $region3: #{decoder_forward.6} parent=0 // loop_header
    %s15 = sphi 0, %s19
    %p16 = scmp.ge.s32.totalorder %s15, 4
    %s25 = sphi 0, %s27
    %s28 = sphi 0, %s25
    %s29 = sphi 0, %s28
    %s45 = sphi 0, %s29
    %s49 = sphi 0, %s49
    %s51 = sphi 0, %s49
    %s52 = sphi 0, %s51
    %s66 = sphi 0, %s52
    %s70 = sphi 0, %s70
    %s72 = sphi 0, %s70
    %s73 = sphi 0, %s72
    %s87 = sphi 0, %s73
    %s91 = sphi 0, %s91
    %s93 = sphi 0, %s91
    %s94 = sphi 0, %s93
    %s108 = sphi 0, %s94
    %s112 = sphi 0, %s112
    %s114 = sphi 0, %s112
    %s115 = sphi 0, %s114
    %s129 = sphi 0, %s115
    %s133 = sphi 0, %s133
    %s135 = sphi 0, %s133
    %s136 = sphi 0, %s135
    %s150 = sphi 0, %s136
    %s154 = sphi 0, %s154
    %s156 = sphi 0, %s154
    %s157 = sphi 0, %s156
    %s171 = sphi 0, %s157
    %s177 = sphi 0, %s179
    %s180 = sphi 0, %s177
    %s181 = sphi 0, %s180
    %s197 = sphi 0, %s181
    %s203 = sphi 0, %s205
    %s206 = sphi 0, %s203
    %s207 = sphi 0, %s206
    %s223 = sphi 0, %s207
  $region4: #{decoder_forward.6} parent=0 // loop_header_branch
    %18 = sbr.rel (%p16) target = $region8
  $region5: #{decoder_forward.6} parent=0 // loop_body
    %s20 = ssub.s32 %s15, 1
    %s21 = ssub.s32 %s15, 2
    %s22 = sadd.s32 %s15, 1
    %s23 = ssub.s32 %s15, %s22
    %p24 = scmp.eq.s32.totalorder %s23, 0
    %s26 = sadd.s32 %s25, 1
    %s27 = scalar_select %p24, %s25, %s26
    %p30 = pneg %p24
    %p31 = scmp.eq.s32.totalorder %s15, 1
    %p32 = por %p30, %p31
    %p33 = scmp.ne.s32.totalorder %s25, %s28
    %p34 = scmp.eq.s32.totalorder %s15, 0
    %p35 = por %p33, %p34
    %p36 = scmp.ne.s32.totalorder %s25, %s28
    %p37 = scmp.eq.s32.totalorder %s20, 1
    %p38 = por %p36, %p37
    %p39 = scmp.ne.s32.totalorder %s28, %s29
    %p40 = scmp.eq.s32.totalorder %s20, 0
    %p41 = por %p39, %p40
    %p42 = scmp.ne.s32.totalorder %s28, %s29
    %p43 = scmp.eq.s32.totalorder %s21, 1
    %p44 = por %p42, %p43
    %p46 = scmp.ne.s32.totalorder %s29, %s45
    %p47 = scmp.eq.s32.totalorder %s21, 0
    %p48 = por %p46, %p47
    %s50 = sadd.s32 %s49, 1
    %p53 = scmp.eq.s32.totalorder %s15, 1
    %p54 = scmp.ne.s32.totalorder %s49, %s51
    %p55 = scmp.eq.s32.totalorder %s15, 0
    %p56 = por %p54, %p55
    %p57 = scmp.ne.s32.totalorder %s49, %s51
    %p58 = scmp.eq.s32.totalorder %s20, 1
    %p59 = por %p57, %p58
    %p60 = scmp.ne.s32.totalorder %s51, %s52
    %p61 = scmp.eq.s32.totalorder %s20, 0
    %p62 = por %p60, %p61
    %p63 = scmp.ne.s32.totalorder %s51, %s52
    %p64 = scmp.eq.s32.totalorder %s21, 1
    %p65 = por %p63, %p64
    %p67 = scmp.ne.s32.totalorder %s52, %s66
    %p68 = scmp.eq.s32.totalorder %s21, 0
    %p69 = por %p67, %p68
    %s71 = sadd.s32 %s70, 1
    %p74 = scmp.eq.s32.totalorder %s15, 1
    %p75 = scmp.ne.s32.totalorder %s70, %s72
    %p76 = scmp.eq.s32.totalorder %s15, 0
    %p77 = por %p75, %p76
    %p78 = scmp.ne.s32.totalorder %s70, %s72
    %p79 = scmp.eq.s32.totalorder %s20, 1
    %p80 = por %p78, %p79
    %p81 = scmp.ne.s32.totalorder %s72, %s73
    %p82 = scmp.eq.s32.totalorder %s20, 0
    %p83 = por %p81, %p82
    %p84 = scmp.ne.s32.totalorder %s72, %s73
    %p85 = scmp.eq.s32.totalorder %s21, 1
    %p86 = por %p84, %p85
    %p88 = scmp.ne.s32.totalorder %s73, %s87
    %p89 = scmp.eq.s32.totalorder %s21, 0
    %p90 = por %p88, %p89
    %s92 = sadd.s32 %s91, 1
    %p95 = scmp.eq.s32.totalorder %s15, 1
    %p96 = scmp.ne.s32.totalorder %s91, %s93
    %p97 = scmp.eq.s32.totalorder %s15, 0
    %p98 = por %p96, %p97
    %p99 = scmp.ne.s32.totalorder %s91, %s93
    %p100 = scmp.eq.s32.totalorder %s20, 1
    %p101 = por %p99, %p100
    %p102 = scmp.ne.s32.totalorder %s93, %s94
    %p103 = scmp.eq.s32.totalorder %s20, 0
    %p104 = por %p102, %p103
    %p105 = scmp.ne.s32.totalorder %s93, %s94
    %p106 = scmp.eq.s32.totalorder %s21, 1
    %p107 = por %p105, %p106
    %p109 = scmp.ne.s32.totalorder %s94, %s108
    %p110 = scmp.eq.s32.totalorder %s21, 0
    %p111 = por %p109, %p110
    %s113 = sadd.s32 %s112, 1
    %p116 = scmp.eq.s32.totalorder %s15, 1
    %p117 = scmp.ne.s32.totalorder %s112, %s114
    %p118 = scmp.eq.s32.totalorder %s15, 0
    %p119 = por %p117, %p118
    %p120 = scmp.ne.s32.totalorder %s112, %s114
    %p121 = scmp.eq.s32.totalorder %s20, 1
    %p122 = por %p120, %p121
    %p123 = scmp.ne.s32.totalorder %s114, %s115
    %p124 = scmp.eq.s32.totalorder %s20, 0
    %p125 = por %p123, %p124
    %p126 = scmp.ne.s32.totalorder %s114, %s115
    %p127 = scmp.eq.s32.totalorder %s21, 1
    %p128 = por %p126, %p127
    %p130 = scmp.ne.s32.totalorder %s115, %s129
    %p131 = scmp.eq.s32.totalorder %s21, 0
    %p132 = por %p130, %p131
    %s134 = sadd.s32 %s133, 1
    %p137 = scmp.eq.s32.totalorder %s15, 1
    %p138 = scmp.ne.s32.totalorder %s133, %s135
    %p139 = scmp.eq.s32.totalorder %s15, 0
    %p140 = por %p138, %p139
    %p141 = scmp.ne.s32.totalorder %s133, %s135
    %p142 = scmp.eq.s32.totalorder %s20, 1
    %p143 = por %p141, %p142
    %p144 = scmp.ne.s32.totalorder %s135, %s136
    %p145 = scmp.eq.s32.totalorder %s20, 0
    %p146 = por %p144, %p145
    %p147 = scmp.ne.s32.totalorder %s135, %s136
    %p148 = scmp.eq.s32.totalorder %s21, 1
    %p149 = por %p147, %p148
    %p151 = scmp.ne.s32.totalorder %s136, %s150
    %p152 = scmp.eq.s32.totalorder %s21, 0
    %p153 = por %p151, %p152
    %s155 = sadd.s32 %s154, 1
    %p158 = scmp.eq.s32.totalorder %s15, 1
    %p159 = scmp.ne.s32.totalorder %s154, %s156
    %p160 = scmp.eq.s32.totalorder %s15, 0
    %p161 = por %p159, %p160
    %p162 = scmp.ne.s32.totalorder %s154, %s156
    %p163 = scmp.eq.s32.totalorder %s20, 1
    %p164 = por %p162, %p163
    %p165 = scmp.ne.s32.totalorder %s156, %s157
    %p166 = scmp.eq.s32.totalorder %s20, 0
    %p167 = por %p165, %p166
    %p168 = scmp.ne.s32.totalorder %s156, %s157
    %p169 = scmp.eq.s32.totalorder %s21, 1
    %p170 = por %p168, %p169
    %p172 = scmp.ne.s32.totalorder %s157, %s171
    %p173 = scmp.eq.s32.totalorder %s21, 0
    %p174 = por %p172, %p173
    %s175 = ssub.s32 %s15, %s22
    %p176 = scmp.eq.s32.totalorder %s175, 0
    %s178 = sadd.s32 %s177, 1
    %s179 = scalar_select %p176, %s177, %s178
    %p182 = pneg %p176
    %p183 = scmp.eq.s32.totalorder %s15, 1
    %p184 = por %p182, %p183
    %p185 = scmp.ne.s32.totalorder %s177, %s180
    %p186 = scmp.eq.s32.totalorder %s15, 0
    %p187 = por %p185, %p186
    %p188 = scmp.ne.s32.totalorder %s177, %s180
    %p189 = scmp.eq.s32.totalorder %s20, 1
    %p190 = por %p188, %p189
    %p191 = scmp.ne.s32.totalorder %s180, %s181
    %p192 = scmp.eq.s32.totalorder %s20, 0
    %p193 = por %p191, %p192
    %p194 = scmp.ne.s32.totalorder %s180, %s181
    %p195 = scmp.eq.s32.totalorder %s21, 1
    %p196 = por %p194, %p195
    %p198 = scmp.ne.s32.totalorder %s181, %s197
    %p199 = scmp.eq.s32.totalorder %s21, 0
    %p200 = por %p198, %p199
    %s201 = ssub.s32 %s15, %s22
    %p202 = scmp.eq.s32.totalorder %s201, 0
    %s204 = sadd.s32 %s203, 1
    %s205 = scalar_select %p202, %s203, %s204
    %p208 = pneg %p202
    %p209 = scmp.eq.s32.totalorder %s15, 1
    %p210 = por %p208, %p209
    %p211 = scmp.ne.s32.totalorder %s203, %s206
    %p212 = scmp.eq.s32.totalorder %s15, 0
    %p213 = por %p211, %p212
    %p214 = scmp.ne.s32.totalorder %s203, %s206
    %p215 = scmp.eq.s32.totalorder %s20, 1
    %p216 = por %p214, %p215
    %p217 = scmp.ne.s32.totalorder %s206, %s207
    %p218 = scmp.eq.s32.totalorder %s20, 0
    %p219 = por %p217, %p218
    %p220 = scmp.ne.s32.totalorder %s206, %s207
    %p221 = scmp.eq.s32.totalorder %s21, 1
    %p222 = por %p220, %p221
    %p224 = scmp.ne.s32.totalorder %s207, %s223
    %p225 = scmp.eq.s32.totalorder %s21, 0
    %p226 = por %p224, %p225
    %p227 = scmp.le.s32.totalorder 1, %s15
    %p228 = scmp.lt.s32.totalorder %s15, 3
    %p229 = pnand %p227, %p228
    %p230 = pneg %p229
    // Predicated region
    $region9: #{decoder_forward.6} parent=5 // pred_check
      _
    $region10: #{decoder_forward.6} parent=5 // pred_check_branch
      %232 = sbr.rel (%p229) target = $region12
    $region11: #{decoder_forward.6} parent=5 // pred_region
      %s233 = ssub.s32 %s15, 1
      // Predicated region
      $region13: #{decoder_forward.6} parent=11 // pred_check
        %p234 = pneg %p62
      $region14: #{decoder_forward.6} parent=11 // pred_check_branch
        %236 = sbr.rel (%p234) target = $region16
      $region15: #{decoder_forward.6} parent=11 // pred_region
        _
      $region16: #{decoder_forward.6} parent=11 // pred_fallthru
        _
      // Predicated region
      $region17: #{decoder_forward.6} parent=11 // pred_check
        %p237 = pneg %p83
      $region18: #{decoder_forward.6} parent=11 // pred_check_branch
        %239 = sbr.rel (%p237) target = $region20
      $region19: #{decoder_forward.6} parent=11 // pred_region
        _
      $region20: #{decoder_forward.6} parent=11 // pred_fallthru
        _
      // Predicated region
      $region21: #{decoder_forward.6} parent=11 // pred_check
        %p240 = pneg %p104
      $region22: #{decoder_forward.6} parent=11 // pred_check_branch
        %242 = sbr.rel (%p240) target = $region24
      $region23: #{decoder_forward.6} parent=11 // pred_region
        _
      $region24: #{decoder_forward.6} parent=11 // pred_fallthru
        _
      // Predicated region
      $region25: #{decoder_forward.6} parent=11 // pred_check
        %p243 = pneg %p125
      $region26: #{decoder_forward.6} parent=11 // pred_check_branch
        %245 = sbr.rel (%p243) target = $region28
      $region27: #{decoder_forward.6} parent=11 // pred_region
        _
      $region28: #{decoder_forward.6} parent=11 // pred_fallthru
        _
      // Predicated region
      $region29: #{decoder_forward.6} parent=11 // pred_check
        %p246 = pneg %p146
      $region30: #{decoder_forward.6} parent=11 // pred_check_branch
        %248 = sbr.rel (%p246) target = $region32
      $region31: #{decoder_forward.6} parent=11 // pred_region
        _
      $region32: #{decoder_forward.6} parent=11 // pred_fallthru
        _
      // Predicated region
      $region33: #{decoder_forward.6} parent=11 // pred_check
        %p249 = pneg %p167
      $region34: #{decoder_forward.6} parent=11 // pred_check_branch
        %251 = sbr.rel (%p249) target = $region36
      $region35: #{decoder_forward.6} parent=11 // pred_region
        _
      $region36: #{decoder_forward.6} parent=11 // pred_fallthru
        _
    $region12: #{decoder_forward.6} parent=5 // pred_fallthru
      _
    %p252 = scmp.lt.s32.totalorder %s15, 2
    // Predicated region
    $region37: #{decoder_forward.6} parent=5 // pred_check
      %p253 = pneg %p252
    $region38: #{decoder_forward.6} parent=5 // pred_check_branch
      %255 = sbr.rel (%p253) target = $region40
    $region39: #{decoder_forward.6} parent=5 // pred_region
      // Predicated region
      $region41: #{decoder_forward.6} parent=39 // pred_check
        %p256 = pneg %p35
      $region42: #{decoder_forward.6} parent=39 // pred_check_branch
        %258 = sbr.rel (%p256) target = $region44
      $region43: #{decoder_forward.6} parent=39 // pred_region
        %p259 = scmp.lt.s32.totalorder %s15, 1
        %s260 = scalar_select %p259, %s15, 1
        %s261 = smul.addr %s260, 39
        %s262 = smul.addr %s261, 8
        %s263 = scalar_lea.vmem %s0, %s262
      $region44: #{decoder_forward.6} parent=39 // pred_fallthru
        _
    $region40: #{decoder_forward.6} parent=5 // pred_fallthru
      _
    %p264 = scmp.le.s32.totalorder 1, %s15
    %p265 = scmp.lt.s32.totalorder %s15, 3
    %p266 = pnand %p264, %p265
    %p267 = pneg %p266
    // Predicated region
    $region45: #{decoder_forward.6} parent=5 // pred_check
      _
    $region46: #{decoder_forward.6} parent=5 // pred_check_branch
      %269 = sbr.rel (%p266) target = $region48
    $region47: #{decoder_forward.6} parent=5 // pred_region
      %s270 = ssub.s32 %s15, 1
      %p271 = scmp.lt.s32.totalorder %s20, 1
      %s272 = scalar_select %p271, %s20, 1
      %s273 = smul.addr %s272, 39
      %s274 = smul.addr %s273, 8
      %s275 = scalar_lea.vmem %s0, %s274
      %p276 = pneg %p41
      %p277 = pneg %p38
      %p278 = pneg %p62
      %p279 = pneg %p59
      %p280 = pneg %p83
      %p281 = pneg %p80
      %p282 = pneg %p104
      %p283 = pneg %p101
      %p284 = pneg %p125
      %p285 = pneg %p122
      %p286 = pneg %p146
      %p287 = pneg %p143
      %p288 = pneg %p167
      %p289 = pneg %p164
      %p290 = pneg %p193
      %p291 = pneg %p190
      %p292 = scmp.lt.s32.totalorder %s20, 1
      %s293 = scalar_select %p292, %s20, 1
      %s294 = smul.addr %s293, 34
      %s295 = smul.addr %s294, 8
      %s296 = scalar_lea.vmem %s7, %s295
      %p297 = pneg %p219
      %p298 = pneg %p216
      %p299 = scmp.lt.s32.totalorder %s20, 1
      %s300 = scalar_select %p299, %s20, 1
      %s301 = smul.addr %s300, 2
      %s302 = scalar_lea.vmem %s8, %s301
      %p303 = scmp.lt.s32.totalorder %s20, 1
      %s304 = scalar_select %p303, %s20, 1
      %s305 = smul.addr %s304, 39
      %s306 = smul.addr %s305, 8
      %s307 = scalar_lea.vmem %s0, %s306
      %p308 = scmp.lt.s32.totalorder %s20, 1
      %s309 = scalar_select %p308, %s20, 1
      %s310 = smul.addr %s309, 34
      %s311 = smul.addr %s310, 8
      %s312 = scalar_lea.vmem %s7, %s311
      %p313 = scmp.lt.s32.totalorder %s20, 1
      %s314 = scalar_select %p313, %s20, 1
      %s315 = smul.addr %s314, 2
      %s316 = scalar_lea.vmem %s8, %s315
      %v318 = vld [vmem:[%s307] sm:$0xff]
      %v319 = vld [vmem:[%s307 + $0x8] sm:$0xff]
      %v320 = vld [vmem:[%s307 + $0x10] sm:$0xff]
      %v321 = vld [vmem:[%s307 + $0x18] sm:$0xff]
      %v322 = vld [vmem:[%s307 + $0x20] sm:$0xff]
      %v323 = vld [vmem:[%s307 + $0x28] sm:$0xff]
      %v324 = vld [vmem:[%s307 + $0x30] sm:$0xff]
      %v325 = vld [vmem:[%s307 + $0x38] sm:$0xff]
      %v326 = vld [vmem:[%s307 + $0x40] sm:$0xff]
      %v327 = vld [vmem:[%s307 + $0x48] sm:$0xff]
      %v328 = vld [vmem:[%s307 + $0x50] sm:$0xff]
      %v329 = vld [vmem:[%s307 + $0x58] sm:$0xff]
      %v330 = vld [vmem:[%s307 + $0x60] sm:$0xff]
      %v331 = vld [vmem:[%s307 + $0x68] sm:$0xff]
      %v332 = vld [vmem:[%s307 + $0x70] sm:$0xff]
      %v333 = vld [vmem:[%s307 + $0x78] sm:$0xff]
      %v334 = vld [vmem:[%s307 + $0x80] sm:$0xff]
      %v335 = vld [vmem:[%s307 + $0x88] sm:$0xff]
      %v336 = vld [vmem:[%s307 + $0x90] sm:$0xff]
      %v337 = vld [vmem:[%s307 + $0x98] sm:$0xff]
      %v338 = vld [vmem:[%s307 + $0xa0] sm:$0xff]
      %v339 = vld [vmem:[%s307 + $0xa8] sm:$0xff]
      %v340 = vld [vmem:[%s307 + $0xb0] sm:$0xff]
      %v341 = vld [vmem:[%s307 + $0xb8] sm:$0xff]
      %v342 = vld [vmem:[%s307 + $0xc0] sm:$0xff]
      %v343 = vld [vmem:[%s307 + $0xc8] sm:$0xff]
      %v344 = vld [vmem:[%s307 + $0xd0] sm:$0xff]
      %v345 = vld [vmem:[%s307 + $0xd8] sm:$0xff]
      %v346 = vld [vmem:[%s307 + $0xe0] sm:$0xff]
      %v347 = vld [vmem:[%s307 + $0xe8] sm:$0xff]
      %v348 = vld [vmem:[%s307 + $0xf0] sm:$0xff]
      %v349 = vld [vmem:[%s307 + $0xf8] sm:$0xff]
      %v350 = vld [vmem:[%s307 + $0x100] sm:$0xff]
      %v351 = vld [vmem:[%s307 + $0x108] sm:$0xff]
      %v352 = vpack.c.bf16 %v319, %v318
      %v353 = vpack.c.bf16 %v321, %v320
      %v354 = vpack.c.bf16 %v323, %v322
      %v355 = vpack.c.bf16 %v325, %v324
      %v356 = vpack.c.bf16 %v327, %v326
      %v357 = vpack.c.bf16 %v329, %v328
      %v358 = vpack.c.bf16 %v331, %v330
      %v359 = vpack.c.bf16 %v333, %v332
      %v360 = vpack.c.bf16 %v335, %v334
      %v361 = vpack.c.bf16 %v337, %v336
      %v362 = vpack.c.bf16 %v339, %v338
      %v363 = vpack.c.bf16 %v341, %v340
      %v364 = vpack.c.bf16 %v343, %v342
      %v365 = vpack.c.bf16 %v345, %v344
      %v366 = vpack.c.bf16 %v347, %v346
      %v367 = vpack.c.bf16 %v349, %v348
      %v368 = vpack.c.bf16 %v351, %v350
      %v369 = vld [vmem:[%s307 + $0x1] sm:$0xff]
      %v370 = vld [vmem:[%s307 + $0x9] sm:$0xff]
      %v371 = vld [vmem:[%s307 + $0x11] sm:$0xff]
      %v372 = vld [vmem:[%s307 + $0x19] sm:$0xff]
      %v373 = vld [vmem:[%s307 + $0x21] sm:$0xff]
      %v374 = vld [vmem:[%s307 + $0x29] sm:$0xff]
      %v375 = vld [vmem:[%s307 + $0x31] sm:$0xff]
      %v376 = vld [vmem:[%s307 + $0x39] sm:$0xff]
      %v377 = vld [vmem:[%s307 + $0x41] sm:$0xff]
      %v378 = vld [vmem:[%s307 + $0x49] sm:$0xff]
      %v379 = vld [vmem:[%s307 + $0x51] sm:$0xff]
      %v380 = vld [vmem:[%s307 + $0x59] sm:$0xff]
      %v381 = vld [vmem:[%s307 + $0x61] sm:$0xff]
      %v382 = vld [vmem:[%s307 + $0x69] sm:$0xff]
      %v383 = vld [vmem:[%s307 + $0x71] sm:$0xff]
      %v384 = vld [vmem:[%s307 + $0x79] sm:$0xff]
      %v385 = vld [vmem:[%s307 + $0x81] sm:$0xff]
      %v386 = vld [vmem:[%s307 + $0x89] sm:$0xff]
      %v387 = vld [vmem:[%s307 + $0x91] sm:$0xff]
      %v388 = vld [vmem:[%s307 + $0x99] sm:$0xff]
      %v389 = vld [vmem:[%s307 + $0xa1] sm:$0xff]
      %v390 = vld [vmem:[%s307 + $0xa9] sm:$0xff]
      %v391 = vld [vmem:[%s307 + $0xb1] sm:$0xff]
      %v392 = vld [vmem:[%s307 + $0xb9] sm:$0xff]
      %v393 = vld [vmem:[%s307 + $0xc1] sm:$0xff]
      %v394 = vld [vmem:[%s307 + $0xc9] sm:$0xff]
      %v395 = vld [vmem:[%s307 + $0xd1] sm:$0xff]
      %v396 = vld [vmem:[%s307 + $0xd9] sm:$0xff]
      %v397 = vld [vmem:[%s307 + $0xe1] sm:$0xff]
      %v398 = vld [vmem:[%s307 + $0xe9] sm:$0xff]
      %v399 = vld [vmem:[%s307 + $0xf1] sm:$0xff]
      %v400 = vld [vmem:[%s307 + $0xf9] sm:$0xff]
      %v401 = vld [vmem:[%s307 + $0x101] sm:$0xff]
      %v402 = vld [vmem:[%s307 + $0x109] sm:$0xff]
      %v403 = vpack.c.bf16 %v370, %v369
      %v404 = vpack.c.bf16 %v372, %v371
      %v405 = vpack.c.bf16 %v374, %v373
      %v406 = vpack.c.bf16 %v376, %v375
      %v407 = vpack.c.bf16 %v378, %v377
      %v408 = vpack.c.bf16 %v380, %v379
      %v409 = vpack.c.bf16 %v382, %v381
      %v410 = vpack.c.bf16 %v384, %v383
      %v411 = vpack.c.bf16 %v386, %v385
      %v412 = vpack.c.bf16 %v388, %v387
      %v413 = vpack.c.bf16 %v390, %v389
      %v414 = vpack.c.bf16 %v392, %v391
      %v415 = vpack.c.bf16 %v394, %v393
      %v416 = vpack.c.bf16 %v396, %v395
      %v417 = vpack.c.bf16 %v398, %v397
      %v418 = vpack.c.bf16 %v400, %v399
      %v419 = vpack.c.bf16 %v402, %v401
      %v420 = vld [vmem:[%s307 + $0x111] sm:$0xff]
      %v421 = vld [vmem:[%s307 + $0x119] sm:$0xff]
      %v422 = vpack.c.bf16 %v421, %v420
      %v423 = vld [vmem:[%s307 + $0x12] sm:$0xff]
      %v424 = vld [vmem:[%s307 + $0x1a] sm:$0xff]
      %v425 = vld [vmem:[%s307 + $0x22] sm:$0xff]
      %v426 = vld [vmem:[%s307 + $0x2a] sm:$0xff]
      %v427 = vld [vmem:[%s307 + $0x32] sm:$0xff]
      %v428 = vld [vmem:[%s307 + $0x3a] sm:$0xff]
      %v429 = vld [vmem:[%s307 + $0x42] sm:$0xff]
      %v430 = vld [vmem:[%s307 + $0x4a] sm:$0xff]
      %v431 = vld [vmem:[%s307 + $0x52] sm:$0xff]
      %v432 = vld [vmem:[%s307 + $0x5a] sm:$0xff]
      %v433 = vld [vmem:[%s307 + $0x62] sm:$0xff]
      %v434 = vld [vmem:[%s307 + $0x6a] sm:$0xff]
      %v435 = vld [vmem:[%s307 + $0x72] sm:$0xff]
      %v436 = vld [vmem:[%s307 + $0x7a] sm:$0xff]
      %v437 = vld [vmem:[%s307 + $0x82] sm:$0xff]
      %v438 = vld [vmem:[%s307 + $0x8a] sm:$0xff]
      %v439 = vld [vmem:[%s307 + $0x92] sm:$0xff]
      %v440 = vld [vmem:[%s307 + $0x9a] sm:$0xff]
      %v441 = vld [vmem:[%s307 + $0xa2] sm:$0xff]
      %v442 = vld [vmem:[%s307 + $0xaa] sm:$0xff]
      %v443 = vld [vmem:[%s307 + $0xb2] sm:$0xff]
      %v444 = vld [vmem:[%s307 + $0xba] sm:$0xff]
      %v445 = vld [vmem:[%s307 + $0xc2] sm:$0xff]
      %v446 = vld [vmem:[%s307 + $0xca] sm:$0xff]
      %v447 = vld [vmem:[%s307 + $0xd2] sm:$0xff]
      %v448 = vld [vmem:[%s307 + $0xda] sm:$0xff]
      %v449 = vld [vmem:[%s307 + $0xe2] sm:$0xff]
      %v450 = vld [vmem:[%s307 + $0xea] sm:$0xff]
      %v451 = vld [vmem:[%s307 + $0xf2] sm:$0xff]
      %v452 = vld [vmem:[%s307 + $0xfa] sm:$0xff]
      %v453 = vld [vmem:[%s307 + $0x102] sm:$0xff]
      %v454 = vld [vmem:[%s307 + $0x10a] sm:$0xff]
      %v455 = vld [vmem:[%s307 + $0x112] sm:$0xff]
      %v456 = vld [vmem:[%s307 + $0x11a] sm:$0xff]
      %v457 = vpack.c.bf16 %v424, %v423
      %v458 = vpack.c.bf16 %v426, %v425
      %v459 = vpack.c.bf16 %v428, %v427
      %v460 = vpack.c.bf16 %v430, %v429
      %v461 = vpack.c.bf16 %v432, %v431
      %v462 = vpack.c.bf16 %v434, %v433
      %v463 = vpack.c.bf16 %v436, %v435
      %v464 = vpack.c.bf16 %v438, %v437
      %v465 = vpack.c.bf16 %v440, %v439
      %v466 = vpack.c.bf16 %v442, %v441
      %v467 = vpack.c.bf16 %v444, %v443
      %v468 = vpack.c.bf16 %v446, %v445
      %v469 = vpack.c.bf16 %v448, %v447
      %v470 = vpack.c.bf16 %v450, %v449
      %v471 = vpack.c.bf16 %v452, %v451
      %v472 = vpack.c.bf16 %v454, %v453
      %v473 = vpack.c.bf16 %v456, %v455
      %v474 = vld [vmem:[%s1] sm:$0xf]
      %v475 = vld [vmem:[%s1 + $0x4] sm:$0xf]
      %v476 = vld [vmem:[%s1 + $0x8] sm:$0xf]
      %v477 = vld [vmem:[%s1 + $0xc] sm:$0xf]
      %v478 = vld [vmem:[%s1 + $0x10] sm:$0xf]
      %v479 = vld [vmem:[%s1 + $0x14] sm:$0xf]
      %v480 = vld [vmem:[%s1 + $0x18] sm:$0xf]
      %v481 = vld [vmem:[%s1 + $0x1c] sm:$0xf]
      %v482 = vld [vmem:[%s2] sm:$0xf]
      %v483 = vld [vmem:[%s2 + $0x4] sm:$0xf]
      %v484 = vld [vmem:[%s2 + $0x8] sm:$0xf]
      %v485 = vld [vmem:[%s2 + $0xc] sm:$0xf]
      %v486 = vld [vmem:[%s2 + $0x10] sm:$0xf]
      %v487 = vld [vmem:[%s2 + $0x14] sm:$0xf]
      %v488 = vld [vmem:[%s2 + $0x18] sm:$0xf]
      %v489 = vld [vmem:[%s2 + $0x1c] sm:$0xf]
      %v498 = vunpack.c.l.b16 %v482
      %v499 = vunpack.c.l.b16 %v483
      %v500 = vunpack.c.l.b16 %v484
      %v501 = vunpack.c.l.b16 %v485
      %v502 = vunpack.c.l.b16 %v486
      %v503 = vunpack.c.l.b16 %v487
      %v504 = vunpack.c.l.b16 %v488
      %v505 = vunpack.c.l.b16 %v489
      %v506 = vpack.c.b16 %v499, %v498
      %v507 = vpack.c.b16 %v501, %v500
      %v508 = vpack.c.b16 %v503, %v502
      %v509 = vpack.c.b16 %v505, %v504
      %vm514 = vcmask 523264
      %v516 = vsel %vm514, %v403, 0
      %v519 = vsel %vm514, %v404, 0
      %v522 = vsel %vm514, %v405, 0
      %v525 = vsel %vm514, %v406, 0
      %v528 = vsel %vm514, %v407, 0
      %v531 = vsel %vm514, %v408, 0
      %v534 = vsel %vm514, %v409, 0
      %v537 = vsel %vm514, %v410, 0
      %v540 = vsel %vm514, %v411, 0
      %v543 = vsel %vm514, %v412, 0
      %v546 = vsel %vm514, %v413, 0
      %v549 = vsel %vm514, %v414, 0
      %v552 = vsel %vm514, %v415, 0
      %v555 = vsel %vm514, %v416, 0
      %v558 = vsel %vm514, %v417, 0
      %v561 = vsel %vm514, %v418, 0
      %v564 = vsel %vm514, %v419, 0
      %566 = vmatprep.subr.bf16.mxu0 0
      %567 = vmatpush1.bf16.msra.mxu0 %v506
      %568 = vmatprep.subr.bf16.mxu0 0
      %569 = vmatpush1.bf16.msra.mxu0 %v507
      %570 = vmatprep.subr.bf16.mxu0 0
      %571 = vmatpush1.bf16.msra.mxu0 %v508
      %572 = vmatprep.subr.bf16.mxu0 0
      %573 = vmatpush1.bf16.msra.mxu0 %v509
      %574 = vmatprep.subr.bf16.mxu0 0
      %575 = vmatpush1.bf16.msra.mxu0 0
      %576 = vmatprep.subr.bf16.mxu0 0
      %577 = vmatpush1.bf16.msra.mxu0 0
      %578 = vmatprep.subr.bf16.mxu0 0
      %579 = vmatpush1.bf16.msra.mxu0 0
      %580 = vmatprep.subr.bf16.mxu0 0
      %581 = vmatpush1.bf16.msra.mxu0 0
      %582 = vmatprep.subr.bf16.mxu0 0
      %583 = vmatpush1.bf16.msra.mxu0 0
      %584 = vmatprep.subr.bf16.mxu0 0
      %585 = vmatpush1.bf16.msra.mxu0 0
      %586 = vmatprep.subr.bf16.mxu0 0
      %587 = vmatpush1.bf16.msra.mxu0 0
      %588 = vmatprep.subr.bf16.mxu0 0
      %589 = vmatpush1.bf16.msra.mxu0 0
      %590 = vmatprep.subr.bf16.mxu0 0
      %591 = vmatpush1.bf16.msra.mxu0 0
      %592 = vmatprep.subr.bf16.mxu0 0
      %593 = vmatpush1.bf16.msra.mxu0 0
      %594 = vmatprep.subr.bf16.mxu0 0
      %595 = vmatpush1.bf16.msra.mxu0 0
      %596 = vmatprep.subr.bf16.mxu0 0
      %597 = vmatpush1.bf16.msra.mxu0 0
      %598 = vmatprep.mubr.bf16.mxu0 0
      %599 = vmatmul.mubr.bf16.gmra.mrb[0].mxu0 %v516
      %v600 = vpop.f32.mrb[0].mxu0
      %v601 = vadd.f32 0.0, %v600
      %v602 = vpop.f32.mrb[0].mxu0
      %v603 = vpop.f32.mrb[0].mxu0
      %v604 = vadd.f32 0.0, %v603
      %v605 = vpop.f32.mrb[0].mxu0
      %606 = vmatprep.mubr.bf16.mxu0 0
      %607 = vmatmul.mubr.bf16.gmra.mrb[0].mxu0 %v519
      %v608 = vpop.f32.mrb[0].mxu0
      %v609 = vadd.f32 0.0, %v608
      %v610 = vpop.f32.mrb[0].mxu0
      %v611 = vpop.f32.mrb[0].mxu0
      %v612 = vadd.f32 0.0, %v611
      %v613 = vpop.f32.mrb[0].mxu0
      %614 = vmatprep.mubr.bf16.mxu0 0
      %615 = vmatmul.mubr.bf16.gmra.mrb[0].mxu0 %v522
      %v616 = vpop.f32.mrb[0].mxu0
      %v617 = vadd.f32 0.0, %v616
      %v618 = vpop.f32.mrb[0].mxu0
      %v619 = vpop.f32.mrb[0].mxu0
      %v620 = vadd.f32 0.0, %v619
      %v621 = vpop.f32.mrb[0].mxu0
      %622 = vmatprep.mubr.bf16.mxu0 0
      %623 = vmatmul.mubr.bf16.gmra.mrb[0].mxu0 %v525
      %v624 = vpop.f32.mrb[0].mxu0
      %v625 = vadd.f32 0.0, %v624
      %v626 = vpop.f32.mrb[0].mxu0
      %v627 = vpop.f32.mrb[0].mxu0
      %v628 = vadd.f32 0.0, %v627
      %v629 = vpop.f32.mrb[0].mxu0
      %630 = vmatprep.mubr.bf16.mxu0 0
      %631 = vmatmul.mubr.bf16.gmra.mrb[0].mxu0 %v528
      %v632 = vpop.f32.mrb[0].mxu0
      %v633 = vadd.f32 0.0, %v632
      %v634 = vpop.f32.mrb[0].mxu0
      %v635 = vpop.f32.mrb[0].mxu0
      %v636 = vadd.f32 0.0, %v635
      %v637 = vpop.f32.mrb[0].mxu0
      %638 = vmatprep.mubr.bf16.mxu0 0
      %639 = vmatmul.mubr.bf16.gmra.mrb[0].mxu0 %v531
      %v640 = vpop.f32.mrb[0].mxu0
      %v641 = vadd.f32 0.0, %v640
      %v642 = vpop.f32.mrb[0].mxu0
      %v643 = vpop.f32.mrb[0].mxu0
      %v644 = vadd.f32 0.0, %v643
      %v645 = vpop.f32.mrb[0].mxu0
      %646 = vmatprep.mubr.bf16.mxu0 0
      %647 = vmatmul.mubr.bf16.gmra.mrb[0].mxu0 %v534
      %v648 = vpop.f32.mrb[0].mxu0
      %v649 = vadd.f32 0.0, %v648
      %v650 = vpop.f32.mrb[0].mxu0
      %v651 = vpop.f32.mrb[0].mxu0
      %v652 = vadd.f32 0.0, %v651
      %v653 = vpop.f32.mrb[0].mxu0
      %654 = vmatprep.mubr.bf16.mxu0 0
      %655 = vmatmul.mubr.bf16.gmra.mrb[0].mxu0 %v537
      %v656 = vpop.f32.mrb[0].mxu0
      %v657 = vadd.f32 0.0, %v656
      %v658 = vpop.f32.mrb[0].mxu0
      %v659 = vpop.f32.mrb[0].mxu0
      %v660 = vadd.f32 0.0, %v659
      %v661 = vpop.f32.mrb[0].mxu0
      %662 = vmatprep.mubr.bf16.mxu0 0
      %663 = vmatmul.mubr.bf16.gmra.mrb[0].mxu0 %v540
      %v664 = vpop.f32.mrb[0].mxu0
      %v665 = vadd.f32 0.0, %v664
      %v666 = vpop.f32.mrb[0].mxu0
      %v667 = vpop.f32.mrb[0].mxu0
      %v668 = vadd.f32 0.0, %v667
      %v669 = vpop.f32.mrb[0].mxu0
      %670 = vmatprep.mubr.bf16.mxu0 0
      %671 = vmatmul.mubr.bf16.gmra.mrb[0].mxu0 %v543
      %v672 = vpop.f32.mrb[0].mxu0
      %v673 = vadd.f32 0.0, %v672
      %v674 = vpop.f32.mrb[0].mxu0
      %v675 = vpop.f32.mrb[0].mxu0
      %v676 = vadd.f32 0.0, %v675
      %v677 = vpop.f32.mrb[0].mxu0
      %678 = vmatprep.mubr.bf16.mxu0 0
      %679 = vmatmul.mubr.bf16.gmra.mrb[0].mxu0 %v546
      %v680 = vpop.f32.mrb[0].mxu0
      %v681 = vadd.f32 0.0, %v680
      %v682 = vpop.f32.mrb[0].mxu0
      %v683 = vpop.f32.mrb[0].mxu0
      %v684 = vadd.f32 0.0, %v683
      %v685 = vpop.f32.mrb[0].mxu0
      %686 = vmatprep.mubr.bf16.mxu0 0
      %687 = vmatmul.mubr.bf16.gmra.mrb[0].mxu0 %v549
      %v688 = vpop.f32.mrb[0].mxu0
      %v689 = vadd.f32 0.0, %v688
      %v690 = vpop.f32.mrb[0].mxu0
      %v691 = vpop.f32.mrb[0].mxu0
      %v692 = vadd.f32 0.0, %v691
      %v693 = vpop.f32.mrb[0].mxu0
      %694 = vmatprep.mubr.bf16.mxu0 0
      %695 = vmatmul.mubr.bf16.gmra.mrb[0].mxu0 %v552
      %v696 = vpop.f32.mrb[0].mxu0
      %v697 = vadd.f32 0.0, %v696
      %v698 = vpop.f32.mrb[0].mxu0
      %v699 = vpop.f32.mrb[0].mxu0
      %v700 = vadd.f32 0.0, %v699
      %v701 = vpop.f32.mrb[0].mxu0
      %702 = vmatprep.mubr.bf16.mxu0 0
      %703 = vmatmul.mubr.bf16.gmra.mrb[0].mxu0 %v555
      %v704 = vpop.f32.mrb[0].mxu0
      %v705 = vadd.f32 0.0, %v704
      %v706 = vpop.f32.mrb[0].mxu0
      %v707 = vpop.f32.mrb[0].mxu0
      %v708 = vadd.f32 0.0, %v707
      %v709 = vpop.f32.mrb[0].mxu0
      %710 = vmatprep.mubr.bf16.mxu0 0
      %711 = vmatmul.mubr.bf16.gmra.mrb[0].mxu0 %v558
      %v712 = vpop.f32.mrb[0].mxu0
      %v713 = vadd.f32 0.0, %v712
      %v714 = vpop.f32.mrb[0].mxu0
      %v715 = vpop.f32.mrb[0].mxu0
      %v716 = vadd.f32 0.0, %v715
      %v717 = vpop.f32.mrb[0].mxu0
      %718 = vmatprep.mubr.bf16.mxu0 0
      %719 = vmatmul.mubr.bf16.gmra.mrb[0].mxu0 %v561
      %v720 = vpop.f32.mrb[0].mxu0
      %v721 = vadd.f32 0.0, %v720
      %v722 = vpop.f32.mrb[0].mxu0
      %v723 = vpop.f32.mrb[0].mxu0
      %v724 = vadd.f32 0.0, %v723
      %v725 = vpop.f32.mrb[0].mxu0
      %726 = vmatprep.mubr.bf16.mxu0 0
      %727 = vmatmul.mubr.bf16.gmra.mrb[0].mxu0 %v564
      %v728 = vpop.f32.mrb[0].mxu0
      %v729 = vadd.f32 0.0, %v728
      %v730 = vpop.f32.mrb[0].mxu0
      %v731 = vpop.f32.mrb[0].mxu0
      %v732 = vadd.f32 0.0, %v731
      %v733 = vpop.f32.mrb[0].mxu0
      %734 = vdwg.mxu0
      %v743 = vunpack.c.l.b16 %v474
      %v744 = vunpack.c.l.b16 %v475
      %v745 = vunpack.c.l.b16 %v476
      %v746 = vunpack.c.l.b16 %v477
      %v747 = vunpack.c.l.b16 %v478
      %v748 = vunpack.c.l.b16 %v479
      %v749 = vunpack.c.l.b16 %v480
      %v750 = vunpack.c.l.b16 %v481
      %v751 = vpack.c.b16 %v744, %v743
      %v752 = vpack.c.b16 %v746, %v745
      %v753 = vpack.c.b16 %v748, %v747
      %v754 = vpack.c.b16 %v750, %v749
      %v760 = vsel %vm514, %v352, 0
      %v763 = vsel %vm514, %v353, 0
      %v766 = vsel %vm514, %v354, 0
      %v769 = vsel %vm514, %v355, 0
      %v772 = vsel %vm514, %v356, 0
      %v775 = vsel %vm514, %v357, 0
      %v778 = vsel %vm514, %v358, 0
      %v781 = vsel %vm514, %v359, 0
      %v784 = vsel %vm514, %v360, 0
      %v787 = vsel %vm514, %v361, 0
      %v790 = vsel %vm514, %v362, 0
      %v793 = vsel %vm514, %v363, 0
      %v796 = vsel %vm514, %v364, 0
      %v799 = vsel %vm514, %v365, 0
      %v802 = vsel %vm514, %v366, 0
      %v805 = vsel %vm514, %v367, 0
      %v808 = vsel %vm514, %v368, 0
      %810 = vmatprep.subr.bf16.mxu0 0
      %811 = vmatpush1.bf16.msra.mxu0 %v751
      %812 = vmatprep.subr.bf16.mxu0 0
      %813 = vmatpush1.bf16.msra.mxu0 %v752
      %814 = vmatprep.subr.bf16.mxu0 0
      %815 = vmatpush1.bf16.msra.mxu0 %v753
      %816 = vmatprep.subr.bf16.mxu0 0
      %817 = vmatpush1.bf16.msra.mxu0 %v754
      %818 = vmatprep.subr.bf16.mxu0 0
      %819 = vmatpush1.bf16.msra.mxu0 0
      %820 = vmatprep.subr.bf16.mxu0 0
      %821 = vmatpush1.bf16.msra.mxu0 0
      %822 = vmatprep.subr.bf16.mxu0 0
      %823 = vmatpush1.bf16.msra.mxu0 0
      %824 = vmatprep.subr.bf16.mxu0 0
      %825 = vmatpush1.bf16.msra.mxu0 0
      %826 = vmatprep.subr.bf16.mxu0 0
      %827 = vmatpush1.bf16.msra.mxu0 0
      %828 = vmatprep.subr.bf16.mxu0 0
      %829 = vmatpush1.bf16.msra.mxu0 0
      %830 = vmatprep.subr.bf16.mxu0 0
      %831 = vmatpush1.bf16.msra.mxu0 0
      %832 = vmatprep.subr.bf16.mxu0 0
      %833 = vmatpush1.bf16.msra.mxu0 0
      %834 = vmatprep.subr.bf16.mxu0 0
      %835 = vmatpush1.bf16.msra.mxu0 0
      %836 = vmatprep.subr.bf16.mxu0 0
      %837 = vmatpush1.bf16.msra.mxu0 0
      %838 = vmatprep.subr.bf16.mxu0 0
      %839 = vmatpush1.bf16.msra.mxu0 0
      %840 = vmatprep.subr.bf16.mxu0 0
      %841 = vmatpush1.bf16.msra.mxu0 0
      %842 = vmatprep.mubr.bf16.mxu0 0
      %843 = vmatmul.mubr.bf16.gmra.mrb[0].mxu0 %v760
      %v844 = vpop.f32.mrb[0].mxu0
      %v845 = vadd.f32 %v601, %v844
      %v846 = vpop.f32.mrb[0].mxu0
      %v847 = vpop.f32.mrb[0].mxu0
      %v848 = vadd.f32 %v604, %v847
      %v849 = vpop.f32.mrb[0].mxu0
      %850 = vmatprep.mubr.bf16.mxu0 0
      %851 = vmatmul.mubr.bf16.gmra.mrb[0].mxu0 %v763
      %v852 = vpop.f32.mrb[0].mxu0
      %v853 = vadd.f32 %v609, %v852
      %v854 = vpop.f32.mrb[0].mxu0
      %v855 = vpop.f32.mrb[0].mxu0
      %v856 = vadd.f32 %v612, %v855
      %v857 = vpop.f32.mrb[0].mxu0
      %858 = vmatprep.mubr.bf16.mxu0 0
      %859 = vmatmul.mubr.bf16.gmra.mrb[0].mxu0 %v766
      %v860 = vpop.f32.mrb[0].mxu0
      %v861 = vadd.f32 %v617, %v860
      %v862 = vpop.f32.mrb[0].mxu0
      %v863 = vpop.f32.mrb[0].mxu0
      %v864 = vadd.f32 %v620, %v863
      %v865 = vpop.f32.mrb[0].mxu0
      %866 = vmatprep.mubr.bf16.mxu0 0
      %867 = vmatmul.mubr.bf16.gmra.mrb[0].mxu0 %v769
      %v868 = vpop.f32.mrb[0].mxu0
      %v869 = vadd.f32 %v625, %v868
      %v870 = vpop.f32.mrb[0].mxu0
      %v871 = vpop.f32.mrb[0].mxu0
      %v872 = vadd.f32 %v628, %v871
      %v873 = vpop.f32.mrb[0].mxu0
      %874 = vmatprep.mubr.bf16.mxu0 0
      %875 = vmatmul.mubr.bf16.gmra.mrb[0].mxu0 %v772
      %v876 = vpop.f32.mrb[0].mxu0
      %v877 = vadd.f32 %v633, %v876
      %v878 = vpop.f32.mrb[0].mxu0
      %v879 = vpop.f32.mrb[0].mxu0
      %v880 = vadd.f32 %v636, %v879
      %v881 = vpop.f32.mrb[0].mxu0
      %882 = vmatprep.mubr.bf16.mxu0 0
      %883 = vmatmul.mubr.bf16.gmra.mrb[0].mxu0 %v775
      %v884 = vpop.f32.mrb[0].mxu0
      %v885 = vadd.f32 %v641, %v884
      %v886 = vpop.f32.mrb[0].mxu0
      %v887 = vpop.f32.mrb[0].mxu0
      %v888 = vadd.f32 %v644, %v887
      %v889 = vpop.f32.mrb[0].mxu0
      %890 = vmatprep.mubr.bf16.mxu0 0
      %891 = vmatmul.mubr.bf16.gmra.mrb[0].mxu0 %v778
      %v892 = vpop.f32.mrb[0].mxu0
      %v893 = vadd.f32 %v649, %v892
      %v894 = vpop.f32.mrb[0].mxu0
      %v895 = vpop.f32.mrb[0].mxu0
      %v896 = vadd.f32 %v652, %v895
      %v897 = vpop.f32.mrb[0].mxu0
      %898 = vmatprep.mubr.bf16.mxu0 0
      %899 = vmatmul.mubr.bf16.gmra.mrb[0].mxu0 %v781
      %v900 = vpop.f32.mrb[0].mxu0
      %v901 = vadd.f32 %v657, %v900
      %v902 = vpop.f32.mrb[0].mxu0
      %v903 = vpop.f32.mrb[0].mxu0
      %v904 = vadd.f32 %v660, %v903
      %v905 = vpop.f32.mrb[0].mxu0
      %906 = vmatprep.mubr.bf16.mxu0 0
      %907 = vmatmul.mubr.bf16.gmra.mrb[0].mxu0 %v784
      %v908 = vpop.f32.mrb[0].mxu0
      %v909 = vadd.f32 %v665, %v908
      %v910 = vpop.f32.mrb[0].mxu0
      %v911 = vpop.f32.mrb[0].mxu0
      %v912 = vadd.f32 %v668, %v911
      %v913 = vpop.f32.mrb[0].mxu0
      %914 = vmatprep.mubr.bf16.mxu0 0
      %915 = vmatmul.mubr.bf16.gmra.mrb[0].mxu0 %v787
      %v916 = vpop.f32.mrb[0].mxu0
      %v917 = vadd.f32 %v673, %v916
      %v918 = vpop.f32.mrb[0].mxu0
      %v919 = vpop.f32.mrb[0].mxu0
      %v920 = vadd.f32 %v676, %v919
      %v921 = vpop.f32.mrb[0].mxu0
      %922 = vmatprep.mubr.bf16.mxu0 0
      %923 = vmatmul.mubr.bf16.gmra.mrb[0].mxu0 %v790
      %v924 = vpop.f32.mrb[0].mxu0
      %v925 = vadd.f32 %v681, %v924
      %v926 = vpop.f32.mrb[0].mxu0
      %v927 = vpop.f32.mrb[0].mxu0
      %v928 = vadd.f32 %v684, %v927
      %v929 = vpop.f32.mrb[0].mxu0
      %930 = vmatprep.mubr.bf16.mxu0 0
      %931 = vmatmul.mubr.bf16.gmra.mrb[0].mxu0 %v793
      %v932 = vpop.f32.mrb[0].mxu0
      %v933 = vadd.f32 %v689, %v932
      %v934 = vpop.f32.mrb[0].mxu0
      %v935 = vpop.f32.mrb[0].mxu0
      %v936 = vadd.f32 %v692, %v935
      %v937 = vpop.f32.mrb[0].mxu0
      %938 = vmatprep.mubr.bf16.mxu0 0
      %939 = vmatmul.mubr.bf16.gmra.mrb[0].mxu0 %v796
      %v940 = vpop.f32.mrb[0].mxu0
      %v941 = vadd.f32 %v697, %v940
      %v942 = vpop.f32.mrb[0].mxu0
      %v943 = vpop.f32.mrb[0].mxu0
      %v944 = vadd.f32 %v700, %v943
      %v945 = vpop.f32.mrb[0].mxu0
      %946 = vmatprep.mubr.bf16.mxu0 0
      %947 = vmatmul.mubr.bf16.gmra.mrb[0].mxu0 %v799
      %v948 = vpop.f32.mrb[0].mxu0
      %v949 = vadd.f32 %v705, %v948
      %v950 = vpop.f32.mrb[0].mxu0
      %v951 = vpop.f32.mrb[0].mxu0
      %v952 = vadd.f32 %v708, %v951
      %v953 = vpop.f32.mrb[0].mxu0
      %954 = vmatprep.mubr.bf16.mxu0 0
      %955 = vmatmul.mubr.bf16.gmra.mrb[0].mxu0 %v802
      %v956 = vpop.f32.mrb[0].mxu0
      %v957 = vadd.f32 %v713, %v956
      %v958 = vpop.f32.mrb[0].mxu0
      %v959 = vpop.f32.mrb[0].mxu0
      %v960 = vadd.f32 %v716, %v959
      %v961 = vpop.f32.mrb[0].mxu0
      %962 = vmatprep.mubr.bf16.mxu0 0
      %963 = vmatmul.mubr.bf16.gmra.mrb[0].mxu0 %v805
      %v964 = vpop.f32.mrb[0].mxu0
      %v965 = vadd.f32 %v721, %v964
      %v966 = vpop.f32.mrb[0].mxu0
      %v967 = vpop.f32.mrb[0].mxu0
      %v968 = vadd.f32 %v724, %v967
      %v969 = vpop.f32.mrb[0].mxu0
      %970 = vmatprep.mubr.bf16.mxu0 0
      %971 = vmatmul.mubr.bf16.gmra.mrb[0].mxu0 %v808
      %v972 = vpop.f32.mrb[0].mxu0
      %v973 = vadd.f32 %v729, %v972
      %v974 = vpop.f32.mrb[0].mxu0
      %v975 = vpop.f32.mrb[0].mxu0
      %v976 = vadd.f32 %v732, %v975
      %v977 = vpop.f32.mrb[0].mxu0
      %978 = vdwg.mxu0
      %v979 = vld [vmem:[%s3] sm:$0xf]
      %v980 = vld [vmem:[%s3 + $0x4] sm:$0xf]
      %v981 = vld [vmem:[%s3 + $0x8] sm:$0xf]
      %v982 = vld [vmem:[%s3 + $0xc] sm:$0xf]
      %v983 = vld [vmem:[%s3 + $0x10] sm:$0xf]
      %v984 = vld [vmem:[%s3 + $0x14] sm:$0xf]
      %v985 = vld [vmem:[%s3 + $0x18] sm:$0xf]
      %v986 = vld [vmem:[%s3 + $0x1c] sm:$0xf]
      %v995 = vunpack.c.l.b16 %v979
      %v996 = vunpack.c.l.b16 %v980
      %v997 = vunpack.c.l.b16 %v981
      %v998 = vunpack.c.l.b16 %v982
      %v999 = vunpack.c.l.b16 %v983
      %v1000 = vunpack.c.l.b16 %v984
      %v1001 = vunpack.c.l.b16 %v985
      %v1002 = vunpack.c.l.b16 %v986
      %v1003 = vpack.c.b16 %v996, %v995
      %v1004 = vpack.c.b16 %v998, %v997
      %v1005 = vpack.c.b16 %v1000, %v999
      %v1006 = vpack.c.b16 %v1002, %v1001
      %v1012 = vsel %vm514, %v422, 0
      %1014 = vmatprep.subr.bf16.mxu0 0
      %1015 = vmatpush1.bf16.msra.mxu0 %v1003
      %1016 = vmatprep.subr.bf16.mxu0 0
      %1017 = vmatpush1.bf16.msra.mxu0 %v1004
      %1018 = vmatprep.subr.bf16.mxu0 0
      %1019 = vmatpush1.bf16.msra.mxu0 %v1005
      %1020 = vmatprep.subr.bf16.mxu0 0
      %1021 = vmatpush1.bf16.msra.mxu0 %v1006
      %1022 = vmatprep.subr.bf16.mxu0 0
      %1023 = vmatpush1.bf16.msra.mxu0 0
      %1024 = vmatprep.subr.bf16.mxu0 0
      %1025 = vmatpush1.bf16.msra.mxu0 0
      %1026 = vmatprep.subr.bf16.mxu0 0
      %1027 = vmatpush1.bf16.msra.mxu0 0
      %1028 = vmatprep.subr.bf16.mxu0 0
      %1029 = vmatpush1.bf16.msra.mxu0 0
      %1030 = vmatprep.subr.bf16.mxu0 0
      %1031 = vmatpush1.bf16.msra.mxu0 0
      %1032 = vmatprep.subr.bf16.mxu0 0
      %1033 = vmatpush1.bf16.msra.mxu0 0
      %1034 = vmatprep.subr.bf16.mxu0 0
      %1035 = vmatpush1.bf16.msra.mxu0 0
      %1036 = vmatprep.subr.bf16.mxu0 0
      %1037 = vmatpush1.bf16.msra.mxu0 0
      %1038 = vmatprep.subr.bf16.mxu0 0
      %1039 = vmatpush1.bf16.msra.mxu0 0
      %1040 = vmatprep.subr.bf16.mxu0 0
      %1041 = vmatpush1.bf16.msra.mxu0 0
      %1042 = vmatprep.subr.bf16.mxu0 0
      %1043 = vmatpush1.bf16.msra.mxu0 0
      %1044 = vmatprep.subr.bf16.mxu0 0
      %1045 = vmatpush1.bf16.msra.mxu0 0
      %1046 = vmatprep.mubr.bf16.mxu0 0
      %1047 = vmatmul.mubr.bf16.gmra.mrb[0].mxu0 %v519
      %v1048 = vpop.f32.mrb[0].mxu0
      %v1049 = vadd.f32 0.0, %v1048
      %v1050 = vpop.f32.mrb[0].mxu0
      %v1051 = vpop.f32.mrb[0].mxu0
      %v1052 = vadd.f32 0.0, %v1051
      %v1053 = vpop.f32.mrb[0].mxu0
      %1054 = vmatprep.mubr.bf16.mxu0 0
      %1055 = vmatmul.mubr.bf16.gmra.mrb[0].mxu0 %v522
      %v1056 = vpop.f32.mrb[0].mxu0
      %v1057 = vadd.f32 0.0, %v1056
      %v1058 = vpop.f32.mrb[0].mxu0
      %v1059 = vpop.f32.mrb[0].mxu0
      %v1060 = vadd.f32 0.0, %v1059
      %v1061 = vpop.f32.mrb[0].mxu0
      %1062 = vmatprep.mubr.bf16.mxu0 0
      %1063 = vmatmul.mubr.bf16.gmra.mrb[0].mxu0 %v525
      %v1064 = vpop.f32.mrb[0].mxu0
      %v1065 = vadd.f32 0.0, %v1064
      %v1066 = vpop.f32.mrb[0].mxu0
      %v1067 = vpop.f32.mrb[0].mxu0
      %v1068 = vadd.f32 0.0, %v1067
      %v1069 = vpop.f32.mrb[0].mxu0
      %1070 = vmatprep.mubr.bf16.mxu0 0
      %1071 = vmatmul.mubr.bf16.gmra.mrb[0].mxu0 %v528
      %v1072 = vpop.f32.mrb[0].mxu0
      %v1073 = vadd.f32 0.0, %v1072
      %v1074 = vpop.f32.mrb[0].mxu0
      %v1075 = vpop.f32.mrb[0].mxu0
      %v1076 = vadd.f32 0.0, %v1075
      %v1077 = vpop.f32.mrb[0].mxu0
      %1078 = vmatprep.mubr.bf16.mxu0 0
      %1079 = vmatmul.mubr.bf16.gmra.mrb[0].mxu0 %v531
      %v1080 = vpop.f32.mrb[0].mxu0
      %v1081 = vadd.f32 0.0, %v1080
      %v1082 = vpop.f32.mrb[0].mxu0
      %v1083 = vpop.f32.mrb[0].mxu0
      %v1084 = vadd.f32 0.0, %v1083
      %v1085 = vpop.f32.mrb[0].mxu0
      %1086 = vmatprep.mubr.bf16.mxu0 0
      %1087 = vmatmul.mubr.bf16.gmra.mrb[0].mxu0 %v534
      %v1088 = vpop.f32.mrb[0].mxu0
      %v1089 = vadd.f32 0.0, %v1088
      %v1090 = vpop.f32.mrb[0].mxu0
      %v1091 = vpop.f32.mrb[0].mxu0
      %v1092 = vadd.f32 0.0, %v1091
      %v1093 = vpop.f32.mrb[0].mxu0
      %1094 = vmatprep.mubr.bf16.mxu0 0
      %1095 = vmatmul.mubr.bf16.gmra.mrb[0].mxu0 %v537
      %v1096 = vpop.f32.mrb[0].mxu0
      %v1097 = vadd.f32 0.0, %v1096
      %v1098 = vpop.f32.mrb[0].mxu0
      %v1099 = vpop.f32.mrb[0].mxu0
      %v1100 = vadd.f32 0.0, %v1099
      %v1101 = vpop.f32.mrb[0].mxu0
      %1102 = vmatprep.mubr.bf16.mxu0 0
      %1103 = vmatmul.mubr.bf16.gmra.mrb[0].mxu0 %v540
      %v1104 = vpop.f32.mrb[0].mxu0
      %v1105 = vadd.f32 0.0, %v1104
      %v1106 = vpop.f32.mrb[0].mxu0
      %v1107 = vpop.f32.mrb[0].mxu0
      %v1108 = vadd.f32 0.0, %v1107
      %v1109 = vpop.f32.mrb[0].mxu0
      %1110 = vmatprep.mubr.bf16.mxu0 0
      %1111 = vmatmul.mubr.bf16.gmra.mrb[0].mxu0 %v543
      %v1112 = vpop.f32.mrb[0].mxu0
      %v1113 = vadd.f32 0.0, %v1112
      %v1114 = vpop.f32.mrb[0].mxu0
      %v1115 = vpop.f32.mrb[0].mxu0
      %v1116 = vadd.f32 0.0, %v1115
      %v1117 = vpop.f32.mrb[0].mxu0
      %1118 = vmatprep.mubr.bf16.mxu0 0
      %1119 = vmatmul.mubr.bf16.gmra.mrb[0].mxu0 %v546
      %v1120 = vpop.f32.mrb[0].mxu0
      %v1121 = vadd.f32 0.0, %v1120
      %v1122 = vpop.f32.mrb[0].mxu0
      %v1123 = vpop.f32.mrb[0].mxu0
      %v1124 = vadd.f32 0.0, %v1123
      %v1125 = vpop.f32.mrb[0].mxu0
      %1126 = vmatprep.mubr.bf16.mxu0 0
      %1127 = vmatmul.mubr.bf16.gmra.mrb[0].mxu0 %v549
      %v1128 = vpop.f32.mrb[0].mxu0
      %v1129 = vadd.f32 0.0, %v1128
      %v1130 = vpop.f32.mrb[0].mxu0
      %v1131 = vpop.f32.mrb[0].mxu0
      %v1132 = vadd.f32 0.0, %v1131
      %v1133 = vpop.f32.mrb[0].mxu0
      %1134 = vmatprep.mubr.bf16.mxu0 0
      %1135 = vmatmul.mubr.bf16.gmra.mrb[0].mxu0 %v552
      %v1136 = vpop.f32.mrb[0].mxu0
      %v1137 = vadd.f32 0.0, %v1136
      %v1138 = vpop.f32.mrb[0].mxu0
      %v1139 = vpop.f32.mrb[0].mxu0
      %v1140 = vadd.f32 0.0, %v1139
      %v1141 = vpop.f32.mrb[0].mxu0
      %1142 = vmatprep.mubr.bf16.mxu0 0
      %1143 = vmatmul.mubr.bf16.gmra.mrb[0].mxu0 %v555
      %v1144 = vpop.f32.mrb[0].mxu0
      %v1145 = vadd.f32 0.0, %v1144
      %v1146 = vpop.f32.mrb[0].mxu0
      %v1147 = vpop.f32.mrb[0].mxu0
      %v1148 = vadd.f32 0.0, %v1147
      %v1149 = vpop.f32.mrb[0].mxu0
      %1150 = vmatprep.mubr.bf16.mxu0 0
      %1151 = vmatmul.mubr.bf16.gmra.mrb[0].mxu0 %v558
      %v1152 = vpop.f32.mrb[0].mxu0
      %v1153 = vadd.f32 0.0, %v1152
      %v1154 = vpop.f32.mrb[0].mxu0
      %v1155 = vpop.f32.mrb[0].mxu0
      %v1156 = vadd.f32 0.0, %v1155
      %v1157 = vpop.f32.mrb[0].mxu0
      %1158 = vmatprep.mubr.bf16.mxu0 0
      %1159 = vmatmul.mubr.bf16.gmra.mrb[0].mxu0 %v561
      %v1160 = vpop.f32.mrb[0].mxu0
      %v1161 = vadd.f32 0.0, %v1160
      %v1162 = vpop.f32.mrb[0].mxu0
      %v1163 = vpop.f32.mrb[0].mxu0
      %v1164 = vadd.f32 0.0, %v1163
      %v1165 = vpop.f32.mrb[0].mxu0
      %1166 = vmatprep.mubr.bf16.mxu0 0
      %1167 = vmatmul.mubr.bf16.gmra.mrb[0].mxu0 %v564
      %v1168 = vpop.f32.mrb[0].mxu0
      %v1169 = vadd.f32 0.0, %v1168
      %v1170 = vpop.f32.mrb[0].mxu0
      %v1171 = vpop.f32.mrb[0].mxu0
      %v1172 = vadd.f32 0.0, %v1171
      %v1173 = vpop.f32.mrb[0].mxu0
      %1174 = vmatprep.mubr.bf16.mxu0 0
      %1175 = vmatmul.mubr.bf16.gmra.mrb[0].mxu0 %v1012
      %v1176 = vpop.f32.mrb[0].mxu0
      %v1177 = vadd.f32 0.0, %v1176
      %v1178 = vpop.f32.mrb[0].mxu0
      %v1179 = vpop.f32.mrb[0].mxu0
      %v1180 = vadd.f32 0.0, %v1179
      %v1181 = vpop.f32.mrb[0].mxu0
      %1182 = vdwg.mxu0
      %v1183 = vadd.f32 %v845, %v1049
      %v1184 = vadd.f32 %v848, %v1052
      %v1185 = vadd.f32 %v853, %v1057
      %v1186 = vadd.f32 %v856, %v1060
      %v1187 = vadd.f32 %v861, %v1065
      %v1188 = vadd.f32 %v864, %v1068
      %v1189 = vadd.f32 %v869, %v1073
      %v1190 = vadd.f32 %v872, %v1076
      %v1191 = vadd.f32 %v877, %v1081
      %v1192 = vadd.f32 %v880, %v1084
      %v1193 = vadd.f32 %v885, %v1089
      %v1194 = vadd.f32 %v888, %v1092
      %v1195 = vadd.f32 %v893, %v1097
      %v1196 = vadd.f32 %v896, %v1100
      %v1197 = vadd.f32 %v901, %v1105
      %v1198 = vadd.f32 %v904, %v1108
      %v1199 = vadd.f32 %v909, %v1113
      %v1200 = vadd.f32 %v912, %v1116
      %v1201 = vadd.f32 %v917, %v1121
      %v1202 = vadd.f32 %v920, %v1124
      %v1203 = vadd.f32 %v925, %v1129
      %v1204 = vadd.f32 %v928, %v1132
      %v1205 = vadd.f32 %v933, %v1137
      %v1206 = vadd.f32 %v936, %v1140
      %v1207 = vadd.f32 %v941, %v1145
      %v1208 = vadd.f32 %v944, %v1148
      %v1209 = vadd.f32 %v949, %v1153
      %v1210 = vadd.f32 %v952, %v1156
      %v1211 = vadd.f32 %v957, %v1161
      %v1212 = vadd.f32 %v960, %v1164
      %v1213 = vadd.f32 %v965, %v1169
      %v1214 = vadd.f32 %v968, %v1172
      %v1215 = vadd.f32 %v973, %v1177
      %v1216 = vadd.f32 %v976, %v1180
      %v1217 = vld [vmem:[%s4] sm:$0xf]
      %v1218 = vld [vmem:[%s4 + $0x4] sm:$0xf]
      %v1219 = vld [vmem:[%s4 + $0x8] sm:$0xf]
      %v1220 = vld [vmem:[%s4 + $0xc] sm:$0xf]
      %v1221 = vld [vmem:[%s4 + $0x10] sm:$0xf]
      %v1222 = vld [vmem:[%s4 + $0x14] sm:$0xf]
      %v1223 = vld [vmem:[%s4 + $0x18] sm:$0xf]
      %v1224 = vld [vmem:[%s4 + $0x1c] sm:$0xf]
      %v1233 = vunpack.c.l.b16 %v1217
      %v1234 = vunpack.c.l.b16 %v1218
      %v1235 = vunpack.c.l.b16 %v1219
      %v1236 = vunpack.c.l.b16 %v1220
      %v1237 = vunpack.c.l.b16 %v1221
      %v1238 = vunpack.c.l.b16 %v1222
      %v1239 = vunpack.c.l.b16 %v1223
      %v1240 = vunpack.c.l.b16 %v1224
      %v1241 = vpack.c.b16 %v1234, %v1233
      %v1242 = vpack.c.b16 %v1236, %v1235
      %v1243 = vpack.c.b16 %v1238, %v1237
      %v1244 = vpack.c.b16 %v1240, %v1239
      %v1250 = vsel %vm514, %v457, 0
      %v1253 = vsel %vm514, %v458, 0
      %v1256 = vsel %vm514, %v459, 0
      %v1259 = vsel %vm514, %v460, 0
      %v1262 = vsel %vm514, %v461, 0
      %v1265 = vsel %vm514, %v462, 0
      %v1268 = vsel %vm514, %v463, 0
      %v1271 = vsel %vm514, %v464, 0
      %v1274 = vsel %vm514, %v465, 0
      %v1277 = vsel %vm514, %v466, 0
      %v1280 = vsel %vm514, %v467, 0
      %v1283 = vsel %vm514, %v468, 0
      %v1286 = vsel %vm514, %v469, 0
      %v1289 = vsel %vm514, %v470, 0
      %v1292 = vsel %vm514, %v471, 0
      %v1295 = vsel %vm514, %v472, 0
      %v1298 = vsel %vm514, %v473, 0
      %1300 = vmatprep.subr.bf16.mxu0 0
      %1301 = vmatpush1.bf16.msra.mxu0 %v1241
      %1302 = vmatprep.subr.bf16.mxu0 0
      %1303 = vmatpush1.bf16.msra.mxu0 %v1242
      %1304 = vmatprep.subr.bf16.mxu0 0
      %1305 = vmatpush1.bf16.msra.mxu0 %v1243
      %1306 = vmatprep.subr.bf16.mxu0 0
      %1307 = vmatpush1.bf16.msra.mxu0 %v1244
      %1308 = vmatprep.subr.bf16.mxu0 0
      %1309 = vmatpush1.bf16.msra.mxu0 0
      %1310 = vmatprep.subr.bf16.mxu0 0
      %1311 = vmatpush1.bf16.msra.mxu0 0
      %1312 = vmatprep.subr.bf16.mxu0 0
      %1313 = vmatpush1.bf16.msra.mxu0 0
      %1314 = vmatprep.subr.bf16.mxu0 0
      %1315 = vmatpush1.bf16.msra.mxu0 0
      %1316 = vmatprep.subr.bf16.mxu0 0
      %1317 = vmatpush1.bf16.msra.mxu0 0
      %1318 = vmatprep.subr.bf16.mxu0 0
      %1319 = vmatpush1.bf16.msra.mxu0 0
      %1320 = vmatprep.subr.bf16.mxu0 0
      %1321 = vmatpush1.bf16.msra.mxu0 0
      %1322 = vmatprep.subr.bf16.mxu0 0
      %1323 = vmatpush1.bf16.msra.mxu0 0
      %1324 = vmatprep.subr.bf16.mxu0 0
      %1325 = vmatpush1.bf16.msra.mxu0 0
      %1326 = vmatprep.subr.bf16.mxu0 0
      %1327 = vmatpush1.bf16.msra.mxu0 0
      %1328 = vmatprep.subr.bf16.mxu0 0
      %1329 = vmatpush1.bf16.msra.mxu0 0
      %1330 = vmatprep.subr.bf16.mxu0 0
      %1331 = vmatpush1.bf16.msra.mxu0 0
      %1332 = vmatprep.mubr.bf16.mxu0 0
      %1333 = vmatmul.mubr.bf16.gmra.mrb[0].mxu0 %v1250
      %v1334 = vpop.f32.mrb[0].mxu0
      %v1335 = vadd.f32 0.0, %v1334
      %v1336 = vpop.f32.mrb[0].mxu0
      %v1337 = vpop.f32.mrb[0].mxu0
      %v1338 = vadd.f32 0.0, %v1337
      %v1339 = vpop.f32.mrb[0].mxu0
      %1340 = vmatprep.mubr.bf16.mxu0 0
      %1341 = vmatmul.mubr.bf16.gmra.mrb[0].mxu0 %v1253
      %v1342 = vpop.f32.mrb[0].mxu0
      %v1343 = vadd.f32 0.0, %v1342
      %v1344 = vpop.f32.mrb[0].mxu0
      %v1345 = vpop.f32.mrb[0].mxu0
      %v1346 = vadd.f32 0.0, %v1345
      %v1347 = vpop.f32.mrb[0].mxu0
      %1348 = vmatprep.mubr.bf16.mxu0 0
      %1349 = vmatmul.mubr.bf16.gmra.mrb[0].mxu0 %v1256
      %v1350 = vpop.f32.mrb[0].mxu0
      %v1351 = vadd.f32 0.0, %v1350
      %v1352 = vpop.f32.mrb[0].mxu0
      %v1353 = vpop.f32.mrb[0].mxu0
      %v1354 = vadd.f32 0.0, %v1353
      %v1355 = vpop.f32.mrb[0].mxu0
      %1356 = vmatprep.mubr.bf16.mxu0 0
      %1357 = vmatmul.mubr.bf16.gmra.mrb[0].mxu0 %v1259
      %v1358 = vpop.f32.mrb[0].mxu0
      %v1359 = vadd.f32 0.0, %v1358
      %v1360 = vpop.f32.mrb[0].mxu0
      %v1361 = vpop.f32.mrb[0].mxu0
      %v1362 = vadd.f32 0.0, %v1361
      %v1363 = vpop.f32.mrb[0].mxu0
      %1364 = vmatprep.mubr.bf16.mxu0 0
      %1365 = vmatmul.mubr.bf16.gmra.mrb[0].mxu0 %v1262
      %v1366 = vpop.f32.mrb[0].mxu0
      %v1367 = vadd.f32 0.0, %v1366
      %v1368 = vpop.f32.mrb[0].mxu0
      %v1369 = vpop.f32.mrb[0].mxu0
      %v1370 = vadd.f32 0.0, %v1369
      %v1371 = vpop.f32.mrb[0].mxu0
      %1372 = vmatprep.mubr.bf16.mxu0 0
      %1373 = vmatmul.mubr.bf16.gmra.mrb[0].mxu0 %v1265
      %v1374 = vpop.f32.mrb[0].mxu0
      %v1375 = vadd.f32 0.0, %v1374
      %v1376 = vpop.f32.mrb[0].mxu0
      %v1377 = vpop.f32.mrb[0].mxu0
      %v1378 = vadd.f32 0.0, %v1377
      %v1379 = vpop.f32.mrb[0].mxu0
      %1380 = vmatprep.mubr.bf16.mxu0 0
      %1381 = vmatmul.mubr.bf16.gmra.mrb[0].mxu0 %v1268
      %v1382 = vpop.f32.mrb[0].mxu0
      %v1383 = vadd.f32 0.0, %v1382
      %v1384 = vpop.f32.mrb[0].mxu0
      %v1385 = vpop.f32.mrb[0].mxu0
      %v1386 = vadd.f32 0.0, %v1385
      %v1387 = vpop.f32.mrb[0].mxu0
      %1388 = vmatprep.mubr.bf16.mxu0 0
      %1389 = vmatmul.mubr.bf16.gmra.mrb[0].mxu0 %v1271
      %v1390 = vpop.f32.mrb[0].mxu0
      %v1391 = vadd.f32 0.0, %v1390
      %v1392 = vpop.f32.mrb[0].mxu0
      %v1393 = vpop.f32.mrb[0].mxu0
      %v1394 = vadd.f32 0.0, %v1393
      %v1395 = vpop.f32.mrb[0].mxu0
      %1396 = vmatprep.mubr.bf16.mxu0 0
      %1397 = vmatmul.mubr.bf16.gmra.mrb[0].mxu0 %v1274
      %v1398 = vpop.f32.mrb[0].mxu0
      %v1399 = vadd.f32 0.0, %v1398
      %v1400 = vpop.f32.mrb[0].mxu0
      %v1401 = vpop.f32.mrb[0].mxu0
      %v1402 = vadd.f32 0.0, %v1401
      %v1403 = vpop.f32.mrb[0].mxu0
      %1404 = vmatprep.mubr.bf16.mxu0 0
      %1405 = vmatmul.mubr.bf16.gmra.mrb[0].mxu0 %v1277
      %v1406 = vpop.f32.mrb[0].mxu0
      %v1407 = vadd.f32 0.0, %v1406
      %v1408 = vpop.f32.mrb[0].mxu0
      %v1409 = vpop.f32.mrb[0].mxu0
      %v1410 = vadd.f32 0.0, %v1409
      %v1411 = vpop.f32.mrb[0].mxu0
      %1412 = vmatprep.mubr.bf16.mxu0 0
      %1413 = vmatmul.mubr.bf16.gmra.mrb[0].mxu0 %v1280
      %v1414 = vpop.f32.mrb[0].mxu0
      %v1415 = vadd.f32 0.0, %v1414
      %v1416 = vpop.f32.mrb[0].mxu0
      %v1417 = vpop.f32.mrb[0].mxu0
      %v1418 = vadd.f32 0.0, %v1417
      %v1419 = vpop.f32.mrb[0].mxu0
      %1420 = vmatprep.mubr.bf16.mxu0 0
      %1421 = vmatmul.mubr.bf16.gmra.mrb[0].mxu0 %v1283
      %v1422 = vpop.f32.mrb[0].mxu0
      %v1423 = vadd.f32 0.0, %v1422
      %v1424 = vpop.f32.mrb[0].mxu0
      %v1425 = vpop.f32.mrb[0].mxu0
      %v1426 = vadd.f32 0.0, %v1425
      %v1427 = vpop.f32.mrb[0].mxu0
      %1428 = vmatprep.mubr.bf16.mxu0 0
      %1429 = vmatmul.mubr.bf16.gmra.mrb[0].mxu0 %v1286
      %v1430 = vpop.f32.mrb[0].mxu0
      %v1431 = vadd.f32 0.0, %v1430
      %v1432 = vpop.f32.mrb[0].mxu0
      %v1433 = vpop.f32.mrb[0].mxu0
      %v1434 = vadd.f32 0.0, %v1433
      %v1435 = vpop.f32.mrb[0].mxu0
      %1436 = vmatprep.mubr.bf16.mxu0 0
      %1437 = vmatmul.mubr.bf16.gmra.mrb[0].mxu0 %v1289
      %v1438 = vpop.f32.mrb[0].mxu0
      %v1439 = vadd.f32 0.0, %v1438
      %v1440 = vpop.f32.mrb[0].mxu0
      %v1441 = vpop.f32.mrb[0].mxu0
      %v1442 = vadd.f32 0.0, %v1441
      %v1443 = vpop.f32.mrb[0].mxu0
      %1444 = vmatprep.mubr.bf16.mxu0 0
      %1445 = vmatmul.mubr.bf16.gmra.mrb[0].mxu0 %v1292
      %v1446 = vpop.f32.mrb[0].mxu0
      %v1447 = vadd.f32 0.0, %v1446
      %v1448 = vpop.f32.mrb[0].mxu0
      %v1449 = vpop.f32.mrb[0].mxu0
      %v1450 = vadd.f32 0.0, %v1449
      %v1451 = vpop.f32.mrb[0].mxu0
      %1452 = vmatprep.mubr.bf16.mxu0 0
      %1453 = vmatmul.mubr.bf16.gmra.mrb[0].mxu0 %v1295
      %v1454 = vpop.f32.mrb[0].mxu0
      %v1455 = vadd.f32 0.0, %v1454
      %v1456 = vpop.f32.mrb[0].mxu0
      %v1457 = vpop.f32.mrb[0].mxu0
      %v1458 = vadd.f32 0.0, %v1457
      %v1459 = vpop.f32.mrb[0].mxu0
      %1460 = vmatprep.mubr.bf16.mxu0 0
      %1461 = vmatmul.mubr.bf16.gmra.mrb[0].mxu0 %v1298
      %v1462 = vpop.f32.mrb[0].mxu0
      %v1463 = vadd.f32 0.0, %v1462
      %v1464 = vpop.f32.mrb[0].mxu0
      %v1465 = vpop.f32.mrb[0].mxu0
      %v1466 = vadd.f32 0.0, %v1465
      %v1467 = vpop.f32.mrb[0].mxu0
      %1468 = vdwg.mxu0
      %v1469 = vadd.f32 %v1183, %v1335
      %v1470 = vadd.f32 %v1184, %v1338
      %v1471 = vadd.f32 %v1185, %v1343
      %v1472 = vadd.f32 %v1186, %v1346
      %v1473 = vadd.f32 %v1187, %v1351
      %v1474 = vadd.f32 %v1188, %v1354
      %v1475 = vadd.f32 %v1189, %v1359
      %v1476 = vadd.f32 %v1190, %v1362
      %v1477 = vadd.f32 %v1191, %v1367
      %v1478 = vadd.f32 %v1192, %v1370
      %v1479 = vadd.f32 %v1193, %v1375
      %v1480 = vadd.f32 %v1194, %v1378
      %v1481 = vadd.f32 %v1195, %v1383
      %v1482 = vadd.f32 %v1196, %v1386
      %v1483 = vadd.f32 %v1197, %v1391
      %v1484 = vadd.f32 %v1198, %v1394
      %v1485 = vadd.f32 %v1199, %v1399
      %v1486 = vadd.f32 %v1200, %v1402
      %v1487 = vadd.f32 %v1201, %v1407
      %v1488 = vadd.f32 %v1202, %v1410
      %v1489 = vadd.f32 %v1203, %v1415
      %v1490 = vadd.f32 %v1204, %v1418
      %v1491 = vadd.f32 %v1205, %v1423
      %v1492 = vadd.f32 %v1206, %v1426
      %v1493 = vadd.f32 %v1207, %v1431
      %v1494 = vadd.f32 %v1208, %v1434
      %v1495 = vadd.f32 %v1209, %v1439
      %v1496 = vadd.f32 %v1210, %v1442
      %v1497 = vadd.f32 %v1211, %v1447
      %v1498 = vadd.f32 %v1212, %v1450
      %v1499 = vadd.f32 %v1213, %v1455
      %v1500 = vadd.f32 %v1214, %v1458
      %v1501 = vadd.f32 %v1215, %v1463
      %v1502 = vadd.f32 %v1216, %v1466
      %v1503 = vld [vmem:[%s5] sm:$0x1]
      %v1505 = vlaneseq
      %v1506 = vshrl.u32 %v1505, 7
      %v1507 = vsub.s32 0, %v1506
      %v1508 = vrot.slane %v1503, %v1507
      %v1510 = vadd.f32 %v1469, %v1508
      %v1511 = vadd.f32 %v1470, %v1508
      %v1512 = vadd.f32 %v1471, %v1508
      %v1513 = vadd.f32 %v1472, %v1508
      %v1514 = vadd.f32 %v1473, %v1508
      %v1515 = vadd.f32 %v1474, %v1508
      %v1516 = vadd.f32 %v1475, %v1508
      %v1517 = vadd.f32 %v1476, %v1508
      %v1518 = vadd.f32 %v1477, %v1508
      %v1519 = vadd.f32 %v1478, %v1508
      %v1520 = vadd.f32 %v1479, %v1508
      %v1521 = vadd.f32 %v1480, %v1508
      %v1522 = vadd.f32 %v1481, %v1508
      %v1523 = vadd.f32 %v1482, %v1508
      %v1524 = vadd.f32 %v1483, %v1508
      %v1525 = vadd.f32 %v1484, %v1508
      %v1526 = vadd.f32 %v1485, %v1508
      %v1527 = vadd.f32 %v1486, %v1508
      %v1528 = vadd.f32 %v1487, %v1508
      %v1529 = vadd.f32 %v1488, %v1508
      %v1530 = vadd.f32 %v1489, %v1508
      %v1531 = vadd.f32 %v1490, %v1508
      %v1532 = vadd.f32 %v1491, %v1508
      %v1533 = vadd.f32 %v1492, %v1508
      %v1534 = vadd.f32 %v1493, %v1508
      %v1535 = vadd.f32 %v1494, %v1508
      %v1536 = vadd.f32 %v1495, %v1508
      %v1537 = vadd.f32 %v1496, %v1508
      %v1538 = vadd.f32 %v1497, %v1508
      %v1539 = vadd.f32 %v1498, %v1508
      %v1540 = vadd.f32 %v1499, %v1508
      %v1541 = vadd.f32 %v1500, %v1508
      %v1542 = vadd.f32 %v1501, %v1508
      %v1543 = vadd.f32 %v1502, %v1508
      %1544 = vst [vmem:[%s312] sm:$0xff] %v1510
      %1545 = vst [vmem:[%s312 + $0x8] sm:$0xff] %v1511
      %1546 = vst [vmem:[%s312 + $0x10] sm:$0xff] %v1512
      %1547 = vst [vmem:[%s312 + $0x18] sm:$0xff] %v1513
      %1548 = vst [vmem:[%s312 + $0x20] sm:$0xff] %v1514
      %1549 = vst [vmem:[%s312 + $0x28] sm:$0xff] %v1515
      %1550 = vst [vmem:[%s312 + $0x30] sm:$0xff] %v1516
      %1551 = vst [vmem:[%s312 + $0x38] sm:$0xff] %v1517
      %1552 = vst [vmem:[%s312 + $0x40] sm:$0xff] %v1518
      %1553 = vst [vmem:[%s312 + $0x48] sm:$0xff] %v1519
      %1554 = vst [vmem:[%s312 + $0x50] sm:$0xff] %v1520
      %1555 = vst [vmem:[%s312 + $0x58] sm:$0xff] %v1521
      %1556 = vst [vmem:[%s312 + $0x60] sm:$0xff] %v1522
      %1557 = vst [vmem:[%s312 + $0x68] sm:$0xff] %v1523
      %1558 = vst [vmem:[%s312 + $0x70] sm:$0xff] %v1524
      %1559 = vst [vmem:[%s312 + $0x78] sm:$0xff] %v1525
      %1560 = vst [vmem:[%s312 + $0x80] sm:$0xff] %v1526
      %1561 = vst [vmem:[%s312 + $0x88] sm:$0xff] %v1527
      %1562 = vst [vmem:[%s312 + $0x90] sm:$0xff] %v1528
      %1563 = vst [vmem:[%s312 + $0x98] sm:$0xff] %v1529
      %1564 = vst [vmem:[%s312 + $0xa0] sm:$0xff] %v1530
      %1565 = vst [vmem:[%s312 + $0xa8] sm:$0xff] %v1531
      %1566 = vst [vmem:[%s312 + $0xb0] sm:$0xff] %v1532
      %1567 = vst [vmem:[%s312 + $0xb8] sm:$0xff] %v1533
      %1568 = vst [vmem:[%s312 + $0xc0] sm:$0xff] %v1534
      %1569 = vst [vmem:[%s312 + $0xc8] sm:$0xff] %v1535
      %1570 = vst [vmem:[%s312 + $0xd0] sm:$0xff] %v1536
      %1571 = vst [vmem:[%s312 + $0xd8] sm:$0xff] %v1537
      %1572 = vst [vmem:[%s312 + $0xe0] sm:$0xff] %v1538
      %1573 = vst [vmem:[%s312 + $0xe8] sm:$0xff] %v1539
      %1574 = vst [vmem:[%s312 + $0xf0] sm:$0xff] %v1540
      %1575 = vst [vmem:[%s312 + $0xf8] sm:$0xff] %v1541
      %1576 = vst [vmem:[%s312 + $0x100] sm:$0xff] %v1542
      %1577 = vst [vmem:[%s312 + $0x108] sm:$0xff] %v1543
      %v1578 = vld [vmem:[%s6] sm:$0xff]
      %v1579 = vld [vmem:[%s6 + $0x8] sm:$0xff]
      %v1580 = vld [vmem:[%s6 + $0x10] sm:$0xff]
      %v1581 = vld [vmem:[%s6 + $0x18] sm:$0xff]
      %v1582 = vld [vmem:[%s6 + $0x20] sm:$0xff]
      %v1583 = vld [vmem:[%s6 + $0x28] sm:$0xff]
      %v1584 = vld [vmem:[%s6 + $0x30] sm:$0xff]
      %v1585 = vld [vmem:[%s6 + $0x38] sm:$0xff]
      %v1586 = vld [vmem:[%s6 + $0x40] sm:$0xff]
      %v1587 = vld [vmem:[%s6 + $0x48] sm:$0xff]
      %v1588 = vld [vmem:[%s6 + $0x50] sm:$0xff]
      %v1589 = vld [vmem:[%s6 + $0x58] sm:$0xff]
      %v1590 = vld [vmem:[%s6 + $0x60] sm:$0xff]
      %v1591 = vld [vmem:[%s6 + $0x68] sm:$0xff]
      %v1592 = vld [vmem:[%s6 + $0x70] sm:$0xff]
      %v1593 = vld [vmem:[%s6 + $0x78] sm:$0xff]
      %v1594 = vld [vmem:[%s6 + $0x80] sm:$0xff]
      %v1595 = vld [vmem:[%s6 + $0x88] sm:$0xff]
      %v1596 = vld [vmem:[%s6 + $0x90] sm:$0xff]
      %v1597 = vld [vmem:[%s6 + $0x98] sm:$0xff]
      %v1598 = vld [vmem:[%s6 + $0xa0] sm:$0xff]
      %v1599 = vld [vmem:[%s6 + $0xa8] sm:$0xff]
      %v1600 = vld [vmem:[%s6 + $0xb0] sm:$0xff]
      %v1601 = vld [vmem:[%s6 + $0xb8] sm:$0xff]
      %v1602 = vld [vmem:[%s6 + $0xc0] sm:$0xff]
      %v1603 = vld [vmem:[%s6 + $0xc8] sm:$0xff]
      %v1604 = vld [vmem:[%s6 + $0xd0] sm:$0xff]
      %v1605 = vld [vmem:[%s6 + $0xd8] sm:$0xff]
      %v1606 = vld [vmem:[%s6 + $0xe0] sm:$0xff]
      %v1607 = vld [vmem:[%s6 + $0xe8] sm:$0xff]
      %v1608 = vld [vmem:[%s6 + $0xf0] sm:$0xff]
      %v1609 = vld [vmem:[%s6 + $0xf8] sm:$0xff]
      %v1610 = vld [vmem:[%s6 + $0x100] sm:$0xff]
      %v1611 = vld [vmem:[%s6 + $0x108] sm:$0xff]
      %1613 = vset.pattern.permute.xlu0 0
      %1614 = vperm.xlu0 %1613, %v1578
      %v1615 = vpop.permute.xlu0 %1614
      %1618 = vset.pattern.permute.xlu0 0
      %1619 = vperm.xlu0 %1618, %v1579
      %v1620 = vpop.permute.xlu0 %1619
      %1623 = vset.pattern.permute.xlu0 0
      %1624 = vperm.xlu0 %1623, %v1580
      %v1625 = vpop.permute.xlu0 %1624
      %1628 = vset.pattern.permute.xlu0 0
      %1629 = vperm.xlu0 %1628, %v1581
      %v1630 = vpop.permute.xlu0 %1629
      %1633 = vset.pattern.permute.xlu0 0
      %1634 = vperm.xlu0 %1633, %v1582
      %v1635 = vpop.permute.xlu0 %1634
      %1638 = vset.pattern.permute.xlu0 0
      %1639 = vperm.xlu0 %1638, %v1583
      %v1640 = vpop.permute.xlu0 %1639
      %1643 = vset.pattern.permute.xlu0 0
      %1644 = vperm.xlu0 %1643, %v1584
      %v1645 = vpop.permute.xlu0 %1644
      %1648 = vset.pattern.permute.xlu0 0
      %1649 = vperm.xlu0 %1648, %v1585
      %v1650 = vpop.permute.xlu0 %1649
      %1653 = vset.pattern.permute.xlu0 0
      %1654 = vperm.xlu0 %1653, %v1586
      %v1655 = vpop.permute.xlu0 %1654
      %1658 = vset.pattern.permute.xlu0 0
      %1659 = vperm.xlu0 %1658, %v1587
      %v1660 = vpop.permute.xlu0 %1659
      %1663 = vset.pattern.permute.xlu0 0
      %1664 = vperm.xlu0 %1663, %v1588
      %v1665 = vpop.permute.xlu0 %1664
      %1668 = vset.pattern.permute.xlu0 0
      %1669 = vperm.xlu0 %1668, %v1589
      %v1670 = vpop.permute.xlu0 %1669
      %1673 = vset.pattern.permute.xlu0 0
      %1674 = vperm.xlu0 %1673, %v1590
      %v1675 = vpop.permute.xlu0 %1674
      %1678 = vset.pattern.permute.xlu0 0
      %1679 = vperm.xlu0 %1678, %v1591
      %v1680 = vpop.permute.xlu0 %1679
      %1683 = vset.pattern.permute.xlu0 0
      %1684 = vperm.xlu0 %1683, %v1592
      %v1685 = vpop.permute.xlu0 %1684
      %1688 = vset.pattern.permute.xlu0 0
      %1689 = vperm.xlu0 %1688, %v1593
      %v1690 = vpop.permute.xlu0 %1689
      %1693 = vset.pattern.permute.xlu0 0
      %1694 = vperm.xlu0 %1693, %v1594
      %v1695 = vpop.permute.xlu0 %1694
      %1698 = vset.pattern.permute.xlu0 0
      %1699 = vperm.xlu0 %1698, %v1595
      %v1700 = vpop.permute.xlu0 %1699
      %1703 = vset.pattern.permute.xlu0 0
      %1704 = vperm.xlu0 %1703, %v1596
      %v1705 = vpop.permute.xlu0 %1704
      %1708 = vset.pattern.permute.xlu0 0
      %1709 = vperm.xlu0 %1708, %v1597
      %v1710 = vpop.permute.xlu0 %1709
      %1713 = vset.pattern.permute.xlu0 0
      %1714 = vperm.xlu0 %1713, %v1598
      %v1715 = vpop.permute.xlu0 %1714
      %1718 = vset.pattern.permute.xlu0 0
      %1719 = vperm.xlu0 %1718, %v1599
      %v1720 = vpop.permute.xlu0 %1719
      %1723 = vset.pattern.permute.xlu0 0
      %1724 = vperm.xlu0 %1723, %v1600
      %v1725 = vpop.permute.xlu0 %1724
      %1728 = vset.pattern.permute.xlu0 0
      %1729 = vperm.xlu0 %1728, %v1601
      %v1730 = vpop.permute.xlu0 %1729
      %1733 = vset.pattern.permute.xlu0 0
      %1734 = vperm.xlu0 %1733, %v1602
      %v1735 = vpop.permute.xlu0 %1734
      %1738 = vset.pattern.permute.xlu0 0
      %1739 = vperm.xlu0 %1738, %v1603
      %v1740 = vpop.permute.xlu0 %1739
      %1743 = vset.pattern.permute.xlu0 0
      %1744 = vperm.xlu0 %1743, %v1604
      %v1745 = vpop.permute.xlu0 %1744
      %1748 = vset.pattern.permute.xlu0 0
      %1749 = vperm.xlu0 %1748, %v1605
      %v1750 = vpop.permute.xlu0 %1749
      %1753 = vset.pattern.permute.xlu0 0
      %1754 = vperm.xlu0 %1753, %v1606
      %v1755 = vpop.permute.xlu0 %1754
      %1758 = vset.pattern.permute.xlu0 0
      %1759 = vperm.xlu0 %1758, %v1607
      %v1760 = vpop.permute.xlu0 %1759
      %1763 = vset.pattern.permute.xlu0 0
      %1764 = vperm.xlu0 %1763, %v1608
      %v1765 = vpop.permute.xlu0 %1764
      %1768 = vset.pattern.permute.xlu0 0
      %1769 = vperm.xlu0 %1768, %v1609
      %v1770 = vpop.permute.xlu0 %1769
      %1773 = vset.pattern.permute.xlu0 0
      %1774 = vperm.xlu0 %1773, %v1610
      %v1775 = vpop.permute.xlu0 %1774
      %1778 = vset.pattern.permute.xlu0 0
      %1779 = vperm.xlu0 %1778, %v1611
      %v1780 = vpop.permute.xlu0 %1779
      %v1782 = vmul.f32 %v1510, %v1615
      %v1783 = vmul.f32 %v1511, %v1620
      %v1784 = vmul.f32 %v1512, %v1625
      %v1785 = vmul.f32 %v1513, %v1630
      %v1786 = vmul.f32 %v1514, %v1635
      %v1787 = vmul.f32 %v1515, %v1640
      %v1788 = vmul.f32 %v1516, %v1645
      %v1789 = vmul.f32 %v1517, %v1650
      %v1790 = vmul.f32 %v1518, %v1655
      %v1791 = vmul.f32 %v1519, %v1660
      %v1792 = vmul.f32 %v1520, %v1665
      %v1793 = vmul.f32 %v1521, %v1670
      %v1794 = vmul.f32 %v1522, %v1675
      %v1795 = vmul.f32 %v1523, %v1680
      %v1796 = vmul.f32 %v1524, %v1685
      %v1797 = vmul.f32 %v1525, %v1690
      %v1798 = vmul.f32 %v1526, %v1695
      %v1799 = vmul.f32 %v1527, %v1700
      %v1800 = vmul.f32 %v1528, %v1705
      %v1801 = vmul.f32 %v1529, %v1710
      %v1802 = vmul.f32 %v1530, %v1715
      %v1803 = vmul.f32 %v1531, %v1720
      %v1804 = vmul.f32 %v1532, %v1725
      %v1805 = vmul.f32 %v1533, %v1730
      %v1806 = vmul.f32 %v1534, %v1735
      %v1807 = vmul.f32 %v1535, %v1740
      %v1808 = vmul.f32 %v1536, %v1745
      %v1809 = vmul.f32 %v1537, %v1750
      %v1810 = vmul.f32 %v1538, %v1755
      %v1811 = vmul.f32 %v1539, %v1760
      %v1812 = vmul.f32 %v1540, %v1765
      %v1813 = vmul.f32 %v1541, %v1770
      %v1814 = vmul.f32 %v1542, %v1775
      %v1815 = vmul.f32 %v1543, %v1780
      %v1816 = vadd.f32 %v1782, %v1783
      %v1817 = vadd.f32 %v1816, %v1784
      %v1818 = vadd.f32 %v1817, %v1785
      %v1819 = vadd.f32 %v1818, %v1786
      %v1820 = vadd.f32 %v1819, %v1787
      %v1821 = vadd.f32 %v1820, %v1788
      %v1822 = vadd.f32 %v1821, %v1789
      %v1823 = vadd.f32 %v1822, %v1790
      %v1824 = vadd.f32 %v1823, %v1791
      %v1825 = vadd.f32 %v1824, %v1792
      %v1826 = vadd.f32 %v1825, %v1793
      %v1827 = vadd.f32 %v1826, %v1794
      %v1828 = vadd.f32 %v1827, %v1795
      %v1829 = vadd.f32 %v1828, %v1796
      %v1830 = vadd.f32 %v1829, %v1797
      %v1831 = vadd.f32 %v1830, %v1798
      %v1832 = vadd.f32 %v1831, %v1799
      %v1833 = vadd.f32 %v1832, %v1800
      %v1834 = vadd.f32 %v1833, %v1801
      %v1835 = vadd.f32 %v1834, %v1802
      %v1836 = vadd.f32 %v1835, %v1803
      %v1837 = vadd.f32 %v1836, %v1804
      %v1838 = vadd.f32 %v1837, %v1805
      %v1839 = vadd.f32 %v1838, %v1806
      %v1840 = vadd.f32 %v1839, %v1807
      %v1841 = vadd.f32 %v1840, %v1808
      %v1842 = vadd.f32 %v1841, %v1809
      %v1843 = vadd.f32 %v1842, %v1810
      %v1844 = vadd.f32 %v1843, %v1811
      %v1845 = vadd.f32 %v1844, %v1812
      %v1846 = vadd.f32 %v1845, %v1813
      %v1847 = vadd.f32 %v1846, %v1814
      %v1848 = vadd.f32 %v1847, %v1815
      %v1849 = vrot.slane %v1848, 4
      %v1850 = vadd.f32 %v1848, %v1849
      %v1851 = vrot.slane %v1850, 2
      %v1852 = vadd.f32 %v1850, %v1851
      %v1853 = vrot.slane %v1852, 1
      %v1854 = vadd.f32 %v1852, %v1853
      %v1855 = vmul.f32 %v1782, %v1782
      %v1856 = vmul.f32 %v1783, %v1783
      %v1857 = vmul.f32 %v1784, %v1784
      %v1858 = vmul.f32 %v1785, %v1785
      %v1859 = vmul.f32 %v1786, %v1786
      %v1860 = vmul.f32 %v1787, %v1787
      %v1861 = vmul.f32 %v1788, %v1788
      %v1862 = vmul.f32 %v1789, %v1789
      %v1863 = vmul.f32 %v1790, %v1790
      %v1864 = vmul.f32 %v1791, %v1791
      %v1865 = vmul.f32 %v1792, %v1792
      %v1866 = vmul.f32 %v1793, %v1793
      %v1867 = vmul.f32 %v1794, %v1794
      %v1868 = vmul.f32 %v1795, %v1795
      %v1869 = vmul.f32 %v1796, %v1796
      %v1870 = vmul.f32 %v1797, %v1797
      %v1871 = vmul.f32 %v1798, %v1798
      %v1872 = vmul.f32 %v1799, %v1799
      %v1873 = vmul.f32 %v1800, %v1800
      %v1874 = vmul.f32 %v1801, %v1801
      %v1875 = vmul.f32 %v1802, %v1802
      %v1876 = vmul.f32 %v1803, %v1803
      %v1877 = vmul.f32 %v1804, %v1804
      %v1878 = vmul.f32 %v1805, %v1805
      %v1879 = vmul.f32 %v1806, %v1806
      %v1880 = vmul.f32 %v1807, %v1807
      %v1881 = vmul.f32 %v1808, %v1808
      %v1882 = vmul.f32 %v1809, %v1809
      %v1883 = vmul.f32 %v1810, %v1810
      %v1884 = vmul.f32 %v1811, %v1811
      %v1885 = vmul.f32 %v1812, %v1812
      %v1886 = vmul.f32 %v1813, %v1813
      %v1887 = vmul.f32 %v1814, %v1814
      %v1888 = vmul.f32 %v1815, %v1815
      %v1889 = vadd.f32 %v1855, %v1856
      %v1890 = vadd.f32 %v1889, %v1857
      %v1891 = vadd.f32 %v1890, %v1858
      %v1892 = vadd.f32 %v1891, %v1859
      %v1893 = vadd.f32 %v1892, %v1860
      %v1894 = vadd.f32 %v1893, %v1861
      %v1895 = vadd.f32 %v1894, %v1862
      %v1896 = vadd.f32 %v1895, %v1863
      %v1897 = vadd.f32 %v1896, %v1864
      %v1898 = vadd.f32 %v1897, %v1865
      %v1899 = vadd.f32 %v1898, %v1866
      %v1900 = vadd.f32 %v1899, %v1867
      %v1901 = vadd.f32 %v1900, %v1868
      %v1902 = vadd.f32 %v1901, %v1869
      %v1903 = vadd.f32 %v1902, %v1870
      %v1904 = vadd.f32 %v1903, %v1871
      %v1905 = vadd.f32 %v1904, %v1872
      %v1906 = vadd.f32 %v1905, %v1873
      %v1907 = vadd.f32 %v1906, %v1874
      %v1908 = vadd.f32 %v1907, %v1875
      %v1909 = vadd.f32 %v1908, %v1876
      %v1910 = vadd.f32 %v1909, %v1877
      %v1911 = vadd.f32 %v1910, %v1878
      %v1912 = vadd.f32 %v1911, %v1879
      %v1913 = vadd.f32 %v1912, %v1880
      %v1914 = vadd.f32 %v1913, %v1881
      %v1915 = vadd.f32 %v1914, %v1882
      %v1916 = vadd.f32 %v1915, %v1883
      %v1917 = vadd.f32 %v1916, %v1884
      %v1918 = vadd.f32 %v1917, %v1885
      %v1919 = vadd.f32 %v1918, %v1886
      %v1920 = vadd.f32 %v1919, %v1887
      %v1921 = vadd.f32 %v1920, %v1888
      %v1922 = vrot.slane %v1921, 4
      %v1923 = vadd.f32 %v1921, %v1922
      %v1924 = vrot.slane %v1923, 2
      %v1925 = vadd.f32 %v1923, %v1924
      %v1926 = vrot.slane %v1925, 1
      %v1927 = vadd.f32 %v1925, %v1926
      %vm1928 = vcmask 1040384
      %v1929 = vsel %vm1928, %v1854, %v1927
      %1930 = vst [vmem:[%s316] sm:$0x3] %v1929
      %p1931 = scmp.lt.s32.totalorder %s20, 1
      %s1932 = scalar_select %p1931, %s20, 1
      %s1933 = smul.addr %s1932, 34
      %s1934 = smul.addr %s1933, 8
      %s1935 = scalar_lea.vmem %s7, %s1934
      %p1936 = scmp.lt.s32.totalorder %s20, 1
      %s1937 = scalar_select %p1936, %s20, 1
      %s1938 = smul.addr %s1937, 2
      %s1939 = scalar_lea.vmem %s8, %s1938
      // Predicated region
      $region49: #{decoder_forward.6} parent=47 // pred_check
        %p1940 = pneg %p190
      $region50: #{decoder_forward.6} parent=47 // pred_check_branch
        %1942 = sbr.rel (%p1940) target = $region52
      $region51: #{decoder_forward.6} parent=47 // pred_region
        _
      $region52: #{decoder_forward.6} parent=47 // pred_fallthru
        _
      // Predicated region
      $region53: #{decoder_forward.6} parent=47 // pred_check
        %p1943 = pneg %p216
      $region54: #{decoder_forward.6} parent=47 // pred_check_branch
        %1945 = sbr.rel (%p1943) target = $region56
      $region55: #{decoder_forward.6} parent=47 // pred_region
        _
      $region56: #{decoder_forward.6} parent=47 // pred_fallthru
        _
    $region48: #{decoder_forward.6} parent=5 // pred_fallthru
      _
    %p1946 = scmp.le.s32.totalorder 2, %s15
    // Predicated region
    $region57: #{decoder_forward.6} parent=5 // pred_check
      %p1947 = pneg %p1946
    $region58: #{decoder_forward.6} parent=5 // pred_check_branch
      %1949 = sbr.rel (%p1947) target = $region60
    $region59: #{decoder_forward.6} parent=5 // pred_region
      %s1950 = ssub.s32 %s15, 2
      // Predicated region
      $region61: #{decoder_forward.6} parent=59 // pred_check
        %p1951 = pneg %p196
      $region62: #{decoder_forward.6} parent=59 // pred_check_branch
        %1953 = sbr.rel (%p1951) target = $region64
      $region63: #{decoder_forward.6} parent=59 // pred_region
        %p1954 = scmp.lt.s32.totalorder %s21, 1
        %s1955 = scalar_select %p1954, %s21, 1
        %s1956 = smul.addr %s1955, 34
        %s1957 = smul.addr %s1956, 8
        %s1958 = scalar_lea.vmem %s7, %s1957
      $region64: #{decoder_forward.6} parent=59 // pred_fallthru
        _
      // Predicated region
      $region65: #{decoder_forward.6} parent=59 // pred_check
        %p1959 = pneg %p222
      $region66: #{decoder_forward.6} parent=59 // pred_check_branch
        %1961 = sbr.rel (%p1959) target = $region68
      $region67: #{decoder_forward.6} parent=59 // pred_region
        %p1962 = scmp.lt.s32.totalorder %s21, 1
        %s1963 = scalar_select %p1962, %s21, 1
        %s1964 = smul.addr %s1963, 2
        %s1965 = scalar_lea.vmem %s8, %s1964
      $region68: #{decoder_forward.6} parent=59 // pred_fallthru
        _
    $region60: #{decoder_forward.6} parent=5 // pred_fallthru
      _
  $region6: #{decoder_forward.6} parent=0 // loop_footer
    %s19 = sadd.s32 1, %s15
  $region7: #{decoder_forward.6} parent=0 // loop_footer_branch
    %14 = sbr.rel target = $region3
  $region8: #{decoder_forward.6} parent=0 // loop_exit
    _

// kernel: decoder_forward.7
$region0: #{decoder_forward.7}
  #allocation0 [shape = 'u32[]', space=smem, size = 0x4, offset = 0x4, fixed_abs, tag = 'smem constant byte address 0x4 - core index']
  #allocation1 [shape = 'u32[144,128]{1,0:T(1,128)}', space=vmem, size = 0x12000, scoped, tag = 'internal scratch']
  %s0 = inlined_call_operand.vmem [shape: f32[2,1122,32], index: 0, kind: input, shape index: {}]
  %s1 = inlined_call_operand.vmem [shape: bf16[32,128], index: 1, kind: input, shape index: {}]
  %s2 = inlined_call_operand.vmem [shape: bf16[32,128], index: 2, kind: input, shape index: {}]
  %s3 = inlined_call_operand.vmem [shape: bf16[32,128], index: 3, kind: input, shape index: {}]
  %s4 = inlined_call_operand.vmem [shape: bf16[32,128], index: 4, kind: input, shape index: {}]
  %s5 = inlined_call_operand.vmem [shape: f32[1,128], index: 5, kind: input, shape index: {}]
  %s6 = inlined_call_operand.vmem [shape: f32[2,1056,128], index: 6, kind: output, shape index: {}]
  %s7 = sld [smem:[#allocation0]]
  $region57: #{decoder_forward.7} parent=0
    _
  %s9 = ssub.s32 1, %s7
  %s10 = scalar_select 0, %s9, %s7
  loop: start=0, step=1, limit=4
  $region2: #{decoder_forward.7} parent=0 // loop_pre_header
    _
  $region3: #{decoder_forward.7} parent=0 // loop_header
    %s12 = sphi 0, %s16
    %p13 = scmp.ge.s32.totalorder %s12, 4
    %s22 = sphi 0, %s24
    %s25 = sphi 0, %s22
    %s26 = sphi 0, %s25
    %s42 = sphi 0, %s26
    %s46 = sphi 0, %s46
    %s48 = sphi 0, %s46
    %s49 = sphi 0, %s48
    %s63 = sphi 0, %s49
    %s67 = sphi 0, %s67
    %s69 = sphi 0, %s67
    %s70 = sphi 0, %s69
    %s84 = sphi 0, %s70
    %s88 = sphi 0, %s88
    %s90 = sphi 0, %s88
    %s91 = sphi 0, %s90
    %s105 = sphi 0, %s91
    %s109 = sphi 0, %s109
    %s111 = sphi 0, %s109
    %s112 = sphi 0, %s111
    %s126 = sphi 0, %s112
    %s130 = sphi 0, %s130
    %s132 = sphi 0, %s130
    %s133 = sphi 0, %s132
    %s147 = sphi 0, %s133
    %s153 = sphi 0, %s155
    %s156 = sphi 0, %s153
    %s157 = sphi 0, %s156
    %s173 = sphi 0, %s157
  $region4: #{decoder_forward.7} parent=0 // loop_header_branch
    %15 = sbr.rel (%p13) target = $region8
  $region5: #{decoder_forward.7} parent=0 // loop_body
    %s17 = ssub.s32 %s12, 1
    %s18 = ssub.s32 %s12, 2
    %s19 = sadd.s32 %s12, 1
    %s20 = ssub.s32 %s12, %s19
    %p21 = scmp.eq.s32.totalorder %s20, 0
    %s23 = sadd.s32 %s22, 1
    %s24 = scalar_select %p21, %s22, %s23
    %p27 = pneg %p21
    %p28 = scmp.eq.s32.totalorder %s12, 1
    %p29 = por %p27, %p28
    %p30 = scmp.ne.s32.totalorder %s22, %s25
    %p31 = scmp.eq.s32.totalorder %s12, 0
    %p32 = por %p30, %p31
    %p33 = scmp.ne.s32.totalorder %s22, %s25
    %p34 = scmp.eq.s32.totalorder %s17, 1
    %p35 = por %p33, %p34
    %p36 = scmp.ne.s32.totalorder %s25, %s26
    %p37 = scmp.eq.s32.totalorder %s17, 0
    %p38 = por %p36, %p37
    %p39 = scmp.ne.s32.totalorder %s25, %s26
    %p40 = scmp.eq.s32.totalorder %s18, 1
    %p41 = por %p39, %p40
    %p43 = scmp.ne.s32.totalorder %s26, %s42
    %p44 = scmp.eq.s32.totalorder %s18, 0
    %p45 = por %p43, %p44
    %s47 = sadd.s32 %s46, 1
    %p50 = scmp.eq.s32.totalorder %s12, 1
    %p51 = scmp.ne.s32.totalorder %s46, %s48
    %p52 = scmp.eq.s32.totalorder %s12, 0
    %p53 = por %p51, %p52
    %p54 = scmp.ne.s32.totalorder %s46, %s48
    %p55 = scmp.eq.s32.totalorder %s17, 1
    %p56 = por %p54, %p55
    %p57 = scmp.ne.s32.totalorder %s48, %s49
    %p58 = scmp.eq.s32.totalorder %s17, 0
    %p59 = por %p57, %p58
    %p60 = scmp.ne.s32.totalorder %s48, %s49
    %p61 = scmp.eq.s32.totalorder %s18, 1
    %p62 = por %p60, %p61
    %p64 = scmp.ne.s32.totalorder %s49, %s63
    %p65 = scmp.eq.s32.totalorder %s18, 0
    %p66 = por %p64, %p65
    %s68 = sadd.s32 %s67, 1
    %p71 = scmp.eq.s32.totalorder %s12, 1
    %p72 = scmp.ne.s32.totalorder %s67, %s69
    %p73 = scmp.eq.s32.totalorder %s12, 0
    %p74 = por %p72, %p73
    %p75 = scmp.ne.s32.totalorder %s67, %s69
    %p76 = scmp.eq.s32.totalorder %s17, 1
    %p77 = por %p75, %p76
    %p78 = scmp.ne.s32.totalorder %s69, %s70
    %p79 = scmp.eq.s32.totalorder %s17, 0
    %p80 = por %p78, %p79
    %p81 = scmp.ne.s32.totalorder %s69, %s70
    %p82 = scmp.eq.s32.totalorder %s18, 1
    %p83 = por %p81, %p82
    %p85 = scmp.ne.s32.totalorder %s70, %s84
    %p86 = scmp.eq.s32.totalorder %s18, 0
    %p87 = por %p85, %p86
    %s89 = sadd.s32 %s88, 1
    %p92 = scmp.eq.s32.totalorder %s12, 1
    %p93 = scmp.ne.s32.totalorder %s88, %s90
    %p94 = scmp.eq.s32.totalorder %s12, 0
    %p95 = por %p93, %p94
    %p96 = scmp.ne.s32.totalorder %s88, %s90
    %p97 = scmp.eq.s32.totalorder %s17, 1
    %p98 = por %p96, %p97
    %p99 = scmp.ne.s32.totalorder %s90, %s91
    %p100 = scmp.eq.s32.totalorder %s17, 0
    %p101 = por %p99, %p100
    %p102 = scmp.ne.s32.totalorder %s90, %s91
    %p103 = scmp.eq.s32.totalorder %s18, 1
    %p104 = por %p102, %p103
    %p106 = scmp.ne.s32.totalorder %s91, %s105
    %p107 = scmp.eq.s32.totalorder %s18, 0
    %p108 = por %p106, %p107
    %s110 = sadd.s32 %s109, 1
    %p113 = scmp.eq.s32.totalorder %s12, 1
    %p114 = scmp.ne.s32.totalorder %s109, %s111
    %p115 = scmp.eq.s32.totalorder %s12, 0
    %p116 = por %p114, %p115
    %p117 = scmp.ne.s32.totalorder %s109, %s111
    %p118 = scmp.eq.s32.totalorder %s17, 1
    %p119 = por %p117, %p118
    %p120 = scmp.ne.s32.totalorder %s111, %s112
    %p121 = scmp.eq.s32.totalorder %s17, 0
    %p122 = por %p120, %p121
    %p123 = scmp.ne.s32.totalorder %s111, %s112
    %p124 = scmp.eq.s32.totalorder %s18, 1
    %p125 = por %p123, %p124
    %p127 = scmp.ne.s32.totalorder %s112, %s126
    %p128 = scmp.eq.s32.totalorder %s18, 0
    %p129 = por %p127, %p128
    %s131 = sadd.s32 %s130, 1
    %p134 = scmp.eq.s32.totalorder %s12, 1
    %p135 = scmp.ne.s32.totalorder %s130, %s132
    %p136 = scmp.eq.s32.totalorder %s12, 0
    %p137 = por %p135, %p136
    %p138 = scmp.ne.s32.totalorder %s130, %s132
    %p139 = scmp.eq.s32.totalorder %s17, 1
    %p140 = por %p138, %p139
    %p141 = scmp.ne.s32.totalorder %s132, %s133
    %p142 = scmp.eq.s32.totalorder %s17, 0
    %p143 = por %p141, %p142
    %p144 = scmp.ne.s32.totalorder %s132, %s133
    %p145 = scmp.eq.s32.totalorder %s18, 1
    %p146 = por %p144, %p145
    %p148 = scmp.ne.s32.totalorder %s133, %s147
    %p149 = scmp.eq.s32.totalorder %s18, 0
    %p150 = por %p148, %p149
    %s151 = ssub.s32 %s12, %s19
    %p152 = scmp.eq.s32.totalorder %s151, 0
    %s154 = sadd.s32 %s153, 1
    %s155 = scalar_select %p152, %s153, %s154
    %p158 = pneg %p152
    %p159 = scmp.eq.s32.totalorder %s12, 1
    %p160 = por %p158, %p159
    %p161 = scmp.ne.s32.totalorder %s153, %s156
    %p162 = scmp.eq.s32.totalorder %s12, 0
    %p163 = por %p161, %p162
    %p164 = scmp.ne.s32.totalorder %s153, %s156
    %p165 = scmp.eq.s32.totalorder %s17, 1
    %p166 = por %p164, %p165
    %p167 = scmp.ne.s32.totalorder %s156, %s157
    %p168 = scmp.eq.s32.totalorder %s17, 0
    %p169 = por %p167, %p168
    %p170 = scmp.ne.s32.totalorder %s156, %s157
    %p171 = scmp.eq.s32.totalorder %s18, 1
    %p172 = por %p170, %p171
    %p174 = scmp.ne.s32.totalorder %s157, %s173
    %p175 = scmp.eq.s32.totalorder %s18, 0
    %p176 = por %p174, %p175
    %p177 = scmp.le.s32.totalorder 1, %s12
    %p178 = scmp.lt.s32.totalorder %s12, 3
    %p179 = pnand %p177, %p178
    %p180 = pneg %p179
    // Predicated region
    $region9: #{decoder_forward.7} parent=5 // pred_check
      _
    $region10: #{decoder_forward.7} parent=5 // pred_check_branch
      %182 = sbr.rel (%p179) target = $region12
    $region11: #{decoder_forward.7} parent=5 // pred_region
      %s183 = ssub.s32 %s12, 1
      // Predicated region
      $region13: #{decoder_forward.7} parent=11 // pred_check
        %p184 = pneg %p59
      $region14: #{decoder_forward.7} parent=11 // pred_check_branch
        %186 = sbr.rel (%p184) target = $region16
      $region15: #{decoder_forward.7} parent=11 // pred_region
        _
      $region16: #{decoder_forward.7} parent=11 // pred_fallthru
        _
      // Predicated region
      $region17: #{decoder_forward.7} parent=11 // pred_check
        %p187 = pneg %p80
      $region18: #{decoder_forward.7} parent=11 // pred_check_branch
        %189 = sbr.rel (%p187) target = $region20
      $region19: #{decoder_forward.7} parent=11 // pred_region
        _
      $region20: #{decoder_forward.7} parent=11 // pred_fallthru
        _
      // Predicated region
      $region21: #{decoder_forward.7} parent=11 // pred_check
        %p190 = pneg %p101
      $region22: #{decoder_forward.7} parent=11 // pred_check_branch
        %192 = sbr.rel (%p190) target = $region24
      $region23: #{decoder_forward.7} parent=11 // pred_region
        _
      $region24: #{decoder_forward.7} parent=11 // pred_fallthru
        _
      // Predicated region
      $region25: #{decoder_forward.7} parent=11 // pred_check
        %p193 = pneg %p122
      $region26: #{decoder_forward.7} parent=11 // pred_check_branch
        %195 = sbr.rel (%p193) target = $region28
      $region27: #{decoder_forward.7} parent=11 // pred_region
        _
      $region28: #{decoder_forward.7} parent=11 // pred_fallthru
        _
      // Predicated region
      $region29: #{decoder_forward.7} parent=11 // pred_check
        %p196 = pneg %p143
      $region30: #{decoder_forward.7} parent=11 // pred_check_branch
        %198 = sbr.rel (%p196) target = $region32
      $region31: #{decoder_forward.7} parent=11 // pred_region
        _
      $region32: #{decoder_forward.7} parent=11 // pred_fallthru
        _
    $region12: #{decoder_forward.7} parent=5 // pred_fallthru
      _
    %p199 = scmp.lt.s32.totalorder %s12, 2
    // Predicated region
    $region33: #{decoder_forward.7} parent=5 // pred_check
      %p200 = pneg %p199
    $region34: #{decoder_forward.7} parent=5 // pred_check_branch
      %202 = sbr.rel (%p200) target = $region36
    $region35: #{decoder_forward.7} parent=5 // pred_region
      // Predicated region
      $region37: #{decoder_forward.7} parent=35 // pred_check
        %p203 = pneg %p32
      $region38: #{decoder_forward.7} parent=35 // pred_check_branch
        %205 = sbr.rel (%p203) target = $region40
      $region39: #{decoder_forward.7} parent=35 // pred_region
        %p206 = scmp.lt.s32.totalorder %s12, 1
        %s207 = scalar_select %p206, %s12, 1
        %s208 = smul.addr %s207, 141
        %s209 = smul.addr %s208, 8
        %s210 = scalar_lea.vmem %s0, %s209
      $region40: #{decoder_forward.7} parent=35 // pred_fallthru
        _
    $region36: #{decoder_forward.7} parent=5 // pred_fallthru
      _
    %p211 = scmp.le.s32.totalorder 1, %s12
    %p212 = scmp.lt.s32.totalorder %s12, 3
    %p213 = pnand %p211, %p212
    %p214 = pneg %p213
    // Predicated region
    $region41: #{decoder_forward.7} parent=5 // pred_check
      _
    $region42: #{decoder_forward.7} parent=5 // pred_check_branch
      %216 = sbr.rel (%p213) target = $region44
    $region43: #{decoder_forward.7} parent=5 // pred_region
      %s217 = ssub.s32 %s12, 1
      %p218 = scmp.lt.s32.totalorder %s17, 1
      %s219 = scalar_select %p218, %s17, 1
      %s220 = smul.addr %s219, 141
      %s221 = smul.addr %s220, 8
      %s222 = scalar_lea.vmem %s0, %s221
      %p223 = pneg %p38
      %p224 = pneg %p35
      %p225 = pneg %p59
      %p226 = pneg %p56
      %p227 = pneg %p80
      %p228 = pneg %p77
      %p229 = pneg %p101
      %p230 = pneg %p98
      %p231 = pneg %p122
      %p232 = pneg %p119
      %p233 = pneg %p143
      %p234 = pneg %p140
      %p235 = pneg %p169
      %p236 = pneg %p166
      %p237 = scmp.lt.s32.totalorder %s17, 1
      %s238 = scalar_select %p237, %s17, 1
      %s239 = smul.addr %s238, 132
      %s240 = smul.addr %s239, 8
      %s241 = scalar_lea.vmem %s6, %s240
      %p242 = scmp.lt.s32.totalorder %s17, 1
      %s243 = scalar_select %p242, %s17, 1
      %s244 = smul.addr %s243, 141
      %s245 = smul.addr %s244, 8
      %s246 = scalar_lea.vmem %s0, %s245
      %p247 = scmp.lt.s32.totalorder %s17, 1
      %s248 = scalar_select %p247, %s17, 1
      %s249 = smul.addr %s248, 132
      %s250 = smul.addr %s249, 8
      %s251 = scalar_lea.vmem %s6, %s250
      %v253 = vld [vmem:[%s246] sm:$0xff]
      %v254 = vld [vmem:[%s246 + $0x8] sm:$0xff]
      %v255 = vld [vmem:[%s246 + $0x10] sm:$0xff]
      %v256 = vld [vmem:[%s246 + $0x18] sm:$0xff]
      %v257 = vld [vmem:[%s246 + $0x20] sm:$0xff]
      %v258 = vld [vmem:[%s246 + $0x28] sm:$0xff]
      %v259 = vld [vmem:[%s246 + $0x30] sm:$0xff]
      %v260 = vld [vmem:[%s246 + $0x38] sm:$0xff]
      %v261 = vld [vmem:[%s246 + $0x40] sm:$0xff]
      %v262 = vld [vmem:[%s246 + $0x48] sm:$0xff]
      %v263 = vld [vmem:[%s246 + $0x50] sm:$0xff]
      %v264 = vld [vmem:[%s246 + $0x58] sm:$0xff]
      %v265 = vld [vmem:[%s246 + $0x60] sm:$0xff]
      %v266 = vld [vmem:[%s246 + $0x68] sm:$0xff]
      %v267 = vld [vmem:[%s246 + $0x70] sm:$0xff]
      %v268 = vld [vmem:[%s246 + $0x78] sm:$0xff]
      %v269 = vld [vmem:[%s246 + $0x80] sm:$0xff]
      %v270 = vld [vmem:[%s246 + $0x88] sm:$0xff]
      %v271 = vld [vmem:[%s246 + $0x90] sm:$0xff]
      %v272 = vld [vmem:[%s246 + $0x98] sm:$0xff]
      %v273 = vld [vmem:[%s246 + $0xa0] sm:$0xff]
      %v274 = vld [vmem:[%s246 + $0xa8] sm:$0xff]
      %v275 = vld [vmem:[%s246 + $0xb0] sm:$0xff]
      %v276 = vld [vmem:[%s246 + $0xb8] sm:$0xff]
      %v277 = vld [vmem:[%s246 + $0xc0] sm:$0xff]
      %v278 = vld [vmem:[%s246 + $0xc8] sm:$0xff]
      %v279 = vld [vmem:[%s246 + $0xd0] sm:$0xff]
      %v280 = vld [vmem:[%s246 + $0xd8] sm:$0xff]
      %v281 = vld [vmem:[%s246 + $0xe0] sm:$0xff]
      %v282 = vld [vmem:[%s246 + $0xe8] sm:$0xff]
      %v283 = vld [vmem:[%s246 + $0xf0] sm:$0xff]
      %v284 = vld [vmem:[%s246 + $0xf8] sm:$0xff]
      %v285 = vld [vmem:[%s246 + $0x100] sm:$0xff]
      %v286 = vld [vmem:[%s246 + $0x108] sm:$0xff]
      %v287 = vld [vmem:[%s246 + $0x110] sm:$0xff]
      %v288 = vld [vmem:[%s246 + $0x118] sm:$0xff]
      %v289 = vld [vmem:[%s246 + $0x120] sm:$0xff]
      %v290 = vld [vmem:[%s246 + $0x128] sm:$0xff]
      %v291 = vld [vmem:[%s246 + $0x130] sm:$0xff]
      %v292 = vld [vmem:[%s246 + $0x138] sm:$0xff]
      %v293 = vld [vmem:[%s246 + $0x140] sm:$0xff]
      %v294 = vld [vmem:[%s246 + $0x148] sm:$0xff]
      %v295 = vld [vmem:[%s246 + $0x150] sm:$0xff]
      %v296 = vld [vmem:[%s246 + $0x158] sm:$0xff]
      %v297 = vld [vmem:[%s246 + $0x160] sm:$0xff]
      %v298 = vld [vmem:[%s246 + $0x168] sm:$0xff]
      %v299 = vld [vmem:[%s246 + $0x170] sm:$0xff]
      %v300 = vld [vmem:[%s246 + $0x178] sm:$0xff]
      %v301 = vld [vmem:[%s246 + $0x180] sm:$0xff]
      %v302 = vld [vmem:[%s246 + $0x188] sm:$0xff]
      %v303 = vld [vmem:[%s246 + $0x190] sm:$0xff]
      %v304 = vld [vmem:[%s246 + $0x198] sm:$0xff]
      %v305 = vld [vmem:[%s246 + $0x1a0] sm:$0xff]
      %v306 = vld [vmem:[%s246 + $0x1a8] sm:$0xff]
      %v307 = vld [vmem:[%s246 + $0x1b0] sm:$0xff]
      %v308 = vld [vmem:[%s246 + $0x1b8] sm:$0xff]
      %v309 = vld [vmem:[%s246 + $0x1c0] sm:$0xff]
      %v310 = vld [vmem:[%s246 + $0x1c8] sm:$0xff]
      %v311 = vld [vmem:[%s246 + $0x1d0] sm:$0xff]
      %v312 = vld [vmem:[%s246 + $0x1d8] sm:$0xff]
      %v313 = vld [vmem:[%s246 + $0x1e0] sm:$0xff]
      %v314 = vld [vmem:[%s246 + $0x1e8] sm:$0xff]
      %v315 = vld [vmem:[%s246 + $0x1f0] sm:$0xff]
      %v316 = vld [vmem:[%s246 + $0x1f8] sm:$0xff]
      %v317 = vld [vmem:[%s246 + $0x200] sm:$0xff]
      %v318 = vld [vmem:[%s246 + $0x208] sm:$0xff]
      %v319 = vld [vmem:[%s246 + $0x210] sm:$0xff]
      %v320 = vld [vmem:[%s246 + $0x218] sm:$0xff]
      %v321 = vld [vmem:[%s246 + $0x220] sm:$0xff]
      %v322 = vld [vmem:[%s246 + $0x228] sm:$0xff]
      %v323 = vld [vmem:[%s246 + $0x230] sm:$0xff]
      %v324 = vld [vmem:[%s246 + $0x238] sm:$0xff]
      %v325 = vld [vmem:[%s246 + $0x240] sm:$0xff]
      %v326 = vld [vmem:[%s246 + $0x248] sm:$0xff]
      %v327 = vld [vmem:[%s246 + $0x250] sm:$0xff]
      %v328 = vld [vmem:[%s246 + $0x258] sm:$0xff]
      %v329 = vld [vmem:[%s246 + $0x260] sm:$0xff]
      %v330 = vld [vmem:[%s246 + $0x268] sm:$0xff]
      %v331 = vld [vmem:[%s246 + $0x270] sm:$0xff]
      %v332 = vld [vmem:[%s246 + $0x278] sm:$0xff]
      %v333 = vld [vmem:[%s246 + $0x280] sm:$0xff]
      %v334 = vld [vmem:[%s246 + $0x288] sm:$0xff]
      %v335 = vld [vmem:[%s246 + $0x290] sm:$0xff]
      %v336 = vld [vmem:[%s246 + $0x298] sm:$0xff]
      %v337 = vld [vmem:[%s246 + $0x2a0] sm:$0xff]
      %v338 = vld [vmem:[%s246 + $0x2a8] sm:$0xff]
      %v339 = vld [vmem:[%s246 + $0x2b0] sm:$0xff]
      %v340 = vld [vmem:[%s246 + $0x2b8] sm:$0xff]
      %v341 = vld [vmem:[%s246 + $0x2c0] sm:$0xff]
      %v342 = vld [vmem:[%s246 + $0x2c8] sm:$0xff]
      %v343 = vld [vmem:[%s246 + $0x2d0] sm:$0xff]
      %v344 = vld [vmem:[%s246 + $0x2d8] sm:$0xff]
      %v345 = vld [vmem:[%s246 + $0x2e0] sm:$0xff]
      %v346 = vld [vmem:[%s246 + $0x2e8] sm:$0xff]
      %v347 = vld [vmem:[%s246 + $0x2f0] sm:$0xff]
      %v348 = vld [vmem:[%s246 + $0x2f8] sm:$0xff]
      %v349 = vld [vmem:[%s246 + $0x300] sm:$0xff]
      %v350 = vld [vmem:[%s246 + $0x308] sm:$0xff]
      %v351 = vld [vmem:[%s246 + $0x310] sm:$0xff]
      %v352 = vld [vmem:[%s246 + $0x318] sm:$0xff]
      %v353 = vld [vmem:[%s246 + $0x320] sm:$0xff]
      %v354 = vld [vmem:[%s246 + $0x328] sm:$0xff]
      %v355 = vld [vmem:[%s246 + $0x330] sm:$0xff]
      %v356 = vld [vmem:[%s246 + $0x338] sm:$0xff]
      %v357 = vld [vmem:[%s246 + $0x340] sm:$0xff]
      %v358 = vld [vmem:[%s246 + $0x348] sm:$0xff]
      %v359 = vld [vmem:[%s246 + $0x350] sm:$0xff]
      %v360 = vld [vmem:[%s246 + $0x358] sm:$0xff]
      %v361 = vld [vmem:[%s246 + $0x360] sm:$0xff]
      %v362 = vld [vmem:[%s246 + $0x368] sm:$0xff]
      %v363 = vld [vmem:[%s246 + $0x370] sm:$0xff]
      %v364 = vld [vmem:[%s246 + $0x378] sm:$0xff]
      %v365 = vld [vmem:[%s246 + $0x380] sm:$0xff]
      %v366 = vld [vmem:[%s246 + $0x388] sm:$0xff]
      %v367 = vld [vmem:[%s246 + $0x390] sm:$0xff]
      %v368 = vld [vmem:[%s246 + $0x398] sm:$0xff]
      %v369 = vld [vmem:[%s246 + $0x3a0] sm:$0xff]
      %v370 = vld [vmem:[%s246 + $0x3a8] sm:$0xff]
      %v371 = vld [vmem:[%s246 + $0x3b0] sm:$0xff]
      %v372 = vld [vmem:[%s246 + $0x3b8] sm:$0xff]
      %v373 = vld [vmem:[%s246 + $0x3c0] sm:$0xff]
      %v374 = vld [vmem:[%s246 + $0x3c8] sm:$0xff]
      %v375 = vld [vmem:[%s246 + $0x3d0] sm:$0xff]
      %v376 = vld [vmem:[%s246 + $0x3d8] sm:$0xff]
      %v377 = vld [vmem:[%s246 + $0x3e0] sm:$0xff]
      %v378 = vld [vmem:[%s246 + $0x3e8] sm:$0xff]
      %v379 = vld [vmem:[%s246 + $0x3f0] sm:$0xff]
      %v380 = vld [vmem:[%s246 + $0x3f8] sm:$0xff]
      %v381 = vld [vmem:[%s246 + $0x400] sm:$0xff]
      %v382 = vld [vmem:[%s246 + $0x408] sm:$0xff]
      %v383 = vld [vmem:[%s246 + $0x410] sm:$0xff]
      %v384 = vld [vmem:[%s246 + $0x418] sm:$0xff]
      %v385 = vpack.c.bf16 %v254, %v253
      %v386 = vpack.c.bf16 %v256, %v255
      %v387 = vpack.c.bf16 %v258, %v257
      %v388 = vpack.c.bf16 %v260, %v259
      %v389 = vpack.c.bf16 %v262, %v261
      %v390 = vpack.c.bf16 %v264, %v263
      %v391 = vpack.c.bf16 %v266, %v265
      %v392 = vpack.c.bf16 %v268, %v267
      %v393 = vpack.c.bf16 %v270, %v269
      %v394 = vpack.c.bf16 %v272, %v271
      %v395 = vpack.c.bf16 %v274, %v273
      %v396 = vpack.c.bf16 %v276, %v275
      %v397 = vpack.c.bf16 %v278, %v277
      %v398 = vpack.c.bf16 %v280, %v279
      %v399 = vpack.c.bf16 %v282, %v281
      %v400 = vpack.c.bf16 %v284, %v283
      %v401 = vpack.c.bf16 %v286, %v285
      %v402 = vpack.c.bf16 %v288, %v287
      %v403 = vpack.c.bf16 %v290, %v289
      %v404 = vpack.c.bf16 %v292, %v291
      %v405 = vpack.c.bf16 %v294, %v293
      %v406 = vpack.c.bf16 %v296, %v295
      %v407 = vpack.c.bf16 %v298, %v297
      %v408 = vpack.c.bf16 %v300, %v299
      %v409 = vpack.c.bf16 %v302, %v301
      %v410 = vpack.c.bf16 %v304, %v303
      %v411 = vpack.c.bf16 %v306, %v305
      %v412 = vpack.c.bf16 %v308, %v307
      %v413 = vpack.c.bf16 %v310, %v309
      %v414 = vpack.c.bf16 %v312, %v311
      %v415 = vpack.c.bf16 %v314, %v313
      %v416 = vpack.c.bf16 %v316, %v315
      %v417 = vpack.c.bf16 %v318, %v317
      %v418 = vpack.c.bf16 %v320, %v319
      %v419 = vpack.c.bf16 %v322, %v321
      %v420 = vpack.c.bf16 %v324, %v323
      %v421 = vpack.c.bf16 %v326, %v325
      %v422 = vpack.c.bf16 %v328, %v327
      %v423 = vpack.c.bf16 %v330, %v329
      %v424 = vpack.c.bf16 %v332, %v331
      %v425 = vpack.c.bf16 %v334, %v333
      %v426 = vpack.c.bf16 %v336, %v335
      %v427 = vpack.c.bf16 %v338, %v337
      %v428 = vpack.c.bf16 %v340, %v339
      %v429 = vpack.c.bf16 %v342, %v341
      %v430 = vpack.c.bf16 %v344, %v343
      %v431 = vpack.c.bf16 %v346, %v345
      %v432 = vpack.c.bf16 %v348, %v347
      %v433 = vpack.c.bf16 %v350, %v349
      %v434 = vpack.c.bf16 %v352, %v351
      %v435 = vpack.c.bf16 %v354, %v353
      %v436 = vpack.c.bf16 %v356, %v355
      %v437 = vpack.c.bf16 %v358, %v357
      %v438 = vpack.c.bf16 %v360, %v359
      %v439 = vpack.c.bf16 %v362, %v361
      %v440 = vpack.c.bf16 %v364, %v363
      %v441 = vpack.c.bf16 %v366, %v365
      %v442 = vpack.c.bf16 %v368, %v367
      %v443 = vpack.c.bf16 %v370, %v369
      %v444 = vpack.c.bf16 %v372, %v371
      %v445 = vpack.c.bf16 %v374, %v373
      %v446 = vpack.c.bf16 %v376, %v375
      %v447 = vpack.c.bf16 %v378, %v377
      %v448 = vpack.c.bf16 %v380, %v379
      %v449 = vpack.c.bf16 %v382, %v381
      %v450 = vpack.c.bf16 %v384, %v383
      %v451 = vld [vmem:[%s246 + $0x1] sm:$0xff]
      %v452 = vld [vmem:[%s246 + $0x9] sm:$0xff]
      %v453 = vld [vmem:[%s246 + $0x11] sm:$0xff]
      %v454 = vld [vmem:[%s246 + $0x19] sm:$0xff]
      %v455 = vld [vmem:[%s246 + $0x21] sm:$0xff]
      %v456 = vld [vmem:[%s246 + $0x29] sm:$0xff]
      %v457 = vld [vmem:[%s246 + $0x31] sm:$0xff]
      %v458 = vld [vmem:[%s246 + $0x39] sm:$0xff]
      %v459 = vld [vmem:[%s246 + $0x41] sm:$0xff]
      %v460 = vld [vmem:[%s246 + $0x49] sm:$0xff]
      %v461 = vld [vmem:[%s246 + $0x51] sm:$0xff]
      %v462 = vld [vmem:[%s246 + $0x59] sm:$0xff]
      %v463 = vld [vmem:[%s246 + $0x61] sm:$0xff]
      %v464 = vld [vmem:[%s246 + $0x69] sm:$0xff]
      %v465 = vld [vmem:[%s246 + $0x71] sm:$0xff]
      %v466 = vld [vmem:[%s246 + $0x79] sm:$0xff]
      %v467 = vld [vmem:[%s246 + $0x81] sm:$0xff]
      %v468 = vld [vmem:[%s246 + $0x89] sm:$0xff]
      %v469 = vld [vmem:[%s246 + $0x91] sm:$0xff]
      %v470 = vld [vmem:[%s246 + $0x99] sm:$0xff]
      %v471 = vld [vmem:[%s246 + $0xa1] sm:$0xff]
      %v472 = vld [vmem:[%s246 + $0xa9] sm:$0xff]
      %v473 = vld [vmem:[%s246 + $0xb1] sm:$0xff]
      %v474 = vld [vmem:[%s246 + $0xb9] sm:$0xff]
      %v475 = vld [vmem:[%s246 + $0xc1] sm:$0xff]
      %v476 = vld [vmem:[%s246 + $0xc9] sm:$0xff]
      %v477 = vld [vmem:[%s246 + $0xd1] sm:$0xff]
      %v478 = vld [vmem:[%s246 + $0xd9] sm:$0xff]
      %v479 = vld [vmem:[%s246 + $0xe1] sm:$0xff]
      %v480 = vld [vmem:[%s246 + $0xe9] sm:$0xff]
      %v481 = vld [vmem:[%s246 + $0xf1] sm:$0xff]
      %v482 = vld [vmem:[%s246 + $0xf9] sm:$0xff]
      %v483 = vld [vmem:[%s246 + $0x101] sm:$0xff]
      %v484 = vld [vmem:[%s246 + $0x109] sm:$0xff]
      %v485 = vld [vmem:[%s246 + $0x111] sm:$0xff]
      %v486 = vld [vmem:[%s246 + $0x119] sm:$0xff]
      %v487 = vld [vmem:[%s246 + $0x121] sm:$0xff]
      %v488 = vld [vmem:[%s246 + $0x129] sm:$0xff]
      %v489 = vld [vmem:[%s246 + $0x131] sm:$0xff]
      %v490 = vld [vmem:[%s246 + $0x139] sm:$0xff]
      %v491 = vld [vmem:[%s246 + $0x141] sm:$0xff]
      %v492 = vld [vmem:[%s246 + $0x149] sm:$0xff]
      %v493 = vld [vmem:[%s246 + $0x151] sm:$0xff]
      %v494 = vld [vmem:[%s246 + $0x159] sm:$0xff]
      %v495 = vld [vmem:[%s246 + $0x161] sm:$0xff]
      %v496 = vld [vmem:[%s246 + $0x169] sm:$0xff]
      %v497 = vld [vmem:[%s246 + $0x171] sm:$0xff]
      %v498 = vld [vmem:[%s246 + $0x179] sm:$0xff]
      %v499 = vld [vmem:[%s246 + $0x181] sm:$0xff]
      %v500 = vld [vmem:[%s246 + $0x189] sm:$0xff]
      %v501 = vld [vmem:[%s246 + $0x191] sm:$0xff]
      %v502 = vld [vmem:[%s246 + $0x199] sm:$0xff]
      %v503 = vld [vmem:[%s246 + $0x1a1] sm:$0xff]
      %v504 = vld [vmem:[%s246 + $0x1a9] sm:$0xff]
      %v505 = vld [vmem:[%s246 + $0x1b1] sm:$0xff]
      %v506 = vld [vmem:[%s246 + $0x1b9] sm:$0xff]
      %v507 = vld [vmem:[%s246 + $0x1c1] sm:$0xff]
      %v508 = vld [vmem:[%s246 + $0x1c9] sm:$0xff]
      %v509 = vld [vmem:[%s246 + $0x1d1] sm:$0xff]
      %v510 = vld [vmem:[%s246 + $0x1d9] sm:$0xff]
      %v511 = vld [vmem:[%s246 + $0x1e1] sm:$0xff]
      %v512 = vld [vmem:[%s246 + $0x1e9] sm:$0xff]
      %v513 = vld [vmem:[%s246 + $0x1f1] sm:$0xff]
      %v514 = vld [vmem:[%s246 + $0x1f9] sm:$0xff]
      %v515 = vld [vmem:[%s246 + $0x201] sm:$0xff]
      %v516 = vld [vmem:[%s246 + $0x209] sm:$0xff]
      %v517 = vld [vmem:[%s246 + $0x211] sm:$0xff]
      %v518 = vld [vmem:[%s246 + $0x219] sm:$0xff]
      %v519 = vld [vmem:[%s246 + $0x221] sm:$0xff]
      %v520 = vld [vmem:[%s246 + $0x229] sm:$0xff]
      %v521 = vld [vmem:[%s246 + $0x231] sm:$0xff]
      %v522 = vld [vmem:[%s246 + $0x239] sm:$0xff]
      %v523 = vld [vmem:[%s246 + $0x241] sm:$0xff]
      %v524 = vld [vmem:[%s246 + $0x249] sm:$0xff]
      %v525 = vld [vmem:[%s246 + $0x251] sm:$0xff]
      %v526 = vld [vmem:[%s246 + $0x259] sm:$0xff]
      %v527 = vld [vmem:[%s246 + $0x261] sm:$0xff]
      %v528 = vld [vmem:[%s246 + $0x269] sm:$0xff]
      %v529 = vld [vmem:[%s246 + $0x271] sm:$0xff]
      %v530 = vld [vmem:[%s246 + $0x279] sm:$0xff]
      %v531 = vld [vmem:[%s246 + $0x281] sm:$0xff]
      %v532 = vld [vmem:[%s246 + $0x289] sm:$0xff]
      %v533 = vld [vmem:[%s246 + $0x291] sm:$0xff]
      %v534 = vld [vmem:[%s246 + $0x299] sm:$0xff]
      %v535 = vld [vmem:[%s246 + $0x2a1] sm:$0xff]
      %v536 = vld [vmem:[%s246 + $0x2a9] sm:$0xff]
      %v537 = vld [vmem:[%s246 + $0x2b1] sm:$0xff]
      %v538 = vld [vmem:[%s246 + $0x2b9] sm:$0xff]
      %v539 = vld [vmem:[%s246 + $0x2c1] sm:$0xff]
      %v540 = vld [vmem:[%s246 + $0x2c9] sm:$0xff]
      %v541 = vld [vmem:[%s246 + $0x2d1] sm:$0xff]
      %v542 = vld [vmem:[%s246 + $0x2d9] sm:$0xff]
      %v543 = vld [vmem:[%s246 + $0x2e1] sm:$0xff]
      %v544 = vld [vmem:[%s246 + $0x2e9] sm:$0xff]
      %v545 = vld [vmem:[%s246 + $0x2f1] sm:$0xff]
      %v546 = vld [vmem:[%s246 + $0x2f9] sm:$0xff]
      %v547 = vld [vmem:[%s246 + $0x301] sm:$0xff]
      %v548 = vld [vmem:[%s246 + $0x309] sm:$0xff]
      %v549 = vld [vmem:[%s246 + $0x311] sm:$0xff]
      %v550 = vld [vmem:[%s246 + $0x319] sm:$0xff]
      %v551 = vld [vmem:[%s246 + $0x321] sm:$0xff]
      %v552 = vld [vmem:[%s246 + $0x329] sm:$0xff]
      %v553 = vld [vmem:[%s246 + $0x331] sm:$0xff]
      %v554 = vld [vmem:[%s246 + $0x339] sm:$0xff]
      %v555 = vld [vmem:[%s246 + $0x341] sm:$0xff]
      %v556 = vld [vmem:[%s246 + $0x349] sm:$0xff]
      %v557 = vld [vmem:[%s246 + $0x351] sm:$0xff]
      %v558 = vld [vmem:[%s246 + $0x359] sm:$0xff]
      %v559 = vld [vmem:[%s246 + $0x361] sm:$0xff]
      %v560 = vld [vmem:[%s246 + $0x369] sm:$0xff]
      %v561 = vld [vmem:[%s246 + $0x371] sm:$0xff]
      %v562 = vld [vmem:[%s246 + $0x379] sm:$0xff]
      %v563 = vld [vmem:[%s246 + $0x381] sm:$0xff]
      %v564 = vld [vmem:[%s246 + $0x389] sm:$0xff]
      %v565 = vld [vmem:[%s246 + $0x391] sm:$0xff]
      %v566 = vld [vmem:[%s246 + $0x399] sm:$0xff]
      %v567 = vld [vmem:[%s246 + $0x3a1] sm:$0xff]
      %v568 = vld [vmem:[%s246 + $0x3a9] sm:$0xff]
      %v569 = vld [vmem:[%s246 + $0x3b1] sm:$0xff]
      %v570 = vld [vmem:[%s246 + $0x3b9] sm:$0xff]
      %v571 = vld [vmem:[%s246 + $0x3c1] sm:$0xff]
      %v572 = vld [vmem:[%s246 + $0x3c9] sm:$0xff]
      %v573 = vld [vmem:[%s246 + $0x3d1] sm:$0xff]
      %v574 = vld [vmem:[%s246 + $0x3d9] sm:$0xff]
      %v575 = vld [vmem:[%s246 + $0x3e1] sm:$0xff]
      %v576 = vld [vmem:[%s246 + $0x3e9] sm:$0xff]
      %v577 = vld [vmem:[%s246 + $0x3f1] sm:$0xff]
      %v578 = vld [vmem:[%s246 + $0x3f9] sm:$0xff]
      %v579 = vld [vmem:[%s246 + $0x401] sm:$0xff]
      %v580 = vld [vmem:[%s246 + $0x409] sm:$0xff]
      %v581 = vld [vmem:[%s246 + $0x411] sm:$0xff]
      %v582 = vld [vmem:[%s246 + $0x419] sm:$0xff]
      %v583 = vpack.c.bf16 %v452, %v451
      %v584 = vpack.c.bf16 %v454, %v453
      %v585 = vpack.c.bf16 %v456, %v455
      %v586 = vpack.c.bf16 %v458, %v457
      %v587 = vpack.c.bf16 %v460, %v459
      %v588 = vpack.c.bf16 %v462, %v461
      %v589 = vpack.c.bf16 %v464, %v463
      %v590 = vpack.c.bf16 %v466, %v465
      %v591 = vpack.c.bf16 %v468, %v467
      %v592 = vpack.c.bf16 %v470, %v469
      %v593 = vpack.c.bf16 %v472, %v471
      %v594 = vpack.c.bf16 %v474, %v473
      %v595 = vpack.c.bf16 %v476, %v475
      %v596 = vpack.c.bf16 %v478, %v477
      %v597 = vpack.c.bf16 %v480, %v479
      %v598 = vpack.c.bf16 %v482, %v481
      %v599 = vpack.c.bf16 %v484, %v483
      %v600 = vpack.c.bf16 %v486, %v485
      %v601 = vpack.c.bf16 %v488, %v487
      %v602 = vpack.c.bf16 %v490, %v489
      %v603 = vpack.c.bf16 %v492, %v491
      %v604 = vpack.c.bf16 %v494, %v493
      %v605 = vpack.c.bf16 %v496, %v495
      %v606 = vpack.c.bf16 %v498, %v497
      %v607 = vpack.c.bf16 %v500, %v499
      %v608 = vpack.c.bf16 %v502, %v501
      %v609 = vpack.c.bf16 %v504, %v503
      %v610 = vpack.c.bf16 %v506, %v505
      %v611 = vpack.c.bf16 %v508, %v507
      %v612 = vpack.c.bf16 %v510, %v509
      %v613 = vpack.c.bf16 %v512, %v511
      %v614 = vpack.c.bf16 %v514, %v513
      %v615 = vpack.c.bf16 %v516, %v515
      %v616 = vpack.c.bf16 %v518, %v517
      %v617 = vpack.c.bf16 %v520, %v519
      %v618 = vpack.c.bf16 %v522, %v521
      %v619 = vpack.c.bf16 %v524, %v523
      %v620 = vpack.c.bf16 %v526, %v525
      %v621 = vpack.c.bf16 %v528, %v527
      %v622 = vpack.c.bf16 %v530, %v529
      %v623 = vpack.c.bf16 %v532, %v531
      %v624 = vpack.c.bf16 %v534, %v533
      %v625 = vpack.c.bf16 %v536, %v535
      %v626 = vpack.c.bf16 %v538, %v537
      %v627 = vpack.c.bf16 %v540, %v539
      %v628 = vpack.c.bf16 %v542, %v541
      %v629 = vpack.c.bf16 %v544, %v543
      %v630 = vpack.c.bf16 %v546, %v545
      %v631 = vpack.c.bf16 %v548, %v547
      %v632 = vpack.c.bf16 %v550, %v549
      %v633 = vpack.c.bf16 %v552, %v551
      %v634 = vpack.c.bf16 %v554, %v553
      %v635 = vpack.c.bf16 %v556, %v555
      %v636 = vpack.c.bf16 %v558, %v557
      %v637 = vpack.c.bf16 %v560, %v559
      %v638 = vpack.c.bf16 %v562, %v561
      %v639 = vpack.c.bf16 %v564, %v563
      %v640 = vpack.c.bf16 %v566, %v565
      %v641 = vpack.c.bf16 %v568, %v567
      %v642 = vpack.c.bf16 %v570, %v569
      %v643 = vpack.c.bf16 %v572, %v571
      %v644 = vpack.c.bf16 %v574, %v573
      %v645 = vpack.c.bf16 %v576, %v575
      %v646 = vpack.c.bf16 %v578, %v577
      %v647 = vpack.c.bf16 %v580, %v579
      %v648 = vpack.c.bf16 %v582, %v581
      %v649 = vld [vmem:[%s246 + $0x421] sm:$0xff]
      %v650 = vld [vmem:[%s246 + $0x429] sm:$0xff]
      %v651 = vld [vmem:[%s246 + $0x431] sm:$0xff]
      %v652 = vld [vmem:[%s246 + $0x439] sm:$0xff]
      %v653 = vpack.c.bf16 %v650, %v649
      %v654 = vpack.c.bf16 %v652, %v651
      %v655 = vld [vmem:[%s246 + $0x22] sm:$0xff]
      %v656 = vld [vmem:[%s246 + $0x2a] sm:$0xff]
      %v657 = vld [vmem:[%s246 + $0x32] sm:$0xff]
      %v658 = vld [vmem:[%s246 + $0x3a] sm:$0xff]
      %v659 = vld [vmem:[%s246 + $0x42] sm:$0xff]
      %v660 = vld [vmem:[%s246 + $0x4a] sm:$0xff]
      %v661 = vld [vmem:[%s246 + $0x52] sm:$0xff]
      %v662 = vld [vmem:[%s246 + $0x5a] sm:$0xff]
      %v663 = vld [vmem:[%s246 + $0x62] sm:$0xff]
      %v664 = vld [vmem:[%s246 + $0x6a] sm:$0xff]
      %v665 = vld [vmem:[%s246 + $0x72] sm:$0xff]
      %v666 = vld [vmem:[%s246 + $0x7a] sm:$0xff]
      %v667 = vld [vmem:[%s246 + $0x82] sm:$0xff]
      %v668 = vld [vmem:[%s246 + $0x8a] sm:$0xff]
      %v669 = vld [vmem:[%s246 + $0x92] sm:$0xff]
      %v670 = vld [vmem:[%s246 + $0x9a] sm:$0xff]
      %v671 = vld [vmem:[%s246 + $0xa2] sm:$0xff]
      %v672 = vld [vmem:[%s246 + $0xaa] sm:$0xff]
      %v673 = vld [vmem:[%s246 + $0xb2] sm:$0xff]
      %v674 = vld [vmem:[%s246 + $0xba] sm:$0xff]
      %v675 = vld [vmem:[%s246 + $0xc2] sm:$0xff]
      %v676 = vld [vmem:[%s246 + $0xca] sm:$0xff]
      %v677 = vld [vmem:[%s246 + $0xd2] sm:$0xff]
      %v678 = vld [vmem:[%s246 + $0xda] sm:$0xff]
      %v679 = vld [vmem:[%s246 + $0xe2] sm:$0xff]
      %v680 = vld [vmem:[%s246 + $0xea] sm:$0xff]
      %v681 = vld [vmem:[%s246 + $0xf2] sm:$0xff]
      %v682 = vld [vmem:[%s246 + $0xfa] sm:$0xff]
      %v683 = vld [vmem:[%s246 + $0x102] sm:$0xff]
      %v684 = vld [vmem:[%s246 + $0x10a] sm:$0xff]
      %v685 = vld [vmem:[%s246 + $0x112] sm:$0xff]
      %v686 = vld [vmem:[%s246 + $0x11a] sm:$0xff]
      %v687 = vld [vmem:[%s246 + $0x122] sm:$0xff]
      %v688 = vld [vmem:[%s246 + $0x12a] sm:$0xff]
      %v689 = vld [vmem:[%s246 + $0x132] sm:$0xff]
      %v690 = vld [vmem:[%s246 + $0x13a] sm:$0xff]
      %v691 = vld [vmem:[%s246 + $0x142] sm:$0xff]
      %v692 = vld [vmem:[%s246 + $0x14a] sm:$0xff]
      %v693 = vld [vmem:[%s246 + $0x152] sm:$0xff]
      %v694 = vld [vmem:[%s246 + $0x15a] sm:$0xff]
      %v695 = vld [vmem:[%s246 + $0x162] sm:$0xff]
      %v696 = vld [vmem:[%s246 + $0x16a] sm:$0xff]
      %v697 = vld [vmem:[%s246 + $0x172] sm:$0xff]
      %v698 = vld [vmem:[%s246 + $0x17a] sm:$0xff]
      %v699 = vld [vmem:[%s246 + $0x182] sm:$0xff]
      %v700 = vld [vmem:[%s246 + $0x18a] sm:$0xff]
      %v701 = vld [vmem:[%s246 + $0x192] sm:$0xff]
      %v702 = vld [vmem:[%s246 + $0x19a] sm:$0xff]
      %v703 = vld [vmem:[%s246 + $0x1a2] sm:$0xff]
      %v704 = vld [vmem:[%s246 + $0x1aa] sm:$0xff]
      %v705 = vld [vmem:[%s246 + $0x1b2] sm:$0xff]
      %v706 = vld [vmem:[%s246 + $0x1ba] sm:$0xff]
      %v707 = vld [vmem:[%s246 + $0x1c2] sm:$0xff]
      %v708 = vld [vmem:[%s246 + $0x1ca] sm:$0xff]
      %v709 = vld [vmem:[%s246 + $0x1d2] sm:$0xff]
      %v710 = vld [vmem:[%s246 + $0x1da] sm:$0xff]
      %v711 = vld [vmem:[%s246 + $0x1e2] sm:$0xff]
      %v712 = vld [vmem:[%s246 + $0x1ea] sm:$0xff]
      %v713 = vld [vmem:[%s246 + $0x1f2] sm:$0xff]
      %v714 = vld [vmem:[%s246 + $0x1fa] sm:$0xff]
      %v715 = vld [vmem:[%s246 + $0x202] sm:$0xff]
      %v716 = vld [vmem:[%s246 + $0x20a] sm:$0xff]
      %v717 = vld [vmem:[%s246 + $0x212] sm:$0xff]
      %v718 = vld [vmem:[%s246 + $0x21a] sm:$0xff]
      %v719 = vld [vmem:[%s246 + $0x222] sm:$0xff]
      %v720 = vld [vmem:[%s246 + $0x22a] sm:$0xff]
      %v721 = vld [vmem:[%s246 + $0x232] sm:$0xff]
      %v722 = vld [vmem:[%s246 + $0x23a] sm:$0xff]
      %v723 = vld [vmem:[%s246 + $0x242] sm:$0xff]
      %v724 = vld [vmem:[%s246 + $0x24a] sm:$0xff]
      %v725 = vld [vmem:[%s246 + $0x252] sm:$0xff]
      %v726 = vld [vmem:[%s246 + $0x25a] sm:$0xff]
      %v727 = vld [vmem:[%s246 + $0x262] sm:$0xff]
      %v728 = vld [vmem:[%s246 + $0x26a] sm:$0xff]
      %v729 = vld [vmem:[%s246 + $0x272] sm:$0xff]
      %v730 = vld [vmem:[%s246 + $0x27a] sm:$0xff]
      %v731 = vld [vmem:[%s246 + $0x282] sm:$0xff]
      %v732 = vld [vmem:[%s246 + $0x28a] sm:$0xff]
      %v733 = vld [vmem:[%s246 + $0x292] sm:$0xff]
      %v734 = vld [vmem:[%s246 + $0x29a] sm:$0xff]
      %v735 = vld [vmem:[%s246 + $0x2a2] sm:$0xff]
      %v736 = vld [vmem:[%s246 + $0x2aa] sm:$0xff]
      %v737 = vld [vmem:[%s246 + $0x2b2] sm:$0xff]
      %v738 = vld [vmem:[%s246 + $0x2ba] sm:$0xff]
      %v739 = vld [vmem:[%s246 + $0x2c2] sm:$0xff]
      %v740 = vld [vmem:[%s246 + $0x2ca] sm:$0xff]
      %v741 = vld [vmem:[%s246 + $0x2d2] sm:$0xff]
      %v742 = vld [vmem:[%s246 + $0x2da] sm:$0xff]
      %v743 = vld [vmem:[%s246 + $0x2e2] sm:$0xff]
      %v744 = vld [vmem:[%s246 + $0x2ea] sm:$0xff]
      %v745 = vld [vmem:[%s246 + $0x2f2] sm:$0xff]
      %v746 = vld [vmem:[%s246 + $0x2fa] sm:$0xff]
      %v747 = vld [vmem:[%s246 + $0x302] sm:$0xff]
      %v748 = vld [vmem:[%s246 + $0x30a] sm:$0xff]
      %v749 = vld [vmem:[%s246 + $0x312] sm:$0xff]
      %v750 = vld [vmem:[%s246 + $0x31a] sm:$0xff]
      %v751 = vld [vmem:[%s246 + $0x322] sm:$0xff]
      %v752 = vld [vmem:[%s246 + $0x32a] sm:$0xff]
      %v753 = vld [vmem:[%s246 + $0x332] sm:$0xff]
      %v754 = vld [vmem:[%s246 + $0x33a] sm:$0xff]
      %v755 = vld [vmem:[%s246 + $0x342] sm:$0xff]
      %v756 = vld [vmem:[%s246 + $0x34a] sm:$0xff]
      %v757 = vld [vmem:[%s246 + $0x352] sm:$0xff]
      %v758 = vld [vmem:[%s246 + $0x35a] sm:$0xff]
      %v759 = vld [vmem:[%s246 + $0x362] sm:$0xff]
      %v760 = vld [vmem:[%s246 + $0x36a] sm:$0xff]
      %v761 = vld [vmem:[%s246 + $0x372] sm:$0xff]
      %v762 = vld [vmem:[%s246 + $0x37a] sm:$0xff]
      %v763 = vld [vmem:[%s246 + $0x382] sm:$0xff]
      %v764 = vld [vmem:[%s246 + $0x38a] sm:$0xff]
      %v765 = vld [vmem:[%s246 + $0x392] sm:$0xff]
      %v766 = vld [vmem:[%s246 + $0x39a] sm:$0xff]
      %v767 = vld [vmem:[%s246 + $0x3a2] sm:$0xff]
      %v768 = vld [vmem:[%s246 + $0x3aa] sm:$0xff]
      %v769 = vld [vmem:[%s246 + $0x3b2] sm:$0xff]
      %v770 = vld [vmem:[%s246 + $0x3ba] sm:$0xff]
      %v771 = vld [vmem:[%s246 + $0x3c2] sm:$0xff]
      %v772 = vld [vmem:[%s246 + $0x3ca] sm:$0xff]
      %v773 = vld [vmem:[%s246 + $0x3d2] sm:$0xff]
      %v774 = vld [vmem:[%s246 + $0x3da] sm:$0xff]
      %v775 = vld [vmem:[%s246 + $0x3e2] sm:$0xff]
      %v776 = vld [vmem:[%s246 + $0x3ea] sm:$0xff]
      %v777 = vld [vmem:[%s246 + $0x3f2] sm:$0xff]
      %v778 = vld [vmem:[%s246 + $0x3fa] sm:$0xff]
      %v779 = vld [vmem:[%s246 + $0x402] sm:$0xff]
      %v780 = vld [vmem:[%s246 + $0x40a] sm:$0xff]
      %v781 = vld [vmem:[%s246 + $0x412] sm:$0xff]
      %v782 = vld [vmem:[%s246 + $0x41a] sm:$0xff]
      %v783 = vld [vmem:[%s246 + $0x422] sm:$0xff]
      %v784 = vld [vmem:[%s246 + $0x42a] sm:$0xff]
      %v785 = vld [vmem:[%s246 + $0x432] sm:$0xff]
      %v786 = vld [vmem:[%s246 + $0x43a] sm:$0xff]
      %v787 = vpack.c.bf16 %v656, %v655
      %v788 = vpack.c.bf16 %v658, %v657
      %v789 = vpack.c.bf16 %v660, %v659
      %v790 = vpack.c.bf16 %v662, %v661
      %v791 = vpack.c.bf16 %v664, %v663
      %v792 = vpack.c.bf16 %v666, %v665
      %v793 = vpack.c.bf16 %v668, %v667
      %v794 = vpack.c.bf16 %v670, %v669
      %v795 = vpack.c.bf16 %v672, %v671
      %v796 = vpack.c.bf16 %v674, %v673
      %v797 = vpack.c.bf16 %v676, %v675
      %v798 = vpack.c.bf16 %v678, %v677
      %v799 = vpack.c.bf16 %v680, %v679
      %v800 = vpack.c.bf16 %v682, %v681
      %v801 = vpack.c.bf16 %v684, %v683
      %v802 = vpack.c.bf16 %v686, %v685
      %v803 = vpack.c.bf16 %v688, %v687
      %v804 = vpack.c.bf16 %v690, %v689
      %v805 = vpack.c.bf16 %v692, %v691
      %v806 = vpack.c.bf16 %v694, %v693
      %v807 = vpack.c.bf16 %v696, %v695
      %v808 = vpack.c.bf16 %v698, %v697
      %v809 = vpack.c.bf16 %v700, %v699
      %v810 = vpack.c.bf16 %v702, %v701
      %v811 = vpack.c.bf16 %v704, %v703
      %v812 = vpack.c.bf16 %v706, %v705
      %v813 = vpack.c.bf16 %v708, %v707
      %v814 = vpack.c.bf16 %v710, %v709
      %v815 = vpack.c.bf16 %v712, %v711
      %v816 = vpack.c.bf16 %v714, %v713
      %v817 = vpack.c.bf16 %v716, %v715
      %v818 = vpack.c.bf16 %v718, %v717
      %v819 = vpack.c.bf16 %v720, %v719
      %v820 = vpack.c.bf16 %v722, %v721
      %v821 = vpack.c.bf16 %v724, %v723
      %v822 = vpack.c.bf16 %v726, %v725
      %v823 = vpack.c.bf16 %v728, %v727
      %v824 = vpack.c.bf16 %v730, %v729
      %v825 = vpack.c.bf16 %v732, %v731
      %v826 = vpack.c.bf16 %v734, %v733
      %v827 = vpack.c.bf16 %v736, %v735
      %v828 = vpack.c.bf16 %v738, %v737
      %v829 = vpack.c.bf16 %v740, %v739
      %v830 = vpack.c.bf16 %v742, %v741
      %v831 = vpack.c.bf16 %v744, %v743
      %v832 = vpack.c.bf16 %v746, %v745
      %v833 = vpack.c.bf16 %v748, %v747
      %v834 = vpack.c.bf16 %v750, %v749
      %v835 = vpack.c.bf16 %v752, %v751
      %v836 = vpack.c.bf16 %v754, %v753
      %v837 = vpack.c.bf16 %v756, %v755
      %v838 = vpack.c.bf16 %v758, %v757
      %v839 = vpack.c.bf16 %v760, %v759
      %v840 = vpack.c.bf16 %v762, %v761
      %v841 = vpack.c.bf16 %v764, %v763
      %v842 = vpack.c.bf16 %v766, %v765
      %v843 = vpack.c.bf16 %v768, %v767
      %v844 = vpack.c.bf16 %v770, %v769
      %v845 = vpack.c.bf16 %v772, %v771
      %v846 = vpack.c.bf16 %v774, %v773
      %v847 = vpack.c.bf16 %v776, %v775
      %v848 = vpack.c.bf16 %v778, %v777
      %v849 = vpack.c.bf16 %v780, %v779
      %v850 = vpack.c.bf16 %v782, %v781
      %v851 = vpack.c.bf16 %v784, %v783
      %v852 = vpack.c.bf16 %v786, %v785
      %v853 = vld [vmem:[%s1] sm:$0xf]
      %v854 = vld [vmem:[%s1 + $0x4] sm:$0xf]
      %v855 = vld [vmem:[%s1 + $0x8] sm:$0xf]
      %v856 = vld [vmem:[%s1 + $0xc] sm:$0xf]
      %v857 = vld [vmem:[%s2] sm:$0xf]
      %v858 = vld [vmem:[%s2 + $0x4] sm:$0xf]
      %v859 = vld [vmem:[%s2 + $0x8] sm:$0xf]
      %v860 = vld [vmem:[%s2 + $0xc] sm:$0xf]
      %v865 = vunpack.c.l.b16 %v857
      %v866 = vunpack.c.l.b16 %v858
      %v867 = vunpack.c.l.b16 %v859
      %v868 = vunpack.c.l.b16 %v860
      %v869 = vpack.c.b16 %v866, %v865
      %v870 = vpack.c.b16 %v868, %v867
      %vm873 = vcmask 261120
      %v875 = vsel %vm873, %v583, 0
      %v878 = vsel %vm873, %v584, 0
      %v881 = vsel %vm873, %v585, 0
      %v884 = vsel %vm873, %v586, 0
      %v887 = vsel %vm873, %v587, 0
      %v890 = vsel %vm873, %v588, 0
      %v893 = vsel %vm873, %v589, 0
      %v896 = vsel %vm873, %v590, 0
      %v899 = vsel %vm873, %v591, 0
      %v902 = vsel %vm873, %v592, 0
      %v905 = vsel %vm873, %v593, 0
      %v908 = vsel %vm873, %v594, 0
      %v911 = vsel %vm873, %v595, 0
      %v914 = vsel %vm873, %v596, 0
      %v917 = vsel %vm873, %v597, 0
      %v920 = vsel %vm873, %v598, 0
      %v923 = vsel %vm873, %v599, 0
      %v926 = vsel %vm873, %v600, 0
      %v929 = vsel %vm873, %v601, 0
      %v932 = vsel %vm873, %v602, 0
      %v935 = vsel %vm873, %v603, 0
      %v938 = vsel %vm873, %v604, 0
      %v941 = vsel %vm873, %v605, 0
      %v944 = vsel %vm873, %v606, 0
      %v947 = vsel %vm873, %v607, 0
      %v950 = vsel %vm873, %v608, 0
      %v953 = vsel %vm873, %v609, 0
      %v956 = vsel %vm873, %v610, 0
      %v959 = vsel %vm873, %v611, 0
      %v962 = vsel %vm873, %v612, 0
      %v965 = vsel %vm873, %v613, 0
      %v968 = vsel %vm873, %v614, 0
      %v971 = vsel %vm873, %v615, 0
      %v974 = vsel %vm873, %v616, 0
      %v977 = vsel %vm873, %v617, 0
      %v980 = vsel %vm873, %v618, 0
      %v983 = vsel %vm873, %v619, 0
      %v986 = vsel %vm873, %v620, 0
      %v989 = vsel %vm873, %v621, 0
      %v992 = vsel %vm873, %v622, 0
      %v995 = vsel %vm873, %v623, 0
      %v998 = vsel %vm873, %v624, 0
      %v1001 = vsel %vm873, %v625, 0
      %v1004 = vsel %vm873, %v626, 0
      %v1007 = vsel %vm873, %v627, 0
      %v1010 = vsel %vm873, %v628, 0
      %v1013 = vsel %vm873, %v629, 0
      %v1016 = vsel %vm873, %v630, 0
      %v1019 = vsel %vm873, %v631, 0
      %v1022 = vsel %vm873, %v632, 0
      %v1025 = vsel %vm873, %v633, 0
      %v1028 = vsel %vm873, %v634, 0
      %v1031 = vsel %vm873, %v635, 0
      %v1034 = vsel %vm873, %v636, 0
      %v1037 = vsel %vm873, %v637, 0
      %v1040 = vsel %vm873, %v638, 0
      %v1043 = vsel %vm873, %v639, 0
      %v1046 = vsel %vm873, %v640, 0
      %v1049 = vsel %vm873, %v641, 0
      %v1052 = vsel %vm873, %v642, 0
      %v1055 = vsel %vm873, %v643, 0
      %v1058 = vsel %vm873, %v644, 0
      %v1061 = vsel %vm873, %v645, 0
      %v1064 = vsel %vm873, %v646, 0
      %v1067 = vsel %vm873, %v647, 0
      %v1070 = vsel %vm873, %v648, 0
      %1072 = vmatprep.subr.bf16.mxu0 0
      %1073 = vmatpush1.bf16.msra.mxu0 %v869
      %1074 = vmatprep.subr.bf16.mxu0 0
      %1075 = vmatpush1.bf16.msra.mxu0 %v870
      %1076 = vmatprep.subr.bf16.mxu0 0
      %1077 = vmatpush1.bf16.msra.mxu0 0
      %1078 = vmatprep.subr.bf16.mxu0 0
      %1079 = vmatpush1.bf16.msra.mxu0 0
      %1080 = vmatprep.subr.bf16.mxu0 0
      %1081 = vmatpush1.bf16.msra.mxu0 0
      %1082 = vmatprep.subr.bf16.mxu0 0
      %1083 = vmatpush1.bf16.msra.mxu0 0
      %1084 = vmatprep.subr.bf16.mxu0 0
      %1085 = vmatpush1.bf16.msra.mxu0 0
      %1086 = vmatprep.subr.bf16.mxu0 0
      %1087 = vmatpush1.bf16.msra.mxu0 0
      %1088 = vmatprep.subr.bf16.mxu0 0
      %1089 = vmatpush1.bf16.msra.mxu0 0
      %1090 = vmatprep.subr.bf16.mxu0 0
      %1091 = vmatpush1.bf16.msra.mxu0 0
      %1092 = vmatprep.subr.bf16.mxu0 0
      %1093 = vmatpush1.bf16.msra.mxu0 0
      %1094 = vmatprep.subr.bf16.mxu0 0
      %1095 = vmatpush1.bf16.msra.mxu0 0
      %1096 = vmatprep.subr.bf16.mxu0 0
      %1097 = vmatpush1.bf16.msra.mxu0 0
      %1098 = vmatprep.subr.bf16.mxu0 0
      %1099 = vmatpush1.bf16.msra.mxu0 0
      %1100 = vmatprep.subr.bf16.mxu0 0
      %1101 = vmatpush1.bf16.msra.mxu0 0
      %1102 = vmatprep.subr.bf16.mxu0 0
      %1103 = vmatpush1.bf16.msra.mxu0 0
      %1104 = vmatprep.mubr.bf16.mxu0 0
      %1105 = vmatmul.mubr.bf16.gmra.mrb[0].mxu0 %v875
      %v1106 = vpop.f32.mrb[0].mxu0
      %v1107 = vadd.f32 0.0, %v1106
      %v1108 = vpop.f32.mrb[0].mxu0
      %v1109 = vpop.f32.mrb[0].mxu0
      %v1110 = vadd.f32 0.0, %v1109
      %v1111 = vpop.f32.mrb[0].mxu0
      %1112 = vmatprep.mubr.bf16.mxu0 0
      %1113 = vmatmul.mubr.bf16.gmra.mrb[0].mxu0 %v878
      %v1114 = vpop.f32.mrb[0].mxu0
      %v1115 = vadd.f32 0.0, %v1114
      %v1116 = vpop.f32.mrb[0].mxu0
      %v1117 = vpop.f32.mrb[0].mxu0
      %v1118 = vadd.f32 0.0, %v1117
      %v1119 = vpop.f32.mrb[0].mxu0
      %1120 = vmatprep.mubr.bf16.mxu0 0
      %1121 = vmatmul.mubr.bf16.gmra.mrb[0].mxu0 %v881
      %v1122 = vpop.f32.mrb[0].mxu0
      %v1123 = vadd.f32 0.0, %v1122
      %v1124 = vpop.f32.mrb[0].mxu0
      %v1125 = vpop.f32.mrb[0].mxu0
      %v1126 = vadd.f32 0.0, %v1125
      %v1127 = vpop.f32.mrb[0].mxu0
      %1128 = vmatprep.mubr.bf16.mxu0 0
      %1129 = vmatmul.mubr.bf16.gmra.mrb[0].mxu0 %v884
      %v1130 = vpop.f32.mrb[0].mxu0
      %v1131 = vadd.f32 0.0, %v1130
      %v1132 = vpop.f32.mrb[0].mxu0
      %v1133 = vpop.f32.mrb[0].mxu0
      %v1134 = vadd.f32 0.0, %v1133
      %v1135 = vpop.f32.mrb[0].mxu0
      %1136 = vmatprep.mubr.bf16.mxu0 0
      %1137 = vmatmul.mubr.bf16.gmra.mrb[0].mxu0 %v887
      %v1138 = vpop.f32.mrb[0].mxu0
      %v1139 = vadd.f32 0.0, %v1138
      %v1140 = vpop.f32.mrb[0].mxu0
      %v1141 = vpop.f32.mrb[0].mxu0
      %v1142 = vadd.f32 0.0, %v1141
      %v1143 = vpop.f32.mrb[0].mxu0
      %1144 = vmatprep.mubr.bf16.mxu0 0
      %1145 = vmatmul.mubr.bf16.gmra.mrb[0].mxu0 %v890
      %v1146 = vpop.f32.mrb[0].mxu0
      %v1147 = vadd.f32 0.0, %v1146
      %v1148 = vpop.f32.mrb[0].mxu0
      %v1149 = vpop.f32.mrb[0].mxu0
      %v1150 = vadd.f32 0.0, %v1149
      %v1151 = vpop.f32.mrb[0].mxu0
      %1152 = vmatprep.mubr.bf16.mxu0 0
      %1153 = vmatmul.mubr.bf16.gmra.mrb[0].mxu0 %v893
      %v1154 = vpop.f32.mrb[0].mxu0
      %v1155 = vadd.f32 0.0, %v1154
      %v1156 = vpop.f32.mrb[0].mxu0
      %v1157 = vpop.f32.mrb[0].mxu0
      %v1158 = vadd.f32 0.0, %v1157
      %v1159 = vpop.f32.mrb[0].mxu0
      %1160 = vmatprep.mubr.bf16.mxu0 0
      %1161 = vmatmul.mubr.bf16.gmra.mrb[0].mxu0 %v896
      %v1162 = vpop.f32.mrb[0].mxu0
      %v1163 = vadd.f32 0.0, %v1162
      %v1164 = vpop.f32.mrb[0].mxu0
      %v1165 = vpop.f32.mrb[0].mxu0
      %v1166 = vadd.f32 0.0, %v1165
      %v1167 = vpop.f32.mrb[0].mxu0
      %1168 = vmatprep.mubr.bf16.mxu0 0
      %1169 = vmatmul.mubr.bf16.gmra.mrb[0].mxu0 %v899
      %v1170 = vpop.f32.mrb[0].mxu0
      %v1171 = vadd.f32 0.0, %v1170
      %v1172 = vpop.f32.mrb[0].mxu0
      %v1173 = vpop.f32.mrb[0].mxu0
      %v1174 = vadd.f32 0.0, %v1173
      %v1175 = vpop.f32.mrb[0].mxu0
      %1176 = vmatprep.mubr.bf16.mxu0 0
      %1177 = vmatmul.mubr.bf16.gmra.mrb[0].mxu0 %v902
      %v1178 = vpop.f32.mrb[0].mxu0
      %v1179 = vadd.f32 0.0, %v1178
      %v1180 = vpop.f32.mrb[0].mxu0
      %v1181 = vpop.f32.mrb[0].mxu0
      %v1182 = vadd.f32 0.0, %v1181
      %v1183 = vpop.f32.mrb[0].mxu0
      %1184 = vmatprep.mubr.bf16.mxu0 0
      %1185 = vmatmul.mubr.bf16.gmra.mrb[0].mxu0 %v905
      %v1186 = vpop.f32.mrb[0].mxu0
      %v1187 = vadd.f32 0.0, %v1186
      %v1188 = vpop.f32.mrb[0].mxu0
      %v1189 = vpop.f32.mrb[0].mxu0
      %v1190 = vadd.f32 0.0, %v1189
      %v1191 = vpop.f32.mrb[0].mxu0
      %1192 = vmatprep.mubr.bf16.mxu0 0
      %1193 = vmatmul.mubr.bf16.gmra.mrb[0].mxu0 %v908
      %v1194 = vpop.f32.mrb[0].mxu0
      %v1195 = vadd.f32 0.0, %v1194
      %v1196 = vpop.f32.mrb[0].mxu0
      %v1197 = vpop.f32.mrb[0].mxu0
      %v1198 = vadd.f32 0.0, %v1197
      %v1199 = vpop.f32.mrb[0].mxu0
      %1200 = vmatprep.mubr.bf16.mxu0 0
      %1201 = vmatmul.mubr.bf16.gmra.mrb[0].mxu0 %v911
      %v1202 = vpop.f32.mrb[0].mxu0
      %v1203 = vadd.f32 0.0, %v1202
      %v1204 = vpop.f32.mrb[0].mxu0
      %v1205 = vpop.f32.mrb[0].mxu0
      %v1206 = vadd.f32 0.0, %v1205
      %v1207 = vpop.f32.mrb[0].mxu0
      %1208 = vmatprep.mubr.bf16.mxu0 0
      %1209 = vmatmul.mubr.bf16.gmra.mrb[0].mxu0 %v914
      %v1210 = vpop.f32.mrb[0].mxu0
      %v1211 = vadd.f32 0.0, %v1210
      %v1212 = vpop.f32.mrb[0].mxu0
      %v1213 = vpop.f32.mrb[0].mxu0
      %v1214 = vadd.f32 0.0, %v1213
      %v1215 = vpop.f32.mrb[0].mxu0
      %1216 = vmatprep.mubr.bf16.mxu0 0
      %1217 = vmatmul.mubr.bf16.gmra.mrb[0].mxu0 %v917
      %v1218 = vpop.f32.mrb[0].mxu0
      %v1219 = vadd.f32 0.0, %v1218
      %v1220 = vpop.f32.mrb[0].mxu0
      %v1221 = vpop.f32.mrb[0].mxu0
      %v1222 = vadd.f32 0.0, %v1221
      %v1223 = vpop.f32.mrb[0].mxu0
      %1224 = vmatprep.mubr.bf16.mxu0 0
      %1225 = vmatmul.mubr.bf16.gmra.mrb[0].mxu0 %v920
      %v1226 = vpop.f32.mrb[0].mxu0
      %v1227 = vadd.f32 0.0, %v1226
      %v1228 = vpop.f32.mrb[0].mxu0
      %v1229 = vpop.f32.mrb[0].mxu0
      %v1230 = vadd.f32 0.0, %v1229
      %v1231 = vpop.f32.mrb[0].mxu0
      %1232 = vmatprep.mubr.bf16.mxu0 0
      %1233 = vmatmul.mubr.bf16.gmra.mrb[0].mxu0 %v923
      %v1234 = vpop.f32.mrb[0].mxu0
      %v1235 = vadd.f32 0.0, %v1234
      %v1236 = vpop.f32.mrb[0].mxu0
      %v1237 = vpop.f32.mrb[0].mxu0
      %v1238 = vadd.f32 0.0, %v1237
      %v1239 = vpop.f32.mrb[0].mxu0
      %1240 = vmatprep.mubr.bf16.mxu0 0
      %1241 = vmatmul.mubr.bf16.gmra.mrb[0].mxu0 %v926
      %v1242 = vpop.f32.mrb[0].mxu0
      %v1243 = vadd.f32 0.0, %v1242
      %v1244 = vpop.f32.mrb[0].mxu0
      %v1245 = vpop.f32.mrb[0].mxu0
      %v1246 = vadd.f32 0.0, %v1245
      %v1247 = vpop.f32.mrb[0].mxu0
      %1248 = vmatprep.mubr.bf16.mxu0 0
      %1249 = vmatmul.mubr.bf16.gmra.mrb[0].mxu0 %v929
      %v1250 = vpop.f32.mrb[0].mxu0
      %v1251 = vadd.f32 0.0, %v1250
      %v1252 = vpop.f32.mrb[0].mxu0
      %v1253 = vpop.f32.mrb[0].mxu0
      %v1254 = vadd.f32 0.0, %v1253
      %v1255 = vpop.f32.mrb[0].mxu0
      %1256 = vmatprep.mubr.bf16.mxu0 0
      %1257 = vmatmul.mubr.bf16.gmra.mrb[0].mxu0 %v932
      %v1258 = vpop.f32.mrb[0].mxu0
      %v1259 = vadd.f32 0.0, %v1258
      %v1260 = vpop.f32.mrb[0].mxu0
      %v1261 = vpop.f32.mrb[0].mxu0
      %v1262 = vadd.f32 0.0, %v1261
      %v1263 = vpop.f32.mrb[0].mxu0
      %1264 = vmatprep.mubr.bf16.mxu0 0
      %1265 = vmatmul.mubr.bf16.gmra.mrb[0].mxu0 %v935
      %v1266 = vpop.f32.mrb[0].mxu0
      %v1267 = vadd.f32 0.0, %v1266
      %v1268 = vpop.f32.mrb[0].mxu0
      %v1269 = vpop.f32.mrb[0].mxu0
      %v1270 = vadd.f32 0.0, %v1269
      %v1271 = vpop.f32.mrb[0].mxu0
      %1272 = vmatprep.mubr.bf16.mxu0 0
      %1273 = vmatmul.mubr.bf16.gmra.mrb[0].mxu0 %v938
      %v1274 = vpop.f32.mrb[0].mxu0
      %v1275 = vadd.f32 0.0, %v1274
      %v1276 = vpop.f32.mrb[0].mxu0
      %v1277 = vpop.f32.mrb[0].mxu0
      %v1278 = vadd.f32 0.0, %v1277
      %v1279 = vpop.f32.mrb[0].mxu0
      %1280 = vmatprep.mubr.bf16.mxu0 0
      %1281 = vmatmul.mubr.bf16.gmra.mrb[0].mxu0 %v941
      %v1282 = vpop.f32.mrb[0].mxu0
      %v1283 = vadd.f32 0.0, %v1282
      %v1284 = vpop.f32.mrb[0].mxu0
      %v1285 = vpop.f32.mrb[0].mxu0
      %v1286 = vadd.f32 0.0, %v1285
      %v1287 = vpop.f32.mrb[0].mxu0
      %1288 = vmatprep.mubr.bf16.mxu0 0
      %1289 = vmatmul.mubr.bf16.gmra.mrb[0].mxu0 %v944
      %v1290 = vpop.f32.mrb[0].mxu0
      %v1291 = vadd.f32 0.0, %v1290
      %v1292 = vpop.f32.mrb[0].mxu0
      %v1293 = vpop.f32.mrb[0].mxu0
      %v1294 = vadd.f32 0.0, %v1293
      %v1295 = vpop.f32.mrb[0].mxu0
      %1296 = vmatprep.mubr.bf16.mxu0 0
      %1297 = vmatmul.mubr.bf16.gmra.mrb[0].mxu0 %v947
      %v1298 = vpop.f32.mrb[0].mxu0
      %v1299 = vadd.f32 0.0, %v1298
      %v1300 = vpop.f32.mrb[0].mxu0
      %v1301 = vpop.f32.mrb[0].mxu0
      %v1302 = vadd.f32 0.0, %v1301
      %v1303 = vpop.f32.mrb[0].mxu0
      %1304 = vmatprep.mubr.bf16.mxu0 0
      %1305 = vmatmul.mubr.bf16.gmra.mrb[0].mxu0 %v950
      %v1306 = vpop.f32.mrb[0].mxu0
      %v1307 = vadd.f32 0.0, %v1306
      %v1308 = vpop.f32.mrb[0].mxu0
      %v1309 = vpop.f32.mrb[0].mxu0
      %v1310 = vadd.f32 0.0, %v1309
      %v1311 = vpop.f32.mrb[0].mxu0
      %1312 = vmatprep.mubr.bf16.mxu0 0
      %1313 = vmatmul.mubr.bf16.gmra.mrb[0].mxu0 %v953
      %v1314 = vpop.f32.mrb[0].mxu0
      %v1315 = vadd.f32 0.0, %v1314
      %v1316 = vpop.f32.mrb[0].mxu0
      %v1317 = vpop.f32.mrb[0].mxu0
      %v1318 = vadd.f32 0.0, %v1317
      %v1319 = vpop.f32.mrb[0].mxu0
      %1320 = vmatprep.mubr.bf16.mxu0 0
      %1321 = vmatmul.mubr.bf16.gmra.mrb[0].mxu0 %v956
      %v1322 = vpop.f32.mrb[0].mxu0
      %v1323 = vadd.f32 0.0, %v1322
      %v1324 = vpop.f32.mrb[0].mxu0
      %v1325 = vpop.f32.mrb[0].mxu0
      %v1326 = vadd.f32 0.0, %v1325
      %v1327 = vpop.f32.mrb[0].mxu0
      %1328 = vmatprep.mubr.bf16.mxu0 0
      %1329 = vmatmul.mubr.bf16.gmra.mrb[0].mxu0 %v959
      %v1330 = vpop.f32.mrb[0].mxu0
      %v1331 = vadd.f32 0.0, %v1330
      %v1332 = vpop.f32.mrb[0].mxu0
      %v1333 = vpop.f32.mrb[0].mxu0
      %v1334 = vadd.f32 0.0, %v1333
      %v1335 = vpop.f32.mrb[0].mxu0
      %1336 = vmatprep.mubr.bf16.mxu0 0
      %1337 = vmatmul.mubr.bf16.gmra.mrb[0].mxu0 %v962
      %v1338 = vpop.f32.mrb[0].mxu0
      %v1339 = vadd.f32 0.0, %v1338
      %v1340 = vpop.f32.mrb[0].mxu0
      %v1341 = vpop.f32.mrb[0].mxu0
      %v1342 = vadd.f32 0.0, %v1341
      %v1343 = vpop.f32.mrb[0].mxu0
      %1344 = vmatprep.mubr.bf16.mxu0 0
      %1345 = vmatmul.mubr.bf16.gmra.mrb[0].mxu0 %v965
      %v1346 = vpop.f32.mrb[0].mxu0
      %v1347 = vadd.f32 0.0, %v1346
      %v1348 = vpop.f32.mrb[0].mxu0
      %v1349 = vpop.f32.mrb[0].mxu0
      %v1350 = vadd.f32 0.0, %v1349
      %v1351 = vpop.f32.mrb[0].mxu0
      %1352 = vmatprep.mubr.bf16.mxu0 0
      %1353 = vmatmul.mubr.bf16.gmra.mrb[0].mxu0 %v968
      %v1354 = vpop.f32.mrb[0].mxu0
      %v1355 = vadd.f32 0.0, %v1354
      %v1356 = vpop.f32.mrb[0].mxu0
      %v1357 = vpop.f32.mrb[0].mxu0
      %v1358 = vadd.f32 0.0, %v1357
      %v1359 = vpop.f32.mrb[0].mxu0
      %1360 = vmatprep.mubr.bf16.mxu0 0
      %1361 = vmatmul.mubr.bf16.gmra.mrb[0].mxu0 %v971
      %v1362 = vpop.f32.mrb[0].mxu0
      %v1363 = vadd.f32 0.0, %v1362
      %v1364 = vpop.f32.mrb[0].mxu0
      %v1365 = vpop.f32.mrb[0].mxu0
      %v1366 = vadd.f32 0.0, %v1365
      %v1367 = vpop.f32.mrb[0].mxu0
      %1368 = vmatprep.mubr.bf16.mxu0 0
      %1369 = vmatmul.mubr.bf16.gmra.mrb[0].mxu0 %v974
      %v1370 = vpop.f32.mrb[0].mxu0
      %v1371 = vadd.f32 0.0, %v1370
      %v1372 = vpop.f32.mrb[0].mxu0
      %v1373 = vpop.f32.mrb[0].mxu0
      %v1374 = vadd.f32 0.0, %v1373
      %v1375 = vpop.f32.mrb[0].mxu0
      %1376 = vmatprep.mubr.bf16.mxu0 0
      %1377 = vmatmul.mubr.bf16.gmra.mrb[0].mxu0 %v977
      %v1378 = vpop.f32.mrb[0].mxu0
      %v1379 = vadd.f32 0.0, %v1378
      %v1380 = vpop.f32.mrb[0].mxu0
      %v1381 = vpop.f32.mrb[0].mxu0
      %v1382 = vadd.f32 0.0, %v1381
      %v1383 = vpop.f32.mrb[0].mxu0
      %1384 = vmatprep.mubr.bf16.mxu0 0
      %1385 = vmatmul.mubr.bf16.gmra.mrb[0].mxu0 %v980
      %v1386 = vpop.f32.mrb[0].mxu0
      %v1387 = vadd.f32 0.0, %v1386
      %v1388 = vpop.f32.mrb[0].mxu0
      %v1389 = vpop.f32.mrb[0].mxu0
      %v1390 = vadd.f32 0.0, %v1389
      %v1391 = vpop.f32.mrb[0].mxu0
      %1392 = vmatprep.mubr.bf16.mxu0 0
      %1393 = vmatmul.mubr.bf16.gmra.mrb[0].mxu0 %v983
      %v1394 = vpop.f32.mrb[0].mxu0
      %v1395 = vadd.f32 0.0, %v1394
      %v1396 = vpop.f32.mrb[0].mxu0
      %v1397 = vpop.f32.mrb[0].mxu0
      %v1398 = vadd.f32 0.0, %v1397
      %v1399 = vpop.f32.mrb[0].mxu0
      %1400 = vmatprep.mubr.bf16.mxu0 0
      %1401 = vmatmul.mubr.bf16.gmra.mrb[0].mxu0 %v986
      %v1402 = vpop.f32.mrb[0].mxu0
      %v1403 = vadd.f32 0.0, %v1402
      %v1404 = vpop.f32.mrb[0].mxu0
      %v1405 = vpop.f32.mrb[0].mxu0
      %v1406 = vadd.f32 0.0, %v1405
      %v1407 = vpop.f32.mrb[0].mxu0
      %1408 = vmatprep.mubr.bf16.mxu0 0
      %1409 = vmatmul.mubr.bf16.gmra.mrb[0].mxu0 %v989
      %v1410 = vpop.f32.mrb[0].mxu0
      %v1411 = vadd.f32 0.0, %v1410
      %v1412 = vpop.f32.mrb[0].mxu0
      %v1413 = vpop.f32.mrb[0].mxu0
      %v1414 = vadd.f32 0.0, %v1413
      %v1415 = vpop.f32.mrb[0].mxu0
      %1416 = vmatprep.mubr.bf16.mxu0 0
      %1417 = vmatmul.mubr.bf16.gmra.mrb[0].mxu0 %v992
      %v1418 = vpop.f32.mrb[0].mxu0
      %v1419 = vadd.f32 0.0, %v1418
      %v1420 = vpop.f32.mrb[0].mxu0
      %v1421 = vpop.f32.mrb[0].mxu0
      %v1422 = vadd.f32 0.0, %v1421
      %v1423 = vpop.f32.mrb[0].mxu0
      %1424 = vmatprep.mubr.bf16.mxu0 0
      %1425 = vmatmul.mubr.bf16.gmra.mrb[0].mxu0 %v995
      %v1426 = vpop.f32.mrb[0].mxu0
      %v1427 = vadd.f32 0.0, %v1426
      %v1428 = vpop.f32.mrb[0].mxu0
      %v1429 = vpop.f32.mrb[0].mxu0
      %v1430 = vadd.f32 0.0, %v1429
      %v1431 = vpop.f32.mrb[0].mxu0
      %1432 = vmatprep.mubr.bf16.mxu0 0
      %1433 = vmatmul.mubr.bf16.gmra.mrb[0].mxu0 %v998
      %v1434 = vpop.f32.mrb[0].mxu0
      %v1435 = vadd.f32 0.0, %v1434
      %v1436 = vpop.f32.mrb[0].mxu0
      %v1437 = vpop.f32.mrb[0].mxu0
      %v1438 = vadd.f32 0.0, %v1437
      %v1439 = vpop.f32.mrb[0].mxu0
      %1440 = vmatprep.mubr.bf16.mxu0 0
      %1441 = vmatmul.mubr.bf16.gmra.mrb[0].mxu0 %v1001
      %v1442 = vpop.f32.mrb[0].mxu0
      %v1443 = vadd.f32 0.0, %v1442
      %v1444 = vpop.f32.mrb[0].mxu0
      %v1445 = vpop.f32.mrb[0].mxu0
      %v1446 = vadd.f32 0.0, %v1445
      %v1447 = vpop.f32.mrb[0].mxu0
      %1448 = vmatprep.mubr.bf16.mxu0 0
      %1449 = vmatmul.mubr.bf16.gmra.mrb[0].mxu0 %v1004
      %v1450 = vpop.f32.mrb[0].mxu0
      %v1451 = vadd.f32 0.0, %v1450
      %v1452 = vpop.f32.mrb[0].mxu0
      %v1453 = vpop.f32.mrb[0].mxu0
      %v1454 = vadd.f32 0.0, %v1453
      %v1455 = vpop.f32.mrb[0].mxu0
      %1456 = vmatprep.mubr.bf16.mxu0 0
      %1457 = vmatmul.mubr.bf16.gmra.mrb[0].mxu0 %v1007
      %v1458 = vpop.f32.mrb[0].mxu0
      %v1459 = vadd.f32 0.0, %v1458
      %v1460 = vpop.f32.mrb[0].mxu0
      %v1461 = vpop.f32.mrb[0].mxu0
      %v1462 = vadd.f32 0.0, %v1461
      %v1463 = vpop.f32.mrb[0].mxu0
      %1464 = vmatprep.mubr.bf16.mxu0 0
      %1465 = vmatmul.mubr.bf16.gmra.mrb[0].mxu0 %v1010
      %v1466 = vpop.f32.mrb[0].mxu0
      %v1467 = vadd.f32 0.0, %v1466
      %v1468 = vpop.f32.mrb[0].mxu0
      %v1469 = vpop.f32.mrb[0].mxu0
      %v1470 = vadd.f32 0.0, %v1469
      %v1471 = vpop.f32.mrb[0].mxu0
      %1472 = vmatprep.mubr.bf16.mxu0 0
      %1473 = vmatmul.mubr.bf16.gmra.mrb[0].mxu0 %v1013
      %v1474 = vpop.f32.mrb[0].mxu0
      %v1475 = vadd.f32 0.0, %v1474
      %v1476 = vpop.f32.mrb[0].mxu0
      %v1477 = vpop.f32.mrb[0].mxu0
      %v1478 = vadd.f32 0.0, %v1477
      %v1479 = vpop.f32.mrb[0].mxu0
      %1480 = vmatprep.mubr.bf16.mxu0 0
      %1481 = vmatmul.mubr.bf16.gmra.mrb[0].mxu0 %v1016
      %v1482 = vpop.f32.mrb[0].mxu0
      %v1483 = vadd.f32 0.0, %v1482
      %v1484 = vpop.f32.mrb[0].mxu0
      %v1485 = vpop.f32.mrb[0].mxu0
      %v1486 = vadd.f32 0.0, %v1485
      %v1487 = vpop.f32.mrb[0].mxu0
      %1488 = vmatprep.mubr.bf16.mxu0 0
      %1489 = vmatmul.mubr.bf16.gmra.mrb[0].mxu0 %v1019
      %v1490 = vpop.f32.mrb[0].mxu0
      %v1491 = vadd.f32 0.0, %v1490
      %v1492 = vpop.f32.mrb[0].mxu0
      %v1493 = vpop.f32.mrb[0].mxu0
      %v1494 = vadd.f32 0.0, %v1493
      %v1495 = vpop.f32.mrb[0].mxu0
      %1496 = vmatprep.mubr.bf16.mxu0 0
      %1497 = vmatmul.mubr.bf16.gmra.mrb[0].mxu0 %v1022
      %v1498 = vpop.f32.mrb[0].mxu0
      %v1499 = vadd.f32 0.0, %v1498
      %v1500 = vpop.f32.mrb[0].mxu0
      %v1501 = vpop.f32.mrb[0].mxu0
      %v1502 = vadd.f32 0.0, %v1501
      %v1503 = vpop.f32.mrb[0].mxu0
      %1504 = vmatprep.mubr.bf16.mxu0 0
      %1505 = vmatmul.mubr.bf16.gmra.mrb[0].mxu0 %v1025
      %v1506 = vpop.f32.mrb[0].mxu0
      %v1507 = vadd.f32 0.0, %v1506
      %v1508 = vpop.f32.mrb[0].mxu0
      %v1509 = vpop.f32.mrb[0].mxu0
      %v1510 = vadd.f32 0.0, %v1509
      %v1511 = vpop.f32.mrb[0].mxu0
      %1512 = vmatprep.mubr.bf16.mxu0 0
      %1513 = vmatmul.mubr.bf16.gmra.mrb[0].mxu0 %v1028
      %v1514 = vpop.f32.mrb[0].mxu0
      %v1515 = vadd.f32 0.0, %v1514
      %v1516 = vpop.f32.mrb[0].mxu0
      %v1517 = vpop.f32.mrb[0].mxu0
      %v1518 = vadd.f32 0.0, %v1517
      %v1519 = vpop.f32.mrb[0].mxu0
      %1520 = vmatprep.mubr.bf16.mxu0 0
      %1521 = vmatmul.mubr.bf16.gmra.mrb[0].mxu0 %v1031
      %v1522 = vpop.f32.mrb[0].mxu0
      %v1523 = vadd.f32 0.0, %v1522
      %v1524 = vpop.f32.mrb[0].mxu0
      %v1525 = vpop.f32.mrb[0].mxu0
      %v1526 = vadd.f32 0.0, %v1525
      %v1527 = vpop.f32.mrb[0].mxu0
      %1528 = vmatprep.mubr.bf16.mxu0 0
      %1529 = vmatmul.mubr.bf16.gmra.mrb[0].mxu0 %v1034
      %v1530 = vpop.f32.mrb[0].mxu0
      %v1531 = vadd.f32 0.0, %v1530
      %v1532 = vpop.f32.mrb[0].mxu0
      %v1533 = vpop.f32.mrb[0].mxu0
      %v1534 = vadd.f32 0.0, %v1533
      %v1535 = vpop.f32.mrb[0].mxu0
      %1536 = vmatprep.mubr.bf16.mxu0 0
      %1537 = vmatmul.mubr.bf16.gmra.mrb[0].mxu0 %v1037
      %v1538 = vpop.f32.mrb[0].mxu0
      %v1539 = vadd.f32 0.0, %v1538
      %v1540 = vpop.f32.mrb[0].mxu0
      %v1541 = vpop.f32.mrb[0].mxu0
      %v1542 = vadd.f32 0.0, %v1541
      %v1543 = vpop.f32.mrb[0].mxu0
      %1544 = vmatprep.mubr.bf16.mxu0 0
      %1545 = vmatmul.mubr.bf16.gmra.mrb[0].mxu0 %v1040
      %v1546 = vpop.f32.mrb[0].mxu0
      %v1547 = vadd.f32 0.0, %v1546
      %v1548 = vpop.f32.mrb[0].mxu0
      %v1549 = vpop.f32.mrb[0].mxu0
      %v1550 = vadd.f32 0.0, %v1549
      %v1551 = vpop.f32.mrb[0].mxu0
      %1552 = vmatprep.mubr.bf16.mxu0 0
      %1553 = vmatmul.mubr.bf16.gmra.mrb[0].mxu0 %v1043
      %v1554 = vpop.f32.mrb[0].mxu0
      %v1555 = vadd.f32 0.0, %v1554
      %v1556 = vpop.f32.mrb[0].mxu0
      %v1557 = vpop.f32.mrb[0].mxu0
      %v1558 = vadd.f32 0.0, %v1557
      %v1559 = vpop.f32.mrb[0].mxu0
      %1560 = vmatprep.mubr.bf16.mxu0 0
      %1561 = vmatmul.mubr.bf16.gmra.mrb[0].mxu0 %v1046
      %v1562 = vpop.f32.mrb[0].mxu0
      %v1563 = vadd.f32 0.0, %v1562
      %v1564 = vpop.f32.mrb[0].mxu0
      %v1565 = vpop.f32.mrb[0].mxu0
      %v1566 = vadd.f32 0.0, %v1565
      %v1567 = vpop.f32.mrb[0].mxu0
      %1568 = vmatprep.mubr.bf16.mxu0 0
      %1569 = vmatmul.mubr.bf16.gmra.mrb[0].mxu0 %v1049
      %v1570 = vpop.f32.mrb[0].mxu0
      %v1571 = vadd.f32 0.0, %v1570
      %v1572 = vpop.f32.mrb[0].mxu0
      %v1573 = vpop.f32.mrb[0].mxu0
      %v1574 = vadd.f32 0.0, %v1573
      %v1575 = vpop.f32.mrb[0].mxu0
      %1576 = vmatprep.mubr.bf16.mxu0 0
      %1577 = vmatmul.mubr.bf16.gmra.mrb[0].mxu0 %v1052
      %v1578 = vpop.f32.mrb[0].mxu0
      %v1579 = vadd.f32 0.0, %v1578
      %v1580 = vpop.f32.mrb[0].mxu0
      %v1581 = vpop.f32.mrb[0].mxu0
      %v1582 = vadd.f32 0.0, %v1581
      %v1583 = vpop.f32.mrb[0].mxu0
      %1584 = vmatprep.mubr.bf16.mxu0 0
      %1585 = vmatmul.mubr.bf16.gmra.mrb[0].mxu0 %v1055
      %v1586 = vpop.f32.mrb[0].mxu0
      %v1587 = vadd.f32 0.0, %v1586
      %v1588 = vpop.f32.mrb[0].mxu0
      %v1589 = vpop.f32.mrb[0].mxu0
      %v1590 = vadd.f32 0.0, %v1589
      %v1591 = vpop.f32.mrb[0].mxu0
      %1592 = vmatprep.mubr.bf16.mxu0 0
      %1593 = vmatmul.mubr.bf16.gmra.mrb[0].mxu0 %v1058
      %v1594 = vpop.f32.mrb[0].mxu0
      %v1595 = vadd.f32 0.0, %v1594
      %v1596 = vpop.f32.mrb[0].mxu0
      %v1597 = vpop.f32.mrb[0].mxu0
      %v1598 = vadd.f32 0.0, %v1597
      %v1599 = vpop.f32.mrb[0].mxu0
      %1600 = vmatprep.mubr.bf16.mxu0 0
      %1601 = vmatmul.mubr.bf16.gmra.mrb[0].mxu0 %v1061
      %v1602 = vpop.f32.mrb[0].mxu0
      %v1603 = vadd.f32 0.0, %v1602
      %v1604 = vpop.f32.mrb[0].mxu0
      %v1605 = vpop.f32.mrb[0].mxu0
      %v1606 = vadd.f32 0.0, %v1605
      %v1607 = vpop.f32.mrb[0].mxu0
      %1608 = vmatprep.mubr.bf16.mxu0 0
      %1609 = vmatmul.mubr.bf16.gmra.mrb[0].mxu0 %v1064
      %v1610 = vpop.f32.mrb[0].mxu0
      %v1611 = vadd.f32 0.0, %v1610
      %v1612 = vpop.f32.mrb[0].mxu0
      %v1613 = vpop.f32.mrb[0].mxu0
      %v1614 = vadd.f32 0.0, %v1613
      %v1615 = vpop.f32.mrb[0].mxu0
      %1616 = vmatprep.mubr.bf16.mxu0 0
      %1617 = vmatmul.mubr.bf16.gmra.mrb[0].mxu0 %v1067
      %v1618 = vpop.f32.mrb[0].mxu0
      %v1619 = vadd.f32 0.0, %v1618
      %v1620 = vpop.f32.mrb[0].mxu0
      %v1621 = vpop.f32.mrb[0].mxu0
      %v1622 = vadd.f32 0.0, %v1621
      %v1623 = vpop.f32.mrb[0].mxu0
      %1624 = vmatprep.mubr.bf16.mxu0 0
      %1625 = vmatmul.mubr.bf16.gmra.mrb[0].mxu0 %v1070
      %v1626 = vpop.f32.mrb[0].mxu0
      %v1627 = vadd.f32 0.0, %v1626
      %v1628 = vpop.f32.mrb[0].mxu0
      %v1629 = vpop.f32.mrb[0].mxu0
      %v1630 = vadd.f32 0.0, %v1629
      %v1631 = vpop.f32.mrb[0].mxu0
      %1632 = vdwg.mxu0
      %v1637 = vunpack.c.l.b16 %v853
      %v1638 = vunpack.c.l.b16 %v854
      %v1639 = vunpack.c.l.b16 %v855
      %v1640 = vunpack.c.l.b16 %v856
      %v1641 = vpack.c.b16 %v1638, %v1637
      %v1642 = vpack.c.b16 %v1640, %v1639
      %v1646 = vsel %vm873, %v385, 0
      %v1649 = vsel %vm873, %v386, 0
      %v1652 = vsel %vm873, %v387, 0
      %v1655 = vsel %vm873, %v388, 0
      %v1658 = vsel %vm873, %v389, 0
      %v1661 = vsel %vm873, %v390, 0
      %v1664 = vsel %vm873, %v391, 0
      %v1667 = vsel %vm873, %v392, 0
      %v1670 = vsel %vm873, %v393, 0
      %v1673 = vsel %vm873, %v394, 0
      %v1676 = vsel %vm873, %v395, 0
      %v1679 = vsel %vm873, %v396, 0
      %v1682 = vsel %vm873, %v397, 0
      %v1685 = vsel %vm873, %v398, 0
      %v1688 = vsel %vm873, %v399, 0
      %v1691 = vsel %vm873, %v400, 0
      %v1694 = vsel %vm873, %v401, 0
      %v1697 = vsel %vm873, %v402, 0
      %v1700 = vsel %vm873, %v403, 0
      %v1703 = vsel %vm873, %v404, 0
      %v1706 = vsel %vm873, %v405, 0
      %v1709 = vsel %vm873, %v406, 0
      %v1712 = vsel %vm873, %v407, 0
      %v1715 = vsel %vm873, %v408, 0
      %v1718 = vsel %vm873, %v409, 0
      %v1721 = vsel %vm873, %v410, 0
      %v1724 = vsel %vm873, %v411, 0
      %v1727 = vsel %vm873, %v412, 0
      %v1730 = vsel %vm873, %v413, 0
      %v1733 = vsel %vm873, %v414, 0
      %v1736 = vsel %vm873, %v415, 0
      %v1739 = vsel %vm873, %v416, 0
      %v1742 = vsel %vm873, %v417, 0
      %v1745 = vsel %vm873, %v418, 0
      %v1748 = vsel %vm873, %v419, 0
      %v1751 = vsel %vm873, %v420, 0
      %v1754 = vsel %vm873, %v421, 0
      %v1757 = vsel %vm873, %v422, 0
      %v1760 = vsel %vm873, %v423, 0
      %v1763 = vsel %vm873, %v424, 0
      %v1766 = vsel %vm873, %v425, 0
      %v1769 = vsel %vm873, %v426, 0
      %v1772 = vsel %vm873, %v427, 0
      %v1775 = vsel %vm873, %v428, 0
      %v1778 = vsel %vm873, %v429, 0
      %v1781 = vsel %vm873, %v430, 0
      %v1784 = vsel %vm873, %v431, 0
      %v1787 = vsel %vm873, %v432, 0
      %v1790 = vsel %vm873, %v433, 0
      %v1793 = vsel %vm873, %v434, 0
      %v1796 = vsel %vm873, %v435, 0
      %v1799 = vsel %vm873, %v436, 0
      %v1802 = vsel %vm873, %v437, 0
      %v1805 = vsel %vm873, %v438, 0
      %v1808 = vsel %vm873, %v439, 0
      %v1811 = vsel %vm873, %v440, 0
      %v1814 = vsel %vm873, %v441, 0
      %v1817 = vsel %vm873, %v442, 0
      %v1820 = vsel %vm873, %v443, 0
      %v1823 = vsel %vm873, %v444, 0
      %v1826 = vsel %vm873, %v445, 0
      %v1829 = vsel %vm873, %v446, 0
      %v1832 = vsel %vm873, %v447, 0
      %v1835 = vsel %vm873, %v448, 0
      %v1838 = vsel %vm873, %v449, 0
      %v1841 = vsel %vm873, %v450, 0
      %1843 = vmatprep.subr.bf16.mxu0 0
      %1844 = vmatpush1.bf16.msra.mxu0 %v1641
      %1845 = vmatprep.subr.bf16.mxu0 0
      %1846 = vmatpush1.bf16.msra.mxu0 %v1642
      %1847 = vmatprep.subr.bf16.mxu0 0
      %1848 = vmatpush1.bf16.msra.mxu0 0
      %1849 = vmatprep.subr.bf16.mxu0 0
      %1850 = vmatpush1.bf16.msra.mxu0 0
      %1851 = vmatprep.subr.bf16.mxu0 0
      %1852 = vmatpush1.bf16.msra.mxu0 0
      %1853 = vmatprep.subr.bf16.mxu0 0
      %1854 = vmatpush1.bf16.msra.mxu0 0
      %1855 = vmatprep.subr.bf16.mxu0 0
      %1856 = vmatpush1.bf16.msra.mxu0 0
      %1857 = vmatprep.subr.bf16.mxu0 0
      %1858 = vmatpush1.bf16.msra.mxu0 0
      %1859 = vmatprep.subr.bf16.mxu0 0
      %1860 = vmatpush1.bf16.msra.mxu0 0
      %1861 = vmatprep.subr.bf16.mxu0 0
      %1862 = vmatpush1.bf16.msra.mxu0 0
      %1863 = vmatprep.subr.bf16.mxu0 0
      %1864 = vmatpush1.bf16.msra.mxu0 0
      %1865 = vmatprep.subr.bf16.mxu0 0
      %1866 = vmatpush1.bf16.msra.mxu0 0
      %1867 = vmatprep.subr.bf16.mxu0 0
      %1868 = vmatpush1.bf16.msra.mxu0 0
      %1869 = vmatprep.subr.bf16.mxu0 0
      %1870 = vmatpush1.bf16.msra.mxu0 0
      %1871 = vmatprep.subr.bf16.mxu0 0
      %1872 = vmatpush1.bf16.msra.mxu0 0
      %1873 = vmatprep.subr.bf16.mxu0 0
      %1874 = vmatpush1.bf16.msra.mxu0 0
      %1875 = vmatprep.mubr.bf16.mxu0 0
      %1876 = vmatmul.mubr.bf16.gmra.mrb[0].mxu0 %v1646
      %v1877 = vpop.f32.mrb[0].mxu0
      %v1878 = vadd.f32 %v1107, %v1877
      %v1879 = vpop.f32.mrb[0].mxu0
      %v1880 = vpop.f32.mrb[0].mxu0
      %v1881 = vadd.f32 %v1110, %v1880
      %v1882 = vpop.f32.mrb[0].mxu0
      %1883 = vmatprep.mubr.bf16.mxu0 0
      %1884 = vmatmul.mubr.bf16.gmra.mrb[0].mxu0 %v1649
      %v1885 = vpop.f32.mrb[0].mxu0
      %v1886 = vadd.f32 %v1115, %v1885
      %v1887 = vpop.f32.mrb[0].mxu0
      %v1888 = vpop.f32.mrb[0].mxu0
      %v1889 = vadd.f32 %v1118, %v1888
      %v1890 = vpop.f32.mrb[0].mxu0
      %1891 = vmatprep.mubr.bf16.mxu0 0
      %1892 = vmatmul.mubr.bf16.gmra.mrb[0].mxu0 %v1652
      %v1893 = vpop.f32.mrb[0].mxu0
      %v1894 = vadd.f32 %v1123, %v1893
      %v1895 = vpop.f32.mrb[0].mxu0
      %v1896 = vpop.f32.mrb[0].mxu0
      %v1897 = vadd.f32 %v1126, %v1896
      %v1898 = vpop.f32.mrb[0].mxu0
      %1899 = vmatprep.mubr.bf16.mxu0 0
      %1900 = vmatmul.mubr.bf16.gmra.mrb[0].mxu0 %v1655
      %v1901 = vpop.f32.mrb[0].mxu0
      %v1902 = vadd.f32 %v1131, %v1901
      %v1903 = vpop.f32.mrb[0].mxu0
      %v1904 = vpop.f32.mrb[0].mxu0
      %v1905 = vadd.f32 %v1134, %v1904
      %v1906 = vpop.f32.mrb[0].mxu0
      %1907 = vmatprep.mubr.bf16.mxu0 0
      %1908 = vmatmul.mubr.bf16.gmra.mrb[0].mxu0 %v1658
      %v1909 = vpop.f32.mrb[0].mxu0
      %v1910 = vadd.f32 %v1139, %v1909
      %v1911 = vpop.f32.mrb[0].mxu0
      %v1912 = vpop.f32.mrb[0].mxu0
      %v1913 = vadd.f32 %v1142, %v1912
      %v1914 = vpop.f32.mrb[0].mxu0
      %1915 = vmatprep.mubr.bf16.mxu0 0
      %1916 = vmatmul.mubr.bf16.gmra.mrb[0].mxu0 %v1661
      %v1917 = vpop.f32.mrb[0].mxu0
      %v1918 = vadd.f32 %v1147, %v1917
      %v1919 = vpop.f32.mrb[0].mxu0
      %v1920 = vpop.f32.mrb[0].mxu0
      %v1921 = vadd.f32 %v1150, %v1920
      %v1922 = vpop.f32.mrb[0].mxu0
      %1923 = vmatprep.mubr.bf16.mxu0 0
      %1924 = vmatmul.mubr.bf16.gmra.mrb[0].mxu0 %v1664
      %v1925 = vpop.f32.mrb[0].mxu0
      %v1926 = vadd.f32 %v1155, %v1925
      %v1927 = vpop.f32.mrb[0].mxu0
      %v1928 = vpop.f32.mrb[0].mxu0
      %v1929 = vadd.f32 %v1158, %v1928
      %v1930 = vpop.f32.mrb[0].mxu0
      %1931 = vmatprep.mubr.bf16.mxu0 0
      %1932 = vmatmul.mubr.bf16.gmra.mrb[0].mxu0 %v1667
      %v1933 = vpop.f32.mrb[0].mxu0
      %v1934 = vadd.f32 %v1163, %v1933
      %v1935 = vpop.f32.mrb[0].mxu0
      %v1936 = vpop.f32.mrb[0].mxu0
      %v1937 = vadd.f32 %v1166, %v1936
      %v1938 = vpop.f32.mrb[0].mxu0
      %1939 = vmatprep.mubr.bf16.mxu0 0
      %1940 = vmatmul.mubr.bf16.gmra.mrb[0].mxu0 %v1670
      %v1941 = vpop.f32.mrb[0].mxu0
      %v1942 = vadd.f32 %v1171, %v1941
      %v1943 = vpop.f32.mrb[0].mxu0
      %v1944 = vpop.f32.mrb[0].mxu0
      %v1945 = vadd.f32 %v1174, %v1944
      %v1946 = vpop.f32.mrb[0].mxu0
      %1947 = vmatprep.mubr.bf16.mxu0 0
      %1948 = vmatmul.mubr.bf16.gmra.mrb[0].mxu0 %v1673
      %v1949 = vpop.f32.mrb[0].mxu0
      %v1950 = vadd.f32 %v1179, %v1949
      %v1951 = vpop.f32.mrb[0].mxu0
      %v1952 = vpop.f32.mrb[0].mxu0
      %v1953 = vadd.f32 %v1182, %v1952
      %v1954 = vpop.f32.mrb[0].mxu0
      %1955 = vmatprep.mubr.bf16.mxu0 0
      %1956 = vmatmul.mubr.bf16.gmra.mrb[0].mxu0 %v1676
      %v1957 = vpop.f32.mrb[0].mxu0
      %v1958 = vadd.f32 %v1187, %v1957
      %v1959 = vpop.f32.mrb[0].mxu0
      %v1960 = vpop.f32.mrb[0].mxu0
      %v1961 = vadd.f32 %v1190, %v1960
      %v1962 = vpop.f32.mrb[0].mxu0
      %1963 = vmatprep.mubr.bf16.mxu0 0
      %1964 = vmatmul.mubr.bf16.gmra.mrb[0].mxu0 %v1679
      %v1965 = vpop.f32.mrb[0].mxu0
      %v1966 = vadd.f32 %v1195, %v1965
      %v1967 = vpop.f32.mrb[0].mxu0
      %v1968 = vpop.f32.mrb[0].mxu0
      %v1969 = vadd.f32 %v1198, %v1968
      %v1970 = vpop.f32.mrb[0].mxu0
      %1971 = vmatprep.mubr.bf16.mxu0 0
      %1972 = vmatmul.mubr.bf16.gmra.mrb[0].mxu0 %v1682
      %v1973 = vpop.f32.mrb[0].mxu0
      %v1974 = vadd.f32 %v1203, %v1973
      %v1975 = vpop.f32.mrb[0].mxu0
      %v1976 = vpop.f32.mrb[0].mxu0
      %v1977 = vadd.f32 %v1206, %v1976
      %v1978 = vpop.f32.mrb[0].mxu0
      %1979 = vmatprep.mubr.bf16.mxu0 0
      %1980 = vmatmul.mubr.bf16.gmra.mrb[0].mxu0 %v1685
      %v1981 = vpop.f32.mrb[0].mxu0
      %v1982 = vadd.f32 %v1211, %v1981
      %v1983 = vpop.f32.mrb[0].mxu0
      %v1984 = vpop.f32.mrb[0].mxu0
      %v1985 = vadd.f32 %v1214, %v1984
      %v1986 = vpop.f32.mrb[0].mxu0
      %1987 = vmatprep.mubr.bf16.mxu0 0
      %1988 = vmatmul.mubr.bf16.gmra.mrb[0].mxu0 %v1688
      %v1989 = vpop.f32.mrb[0].mxu0
      %v1990 = vadd.f32 %v1219, %v1989
      %v1991 = vpop.f32.mrb[0].mxu0
      %v1992 = vpop.f32.mrb[0].mxu0
      %v1993 = vadd.f32 %v1222, %v1992
      %v1994 = vpop.f32.mrb[0].mxu0
      %1995 = vmatprep.mubr.bf16.mxu0 0
      %1996 = vmatmul.mubr.bf16.gmra.mrb[0].mxu0 %v1691
      %v1997 = vpop.f32.mrb[0].mxu0
      %v1998 = vadd.f32 %v1227, %v1997
      %v1999 = vpop.f32.mrb[0].mxu0
      %v2000 = vpop.f32.mrb[0].mxu0
      %v2001 = vadd.f32 %v1230, %v2000
      %v2002 = vpop.f32.mrb[0].mxu0
      %2003 = vmatprep.mubr.bf16.mxu0 0
      %2004 = vmatmul.mubr.bf16.gmra.mrb[0].mxu0 %v1694
      %v2005 = vpop.f32.mrb[0].mxu0
      %v2006 = vadd.f32 %v1235, %v2005
      %v2007 = vpop.f32.mrb[0].mxu0
      %v2008 = vpop.f32.mrb[0].mxu0
      %v2009 = vadd.f32 %v1238, %v2008
      %v2010 = vpop.f32.mrb[0].mxu0
      %2011 = vmatprep.mubr.bf16.mxu0 0
      %2012 = vmatmul.mubr.bf16.gmra.mrb[0].mxu0 %v1697
      %v2013 = vpop.f32.mrb[0].mxu0
      %v2014 = vadd.f32 %v1243, %v2013
      %v2015 = vpop.f32.mrb[0].mxu0
      %v2016 = vpop.f32.mrb[0].mxu0
      %v2017 = vadd.f32 %v1246, %v2016
      %v2018 = vpop.f32.mrb[0].mxu0
      %2019 = vmatprep.mubr.bf16.mxu0 0
      %2020 = vmatmul.mubr.bf16.gmra.mrb[0].mxu0 %v1700
      %v2021 = vpop.f32.mrb[0].mxu0
      %v2022 = vadd.f32 %v1251, %v2021
      %v2023 = vpop.f32.mrb[0].mxu0
      %v2024 = vpop.f32.mrb[0].mxu0
      %v2025 = vadd.f32 %v1254, %v2024
      %v2026 = vpop.f32.mrb[0].mxu0
      %2027 = vmatprep.mubr.bf16.mxu0 0
      %2028 = vmatmul.mubr.bf16.gmra.mrb[0].mxu0 %v1703
      %v2029 = vpop.f32.mrb[0].mxu0
      %v2030 = vadd.f32 %v1259, %v2029
      %v2031 = vpop.f32.mrb[0].mxu0
      %v2032 = vpop.f32.mrb[0].mxu0
      %v2033 = vadd.f32 %v1262, %v2032
      %v2034 = vpop.f32.mrb[0].mxu0
      %2035 = vmatprep.mubr.bf16.mxu0 0
      %2036 = vmatmul.mubr.bf16.gmra.mrb[0].mxu0 %v1706
      %v2037 = vpop.f32.mrb[0].mxu0
      %v2038 = vadd.f32 %v1267, %v2037
      %v2039 = vpop.f32.mrb[0].mxu0
      %v2040 = vpop.f32.mrb[0].mxu0
      %v2041 = vadd.f32 %v1270, %v2040
      %v2042 = vpop.f32.mrb[0].mxu0
      %2043 = vmatprep.mubr.bf16.mxu0 0
      %2044 = vmatmul.mubr.bf16.gmra.mrb[0].mxu0 %v1709
      %v2045 = vpop.f32.mrb[0].mxu0
      %v2046 = vadd.f32 %v1275, %v2045
      %v2047 = vpop.f32.mrb[0].mxu0
      %v2048 = vpop.f32.mrb[0].mxu0
      %v2049 = vadd.f32 %v1278, %v2048
      %v2050 = vpop.f32.mrb[0].mxu0
      %2051 = vmatprep.mubr.bf16.mxu0 0
      %2052 = vmatmul.mubr.bf16.gmra.mrb[0].mxu0 %v1712
      %v2053 = vpop.f32.mrb[0].mxu0
      %v2054 = vadd.f32 %v1283, %v2053
      %v2055 = vpop.f32.mrb[0].mxu0
      %v2056 = vpop.f32.mrb[0].mxu0
      %v2057 = vadd.f32 %v1286, %v2056
      %v2058 = vpop.f32.mrb[0].mxu0
      %2059 = vmatprep.mubr.bf16.mxu0 0
      %2060 = vmatmul.mubr.bf16.gmra.mrb[0].mxu0 %v1715
      %v2061 = vpop.f32.mrb[0].mxu0
      %v2062 = vadd.f32 %v1291, %v2061
      %v2063 = vpop.f32.mrb[0].mxu0
      %v2064 = vpop.f32.mrb[0].mxu0
      %v2065 = vadd.f32 %v1294, %v2064
      %v2066 = vpop.f32.mrb[0].mxu0
      %2067 = vmatprep.mubr.bf16.mxu0 0
      %2068 = vmatmul.mubr.bf16.gmra.mrb[0].mxu0 %v1718
      %v2069 = vpop.f32.mrb[0].mxu0
      %v2070 = vadd.f32 %v1299, %v2069
      %v2071 = vpop.f32.mrb[0].mxu0
      %v2072 = vpop.f32.mrb[0].mxu0
      %v2073 = vadd.f32 %v1302, %v2072
      %v2074 = vpop.f32.mrb[0].mxu0
      %2075 = vmatprep.mubr.bf16.mxu0 0
      %2076 = vmatmul.mubr.bf16.gmra.mrb[0].mxu0 %v1721
      %v2077 = vpop.f32.mrb[0].mxu0
      %v2078 = vadd.f32 %v1307, %v2077
      %v2079 = vpop.f32.mrb[0].mxu0
      %v2080 = vpop.f32.mrb[0].mxu0
      %v2081 = vadd.f32 %v1310, %v2080
      %v2082 = vpop.f32.mrb[0].mxu0
      %2083 = vmatprep.mubr.bf16.mxu0 0
      %2084 = vmatmul.mubr.bf16.gmra.mrb[0].mxu0 %v1724
      %v2085 = vpop.f32.mrb[0].mxu0
      %v2086 = vadd.f32 %v1315, %v2085
      %v2087 = vpop.f32.mrb[0].mxu0
      %v2088 = vpop.f32.mrb[0].mxu0
      %v2089 = vadd.f32 %v1318, %v2088
      %v2090 = vpop.f32.mrb[0].mxu0
      %2091 = vmatprep.mubr.bf16.mxu0 0
      %2092 = vmatmul.mubr.bf16.gmra.mrb[0].mxu0 %v1727
      %v2093 = vpop.f32.mrb[0].mxu0
      %v2094 = vadd.f32 %v1323, %v2093
      %v2095 = vpop.f32.mrb[0].mxu0
      %v2096 = vpop.f32.mrb[0].mxu0
      %v2097 = vadd.f32 %v1326, %v2096
      %v2098 = vpop.f32.mrb[0].mxu0
      %2099 = vmatprep.mubr.bf16.mxu0 0
      %2100 = vmatmul.mubr.bf16.gmra.mrb[0].mxu0 %v1730
      %v2101 = vpop.f32.mrb[0].mxu0
      %v2102 = vadd.f32 %v1331, %v2101
      %v2103 = vpop.f32.mrb[0].mxu0
      %v2104 = vpop.f32.mrb[0].mxu0
      %v2105 = vadd.f32 %v1334, %v2104
      %v2106 = vpop.f32.mrb[0].mxu0
      %2107 = vmatprep.mubr.bf16.mxu0 0
      %2108 = vmatmul.mubr.bf16.gmra.mrb[0].mxu0 %v1733
      %v2109 = vpop.f32.mrb[0].mxu0
      %v2110 = vadd.f32 %v1339, %v2109
      %v2111 = vpop.f32.mrb[0].mxu0
      %v2112 = vpop.f32.mrb[0].mxu0
      %v2113 = vadd.f32 %v1342, %v2112
      %v2114 = vpop.f32.mrb[0].mxu0
      %2115 = vmatprep.mubr.bf16.mxu0 0
      %2116 = vmatmul.mubr.bf16.gmra.mrb[0].mxu0 %v1736
      %v2117 = vpop.f32.mrb[0].mxu0
      %v2118 = vadd.f32 %v1347, %v2117
      %v2119 = vpop.f32.mrb[0].mxu0
      %v2120 = vpop.f32.mrb[0].mxu0
      %v2121 = vadd.f32 %v1350, %v2120
      %v2122 = vpop.f32.mrb[0].mxu0
      %2123 = vmatprep.mubr.bf16.mxu0 0
      %2124 = vmatmul.mubr.bf16.gmra.mrb[0].mxu0 %v1739
      %v2125 = vpop.f32.mrb[0].mxu0
      %v2126 = vadd.f32 %v1355, %v2125
      %v2127 = vpop.f32.mrb[0].mxu0
      %v2128 = vpop.f32.mrb[0].mxu0
      %v2129 = vadd.f32 %v1358, %v2128
      %v2130 = vpop.f32.mrb[0].mxu0
      %2131 = vmatprep.mubr.bf16.mxu0 0
      %2132 = vmatmul.mubr.bf16.gmra.mrb[0].mxu0 %v1742
      %v2133 = vpop.f32.mrb[0].mxu0
      %v2134 = vadd.f32 %v1363, %v2133
      %v2135 = vpop.f32.mrb[0].mxu0
      %v2136 = vpop.f32.mrb[0].mxu0
      %v2137 = vadd.f32 %v1366, %v2136
      %v2138 = vpop.f32.mrb[0].mxu0
      %2139 = vmatprep.mubr.bf16.mxu0 0
      %2140 = vmatmul.mubr.bf16.gmra.mrb[0].mxu0 %v1745
      %v2141 = vpop.f32.mrb[0].mxu0
      %v2142 = vadd.f32 %v1371, %v2141
      %v2143 = vpop.f32.mrb[0].mxu0
      %v2144 = vpop.f32.mrb[0].mxu0
      %v2145 = vadd.f32 %v1374, %v2144
      %v2146 = vpop.f32.mrb[0].mxu0
      %2147 = vmatprep.mubr.bf16.mxu0 0
      %2148 = vmatmul.mubr.bf16.gmra.mrb[0].mxu0 %v1748
      %v2149 = vpop.f32.mrb[0].mxu0
      %v2150 = vadd.f32 %v1379, %v2149
      %v2151 = vpop.f32.mrb[0].mxu0
      %v2152 = vpop.f32.mrb[0].mxu0
      %v2153 = vadd.f32 %v1382, %v2152
      %v2154 = vpop.f32.mrb[0].mxu0
      %2155 = vmatprep.mubr.bf16.mxu0 0
      %2156 = vmatmul.mubr.bf16.gmra.mrb[0].mxu0 %v1751
      %v2157 = vpop.f32.mrb[0].mxu0
      %v2158 = vadd.f32 %v1387, %v2157
      %v2159 = vpop.f32.mrb[0].mxu0
      %v2160 = vpop.f32.mrb[0].mxu0
      %v2161 = vadd.f32 %v1390, %v2160
      %v2162 = vpop.f32.mrb[0].mxu0
      %2163 = vmatprep.mubr.bf16.mxu0 0
      %2164 = vmatmul.mubr.bf16.gmra.mrb[0].mxu0 %v1754
      %v2165 = vpop.f32.mrb[0].mxu0
      %v2166 = vadd.f32 %v1395, %v2165
      %v2167 = vpop.f32.mrb[0].mxu0
      %v2168 = vpop.f32.mrb[0].mxu0
      %v2169 = vadd.f32 %v1398, %v2168
      %v2170 = vpop.f32.mrb[0].mxu0
      %2171 = vmatprep.mubr.bf16.mxu0 0
      %2172 = vmatmul.mubr.bf16.gmra.mrb[0].mxu0 %v1757
      %v2173 = vpop.f32.mrb[0].mxu0
      %v2174 = vadd.f32 %v1403, %v2173
      %v2175 = vpop.f32.mrb[0].mxu0
      %v2176 = vpop.f32.mrb[0].mxu0
      %v2177 = vadd.f32 %v1406, %v2176
      %v2178 = vpop.f32.mrb[0].mxu0
      %2179 = vmatprep.mubr.bf16.mxu0 0
      %2180 = vmatmul.mubr.bf16.gmra.mrb[0].mxu0 %v1760
      %v2181 = vpop.f32.mrb[0].mxu0
      %v2182 = vadd.f32 %v1411, %v2181
      %v2183 = vpop.f32.mrb[0].mxu0
      %v2184 = vpop.f32.mrb[0].mxu0
      %v2185 = vadd.f32 %v1414, %v2184
      %v2186 = vpop.f32.mrb[0].mxu0
      %2187 = vmatprep.mubr.bf16.mxu0 0
      %2188 = vmatmul.mubr.bf16.gmra.mrb[0].mxu0 %v1763
      %v2189 = vpop.f32.mrb[0].mxu0
      %v2190 = vadd.f32 %v1419, %v2189
      %v2191 = vpop.f32.mrb[0].mxu0
      %v2192 = vpop.f32.mrb[0].mxu0
      %v2193 = vadd.f32 %v1422, %v2192
      %v2194 = vpop.f32.mrb[0].mxu0
      %2195 = vmatprep.mubr.bf16.mxu0 0
      %2196 = vmatmul.mubr.bf16.gmra.mrb[0].mxu0 %v1766
      %v2197 = vpop.f32.mrb[0].mxu0
      %v2198 = vadd.f32 %v1427, %v2197
      %v2199 = vpop.f32.mrb[0].mxu0
      %v2200 = vpop.f32.mrb[0].mxu0
      %v2201 = vadd.f32 %v1430, %v2200
      %v2202 = vpop.f32.mrb[0].mxu0
      %2203 = vmatprep.mubr.bf16.mxu0 0
      %2204 = vmatmul.mubr.bf16.gmra.mrb[0].mxu0 %v1769
      %v2205 = vpop.f32.mrb[0].mxu0
      %v2206 = vadd.f32 %v1435, %v2205
      %v2207 = vpop.f32.mrb[0].mxu0
      %v2208 = vpop.f32.mrb[0].mxu0
      %v2209 = vadd.f32 %v1438, %v2208
      %v2210 = vpop.f32.mrb[0].mxu0
      %2211 = vmatprep.mubr.bf16.mxu0 0
      %2212 = vmatmul.mubr.bf16.gmra.mrb[0].mxu0 %v1772
      %v2213 = vpop.f32.mrb[0].mxu0
      %v2214 = vadd.f32 %v1443, %v2213
      %v2215 = vpop.f32.mrb[0].mxu0
      %v2216 = vpop.f32.mrb[0].mxu0
      %v2217 = vadd.f32 %v1446, %v2216
      %v2218 = vpop.f32.mrb[0].mxu0
      %2219 = vmatprep.mubr.bf16.mxu0 0
      %2220 = vmatmul.mubr.bf16.gmra.mrb[0].mxu0 %v1775
      %v2221 = vpop.f32.mrb[0].mxu0
      %v2222 = vadd.f32 %v1451, %v2221
      %v2223 = vpop.f32.mrb[0].mxu0
      %v2224 = vpop.f32.mrb[0].mxu0
      %v2225 = vadd.f32 %v1454, %v2224
      %v2226 = vpop.f32.mrb[0].mxu0
      %2227 = vmatprep.mubr.bf16.mxu0 0
      %2228 = vmatmul.mubr.bf16.gmra.mrb[0].mxu0 %v1778
      %v2229 = vpop.f32.mrb[0].mxu0
      %v2230 = vadd.f32 %v1459, %v2229
      %v2231 = vpop.f32.mrb[0].mxu0
      %v2232 = vpop.f32.mrb[0].mxu0
      %v2233 = vadd.f32 %v1462, %v2232
      %v2234 = vpop.f32.mrb[0].mxu0
      %2235 = vmatprep.mubr.bf16.mxu0 0
      %2236 = vmatmul.mubr.bf16.gmra.mrb[0].mxu0 %v1781
      %v2237 = vpop.f32.mrb[0].mxu0
      %v2238 = vadd.f32 %v1467, %v2237
      %v2239 = vpop.f32.mrb[0].mxu0
      %v2240 = vpop.f32.mrb[0].mxu0
      %v2241 = vadd.f32 %v1470, %v2240
      %v2242 = vpop.f32.mrb[0].mxu0
      %2243 = vmatprep.mubr.bf16.mxu0 0
      %2244 = vmatmul.mubr.bf16.gmra.mrb[0].mxu0 %v1784
      %v2245 = vpop.f32.mrb[0].mxu0
      %v2246 = vadd.f32 %v1475, %v2245
      %v2247 = vpop.f32.mrb[0].mxu0
      %v2248 = vpop.f32.mrb[0].mxu0
      %v2249 = vadd.f32 %v1478, %v2248
      %v2250 = vpop.f32.mrb[0].mxu0
      %2251 = vmatprep.mubr.bf16.mxu0 0
      %2252 = vmatmul.mubr.bf16.gmra.mrb[0].mxu0 %v1787
      %v2253 = vpop.f32.mrb[0].mxu0
      %v2254 = vadd.f32 %v1483, %v2253
      %v2255 = vpop.f32.mrb[0].mxu0
      %v2256 = vpop.f32.mrb[0].mxu0
      %v2257 = vadd.f32 %v1486, %v2256
      %v2258 = vpop.f32.mrb[0].mxu0
      %2259 = vmatprep.mubr.bf16.mxu0 0
      %2260 = vmatmul.mubr.bf16.gmra.mrb[0].mxu0 %v1790
      %v2261 = vpop.f32.mrb[0].mxu0
      %v2262 = vadd.f32 %v1491, %v2261
      %v2263 = vpop.f32.mrb[0].mxu0
      %v2264 = vpop.f32.mrb[0].mxu0
      %v2265 = vadd.f32 %v1494, %v2264
      %v2266 = vpop.f32.mrb[0].mxu0
      %2267 = vmatprep.mubr.bf16.mxu0 0
      %2268 = vmatmul.mubr.bf16.gmra.mrb[0].mxu0 %v1793
      %v2269 = vpop.f32.mrb[0].mxu0
      %v2270 = vadd.f32 %v1499, %v2269
      %v2271 = vpop.f32.mrb[0].mxu0
      %v2272 = vpop.f32.mrb[0].mxu0
      %v2273 = vadd.f32 %v1502, %v2272
      %v2274 = vpop.f32.mrb[0].mxu0
      %2275 = vmatprep.mubr.bf16.mxu0 0
      %2276 = vmatmul.mubr.bf16.gmra.mrb[0].mxu0 %v1796
      %v2277 = vpop.f32.mrb[0].mxu0
      %v2278 = vadd.f32 %v1507, %v2277
      %v2279 = vpop.f32.mrb[0].mxu0
      %v2280 = vpop.f32.mrb[0].mxu0
      %v2281 = vadd.f32 %v1510, %v2280
      %v2282 = vpop.f32.mrb[0].mxu0
      %2283 = vmatprep.mubr.bf16.mxu0 0
      %2284 = vmatmul.mubr.bf16.gmra.mrb[0].mxu0 %v1799
      %v2285 = vpop.f32.mrb[0].mxu0
      %v2286 = vadd.f32 %v1515, %v2285
      %v2287 = vpop.f32.mrb[0].mxu0
      %v2288 = vpop.f32.mrb[0].mxu0
      %v2289 = vadd.f32 %v1518, %v2288
      %v2290 = vpop.f32.mrb[0].mxu0
      %2291 = vmatprep.mubr.bf16.mxu0 0
      %2292 = vmatmul.mubr.bf16.gmra.mrb[0].mxu0 %v1802
      %v2293 = vpop.f32.mrb[0].mxu0
      %v2294 = vadd.f32 %v1523, %v2293
      %v2295 = vpop.f32.mrb[0].mxu0
      %v2296 = vpop.f32.mrb[0].mxu0
      %v2297 = vadd.f32 %v1526, %v2296
      %v2298 = vpop.f32.mrb[0].mxu0
      %2299 = vmatprep.mubr.bf16.mxu0 0
      %2300 = vmatmul.mubr.bf16.gmra.mrb[0].mxu0 %v1805
      %v2301 = vpop.f32.mrb[0].mxu0
      %v2302 = vadd.f32 %v1531, %v2301
      %v2303 = vpop.f32.mrb[0].mxu0
      %v2304 = vpop.f32.mrb[0].mxu0
      %v2305 = vadd.f32 %v1534, %v2304
      %v2306 = vpop.f32.mrb[0].mxu0
      %2307 = vmatprep.mubr.bf16.mxu0 0
      %2308 = vmatmul.mubr.bf16.gmra.mrb[0].mxu0 %v1808
      %v2309 = vpop.f32.mrb[0].mxu0
      %v2310 = vadd.f32 %v1539, %v2309
      %v2311 = vpop.f32.mrb[0].mxu0
      %v2312 = vpop.f32.mrb[0].mxu0
      %v2313 = vadd.f32 %v1542, %v2312
      %v2314 = vpop.f32.mrb[0].mxu0
      %2315 = vmatprep.mubr.bf16.mxu0 0
      %2316 = vmatmul.mubr.bf16.gmra.mrb[0].mxu0 %v1811
      %v2317 = vpop.f32.mrb[0].mxu0
      %v2318 = vadd.f32 %v1547, %v2317
      %v2319 = vpop.f32.mrb[0].mxu0
      %v2320 = vpop.f32.mrb[0].mxu0
      %v2321 = vadd.f32 %v1550, %v2320
      %v2322 = vpop.f32.mrb[0].mxu0
      %2323 = vmatprep.mubr.bf16.mxu0 0
      %2324 = vmatmul.mubr.bf16.gmra.mrb[0].mxu0 %v1814
      %v2325 = vpop.f32.mrb[0].mxu0
      %v2326 = vadd.f32 %v1555, %v2325
      %v2327 = vpop.f32.mrb[0].mxu0
      %v2328 = vpop.f32.mrb[0].mxu0
      %v2329 = vadd.f32 %v1558, %v2328
      %v2330 = vpop.f32.mrb[0].mxu0
      %2331 = vmatprep.mubr.bf16.mxu0 0
      %2332 = vmatmul.mubr.bf16.gmra.mrb[0].mxu0 %v1817
      %v2333 = vpop.f32.mrb[0].mxu0
      %v2334 = vadd.f32 %v1563, %v2333
      %v2335 = vpop.f32.mrb[0].mxu0
      %v2336 = vpop.f32.mrb[0].mxu0
      %v2337 = vadd.f32 %v1566, %v2336
      %v2338 = vpop.f32.mrb[0].mxu0
      %2339 = vmatprep.mubr.bf16.mxu0 0
      %2340 = vmatmul.mubr.bf16.gmra.mrb[0].mxu0 %v1820
      %v2341 = vpop.f32.mrb[0].mxu0
      %v2342 = vadd.f32 %v1571, %v2341
      %v2343 = vpop.f32.mrb[0].mxu0
      %v2344 = vpop.f32.mrb[0].mxu0
      %v2345 = vadd.f32 %v1574, %v2344
      %v2346 = vpop.f32.mrb[0].mxu0
      %2347 = vmatprep.mubr.bf16.mxu0 0
      %2348 = vmatmul.mubr.bf16.gmra.mrb[0].mxu0 %v1823
      %v2349 = vpop.f32.mrb[0].mxu0
      %v2350 = vadd.f32 %v1579, %v2349
      %v2351 = vpop.f32.mrb[0].mxu0
      %v2352 = vpop.f32.mrb[0].mxu0
      %v2353 = vadd.f32 %v1582, %v2352
      %v2354 = vpop.f32.mrb[0].mxu0
      %2355 = vmatprep.mubr.bf16.mxu0 0
      %2356 = vmatmul.mubr.bf16.gmra.mrb[0].mxu0 %v1826
      %v2357 = vpop.f32.mrb[0].mxu0
      %v2358 = vadd.f32 %v1587, %v2357
      %v2359 = vpop.f32.mrb[0].mxu0
      %v2360 = vpop.f32.mrb[0].mxu0
      %v2361 = vadd.f32 %v1590, %v2360
      %v2362 = vpop.f32.mrb[0].mxu0
      %2363 = vmatprep.mubr.bf16.mxu0 0
      %2364 = vmatmul.mubr.bf16.gmra.mrb[0].mxu0 %v1829
      %v2365 = vpop.f32.mrb[0].mxu0
      %v2366 = vadd.f32 %v1595, %v2365
      %v2367 = vpop.f32.mrb[0].mxu0
      %v2368 = vpop.f32.mrb[0].mxu0
      %v2369 = vadd.f32 %v1598, %v2368
      %v2370 = vpop.f32.mrb[0].mxu0
      %2371 = vmatprep.mubr.bf16.mxu0 0
      %2372 = vmatmul.mubr.bf16.gmra.mrb[0].mxu0 %v1832
      %v2373 = vpop.f32.mrb[0].mxu0
      %v2374 = vadd.f32 %v1603, %v2373
      %v2375 = vpop.f32.mrb[0].mxu0
      %v2376 = vpop.f32.mrb[0].mxu0
      %v2377 = vadd.f32 %v1606, %v2376
      %v2378 = vpop.f32.mrb[0].mxu0
      %2379 = vmatprep.mubr.bf16.mxu0 0
      %2380 = vmatmul.mubr.bf16.gmra.mrb[0].mxu0 %v1835
      %v2381 = vpop.f32.mrb[0].mxu0
      %v2382 = vadd.f32 %v1611, %v2381
      %v2383 = vpop.f32.mrb[0].mxu0
      %v2384 = vpop.f32.mrb[0].mxu0
      %v2385 = vadd.f32 %v1614, %v2384
      %v2386 = vpop.f32.mrb[0].mxu0
      %2387 = vmatprep.mubr.bf16.mxu0 0
      %2388 = vmatmul.mubr.bf16.gmra.mrb[0].mxu0 %v1838
      %v2389 = vpop.f32.mrb[0].mxu0
      %v2390 = vadd.f32 %v1619, %v2389
      %v2391 = vpop.f32.mrb[0].mxu0
      %v2392 = vpop.f32.mrb[0].mxu0
      %v2393 = vadd.f32 %v1622, %v2392
      %v2394 = vpop.f32.mrb[0].mxu0
      %2395 = vmatprep.mubr.bf16.mxu0 0
      %2396 = vmatmul.mubr.bf16.gmra.mrb[0].mxu0 %v1841
      %v2397 = vpop.f32.mrb[0].mxu0
      %v2398 = vadd.f32 %v1627, %v2397
      %v2399 = vpop.f32.mrb[0].mxu0
      %v2400 = vpop.f32.mrb[0].mxu0
      %v2401 = vadd.f32 %v1630, %v2400
      %v2402 = vpop.f32.mrb[0].mxu0
      %2403 = vdwg.mxu0
      %v2404 = vld [vmem:[%s3] sm:$0xf]
      %v2405 = vld [vmem:[%s3 + $0x4] sm:$0xf]
      %v2406 = vld [vmem:[%s3 + $0x8] sm:$0xf]
      %v2407 = vld [vmem:[%s3 + $0xc] sm:$0xf]
      %v2412 = vunpack.c.l.b16 %v2404
      %v2413 = vunpack.c.l.b16 %v2405
      %v2414 = vunpack.c.l.b16 %v2406
      %v2415 = vunpack.c.l.b16 %v2407
      %v2416 = vpack.c.b16 %v2413, %v2412
      %v2417 = vpack.c.b16 %v2415, %v2414
      %v2421 = vsel %vm873, %v653, 0
      %v2424 = vsel %vm873, %v654, 0
      %2426 = vmatprep.subr.bf16.mxu0 0
      %2427 = vmatpush1.bf16.msra.mxu0 %v2416
      %2428 = vmatprep.subr.bf16.mxu0 0
      %2429 = vmatpush1.bf16.msra.mxu0 %v2417
      %2430 = vmatprep.subr.bf16.mxu0 0
      %2431 = vmatpush1.bf16.msra.mxu0 0
      %2432 = vmatprep.subr.bf16.mxu0 0
      %2433 = vmatpush1.bf16.msra.mxu0 0
      %2434 = vmatprep.subr.bf16.mxu0 0
      %2435 = vmatpush1.bf16.msra.mxu0 0
      %2436 = vmatprep.subr.bf16.mxu0 0
      %2437 = vmatpush1.bf16.msra.mxu0 0
      %2438 = vmatprep.subr.bf16.mxu0 0
      %2439 = vmatpush1.bf16.msra.mxu0 0
      %2440 = vmatprep.subr.bf16.mxu0 0
      %2441 = vmatpush1.bf16.msra.mxu0 0
      %2442 = vmatprep.subr.bf16.mxu0 0
      %2443 = vmatpush1.bf16.msra.mxu0 0
      %2444 = vmatprep.subr.bf16.mxu0 0
      %2445 = vmatpush1.bf16.msra.mxu0 0
      %2446 = vmatprep.subr.bf16.mxu0 0
      %2447 = vmatpush1.bf16.msra.mxu0 0
      %2448 = vmatprep.subr.bf16.mxu0 0
      %2449 = vmatpush1.bf16.msra.mxu0 0
      %2450 = vmatprep.subr.bf16.mxu0 0
      %2451 = vmatpush1.bf16.msra.mxu0 0
      %2452 = vmatprep.subr.bf16.mxu0 0
      %2453 = vmatpush1.bf16.msra.mxu0 0
      %2454 = vmatprep.subr.bf16.mxu0 0
      %2455 = vmatpush1.bf16.msra.mxu0 0
      %2456 = vmatprep.subr.bf16.mxu0 0
      %2457 = vmatpush1.bf16.msra.mxu0 0
      %2458 = vmatprep.mubr.bf16.mxu0 0
      %2459 = vmatmul.mubr.bf16.gmra.mrb[0].mxu0 %v881
      %v2460 = vpop.f32.mrb[0].mxu0
      %v2461 = vadd.f32 0.0, %v2460
      %v2462 = vpop.f32.mrb[0].mxu0
      %v2463 = vpop.f32.mrb[0].mxu0
      %v2464 = vadd.f32 0.0, %v2463
      %v2465 = vpop.f32.mrb[0].mxu0
      %2466 = vmatprep.mubr.bf16.mxu0 0
      %2467 = vmatmul.mubr.bf16.gmra.mrb[0].mxu0 %v884
      %v2468 = vpop.f32.mrb[0].mxu0
      %v2469 = vadd.f32 0.0, %v2468
      %v2470 = vpop.f32.mrb[0].mxu0
      %v2471 = vpop.f32.mrb[0].mxu0
      %v2472 = vadd.f32 0.0, %v2471
      %v2473 = vpop.f32.mrb[0].mxu0
      %2474 = vmatprep.mubr.bf16.mxu0 0
      %2475 = vmatmul.mubr.bf16.gmra.mrb[0].mxu0 %v887
      %v2476 = vpop.f32.mrb[0].mxu0
      %v2477 = vadd.f32 0.0, %v2476
      %v2478 = vpop.f32.mrb[0].mxu0
      %v2479 = vpop.f32.mrb[0].mxu0
      %v2480 = vadd.f32 0.0, %v2479
      %v2481 = vpop.f32.mrb[0].mxu0
      %2482 = vmatprep.mubr.bf16.mxu0 0
      %2483 = vmatmul.mubr.bf16.gmra.mrb[0].mxu0 %v890
      %v2484 = vpop.f32.mrb[0].mxu0
      %v2485 = vadd.f32 0.0, %v2484
      %v2486 = vpop.f32.mrb[0].mxu0
      %v2487 = vpop.f32.mrb[0].mxu0
      %v2488 = vadd.f32 0.0, %v2487
      %v2489 = vpop.f32.mrb[0].mxu0
      %2490 = vmatprep.mubr.bf16.mxu0 0
      %2491 = vmatmul.mubr.bf16.gmra.mrb[0].mxu0 %v893
      %v2492 = vpop.f32.mrb[0].mxu0
      %v2493 = vadd.f32 0.0, %v2492
      %v2494 = vpop.f32.mrb[0].mxu0
      %v2495 = vpop.f32.mrb[0].mxu0
      %v2496 = vadd.f32 0.0, %v2495
      %v2497 = vpop.f32.mrb[0].mxu0
      %2498 = vmatprep.mubr.bf16.mxu0 0
      %2499 = vmatmul.mubr.bf16.gmra.mrb[0].mxu0 %v896
      %v2500 = vpop.f32.mrb[0].mxu0
      %v2501 = vadd.f32 0.0, %v2500
      %v2502 = vpop.f32.mrb[0].mxu0
      %v2503 = vpop.f32.mrb[0].mxu0
      %v2504 = vadd.f32 0.0, %v2503
      %v2505 = vpop.f32.mrb[0].mxu0
      %2506 = vmatprep.mubr.bf16.mxu0 0
      %2507 = vmatmul.mubr.bf16.gmra.mrb[0].mxu0 %v899
      %v2508 = vpop.f32.mrb[0].mxu0
      %v2509 = vadd.f32 0.0, %v2508
      %v2510 = vpop.f32.mrb[0].mxu0
      %v2511 = vpop.f32.mrb[0].mxu0
      %v2512 = vadd.f32 0.0, %v2511
      %v2513 = vpop.f32.mrb[0].mxu0
      %2514 = vmatprep.mubr.bf16.mxu0 0
      %2515 = vmatmul.mubr.bf16.gmra.mrb[0].mxu0 %v902
      %v2516 = vpop.f32.mrb[0].mxu0
      %v2517 = vadd.f32 0.0, %v2516
      %v2518 = vpop.f32.mrb[0].mxu0
      %v2519 = vpop.f32.mrb[0].mxu0
      %v2520 = vadd.f32 0.0, %v2519
      %v2521 = vpop.f32.mrb[0].mxu0
      %2522 = vmatprep.mubr.bf16.mxu0 0
      %2523 = vmatmul.mubr.bf16.gmra.mrb[0].mxu0 %v905
      %v2524 = vpop.f32.mrb[0].mxu0
      %v2525 = vadd.f32 0.0, %v2524
      %v2526 = vpop.f32.mrb[0].mxu0
      %v2527 = vpop.f32.mrb[0].mxu0
      %v2528 = vadd.f32 0.0, %v2527
      %v2529 = vpop.f32.mrb[0].mxu0
      %2530 = vmatprep.mubr.bf16.mxu0 0
      %2531 = vmatmul.mubr.bf16.gmra.mrb[0].mxu0 %v908
      %v2532 = vpop.f32.mrb[0].mxu0
      %v2533 = vadd.f32 0.0, %v2532
      %v2534 = vpop.f32.mrb[0].mxu0
      %v2535 = vpop.f32.mrb[0].mxu0
      %v2536 = vadd.f32 0.0, %v2535
      %v2537 = vpop.f32.mrb[0].mxu0
      %2538 = vmatprep.mubr.bf16.mxu0 0
      %2539 = vmatmul.mubr.bf16.gmra.mrb[0].mxu0 %v911
      %v2540 = vpop.f32.mrb[0].mxu0
      %v2541 = vadd.f32 0.0, %v2540
      %v2542 = vpop.f32.mrb[0].mxu0
      %v2543 = vpop.f32.mrb[0].mxu0
      %v2544 = vadd.f32 0.0, %v2543
      %v2545 = vpop.f32.mrb[0].mxu0
      %2546 = vmatprep.mubr.bf16.mxu0 0
      %2547 = vmatmul.mubr.bf16.gmra.mrb[0].mxu0 %v914
      %v2548 = vpop.f32.mrb[0].mxu0
      %v2549 = vadd.f32 0.0, %v2548
      %v2550 = vpop.f32.mrb[0].mxu0
      %v2551 = vpop.f32.mrb[0].mxu0
      %v2552 = vadd.f32 0.0, %v2551
      %v2553 = vpop.f32.mrb[0].mxu0
      %2554 = vmatprep.mubr.bf16.mxu0 0
      %2555 = vmatmul.mubr.bf16.gmra.mrb[0].mxu0 %v917
      %v2556 = vpop.f32.mrb[0].mxu0
      %v2557 = vadd.f32 0.0, %v2556
      %v2558 = vpop.f32.mrb[0].mxu0
      %v2559 = vpop.f32.mrb[0].mxu0
      %v2560 = vadd.f32 0.0, %v2559
      %v2561 = vpop.f32.mrb[0].mxu0
      %2562 = vmatprep.mubr.bf16.mxu0 0
      %2563 = vmatmul.mubr.bf16.gmra.mrb[0].mxu0 %v920
      %v2564 = vpop.f32.mrb[0].mxu0
      %v2565 = vadd.f32 0.0, %v2564
      %v2566 = vpop.f32.mrb[0].mxu0
      %v2567 = vpop.f32.mrb[0].mxu0
      %v2568 = vadd.f32 0.0, %v2567
      %v2569 = vpop.f32.mrb[0].mxu0
      %2570 = vmatprep.mubr.bf16.mxu0 0
      %2571 = vmatmul.mubr.bf16.gmra.mrb[0].mxu0 %v923
      %v2572 = vpop.f32.mrb[0].mxu0
      %v2573 = vadd.f32 0.0, %v2572
      %v2574 = vpop.f32.mrb[0].mxu0
      %v2575 = vpop.f32.mrb[0].mxu0
      %v2576 = vadd.f32 0.0, %v2575
      %v2577 = vpop.f32.mrb[0].mxu0
      %2578 = vmatprep.mubr.bf16.mxu0 0
      %2579 = vmatmul.mubr.bf16.gmra.mrb[0].mxu0 %v926
      %v2580 = vpop.f32.mrb[0].mxu0
      %v2581 = vadd.f32 0.0, %v2580
      %v2582 = vpop.f32.mrb[0].mxu0
      %v2583 = vpop.f32.mrb[0].mxu0
      %v2584 = vadd.f32 0.0, %v2583
      %v2585 = vpop.f32.mrb[0].mxu0
      %2586 = vmatprep.mubr.bf16.mxu0 0
      %2587 = vmatmul.mubr.bf16.gmra.mrb[0].mxu0 %v929
      %v2588 = vpop.f32.mrb[0].mxu0
      %v2589 = vadd.f32 0.0, %v2588
      %v2590 = vpop.f32.mrb[0].mxu0
      %v2591 = vpop.f32.mrb[0].mxu0
      %v2592 = vadd.f32 0.0, %v2591
      %v2593 = vpop.f32.mrb[0].mxu0
      %2594 = vmatprep.mubr.bf16.mxu0 0
      %2595 = vmatmul.mubr.bf16.gmra.mrb[0].mxu0 %v932
      %v2596 = vpop.f32.mrb[0].mxu0
      %v2597 = vadd.f32 0.0, %v2596
      %v2598 = vpop.f32.mrb[0].mxu0
      %v2599 = vpop.f32.mrb[0].mxu0
      %v2600 = vadd.f32 0.0, %v2599
      %v2601 = vpop.f32.mrb[0].mxu0
      %2602 = vmatprep.mubr.bf16.mxu0 0
      %2603 = vmatmul.mubr.bf16.gmra.mrb[0].mxu0 %v935
      %v2604 = vpop.f32.mrb[0].mxu0
      %v2605 = vadd.f32 0.0, %v2604
      %v2606 = vpop.f32.mrb[0].mxu0
      %v2607 = vpop.f32.mrb[0].mxu0
      %v2608 = vadd.f32 0.0, %v2607
      %v2609 = vpop.f32.mrb[0].mxu0
      %2610 = vmatprep.mubr.bf16.mxu0 0
      %2611 = vmatmul.mubr.bf16.gmra.mrb[0].mxu0 %v938
      %v2612 = vpop.f32.mrb[0].mxu0
      %v2613 = vadd.f32 0.0, %v2612
      %v2614 = vpop.f32.mrb[0].mxu0
      %v2615 = vpop.f32.mrb[0].mxu0
      %v2616 = vadd.f32 0.0, %v2615
      %v2617 = vpop.f32.mrb[0].mxu0
      %2618 = vmatprep.mubr.bf16.mxu0 0
      %2619 = vmatmul.mubr.bf16.gmra.mrb[0].mxu0 %v941
      %v2620 = vpop.f32.mrb[0].mxu0
      %v2621 = vadd.f32 0.0, %v2620
      %v2622 = vpop.f32.mrb[0].mxu0
      %v2623 = vpop.f32.mrb[0].mxu0
      %v2624 = vadd.f32 0.0, %v2623
      %v2625 = vpop.f32.mrb[0].mxu0
      %2626 = vmatprep.mubr.bf16.mxu0 0
      %2627 = vmatmul.mubr.bf16.gmra.mrb[0].mxu0 %v944
      %v2628 = vpop.f32.mrb[0].mxu0
      %v2629 = vadd.f32 0.0, %v2628
      %v2630 = vpop.f32.mrb[0].mxu0
      %v2631 = vpop.f32.mrb[0].mxu0
      %v2632 = vadd.f32 0.0, %v2631
      %v2633 = vpop.f32.mrb[0].mxu0
      %2634 = vmatprep.mubr.bf16.mxu0 0
      %2635 = vmatmul.mubr.bf16.gmra.mrb[0].mxu0 %v947
      %v2636 = vpop.f32.mrb[0].mxu0
      %v2637 = vadd.f32 0.0, %v2636
      %v2638 = vpop.f32.mrb[0].mxu0
      %v2639 = vpop.f32.mrb[0].mxu0
      %v2640 = vadd.f32 0.0, %v2639
      %v2641 = vpop.f32.mrb[0].mxu0
      %2642 = vmatprep.mubr.bf16.mxu0 0
      %2643 = vmatmul.mubr.bf16.gmra.mrb[0].mxu0 %v950
      %v2644 = vpop.f32.mrb[0].mxu0
      %v2645 = vadd.f32 0.0, %v2644
      %v2646 = vpop.f32.mrb[0].mxu0
      %v2647 = vpop.f32.mrb[0].mxu0
      %v2648 = vadd.f32 0.0, %v2647
      %v2649 = vpop.f32.mrb[0].mxu0
      %2650 = vmatprep.mubr.bf16.mxu0 0
      %2651 = vmatmul.mubr.bf16.gmra.mrb[0].mxu0 %v953
      %v2652 = vpop.f32.mrb[0].mxu0
      %v2653 = vadd.f32 0.0, %v2652
      %v2654 = vpop.f32.mrb[0].mxu0
      %v2655 = vpop.f32.mrb[0].mxu0
      %v2656 = vadd.f32 0.0, %v2655
      %v2657 = vpop.f32.mrb[0].mxu0
      %2658 = vmatprep.mubr.bf16.mxu0 0
      %2659 = vmatmul.mubr.bf16.gmra.mrb[0].mxu0 %v956
      %v2660 = vpop.f32.mrb[0].mxu0
      %v2661 = vadd.f32 0.0, %v2660
      %v2662 = vpop.f32.mrb[0].mxu0
      %v2663 = vpop.f32.mrb[0].mxu0
      %v2664 = vadd.f32 0.0, %v2663
      %v2665 = vpop.f32.mrb[0].mxu0
      %2666 = vmatprep.mubr.bf16.mxu0 0
      %2667 = vmatmul.mubr.bf16.gmra.mrb[0].mxu0 %v959
      %v2668 = vpop.f32.mrb[0].mxu0
      %v2669 = vadd.f32 0.0, %v2668
      %v2670 = vpop.f32.mrb[0].mxu0
      %v2671 = vpop.f32.mrb[0].mxu0
      %v2672 = vadd.f32 0.0, %v2671
      %v2673 = vpop.f32.mrb[0].mxu0
      %2674 = vmatprep.mubr.bf16.mxu0 0
      %2675 = vmatmul.mubr.bf16.gmra.mrb[0].mxu0 %v962
      %v2676 = vpop.f32.mrb[0].mxu0
      %v2677 = vadd.f32 0.0, %v2676
      %v2678 = vpop.f32.mrb[0].mxu0
      %v2679 = vpop.f32.mrb[0].mxu0
      %v2680 = vadd.f32 0.0, %v2679
      %v2681 = vpop.f32.mrb[0].mxu0
      %2682 = vmatprep.mubr.bf16.mxu0 0
      %2683 = vmatmul.mubr.bf16.gmra.mrb[0].mxu0 %v965
      %v2684 = vpop.f32.mrb[0].mxu0
      %v2685 = vadd.f32 0.0, %v2684
      %v2686 = vpop.f32.mrb[0].mxu0
      %v2687 = vpop.f32.mrb[0].mxu0
      %v2688 = vadd.f32 0.0, %v2687
      %v2689 = vpop.f32.mrb[0].mxu0
      %2690 = vmatprep.mubr.bf16.mxu0 0
      %2691 = vmatmul.mubr.bf16.gmra.mrb[0].mxu0 %v968
      %v2692 = vpop.f32.mrb[0].mxu0
      %v2693 = vadd.f32 0.0, %v2692
      %v2694 = vpop.f32.mrb[0].mxu0
      %v2695 = vpop.f32.mrb[0].mxu0
      %v2696 = vadd.f32 0.0, %v2695
      %v2697 = vpop.f32.mrb[0].mxu0
      %2698 = vmatprep.mubr.bf16.mxu0 0
      %2699 = vmatmul.mubr.bf16.gmra.mrb[0].mxu0 %v971
      %v2700 = vpop.f32.mrb[0].mxu0
      %v2701 = vadd.f32 0.0, %v2700
      %v2702 = vpop.f32.mrb[0].mxu0
      %v2703 = vpop.f32.mrb[0].mxu0
      %v2704 = vadd.f32 0.0, %v2703
      %v2705 = vpop.f32.mrb[0].mxu0
      %2706 = vmatprep.mubr.bf16.mxu0 0
      %2707 = vmatmul.mubr.bf16.gmra.mrb[0].mxu0 %v974
      %v2708 = vpop.f32.mrb[0].mxu0
      %v2709 = vadd.f32 0.0, %v2708
      %v2710 = vpop.f32.mrb[0].mxu0
      %v2711 = vpop.f32.mrb[0].mxu0
      %v2712 = vadd.f32 0.0, %v2711
      %v2713 = vpop.f32.mrb[0].mxu0
      %2714 = vmatprep.mubr.bf16.mxu0 0
      %2715 = vmatmul.mubr.bf16.gmra.mrb[0].mxu0 %v977
      %v2716 = vpop.f32.mrb[0].mxu0
      %v2717 = vadd.f32 0.0, %v2716
      %v2718 = vpop.f32.mrb[0].mxu0
      %v2719 = vpop.f32.mrb[0].mxu0
      %v2720 = vadd.f32 0.0, %v2719
      %v2721 = vpop.f32.mrb[0].mxu0
      %2722 = vmatprep.mubr.bf16.mxu0 0
      %2723 = vmatmul.mubr.bf16.gmra.mrb[0].mxu0 %v980
      %v2724 = vpop.f32.mrb[0].mxu0
      %v2725 = vadd.f32 0.0, %v2724
      %v2726 = vpop.f32.mrb[0].mxu0
      %v2727 = vpop.f32.mrb[0].mxu0
      %v2728 = vadd.f32 0.0, %v2727
      %v2729 = vpop.f32.mrb[0].mxu0
      %2730 = vmatprep.mubr.bf16.mxu0 0
      %2731 = vmatmul.mubr.bf16.gmra.mrb[0].mxu0 %v983
      %v2732 = vpop.f32.mrb[0].mxu0
      %v2733 = vadd.f32 0.0, %v2732
      %v2734 = vpop.f32.mrb[0].mxu0
      %v2735 = vpop.f32.mrb[0].mxu0
      %v2736 = vadd.f32 0.0, %v2735
      %v2737 = vpop.f32.mrb[0].mxu0
      %2738 = vmatprep.mubr.bf16.mxu0 0
      %2739 = vmatmul.mubr.bf16.gmra.mrb[0].mxu0 %v986
      %v2740 = vpop.f32.mrb[0].mxu0
      %v2741 = vadd.f32 0.0, %v2740
      %v2742 = vpop.f32.mrb[0].mxu0
      %v2743 = vpop.f32.mrb[0].mxu0
      %v2744 = vadd.f32 0.0, %v2743
      %v2745 = vpop.f32.mrb[0].mxu0
      %2746 = vmatprep.mubr.bf16.mxu0 0
      %2747 = vmatmul.mubr.bf16.gmra.mrb[0].mxu0 %v989
      %v2748 = vpop.f32.mrb[0].mxu0
      %v2749 = vadd.f32 0.0, %v2748
      %v2750 = vpop.f32.mrb[0].mxu0
      %v2751 = vpop.f32.mrb[0].mxu0
      %v2752 = vadd.f32 0.0, %v2751
      %v2753 = vpop.f32.mrb[0].mxu0
      %2754 = vmatprep.mubr.bf16.mxu0 0
      %2755 = vmatmul.mubr.bf16.gmra.mrb[0].mxu0 %v992
      %v2756 = vpop.f32.mrb[0].mxu0
      %v2757 = vadd.f32 0.0, %v2756
      %v2758 = vpop.f32.mrb[0].mxu0
      %v2759 = vpop.f32.mrb[0].mxu0
      %v2760 = vadd.f32 0.0, %v2759
      %v2761 = vpop.f32.mrb[0].mxu0
      %2762 = vmatprep.mubr.bf16.mxu0 0
      %2763 = vmatmul.mubr.bf16.gmra.mrb[0].mxu0 %v995
      %v2764 = vpop.f32.mrb[0].mxu0
      %v2765 = vadd.f32 0.0, %v2764
      %v2766 = vpop.f32.mrb[0].mxu0
      %v2767 = vpop.f32.mrb[0].mxu0
      %v2768 = vadd.f32 0.0, %v2767
      %v2769 = vpop.f32.mrb[0].mxu0
      %2770 = vmatprep.mubr.bf16.mxu0 0
      %2771 = vmatmul.mubr.bf16.gmra.mrb[0].mxu0 %v998
      %v2772 = vpop.f32.mrb[0].mxu0
      %v2773 = vadd.f32 0.0, %v2772
      %v2774 = vpop.f32.mrb[0].mxu0
      %v2775 = vpop.f32.mrb[0].mxu0
      %v2776 = vadd.f32 0.0, %v2775
      %v2777 = vpop.f32.mrb[0].mxu0
      %2778 = vmatprep.mubr.bf16.mxu0 0
      %2779 = vmatmul.mubr.bf16.gmra.mrb[0].mxu0 %v1001
      %v2780 = vpop.f32.mrb[0].mxu0
      %v2781 = vadd.f32 0.0, %v2780
      %v2782 = vpop.f32.mrb[0].mxu0
      %v2783 = vpop.f32.mrb[0].mxu0
      %v2784 = vadd.f32 0.0, %v2783
      %v2785 = vpop.f32.mrb[0].mxu0
      %2786 = vmatprep.mubr.bf16.mxu0 0
      %2787 = vmatmul.mubr.bf16.gmra.mrb[0].mxu0 %v1004
      %v2788 = vpop.f32.mrb[0].mxu0
      %v2789 = vadd.f32 0.0, %v2788
      %v2790 = vpop.f32.mrb[0].mxu0
      %v2791 = vpop.f32.mrb[0].mxu0
      %v2792 = vadd.f32 0.0, %v2791
      %v2793 = vpop.f32.mrb[0].mxu0
      %2794 = vmatprep.mubr.bf16.mxu0 0
      %2795 = vmatmul.mubr.bf16.gmra.mrb[0].mxu0 %v1007
      %v2796 = vpop.f32.mrb[0].mxu0
      %v2797 = vadd.f32 0.0, %v2796
      %v2798 = vpop.f32.mrb[0].mxu0
      %v2799 = vpop.f32.mrb[0].mxu0
      %v2800 = vadd.f32 0.0, %v2799
      %v2801 = vpop.f32.mrb[0].mxu0
      %2802 = vmatprep.mubr.bf16.mxu0 0
      %2803 = vmatmul.mubr.bf16.gmra.mrb[0].mxu0 %v1010
      %v2804 = vpop.f32.mrb[0].mxu0
      %v2805 = vadd.f32 0.0, %v2804
      %v2806 = vpop.f32.mrb[0].mxu0
      %v2807 = vpop.f32.mrb[0].mxu0
      %v2808 = vadd.f32 0.0, %v2807
      %v2809 = vpop.f32.mrb[0].mxu0
      %2810 = vmatprep.mubr.bf16.mxu0 0
      %2811 = vmatmul.mubr.bf16.gmra.mrb[0].mxu0 %v1013
      %v2812 = vpop.f32.mrb[0].mxu0
      %v2813 = vadd.f32 0.0, %v2812
      %v2814 = vpop.f32.mrb[0].mxu0
      %v2815 = vpop.f32.mrb[0].mxu0
      %v2816 = vadd.f32 0.0, %v2815
      %v2817 = vpop.f32.mrb[0].mxu0
      %2818 = vmatprep.mubr.bf16.mxu0 0
      %2819 = vmatmul.mubr.bf16.gmra.mrb[0].mxu0 %v1016
      %v2820 = vpop.f32.mrb[0].mxu0
      %v2821 = vadd.f32 0.0, %v2820
      %v2822 = vpop.f32.mrb[0].mxu0
      %v2823 = vpop.f32.mrb[0].mxu0
      %v2824 = vadd.f32 0.0, %v2823
      %v2825 = vpop.f32.mrb[0].mxu0
      %2826 = vmatprep.mubr.bf16.mxu0 0
      %2827 = vmatmul.mubr.bf16.gmra.mrb[0].mxu0 %v1019
      %v2828 = vpop.f32.mrb[0].mxu0
      %v2829 = vadd.f32 0.0, %v2828
      %v2830 = vpop.f32.mrb[0].mxu0
      %v2831 = vpop.f32.mrb[0].mxu0
      %v2832 = vadd.f32 0.0, %v2831
      %v2833 = vpop.f32.mrb[0].mxu0
      %2834 = vmatprep.mubr.bf16.mxu0 0
      %2835 = vmatmul.mubr.bf16.gmra.mrb[0].mxu0 %v1022
      %v2836 = vpop.f32.mrb[0].mxu0
      %v2837 = vadd.f32 0.0, %v2836
      %v2838 = vpop.f32.mrb[0].mxu0
      %v2839 = vpop.f32.mrb[0].mxu0
      %v2840 = vadd.f32 0.0, %v2839
      %v2841 = vpop.f32.mrb[0].mxu0
      %2842 = vmatprep.mubr.bf16.mxu0 0
      %2843 = vmatmul.mubr.bf16.gmra.mrb[0].mxu0 %v1025
      %v2844 = vpop.f32.mrb[0].mxu0
      %v2845 = vadd.f32 0.0, %v2844
      %v2846 = vpop.f32.mrb[0].mxu0
      %v2847 = vpop.f32.mrb[0].mxu0
      %v2848 = vadd.f32 0.0, %v2847
      %v2849 = vpop.f32.mrb[0].mxu0
      %2850 = vmatprep.mubr.bf16.mxu0 0
      %2851 = vmatmul.mubr.bf16.gmra.mrb[0].mxu0 %v1028
      %v2852 = vpop.f32.mrb[0].mxu0
      %v2853 = vadd.f32 0.0, %v2852
      %v2854 = vpop.f32.mrb[0].mxu0
      %v2855 = vpop.f32.mrb[0].mxu0
      %v2856 = vadd.f32 0.0, %v2855
      %v2857 = vpop.f32.mrb[0].mxu0
      %2858 = vmatprep.mubr.bf16.mxu0 0
      %2859 = vmatmul.mubr.bf16.gmra.mrb[0].mxu0 %v1031
      %v2860 = vpop.f32.mrb[0].mxu0
      %v2861 = vadd.f32 0.0, %v2860
      %v2862 = vpop.f32.mrb[0].mxu0
      %v2863 = vpop.f32.mrb[0].mxu0
      %v2864 = vadd.f32 0.0, %v2863
      %v2865 = vpop.f32.mrb[0].mxu0
      %2866 = vmatprep.mubr.bf16.mxu0 0
      %2867 = vmatmul.mubr.bf16.gmra.mrb[0].mxu0 %v1034
      %v2868 = vpop.f32.mrb[0].mxu0
      %v2869 = vadd.f32 0.0, %v2868
      %v2870 = vpop.f32.mrb[0].mxu0
      %v2871 = vpop.f32.mrb[0].mxu0
      %v2872 = vadd.f32 0.0, %v2871
      %v2873 = vpop.f32.mrb[0].mxu0
      %2874 = vmatprep.mubr.bf16.mxu0 0
      %2875 = vmatmul.mubr.bf16.gmra.mrb[0].mxu0 %v1037
      %v2876 = vpop.f32.mrb[0].mxu0
      %v2877 = vadd.f32 0.0, %v2876
      %v2878 = vpop.f32.mrb[0].mxu0
      %v2879 = vpop.f32.mrb[0].mxu0
      %v2880 = vadd.f32 0.0, %v2879
      %v2881 = vpop.f32.mrb[0].mxu0
      %2882 = vmatprep.mubr.bf16.mxu0 0
      %2883 = vmatmul.mubr.bf16.gmra.mrb[0].mxu0 %v1040
      %v2884 = vpop.f32.mrb[0].mxu0
      %v2885 = vadd.f32 0.0, %v2884
      %v2886 = vpop.f32.mrb[0].mxu0
      %v2887 = vpop.f32.mrb[0].mxu0
      %v2888 = vadd.f32 0.0, %v2887
      %v2889 = vpop.f32.mrb[0].mxu0
      %2890 = vmatprep.mubr.bf16.mxu0 0
      %2891 = vmatmul.mubr.bf16.gmra.mrb[0].mxu0 %v1043
      %v2892 = vpop.f32.mrb[0].mxu0
      %v2893 = vadd.f32 0.0, %v2892
      %v2894 = vpop.f32.mrb[0].mxu0
      %v2895 = vpop.f32.mrb[0].mxu0
      %v2896 = vadd.f32 0.0, %v2895
      %v2897 = vpop.f32.mrb[0].mxu0
      %2898 = vmatprep.mubr.bf16.mxu0 0
      %2899 = vmatmul.mubr.bf16.gmra.mrb[0].mxu0 %v1046
      %v2900 = vpop.f32.mrb[0].mxu0
      %v2901 = vadd.f32 0.0, %v2900
      %v2902 = vpop.f32.mrb[0].mxu0
      %v2903 = vpop.f32.mrb[0].mxu0
      %v2904 = vadd.f32 0.0, %v2903
      %v2905 = vpop.f32.mrb[0].mxu0
      %2906 = vmatprep.mubr.bf16.mxu0 0
      %2907 = vmatmul.mubr.bf16.gmra.mrb[0].mxu0 %v1049
      %v2908 = vpop.f32.mrb[0].mxu0
      %v2909 = vadd.f32 0.0, %v2908
      %v2910 = vpop.f32.mrb[0].mxu0
      %v2911 = vpop.f32.mrb[0].mxu0
      %v2912 = vadd.f32 0.0, %v2911
      %v2913 = vpop.f32.mrb[0].mxu0
      %2914 = vmatprep.mubr.bf16.mxu0 0
      %2915 = vmatmul.mubr.bf16.gmra.mrb[0].mxu0 %v1052
      %v2916 = vpop.f32.mrb[0].mxu0
      %v2917 = vadd.f32 0.0, %v2916
      %v2918 = vpop.f32.mrb[0].mxu0
      %v2919 = vpop.f32.mrb[0].mxu0
      %v2920 = vadd.f32 0.0, %v2919
      %v2921 = vpop.f32.mrb[0].mxu0
      %2922 = vmatprep.mubr.bf16.mxu0 0
      %2923 = vmatmul.mubr.bf16.gmra.mrb[0].mxu0 %v1055
      %v2924 = vpop.f32.mrb[0].mxu0
      %v2925 = vadd.f32 0.0, %v2924
      %v2926 = vpop.f32.mrb[0].mxu0
      %v2927 = vpop.f32.mrb[0].mxu0
      %v2928 = vadd.f32 0.0, %v2927
      %v2929 = vpop.f32.mrb[0].mxu0
      %2930 = vmatprep.mubr.bf16.mxu0 0
      %2931 = vmatmul.mubr.bf16.gmra.mrb[0].mxu0 %v1058
      %v2932 = vpop.f32.mrb[0].mxu0
      %v2933 = vadd.f32 0.0, %v2932
      %v2934 = vpop.f32.mrb[0].mxu0
      %v2935 = vpop.f32.mrb[0].mxu0
      %v2936 = vadd.f32 0.0, %v2935
      %v2937 = vpop.f32.mrb[0].mxu0
      %2938 = vmatprep.mubr.bf16.mxu0 0
      %2939 = vmatmul.mubr.bf16.gmra.mrb[0].mxu0 %v1061
      %v2940 = vpop.f32.mrb[0].mxu0
      %v2941 = vadd.f32 0.0, %v2940
      %v2942 = vpop.f32.mrb[0].mxu0
      %v2943 = vpop.f32.mrb[0].mxu0
      %v2944 = vadd.f32 0.0, %v2943
      %v2945 = vpop.f32.mrb[0].mxu0
      %2946 = vmatprep.mubr.bf16.mxu0 0
      %2947 = vmatmul.mubr.bf16.gmra.mrb[0].mxu0 %v1064
      %v2948 = vpop.f32.mrb[0].mxu0
      %v2949 = vadd.f32 0.0, %v2948
      %v2950 = vpop.f32.mrb[0].mxu0
      %v2951 = vpop.f32.mrb[0].mxu0
      %v2952 = vadd.f32 0.0, %v2951
      %v2953 = vpop.f32.mrb[0].mxu0
      %2954 = vmatprep.mubr.bf16.mxu0 0
      %2955 = vmatmul.mubr.bf16.gmra.mrb[0].mxu0 %v1067
      %v2956 = vpop.f32.mrb[0].mxu0
      %v2957 = vadd.f32 0.0, %v2956
      %v2958 = vpop.f32.mrb[0].mxu0
      %v2959 = vpop.f32.mrb[0].mxu0
      %v2960 = vadd.f32 0.0, %v2959
      %v2961 = vpop.f32.mrb[0].mxu0
      %2962 = vmatprep.mubr.bf16.mxu0 0
      %2963 = vmatmul.mubr.bf16.gmra.mrb[0].mxu0 %v1070
      %v2964 = vpop.f32.mrb[0].mxu0
      %v2965 = vadd.f32 0.0, %v2964
      %v2966 = vpop.f32.mrb[0].mxu0
      %v2967 = vpop.f32.mrb[0].mxu0
      %v2968 = vadd.f32 0.0, %v2967
      %v2969 = vpop.f32.mrb[0].mxu0
      %2970 = vmatprep.mubr.bf16.mxu0 0
      %2971 = vmatmul.mubr.bf16.gmra.mrb[0].mxu0 %v2421
      %v2972 = vpop.f32.mrb[0].mxu0
      %v2973 = vadd.f32 0.0, %v2972
      %v2974 = vpop.f32.mrb[0].mxu0
      %v2975 = vpop.f32.mrb[0].mxu0
      %v2976 = vadd.f32 0.0, %v2975
      %v2977 = vpop.f32.mrb[0].mxu0
      %2978 = vmatprep.mubr.bf16.mxu0 0
      %2979 = vmatmul.mubr.bf16.gmra.mrb[0].mxu0 %v2424
      %v2980 = vpop.f32.mrb[0].mxu0
      %v2981 = vadd.f32 0.0, %v2980
      %v2982 = vpop.f32.mrb[0].mxu0
      %v2983 = vpop.f32.mrb[0].mxu0
      %v2984 = vadd.f32 0.0, %v2983
      %v2985 = vpop.f32.mrb[0].mxu0
      %2986 = vdwg.mxu0
      %v2987 = vadd.f32 %v1878, %v2461
      %v2988 = vadd.f32 %v1881, %v2464
      %v2989 = vadd.f32 %v1886, %v2469
      %v2990 = vadd.f32 %v1889, %v2472
      %v2991 = vadd.f32 %v1894, %v2477
      %v2992 = vadd.f32 %v1897, %v2480
      %v2993 = vadd.f32 %v1902, %v2485
      %v2994 = vadd.f32 %v1905, %v2488
      %v2995 = vadd.f32 %v1910, %v2493
      %v2996 = vadd.f32 %v1913, %v2496
      %v2997 = vadd.f32 %v1918, %v2501
      %v2998 = vadd.f32 %v1921, %v2504
      %v2999 = vadd.f32 %v1926, %v2509
      %v3000 = vadd.f32 %v1929, %v2512
      %v3001 = vadd.f32 %v1934, %v2517
      %v3002 = vadd.f32 %v1937, %v2520
      %v3003 = vadd.f32 %v1942, %v2525
      %v3004 = vadd.f32 %v1945, %v2528
      %v3005 = vadd.f32 %v1950, %v2533
      %v3006 = vadd.f32 %v1953, %v2536
      %v3007 = vadd.f32 %v1958, %v2541
      %v3008 = vadd.f32 %v1961, %v2544
      %v3009 = vadd.f32 %v1966, %v2549
      %v3010 = vadd.f32 %v1969, %v2552
      %v3011 = vadd.f32 %v1974, %v2557
      %v3012 = vadd.f32 %v1977, %v2560
      %v3013 = vadd.f32 %v1982, %v2565
      %v3014 = vadd.f32 %v1985, %v2568
      %v3015 = vadd.f32 %v1990, %v2573
      %v3016 = vadd.f32 %v1993, %v2576
      %v3017 = vadd.f32 %v1998, %v2581
      %v3018 = vadd.f32 %v2001, %v2584
      %v3019 = vadd.f32 %v2006, %v2589
      %v3020 = vadd.f32 %v2009, %v2592
      %v3021 = vadd.f32 %v2014, %v2597
      %v3022 = vadd.f32 %v2017, %v2600
      %v3023 = vadd.f32 %v2022, %v2605
      %v3024 = vadd.f32 %v2025, %v2608
      %v3025 = vadd.f32 %v2030, %v2613
      %v3026 = vadd.f32 %v2033, %v2616
      %v3027 = vadd.f32 %v2038, %v2621
      %v3028 = vadd.f32 %v2041, %v2624
      %v3029 = vadd.f32 %v2046, %v2629
      %v3030 = vadd.f32 %v2049, %v2632
      %v3031 = vadd.f32 %v2054, %v2637
      %v3032 = vadd.f32 %v2057, %v2640
      %v3033 = vadd.f32 %v2062, %v2645
      %v3034 = vadd.f32 %v2065, %v2648
      %v3035 = vadd.f32 %v2070, %v2653
      %v3036 = vadd.f32 %v2073, %v2656
      %v3037 = vadd.f32 %v2078, %v2661
      %v3038 = vadd.f32 %v2081, %v2664
      %v3039 = vadd.f32 %v2086, %v2669
      %v3040 = vadd.f32 %v2089, %v2672
      %v3041 = vadd.f32 %v2094, %v2677
      %v3042 = vadd.f32 %v2097, %v2680
      %v3043 = vadd.f32 %v2102, %v2685
      %v3044 = vadd.f32 %v2105, %v2688
      %v3045 = vadd.f32 %v2110, %v2693
      %v3046 = vadd.f32 %v2113, %v2696
      %v3047 = vadd.f32 %v2118, %v2701
      %v3048 = vadd.f32 %v2121, %v2704
      %v3049 = vadd.f32 %v2126, %v2709
      %v3050 = vadd.f32 %v2129, %v2712
      %v3051 = vadd.f32 %v2134, %v2717
      %v3052 = vadd.f32 %v2137, %v2720
      %v3053 = vadd.f32 %v2142, %v2725
      %v3054 = vadd.f32 %v2145, %v2728
      %v3055 = vadd.f32 %v2150, %v2733
      %v3056 = vadd.f32 %v2153, %v2736
      %v3057 = vadd.f32 %v2158, %v2741
      %v3058 = vadd.f32 %v2161, %v2744
      %v3059 = vadd.f32 %v2166, %v2749
      %v3060 = vadd.f32 %v2169, %v2752
      %v3061 = vadd.f32 %v2174, %v2757
      %v3062 = vadd.f32 %v2177, %v2760
      %v3063 = vadd.f32 %v2182, %v2765
      %v3064 = vadd.f32 %v2185, %v2768
      %v3065 = vadd.f32 %v2190, %v2773
      %v3066 = vadd.f32 %v2193, %v2776
      %v3067 = vadd.f32 %v2198, %v2781
      %v3068 = vadd.f32 %v2201, %v2784
      %v3069 = vadd.f32 %v2206, %v2789
      %v3070 = vadd.f32 %v2209, %v2792
      %v3071 = vadd.f32 %v2214, %v2797
      %v3072 = vadd.f32 %v2217, %v2800
      %v3073 = vadd.f32 %v2222, %v2805
      %v3074 = vadd.f32 %v2225, %v2808
      %v3075 = vadd.f32 %v2230, %v2813
      %v3076 = vadd.f32 %v2233, %v2816
      %v3077 = vadd.f32 %v2238, %v2821
      %v3078 = vadd.f32 %v2241, %v2824
      %v3079 = vadd.f32 %v2246, %v2829
      %v3080 = vadd.f32 %v2249, %v2832
      %v3081 = vadd.f32 %v2254, %v2837
      %v3082 = vadd.f32 %v2257, %v2840
      %v3083 = vadd.f32 %v2262, %v2845
      %v3084 = vadd.f32 %v2265, %v2848
      %v3085 = vadd.f32 %v2270, %v2853
      %v3086 = vadd.f32 %v2273, %v2856
      %v3087 = vadd.f32 %v2278, %v2861
      %v3088 = vadd.f32 %v2281, %v2864
      %v3089 = vadd.f32 %v2286, %v2869
      %v3090 = vadd.f32 %v2289, %v2872
      %v3091 = vadd.f32 %v2294, %v2877
      %v3092 = vadd.f32 %v2297, %v2880
      %v3093 = vadd.f32 %v2302, %v2885
      %v3094 = vadd.f32 %v2305, %v2888
      %v3095 = vadd.f32 %v2310, %v2893
      %v3096 = vadd.f32 %v2313, %v2896
      %v3097 = vadd.f32 %v2318, %v2901
      %v3098 = vadd.f32 %v2321, %v2904
      %v3099 = vadd.f32 %v2326, %v2909
      %v3100 = vadd.f32 %v2329, %v2912
      %v3101 = vadd.f32 %v2334, %v2917
      %v3102 = vadd.f32 %v2337, %v2920
      %v3103 = vadd.f32 %v2342, %v2925
      %v3104 = vadd.f32 %v2345, %v2928
      %v3105 = vadd.f32 %v2350, %v2933
      %v3106 = vadd.f32 %v2353, %v2936
      %v3107 = vadd.f32 %v2358, %v2941
      %v3108 = vadd.f32 %v2361, %v2944
      %v3109 = vadd.f32 %v2366, %v2949
      %v3110 = vadd.f32 %v2369, %v2952
      %v3111 = vadd.f32 %v2374, %v2957
      %v3112 = vadd.f32 %v2377, %v2960
      %v3113 = vadd.f32 %v2382, %v2965
      %v3114 = vadd.f32 %v2385, %v2968
      %v3115 = vadd.f32 %v2390, %v2973
      %v3116 = vadd.f32 %v2393, %v2976
      %v3117 = vadd.f32 %v2398, %v2981
      %v3118 = vadd.f32 %v2401, %v2984
      %v3119 = vld [vmem:[%s4] sm:$0xf]
      %v3120 = vld [vmem:[%s4 + $0x4] sm:$0xf]
      %v3121 = vld [vmem:[%s4 + $0x8] sm:$0xf]
      %v3122 = vld [vmem:[%s4 + $0xc] sm:$0xf]
      %v3127 = vunpack.c.l.b16 %v3119
      %v3128 = vunpack.c.l.b16 %v3120
      %v3129 = vunpack.c.l.b16 %v3121
      %v3130 = vunpack.c.l.b16 %v3122
      %v3131 = vpack.c.b16 %v3128, %v3127
      %v3132 = vpack.c.b16 %v3130, %v3129
      %v3136 = vsel %vm873, %v787, 0
      %v3139 = vsel %vm873, %v788, 0
      %v3142 = vsel %vm873, %v789, 0
      %v3145 = vsel %vm873, %v790, 0
      %v3148 = vsel %vm873, %v791, 0
      %v3151 = vsel %vm873, %v792, 0
      %v3154 = vsel %vm873, %v793, 0
      %v3157 = vsel %vm873, %v794, 0
      %v3160 = vsel %vm873, %v795, 0
      %v3163 = vsel %vm873, %v796, 0
      %v3166 = vsel %vm873, %v797, 0
      %v3169 = vsel %vm873, %v798, 0
      %v3172 = vsel %vm873, %v799, 0
      %v3175 = vsel %vm873, %v800, 0
      %v3178 = vsel %vm873, %v801, 0
      %v3181 = vsel %vm873, %v802, 0
      %v3184 = vsel %vm873, %v803, 0
      %v3187 = vsel %vm873, %v804, 0
      %v3190 = vsel %vm873, %v805, 0
      %v3193 = vsel %vm873, %v806, 0
      %v3196 = vsel %vm873, %v807, 0
      %v3199 = vsel %vm873, %v808, 0
      %v3202 = vsel %vm873, %v809, 0
      %v3205 = vsel %vm873, %v810, 0
      %v3208 = vsel %vm873, %v811, 0
      %v3211 = vsel %vm873, %v812, 0
      %v3214 = vsel %vm873, %v813, 0
      %v3217 = vsel %vm873, %v814, 0
      %v3220 = vsel %vm873, %v815, 0
      %v3223 = vsel %vm873, %v816, 0
      %v3226 = vsel %vm873, %v817, 0
      %v3229 = vsel %vm873, %v818, 0
      %v3232 = vsel %vm873, %v819, 0
      %v3235 = vsel %vm873, %v820, 0
      %v3238 = vsel %vm873, %v821, 0
      %v3241 = vsel %vm873, %v822, 0
      %v3244 = vsel %vm873, %v823, 0
      %v3247 = vsel %vm873, %v824, 0
      %v3250 = vsel %vm873, %v825, 0
      %v3253 = vsel %vm873, %v826, 0
      %v3256 = vsel %vm873, %v827, 0
      %v3259 = vsel %vm873, %v828, 0
      %v3262 = vsel %vm873, %v829, 0
      %v3265 = vsel %vm873, %v830, 0
      %v3268 = vsel %vm873, %v831, 0
      %v3271 = vsel %vm873, %v832, 0
      %v3274 = vsel %vm873, %v833, 0
      %v3277 = vsel %vm873, %v834, 0
      %v3280 = vsel %vm873, %v835, 0
      %v3283 = vsel %vm873, %v836, 0
      %v3286 = vsel %vm873, %v837, 0
      %v3289 = vsel %vm873, %v838, 0
      %v3292 = vsel %vm873, %v839, 0
      %v3295 = vsel %vm873, %v840, 0
      %v3298 = vsel %vm873, %v841, 0
      %v3301 = vsel %vm873, %v842, 0
      %v3304 = vsel %vm873, %v843, 0
      %v3307 = vsel %vm873, %v844, 0
      %v3310 = vsel %vm873, %v845, 0
      %v3313 = vsel %vm873, %v846, 0
      %v3316 = vsel %vm873, %v847, 0
      %v3319 = vsel %vm873, %v848, 0
      %v3322 = vsel %vm873, %v849, 0
      %v3325 = vsel %vm873, %v850, 0
      %v3328 = vsel %vm873, %v851, 0
      %v3331 = vsel %vm873, %v852, 0
      %3333 = vmatprep.subr.bf16.mxu0 0
      %3334 = vmatpush1.bf16.msra.mxu0 %v3131
      %3335 = vmatprep.subr.bf16.mxu0 0
      %3336 = vmatpush1.bf16.msra.mxu0 %v3132
      %3337 = vmatprep.subr.bf16.mxu0 0
      %3338 = vmatpush1.bf16.msra.mxu0 0
      %3339 = vmatprep.subr.bf16.mxu0 0
      %3340 = vmatpush1.bf16.msra.mxu0 0
      %3341 = vmatprep.subr.bf16.mxu0 0
      %3342 = vmatpush1.bf16.msra.mxu0 0
      %3343 = vmatprep.subr.bf16.mxu0 0
      %3344 = vmatpush1.bf16.msra.mxu0 0
      %3345 = vmatprep.subr.bf16.mxu0 0
      %3346 = vmatpush1.bf16.msra.mxu0 0
      %3347 = vmatprep.subr.bf16.mxu0 0
      %3348 = vmatpush1.bf16.msra.mxu0 0
      %3349 = vmatprep.subr.bf16.mxu0 0
      %3350 = vmatpush1.bf16.msra.mxu0 0
      %3351 = vmatprep.subr.bf16.mxu0 0
      %3352 = vmatpush1.bf16.msra.mxu0 0
      %3353 = vmatprep.subr.bf16.mxu0 0
      %3354 = vmatpush1.bf16.msra.mxu0 0
      %3355 = vmatprep.subr.bf16.mxu0 0
      %3356 = vmatpush1.bf16.msra.mxu0 0
      %3357 = vmatprep.subr.bf16.mxu0 0
      %3358 = vmatpush1.bf16.msra.mxu0 0
      %3359 = vmatprep.subr.bf16.mxu0 0
      %3360 = vmatpush1.bf16.msra.mxu0 0
      %3361 = vmatprep.subr.bf16.mxu0 0
      %3362 = vmatpush1.bf16.msra.mxu0 0
      %3363 = vmatprep.subr.bf16.mxu0 0
      %3364 = vmatpush1.bf16.msra.mxu0 0
      %3365 = vmatprep.mubr.bf16.mxu0 0
      %3366 = vmatmul.mubr.bf16.gmra.mrb[0].mxu0 %v3136
      %v3367 = vpop.f32.mrb[0].mxu0
      %v3368 = vadd.f32 0.0, %v3367
      %v3369 = vpop.f32.mrb[0].mxu0
      %v3370 = vpop.f32.mrb[0].mxu0
      %v3371 = vadd.f32 0.0, %v3370
      %v3372 = vpop.f32.mrb[0].mxu0
      %3373 = vmatprep.mubr.bf16.mxu0 0
      %3374 = vmatmul.mubr.bf16.gmra.mrb[0].mxu0 %v3139
      %v3375 = vpop.f32.mrb[0].mxu0
      %v3376 = vadd.f32 0.0, %v3375
      %v3377 = vpop.f32.mrb[0].mxu0
      %v3378 = vpop.f32.mrb[0].mxu0
      %v3379 = vadd.f32 0.0, %v3378
      %v3380 = vpop.f32.mrb[0].mxu0
      %3381 = vmatprep.mubr.bf16.mxu0 0
      %3382 = vmatmul.mubr.bf16.gmra.mrb[0].mxu0 %v3142
      %v3383 = vpop.f32.mrb[0].mxu0
      %v3384 = vadd.f32 0.0, %v3383
      %v3385 = vpop.f32.mrb[0].mxu0
      %v3386 = vpop.f32.mrb[0].mxu0
      %v3387 = vadd.f32 0.0, %v3386
      %v3388 = vpop.f32.mrb[0].mxu0
      %3389 = vmatprep.mubr.bf16.mxu0 0
      %3390 = vmatmul.mubr.bf16.gmra.mrb[0].mxu0 %v3145
      %v3391 = vpop.f32.mrb[0].mxu0
      %v3392 = vadd.f32 0.0, %v3391
      %v3393 = vpop.f32.mrb[0].mxu0
      %v3394 = vpop.f32.mrb[0].mxu0
      %v3395 = vadd.f32 0.0, %v3394
      %v3396 = vpop.f32.mrb[0].mxu0
      %3397 = vmatprep.mubr.bf16.mxu0 0
      %3398 = vmatmul.mubr.bf16.gmra.mrb[0].mxu0 %v3148
      %v3399 = vpop.f32.mrb[0].mxu0
      %v3400 = vadd.f32 0.0, %v3399
      %v3401 = vpop.f32.mrb[0].mxu0
      %v3402 = vpop.f32.mrb[0].mxu0
      %v3403 = vadd.f32 0.0, %v3402
      %v3404 = vpop.f32.mrb[0].mxu0
      %3405 = vmatprep.mubr.bf16.mxu0 0
      %3406 = vmatmul.mubr.bf16.gmra.mrb[0].mxu0 %v3151
      %v3407 = vpop.f32.mrb[0].mxu0
      %v3408 = vadd.f32 0.0, %v3407
      %v3409 = vpop.f32.mrb[0].mxu0
      %v3410 = vpop.f32.mrb[0].mxu0
      %v3411 = vadd.f32 0.0, %v3410
      %v3412 = vpop.f32.mrb[0].mxu0
      %3413 = vmatprep.mubr.bf16.mxu0 0
      %3414 = vmatmul.mubr.bf16.gmra.mrb[0].mxu0 %v3154
      %v3415 = vpop.f32.mrb[0].mxu0
      %v3416 = vadd.f32 0.0, %v3415
      %v3417 = vpop.f32.mrb[0].mxu0
      %v3418 = vpop.f32.mrb[0].mxu0
      %v3419 = vadd.f32 0.0, %v3418
      %v3420 = vpop.f32.mrb[0].mxu0
      %3421 = vmatprep.mubr.bf16.mxu0 0
      %3422 = vmatmul.mubr.bf16.gmra.mrb[0].mxu0 %v3157
      %v3423 = vpop.f32.mrb[0].mxu0
      %v3424 = vadd.f32 0.0, %v3423
      %v3425 = vpop.f32.mrb[0].mxu0
      %v3426 = vpop.f32.mrb[0].mxu0
      %v3427 = vadd.f32 0.0, %v3426
      %v3428 = vpop.f32.mrb[0].mxu0
      %3429 = vmatprep.mubr.bf16.mxu0 0
      %3430 = vmatmul.mubr.bf16.gmra.mrb[0].mxu0 %v3160
      %v3431 = vpop.f32.mrb[0].mxu0
      %v3432 = vadd.f32 0.0, %v3431
      %v3433 = vpop.f32.mrb[0].mxu0
      %v3434 = vpop.f32.mrb[0].mxu0
      %v3435 = vadd.f32 0.0, %v3434
      %v3436 = vpop.f32.mrb[0].mxu0
      %3437 = vmatprep.mubr.bf16.mxu0 0
      %3438 = vmatmul.mubr.bf16.gmra.mrb[0].mxu0 %v3163
      %v3439 = vpop.f32.mrb[0].mxu0
      %v3440 = vadd.f32 0.0, %v3439
      %v3441 = vpop.f32.mrb[0].mxu0
      %v3442 = vpop.f32.mrb[0].mxu0
      %v3443 = vadd.f32 0.0, %v3442
      %v3444 = vpop.f32.mrb[0].mxu0
      %3445 = vmatprep.mubr.bf16.mxu0 0
      %3446 = vmatmul.mubr.bf16.gmra.mrb[0].mxu0 %v3166
      %v3447 = vpop.f32.mrb[0].mxu0
      %v3448 = vadd.f32 0.0, %v3447
      %v3449 = vpop.f32.mrb[0].mxu0
      %v3450 = vpop.f32.mrb[0].mxu0
      %v3451 = vadd.f32 0.0, %v3450
      %v3452 = vpop.f32.mrb[0].mxu0
      %3453 = vmatprep.mubr.bf16.mxu0 0
      %3454 = vmatmul.mubr.bf16.gmra.mrb[0].mxu0 %v3169
      %v3455 = vpop.f32.mrb[0].mxu0
      %v3456 = vadd.f32 0.0, %v3455
      %v3457 = vpop.f32.mrb[0].mxu0
      %v3458 = vpop.f32.mrb[0].mxu0
      %v3459 = vadd.f32 0.0, %v3458
      %v3460 = vpop.f32.mrb[0].mxu0
      %3461 = vmatprep.mubr.bf16.mxu0 0
      %3462 = vmatmul.mubr.bf16.gmra.mrb[0].mxu0 %v3172
      %v3463 = vpop.f32.mrb[0].mxu0
      %v3464 = vadd.f32 0.0, %v3463
      %v3465 = vpop.f32.mrb[0].mxu0
      %v3466 = vpop.f32.mrb[0].mxu0
      %v3467 = vadd.f32 0.0, %v3466
      %v3468 = vpop.f32.mrb[0].mxu0
      %3469 = vmatprep.mubr.bf16.mxu0 0
      %3470 = vmatmul.mubr.bf16.gmra.mrb[0].mxu0 %v3175
      %v3471 = vpop.f32.mrb[0].mxu0
      %v3472 = vadd.f32 0.0, %v3471
      %v3473 = vpop.f32.mrb[0].mxu0
      %v3474 = vpop.f32.mrb[0].mxu0
      %v3475 = vadd.f32 0.0, %v3474
      %v3476 = vpop.f32.mrb[0].mxu0
      %3477 = vmatprep.mubr.bf16.mxu0 0
      %3478 = vmatmul.mubr.bf16.gmra.mrb[0].mxu0 %v3178
      %v3479 = vpop.f32.mrb[0].mxu0
      %v3480 = vadd.f32 0.0, %v3479
      %v3481 = vpop.f32.mrb[0].mxu0
      %v3482 = vpop.f32.mrb[0].mxu0
      %v3483 = vadd.f32 0.0, %v3482
      %v3484 = vpop.f32.mrb[0].mxu0
      %3485 = vmatprep.mubr.bf16.mxu0 0
      %3486 = vmatmul.mubr.bf16.gmra.mrb[0].mxu0 %v3181
      %v3487 = vpop.f32.mrb[0].mxu0
      %v3488 = vadd.f32 0.0, %v3487
      %v3489 = vpop.f32.mrb[0].mxu0
      %v3490 = vpop.f32.mrb[0].mxu0
      %v3491 = vadd.f32 0.0, %v3490
      %v3492 = vpop.f32.mrb[0].mxu0
      %3493 = vmatprep.mubr.bf16.mxu0 0
      %3494 = vmatmul.mubr.bf16.gmra.mrb[0].mxu0 %v3184
      %v3495 = vpop.f32.mrb[0].mxu0
      %v3496 = vadd.f32 0.0, %v3495
      %v3497 = vpop.f32.mrb[0].mxu0
      %v3498 = vpop.f32.mrb[0].mxu0
      %v3499 = vadd.f32 0.0, %v3498
      %v3500 = vpop.f32.mrb[0].mxu0
      %3501 = vmatprep.mubr.bf16.mxu0 0
      %3502 = vmatmul.mubr.bf16.gmra.mrb[0].mxu0 %v3187
      %v3503 = vpop.f32.mrb[0].mxu0
      %v3504 = vadd.f32 0.0, %v3503
      %v3505 = vpop.f32.mrb[0].mxu0
      %v3506 = vpop.f32.mrb[0].mxu0
      %v3507 = vadd.f32 0.0, %v3506
      %v3508 = vpop.f32.mrb[0].mxu0
      %3509 = vmatprep.mubr.bf16.mxu0 0
      %3510 = vmatmul.mubr.bf16.gmra.mrb[0].mxu0 %v3190
      %v3511 = vpop.f32.mrb[0].mxu0
      %v3512 = vadd.f32 0.0, %v3511
      %v3513 = vpop.f32.mrb[0].mxu0
      %v3514 = vpop.f32.mrb[0].mxu0
      %v3515 = vadd.f32 0.0, %v3514
      %v3516 = vpop.f32.mrb[0].mxu0
      %3517 = vmatprep.mubr.bf16.mxu0 0
      %3518 = vmatmul.mubr.bf16.gmra.mrb[0].mxu0 %v3193
      %v3519 = vpop.f32.mrb[0].mxu0
      %v3520 = vadd.f32 0.0, %v3519
      %v3521 = vpop.f32.mrb[0].mxu0
      %v3522 = vpop.f32.mrb[0].mxu0
      %v3523 = vadd.f32 0.0, %v3522
      %v3524 = vpop.f32.mrb[0].mxu0
      %3525 = vmatprep.mubr.bf16.mxu0 0
      %3526 = vmatmul.mubr.bf16.gmra.mrb[0].mxu0 %v3196
      %v3527 = vpop.f32.mrb[0].mxu0
      %v3528 = vadd.f32 0.0, %v3527
      %v3529 = vpop.f32.mrb[0].mxu0
      %v3530 = vpop.f32.mrb[0].mxu0
      %v3531 = vadd.f32 0.0, %v3530
      %v3532 = vpop.f32.mrb[0].mxu0
      %3533 = vmatprep.mubr.bf16.mxu0 0
      %3534 = vmatmul.mubr.bf16.gmra.mrb[0].mxu0 %v3199
      %v3535 = vpop.f32.mrb[0].mxu0
      %v3536 = vadd.f32 0.0, %v3535
      %v3537 = vpop.f32.mrb[0].mxu0
      %v3538 = vpop.f32.mrb[0].mxu0
      %v3539 = vadd.f32 0.0, %v3538
      %v3540 = vpop.f32.mrb[0].mxu0
      %3541 = vmatprep.mubr.bf16.mxu0 0
      %3542 = vmatmul.mubr.bf16.gmra.mrb[0].mxu0 %v3202
      %v3543 = vpop.f32.mrb[0].mxu0
      %v3544 = vadd.f32 0.0, %v3543
      %v3545 = vpop.f32.mrb[0].mxu0
      %v3546 = vpop.f32.mrb[0].mxu0
      %v3547 = vadd.f32 0.0, %v3546
      %v3548 = vpop.f32.mrb[0].mxu0
      %3549 = vmatprep.mubr.bf16.mxu0 0
      %3550 = vmatmul.mubr.bf16.gmra.mrb[0].mxu0 %v3205
      %v3551 = vpop.f32.mrb[0].mxu0
      %v3552 = vadd.f32 0.0, %v3551
      %v3553 = vpop.f32.mrb[0].mxu0
      %v3554 = vpop.f32.mrb[0].mxu0
      %v3555 = vadd.f32 0.0, %v3554
      %v3556 = vpop.f32.mrb[0].mxu0
      %3557 = vmatprep.mubr.bf16.mxu0 0
      %3558 = vmatmul.mubr.bf16.gmra.mrb[0].mxu0 %v3208
      %v3559 = vpop.f32.mrb[0].mxu0
      %v3560 = vadd.f32 0.0, %v3559
      %v3561 = vpop.f32.mrb[0].mxu0
      %v3562 = vpop.f32.mrb[0].mxu0
      %v3563 = vadd.f32 0.0, %v3562
      %v3564 = vpop.f32.mrb[0].mxu0
      %3565 = vmatprep.mubr.bf16.mxu0 0
      %3566 = vmatmul.mubr.bf16.gmra.mrb[0].mxu0 %v3211
      %v3567 = vpop.f32.mrb[0].mxu0
      %v3568 = vadd.f32 0.0, %v3567
      %v3569 = vpop.f32.mrb[0].mxu0
      %v3570 = vpop.f32.mrb[0].mxu0
      %v3571 = vadd.f32 0.0, %v3570
      %v3572 = vpop.f32.mrb[0].mxu0
      %3573 = vmatprep.mubr.bf16.mxu0 0
      %3574 = vmatmul.mubr.bf16.gmra.mrb[0].mxu0 %v3214
      %v3575 = vpop.f32.mrb[0].mxu0
      %v3576 = vadd.f32 0.0, %v3575
      %v3577 = vpop.f32.mrb[0].mxu0
      %v3578 = vpop.f32.mrb[0].mxu0
      %v3579 = vadd.f32 0.0, %v3578
      %v3580 = vpop.f32.mrb[0].mxu0
      %3581 = vmatprep.mubr.bf16.mxu0 0
      %3582 = vmatmul.mubr.bf16.gmra.mrb[0].mxu0 %v3217
      %v3583 = vpop.f32.mrb[0].mxu0
      %v3584 = vadd.f32 0.0, %v3583
      %v3585 = vpop.f32.mrb[0].mxu0
      %v3586 = vpop.f32.mrb[0].mxu0
      %v3587 = vadd.f32 0.0, %v3586
      %v3588 = vpop.f32.mrb[0].mxu0
      %3589 = vmatprep.mubr.bf16.mxu0 0
      %3590 = vmatmul.mubr.bf16.gmra.mrb[0].mxu0 %v3220
      %v3591 = vpop.f32.mrb[0].mxu0
      %v3592 = vadd.f32 0.0, %v3591
      %v3593 = vpop.f32.mrb[0].mxu0
      %v3594 = vpop.f32.mrb[0].mxu0
      %v3595 = vadd.f32 0.0, %v3594
      %v3596 = vpop.f32.mrb[0].mxu0
      %3597 = vmatprep.mubr.bf16.mxu0 0
      %3598 = vmatmul.mubr.bf16.gmra.mrb[0].mxu0 %v3223
      %v3599 = vpop.f32.mrb[0].mxu0
      %v3600 = vadd.f32 0.0, %v3599
      %v3601 = vpop.f32.mrb[0].mxu0
      %v3602 = vpop.f32.mrb[0].mxu0
      %v3603 = vadd.f32 0.0, %v3602
      %v3604 = vpop.f32.mrb[0].mxu0
      %3605 = vmatprep.mubr.bf16.mxu0 0
      %3606 = vmatmul.mubr.bf16.gmra.mrb[0].mxu0 %v3226
      %v3607 = vpop.f32.mrb[0].mxu0
      %v3608 = vadd.f32 0.0, %v3607
      %v3609 = vpop.f32.mrb[0].mxu0
      %v3610 = vpop.f32.mrb[0].mxu0
      %v3611 = vadd.f32 0.0, %v3610
      %v3612 = vpop.f32.mrb[0].mxu0
      %3613 = vmatprep.mubr.bf16.mxu0 0
      %3614 = vmatmul.mubr.bf16.gmra.mrb[0].mxu0 %v3229
      %v3615 = vpop.f32.mrb[0].mxu0
      %v3616 = vadd.f32 0.0, %v3615
      %v3617 = vpop.f32.mrb[0].mxu0
      %v3618 = vpop.f32.mrb[0].mxu0
      %v3619 = vadd.f32 0.0, %v3618
      %v3620 = vpop.f32.mrb[0].mxu0
      %3621 = vmatprep.mubr.bf16.mxu0 0
      %3622 = vmatmul.mubr.bf16.gmra.mrb[0].mxu0 %v3232
      %v3623 = vpop.f32.mrb[0].mxu0
      %v3624 = vadd.f32 0.0, %v3623
      %v3625 = vpop.f32.mrb[0].mxu0
      %v3626 = vpop.f32.mrb[0].mxu0
      %v3627 = vadd.f32 0.0, %v3626
      %v3628 = vpop.f32.mrb[0].mxu0
      %3629 = vmatprep.mubr.bf16.mxu0 0
      %3630 = vmatmul.mubr.bf16.gmra.mrb[0].mxu0 %v3235
      %v3631 = vpop.f32.mrb[0].mxu0
      %v3632 = vadd.f32 0.0, %v3631
      %v3633 = vpop.f32.mrb[0].mxu0
      %v3634 = vpop.f32.mrb[0].mxu0
      %v3635 = vadd.f32 0.0, %v3634
      %v3636 = vpop.f32.mrb[0].mxu0
      %3637 = vmatprep.mubr.bf16.mxu0 0
      %3638 = vmatmul.mubr.bf16.gmra.mrb[0].mxu0 %v3238
      %v3639 = vpop.f32.mrb[0].mxu0
      %v3640 = vadd.f32 0.0, %v3639
      %v3641 = vpop.f32.mrb[0].mxu0
      %v3642 = vpop.f32.mrb[0].mxu0
      %v3643 = vadd.f32 0.0, %v3642
      %v3644 = vpop.f32.mrb[0].mxu0
      %3645 = vmatprep.mubr.bf16.mxu0 0
      %3646 = vmatmul.mubr.bf16.gmra.mrb[0].mxu0 %v3241
      %v3647 = vpop.f32.mrb[0].mxu0
      %v3648 = vadd.f32 0.0, %v3647
      %v3649 = vpop.f32.mrb[0].mxu0
      %v3650 = vpop.f32.mrb[0].mxu0
      %v3651 = vadd.f32 0.0, %v3650
      %v3652 = vpop.f32.mrb[0].mxu0
      %3653 = vmatprep.mubr.bf16.mxu0 0
      %3654 = vmatmul.mubr.bf16.gmra.mrb[0].mxu0 %v3244
      %v3655 = vpop.f32.mrb[0].mxu0
      %v3656 = vadd.f32 0.0, %v3655
      %v3657 = vpop.f32.mrb[0].mxu0
      %v3658 = vpop.f32.mrb[0].mxu0
      %v3659 = vadd.f32 0.0, %v3658
      %v3660 = vpop.f32.mrb[0].mxu0
      %3661 = vmatprep.mubr.bf16.mxu0 0
      %3662 = vmatmul.mubr.bf16.gmra.mrb[0].mxu0 %v3247
      %v3663 = vpop.f32.mrb[0].mxu0
      %v3664 = vadd.f32 0.0, %v3663
      %v3665 = vpop.f32.mrb[0].mxu0
      %v3666 = vpop.f32.mrb[0].mxu0
      %v3667 = vadd.f32 0.0, %v3666
      %v3668 = vpop.f32.mrb[0].mxu0
      %3669 = vmatprep.mubr.bf16.mxu0 0
      %3670 = vmatmul.mubr.bf16.gmra.mrb[0].mxu0 %v3250
      %v3671 = vpop.f32.mrb[0].mxu0
      %v3672 = vadd.f32 0.0, %v3671
      %v3673 = vpop.f32.mrb[0].mxu0
      %v3674 = vpop.f32.mrb[0].mxu0
      %v3675 = vadd.f32 0.0, %v3674
      %v3676 = vpop.f32.mrb[0].mxu0
      %3677 = vmatprep.mubr.bf16.mxu0 0
      %3678 = vmatmul.mubr.bf16.gmra.mrb[0].mxu0 %v3253
      %v3679 = vpop.f32.mrb[0].mxu0
      %v3680 = vadd.f32 0.0, %v3679
      %v3681 = vpop.f32.mrb[0].mxu0
      %v3682 = vpop.f32.mrb[0].mxu0
      %v3683 = vadd.f32 0.0, %v3682
      %v3684 = vpop.f32.mrb[0].mxu0
      %3685 = vmatprep.mubr.bf16.mxu0 0
      %3686 = vmatmul.mubr.bf16.gmra.mrb[0].mxu0 %v3256
      %v3687 = vpop.f32.mrb[0].mxu0
      %v3688 = vadd.f32 0.0, %v3687
      %v3689 = vpop.f32.mrb[0].mxu0
      %v3690 = vpop.f32.mrb[0].mxu0
      %v3691 = vadd.f32 0.0, %v3690
      %v3692 = vpop.f32.mrb[0].mxu0
      %3693 = vmatprep.mubr.bf16.mxu0 0
      %3694 = vmatmul.mubr.bf16.gmra.mrb[0].mxu0 %v3259
      %v3695 = vpop.f32.mrb[0].mxu0
      %v3696 = vadd.f32 0.0, %v3695
      %v3697 = vpop.f32.mrb[0].mxu0
      %v3698 = vpop.f32.mrb[0].mxu0
      %v3699 = vadd.f32 0.0, %v3698
      %v3700 = vpop.f32.mrb[0].mxu0
      %3701 = vmatprep.mubr.bf16.mxu0 0
      %3702 = vmatmul.mubr.bf16.gmra.mrb[0].mxu0 %v3262
      %v3703 = vpop.f32.mrb[0].mxu0
      %v3704 = vadd.f32 0.0, %v3703
      %v3705 = vpop.f32.mrb[0].mxu0
      %v3706 = vpop.f32.mrb[0].mxu0
      %v3707 = vadd.f32 0.0, %v3706
      %v3708 = vpop.f32.mrb[0].mxu0
      %3709 = vmatprep.mubr.bf16.mxu0 0
      %3710 = vmatmul.mubr.bf16.gmra.mrb[0].mxu0 %v3265
      %v3711 = vpop.f32.mrb[0].mxu0
      %v3712 = vadd.f32 0.0, %v3711
      %v3713 = vpop.f32.mrb[0].mxu0
      %v3714 = vpop.f32.mrb[0].mxu0
      %v3715 = vadd.f32 0.0, %v3714
      %v3716 = vpop.f32.mrb[0].mxu0
      %3717 = vmatprep.mubr.bf16.mxu0 0
      %3718 = vmatmul.mubr.bf16.gmra.mrb[0].mxu0 %v3268
      %v3719 = vpop.f32.mrb[0].mxu0
      %v3720 = vadd.f32 0.0, %v3719
      %v3721 = vpop.f32.mrb[0].mxu0
      %v3722 = vpop.f32.mrb[0].mxu0
      %v3723 = vadd.f32 0.0, %v3722
      %v3724 = vpop.f32.mrb[0].mxu0
      %3725 = vmatprep.mubr.bf16.mxu0 0
      %3726 = vmatmul.mubr.bf16.gmra.mrb[0].mxu0 %v3271
      %v3727 = vpop.f32.mrb[0].mxu0
      %v3728 = vadd.f32 0.0, %v3727
      %v3729 = vpop.f32.mrb[0].mxu0
      %v3730 = vpop.f32.mrb[0].mxu0
      %v3731 = vadd.f32 0.0, %v3730
      %v3732 = vpop.f32.mrb[0].mxu0
      %3733 = vmatprep.mubr.bf16.mxu0 0
      %3734 = vmatmul.mubr.bf16.gmra.mrb[0].mxu0 %v3274
      %v3735 = vpop.f32.mrb[0].mxu0
      %v3736 = vadd.f32 0.0, %v3735
      %v3737 = vpop.f32.mrb[0].mxu0
      %v3738 = vpop.f32.mrb[0].mxu0
      %v3739 = vadd.f32 0.0, %v3738
      %v3740 = vpop.f32.mrb[0].mxu0
      %3741 = vmatprep.mubr.bf16.mxu0 0
      %3742 = vmatmul.mubr.bf16.gmra.mrb[0].mxu0 %v3277
      %v3743 = vpop.f32.mrb[0].mxu0
      %v3744 = vadd.f32 0.0, %v3743
      %v3745 = vpop.f32.mrb[0].mxu0
      %v3746 = vpop.f32.mrb[0].mxu0
      %v3747 = vadd.f32 0.0, %v3746
      %v3748 = vpop.f32.mrb[0].mxu0
      %3749 = vmatprep.mubr.bf16.mxu0 0
      %3750 = vmatmul.mubr.bf16.gmra.mrb[0].mxu0 %v3280
      %v3751 = vpop.f32.mrb[0].mxu0
      %v3752 = vadd.f32 0.0, %v3751
      %v3753 = vpop.f32.mrb[0].mxu0
      %v3754 = vpop.f32.mrb[0].mxu0
      %v3755 = vadd.f32 0.0, %v3754
      %v3756 = vpop.f32.mrb[0].mxu0
      %3757 = vmatprep.mubr.bf16.mxu0 0
      %3758 = vmatmul.mubr.bf16.gmra.mrb[0].mxu0 %v3283
      %v3759 = vpop.f32.mrb[0].mxu0
      %v3760 = vadd.f32 0.0, %v3759
      %v3761 = vpop.f32.mrb[0].mxu0
      %v3762 = vpop.f32.mrb[0].mxu0
      %v3763 = vadd.f32 0.0, %v3762
      %v3764 = vpop.f32.mrb[0].mxu0
      %3765 = vmatprep.mubr.bf16.mxu0 0
      %3766 = vmatmul.mubr.bf16.gmra.mrb[0].mxu0 %v3286
      %v3767 = vpop.f32.mrb[0].mxu0
      %v3768 = vadd.f32 0.0, %v3767
      %v3769 = vpop.f32.mrb[0].mxu0
      %v3770 = vpop.f32.mrb[0].mxu0
      %v3771 = vadd.f32 0.0, %v3770
      %v3772 = vpop.f32.mrb[0].mxu0
      %3773 = vmatprep.mubr.bf16.mxu0 0
      %3774 = vmatmul.mubr.bf16.gmra.mrb[0].mxu0 %v3289
      %v3775 = vpop.f32.mrb[0].mxu0
      %v3776 = vadd.f32 0.0, %v3775
      %v3777 = vpop.f32.mrb[0].mxu0
      %v3778 = vpop.f32.mrb[0].mxu0
      %v3779 = vadd.f32 0.0, %v3778
      %v3780 = vpop.f32.mrb[0].mxu0
      %3781 = vmatprep.mubr.bf16.mxu0 0
      %3782 = vmatmul.mubr.bf16.gmra.mrb[0].mxu0 %v3292
      %v3783 = vpop.f32.mrb[0].mxu0
      %v3784 = vadd.f32 0.0, %v3783
      %v3785 = vpop.f32.mrb[0].mxu0
      %v3786 = vpop.f32.mrb[0].mxu0
      %v3787 = vadd.f32 0.0, %v3786
      %v3788 = vpop.f32.mrb[0].mxu0
      %3789 = vmatprep.mubr.bf16.mxu0 0
      %3790 = vmatmul.mubr.bf16.gmra.mrb[0].mxu0 %v3295
      %v3791 = vpop.f32.mrb[0].mxu0
      %v3792 = vadd.f32 0.0, %v3791
      %v3793 = vpop.f32.mrb[0].mxu0
      %v3794 = vpop.f32.mrb[0].mxu0
      %v3795 = vadd.f32 0.0, %v3794
      %v3796 = vpop.f32.mrb[0].mxu0
      %3797 = vmatprep.mubr.bf16.mxu0 0
      %3798 = vmatmul.mubr.bf16.gmra.mrb[0].mxu0 %v3298
      %v3799 = vpop.f32.mrb[0].mxu0
      %v3800 = vadd.f32 0.0, %v3799
      %v3801 = vpop.f32.mrb[0].mxu0
      %v3802 = vpop.f32.mrb[0].mxu0
      %v3803 = vadd.f32 0.0, %v3802
      %v3804 = vpop.f32.mrb[0].mxu0
      %3805 = vmatprep.mubr.bf16.mxu0 0
      %3806 = vmatmul.mubr.bf16.gmra.mrb[0].mxu0 %v3301
      %v3807 = vpop.f32.mrb[0].mxu0
      %v3808 = vadd.f32 0.0, %v3807
      %v3809 = vpop.f32.mrb[0].mxu0
      %v3810 = vpop.f32.mrb[0].mxu0
      %v3811 = vadd.f32 0.0, %v3810
      %v3812 = vpop.f32.mrb[0].mxu0
      %3813 = vmatprep.mubr.bf16.mxu0 0
      %3814 = vmatmul.mubr.bf16.gmra.mrb[0].mxu0 %v3304
      %v3815 = vpop.f32.mrb[0].mxu0
      %v3816 = vadd.f32 0.0, %v3815
      %v3817 = vpop.f32.mrb[0].mxu0
      %v3818 = vpop.f32.mrb[0].mxu0
      %v3819 = vadd.f32 0.0, %v3818
      %v3820 = vpop.f32.mrb[0].mxu0
      %3821 = vmatprep.mubr.bf16.mxu0 0
      %3822 = vmatmul.mubr.bf16.gmra.mrb[0].mxu0 %v3307
      %v3823 = vpop.f32.mrb[0].mxu0
      %v3824 = vadd.f32 0.0, %v3823
      %v3825 = vpop.f32.mrb[0].mxu0
      %v3826 = vpop.f32.mrb[0].mxu0
      %v3827 = vadd.f32 0.0, %v3826
      %v3828 = vpop.f32.mrb[0].mxu0
      %3829 = vmatprep.mubr.bf16.mxu0 0
      %3830 = vmatmul.mubr.bf16.gmra.mrb[0].mxu0 %v3310
      %v3831 = vpop.f32.mrb[0].mxu0
      %v3832 = vadd.f32 0.0, %v3831
      %v3833 = vpop.f32.mrb[0].mxu0
      %v3834 = vpop.f32.mrb[0].mxu0
      %v3835 = vadd.f32 0.0, %v3834
      %v3836 = vpop.f32.mrb[0].mxu0
      %3837 = vmatprep.mubr.bf16.mxu0 0
      %3838 = vmatmul.mubr.bf16.gmra.mrb[0].mxu0 %v3313
      %v3839 = vpop.f32.mrb[0].mxu0
      %v3840 = vadd.f32 0.0, %v3839
      %v3841 = vpop.f32.mrb[0].mxu0
      %v3842 = vpop.f32.mrb[0].mxu0
      %v3843 = vadd.f32 0.0, %v3842
      %v3844 = vpop.f32.mrb[0].mxu0
      %3845 = vmatprep.mubr.bf16.mxu0 0
      %3846 = vmatmul.mubr.bf16.gmra.mrb[0].mxu0 %v3316
      %v3847 = vpop.f32.mrb[0].mxu0
      %v3848 = vadd.f32 0.0, %v3847
      %v3849 = vpop.f32.mrb[0].mxu0
      %v3850 = vpop.f32.mrb[0].mxu0
      %v3851 = vadd.f32 0.0, %v3850
      %v3852 = vpop.f32.mrb[0].mxu0
      %3853 = vmatprep.mubr.bf16.mxu0 0
      %3854 = vmatmul.mubr.bf16.gmra.mrb[0].mxu0 %v3319
      %v3855 = vpop.f32.mrb[0].mxu0
      %v3856 = vadd.f32 0.0, %v3855
      %v3857 = vpop.f32.mrb[0].mxu0
      %v3858 = vpop.f32.mrb[0].mxu0
      %v3859 = vadd.f32 0.0, %v3858
      %v3860 = vpop.f32.mrb[0].mxu0
      %3861 = vmatprep.mubr.bf16.mxu0 0
      %3862 = vmatmul.mubr.bf16.gmra.mrb[0].mxu0 %v3322
      %v3863 = vpop.f32.mrb[0].mxu0
      %v3864 = vadd.f32 0.0, %v3863
      %v3865 = vpop.f32.mrb[0].mxu0
      %v3866 = vpop.f32.mrb[0].mxu0
      %v3867 = vadd.f32 0.0, %v3866
      %v3868 = vpop.f32.mrb[0].mxu0
      %3869 = vmatprep.mubr.bf16.mxu0 0
      %3870 = vmatmul.mubr.bf16.gmra.mrb[0].mxu0 %v3325
      %v3871 = vpop.f32.mrb[0].mxu0
      %v3872 = vadd.f32 0.0, %v3871
      %v3873 = vpop.f32.mrb[0].mxu0
      %v3874 = vpop.f32.mrb[0].mxu0
      %v3875 = vadd.f32 0.0, %v3874
      %v3876 = vpop.f32.mrb[0].mxu0
      %3877 = vmatprep.mubr.bf16.mxu0 0
      %3878 = vmatmul.mubr.bf16.gmra.mrb[0].mxu0 %v3328
      %v3879 = vpop.f32.mrb[0].mxu0
      %v3880 = vadd.f32 0.0, %v3879
      %v3881 = vpop.f32.mrb[0].mxu0
      %v3882 = vpop.f32.mrb[0].mxu0
      %v3883 = vadd.f32 0.0, %v3882
      %v3884 = vpop.f32.mrb[0].mxu0
      %3885 = vmatprep.mubr.bf16.mxu0 0
      %3886 = vmatmul.mubr.bf16.gmra.mrb[0].mxu0 %v3331
      %v3887 = vpop.f32.mrb[0].mxu0
      %v3888 = vadd.f32 0.0, %v3887
      %v3889 = vpop.f32.mrb[0].mxu0
      %v3890 = vpop.f32.mrb[0].mxu0
      %v3891 = vadd.f32 0.0, %v3890
      %v3892 = vpop.f32.mrb[0].mxu0
      %3893 = vdwg.mxu0
      %v3894 = vadd.f32 %v2987, %v3368
      %v3895 = vadd.f32 %v2988, %v3371
      %v3896 = vadd.f32 %v2989, %v3376
      %v3897 = vadd.f32 %v2990, %v3379
      %v3898 = vadd.f32 %v2991, %v3384
      %v3899 = vadd.f32 %v2992, %v3387
      %v3900 = vadd.f32 %v2993, %v3392
      %v3901 = vadd.f32 %v2994, %v3395
      %v3902 = vadd.f32 %v2995, %v3400
      %v3903 = vadd.f32 %v2996, %v3403
      %v3904 = vadd.f32 %v2997, %v3408
      %v3905 = vadd.f32 %v2998, %v3411
      %v3906 = vadd.f32 %v2999, %v3416
      %v3907 = vadd.f32 %v3000, %v3419
      %v3908 = vadd.f32 %v3001, %v3424
      %v3909 = vadd.f32 %v3002, %v3427
      %v3910 = vadd.f32 %v3003, %v3432
      %v3911 = vadd.f32 %v3004, %v3435
      %v3912 = vadd.f32 %v3005, %v3440
      %v3913 = vadd.f32 %v3006, %v3443
      %v3914 = vadd.f32 %v3007, %v3448
      %v3915 = vadd.f32 %v3008, %v3451
      %v3916 = vadd.f32 %v3009, %v3456
      %v3917 = vadd.f32 %v3010, %v3459
      %v3918 = vadd.f32 %v3011, %v3464
      %v3919 = vadd.f32 %v3012, %v3467
      %v3920 = vadd.f32 %v3013, %v3472
      %v3921 = vadd.f32 %v3014, %v3475
      %v3922 = vadd.f32 %v3015, %v3480
      %v3923 = vadd.f32 %v3016, %v3483
      %v3924 = vadd.f32 %v3017, %v3488
      %v3925 = vadd.f32 %v3018, %v3491
      %v3926 = vadd.f32 %v3019, %v3496
      %v3927 = vadd.f32 %v3020, %v3499
      %v3928 = vadd.f32 %v3021, %v3504
      %v3929 = vadd.f32 %v3022, %v3507
      %v3930 = vadd.f32 %v3023, %v3512
      %v3931 = vadd.f32 %v3024, %v3515
      %v3932 = vadd.f32 %v3025, %v3520
      %v3933 = vadd.f32 %v3026, %v3523
      %v3934 = vadd.f32 %v3027, %v3528
      %v3935 = vadd.f32 %v3028, %v3531
      %v3936 = vadd.f32 %v3029, %v3536
      %v3937 = vadd.f32 %v3030, %v3539
      %v3938 = vadd.f32 %v3031, %v3544
      %v3939 = vadd.f32 %v3032, %v3547
      %v3940 = vadd.f32 %v3033, %v3552
      %v3941 = vadd.f32 %v3034, %v3555
      %v3942 = vadd.f32 %v3035, %v3560
      %v3943 = vadd.f32 %v3036, %v3563
      %v3944 = vadd.f32 %v3037, %v3568
      %v3945 = vadd.f32 %v3038, %v3571
      %v3946 = vadd.f32 %v3039, %v3576
      %v3947 = vadd.f32 %v3040, %v3579
      %v3948 = vadd.f32 %v3041, %v3584
      %v3949 = vadd.f32 %v3042, %v3587
      %v3950 = vadd.f32 %v3043, %v3592
      %v3951 = vadd.f32 %v3044, %v3595
      %v3952 = vadd.f32 %v3045, %v3600
      %v3953 = vadd.f32 %v3046, %v3603
      %v3954 = vadd.f32 %v3047, %v3608
      %v3955 = vadd.f32 %v3048, %v3611
      %v3956 = vadd.f32 %v3049, %v3616
      %v3957 = vadd.f32 %v3050, %v3619
      %v3958 = vadd.f32 %v3051, %v3624
      %v3959 = vadd.f32 %v3052, %v3627
      %v3960 = vadd.f32 %v3053, %v3632
      %v3961 = vadd.f32 %v3054, %v3635
      %v3962 = vadd.f32 %v3055, %v3640
      %v3963 = vadd.f32 %v3056, %v3643
      %v3964 = vadd.f32 %v3057, %v3648
      %v3965 = vadd.f32 %v3058, %v3651
      %v3966 = vadd.f32 %v3059, %v3656
      %v3967 = vadd.f32 %v3060, %v3659
      %v3968 = vadd.f32 %v3061, %v3664
      %v3969 = vadd.f32 %v3062, %v3667
      %v3970 = vadd.f32 %v3063, %v3672
      %v3971 = vadd.f32 %v3064, %v3675
      %v3972 = vadd.f32 %v3065, %v3680
      %v3973 = vadd.f32 %v3066, %v3683
      %v3974 = vadd.f32 %v3067, %v3688
      %v3975 = vadd.f32 %v3068, %v3691
      %v3976 = vadd.f32 %v3069, %v3696
      %v3977 = vadd.f32 %v3070, %v3699
      %v3978 = vadd.f32 %v3071, %v3704
      %v3979 = vadd.f32 %v3072, %v3707
      %v3980 = vadd.f32 %v3073, %v3712
      %v3981 = vadd.f32 %v3074, %v3715
      %v3982 = vadd.f32 %v3075, %v3720
      %v3983 = vadd.f32 %v3076, %v3723
      %v3984 = vadd.f32 %v3077, %v3728
      %v3985 = vadd.f32 %v3078, %v3731
      %v3986 = vadd.f32 %v3079, %v3736
      %v3987 = vadd.f32 %v3080, %v3739
      %v3988 = vadd.f32 %v3081, %v3744
      %v3989 = vadd.f32 %v3082, %v3747
      %v3990 = vadd.f32 %v3083, %v3752
      %v3991 = vadd.f32 %v3084, %v3755
      %v3992 = vadd.f32 %v3085, %v3760
      %v3993 = vadd.f32 %v3086, %v3763
      %v3994 = vadd.f32 %v3087, %v3768
      %v3995 = vadd.f32 %v3088, %v3771
      %v3996 = vadd.f32 %v3089, %v3776
      %v3997 = vadd.f32 %v3090, %v3779
      %v3998 = vadd.f32 %v3091, %v3784
      %v3999 = vadd.f32 %v3092, %v3787
      %v4000 = vadd.f32 %v3093, %v3792
      %v4001 = vadd.f32 %v3094, %v3795
      %v4002 = vadd.f32 %v3095, %v3800
      %v4003 = vadd.f32 %v3096, %v3803
      %v4004 = vadd.f32 %v3097, %v3808
      %v4005 = vadd.f32 %v3098, %v3811
      %v4006 = vadd.f32 %v3099, %v3816
      %v4007 = vadd.f32 %v3100, %v3819
      %v4008 = vadd.f32 %v3101, %v3824
      %v4009 = vadd.f32 %v3102, %v3827
      %v4010 = vadd.f32 %v3103, %v3832
      %v4011 = vadd.f32 %v3104, %v3835
      %v4012 = vadd.f32 %v3105, %v3840
      %v4013 = vadd.f32 %v3106, %v3843
      %v4014 = vadd.f32 %v3107, %v3848
      %v4015 = vadd.f32 %v3108, %v3851
      %v4016 = vadd.f32 %v3109, %v3856
      %v4017 = vadd.f32 %v3110, %v3859
      %v4018 = vadd.f32 %v3111, %v3864
      %v4019 = vadd.f32 %v3112, %v3867
      %v4020 = vadd.f32 %v3113, %v3872
      %v4021 = vadd.f32 %v3114, %v3875
      %v4022 = vadd.f32 %v3115, %v3880
      %v4023 = vadd.f32 %v3116, %v3883
      %v4024 = vadd.f32 %v3117, %v3888
      %v4025 = vadd.f32 %v3118, %v3891
      %v4026 = vld [vmem:[%s5] sm:$0x1]
      %v4028 = vlaneseq
      %v4029 = vshrl.u32 %v4028, 7
      %v4030 = vsub.s32 0, %v4029
      %v4031 = vrot.slane %v4026, %v4030
      %v4033 = vadd.f32 %v3894, %v4031
      %v4034 = vadd.f32 %v3895, %v4031
      %v4035 = vadd.f32 %v3896, %v4031
      %v4036 = vadd.f32 %v3897, %v4031
      %v4037 = vadd.f32 %v3898, %v4031
      %v4038 = vadd.f32 %v3899, %v4031
      %v4039 = vadd.f32 %v3900, %v4031
      %v4040 = vadd.f32 %v3901, %v4031
      %v4041 = vadd.f32 %v3902, %v4031
      %v4042 = vadd.f32 %v3903, %v4031
      %v4043 = vadd.f32 %v3904, %v4031
      %v4044 = vadd.f32 %v3905, %v4031
      %v4045 = vadd.f32 %v3906, %v4031
      %v4046 = vadd.f32 %v3907, %v4031
      %v4047 = vadd.f32 %v3908, %v4031
      %v4048 = vadd.f32 %v3909, %v4031
      %v4049 = vadd.f32 %v3910, %v4031
      %v4050 = vadd.f32 %v3911, %v4031
      %v4051 = vadd.f32 %v3912, %v4031
      %v4052 = vadd.f32 %v3913, %v4031
      %v4053 = vadd.f32 %v3914, %v4031
      %v4054 = vadd.f32 %v3915, %v4031
      %v4055 = vadd.f32 %v3916, %v4031
      %v4056 = vadd.f32 %v3917, %v4031
      %v4057 = vadd.f32 %v3918, %v4031
      %v4058 = vadd.f32 %v3919, %v4031
      %v4059 = vadd.f32 %v3920, %v4031
      %v4060 = vadd.f32 %v3921, %v4031
      %v4061 = vadd.f32 %v3922, %v4031
      %v4062 = vadd.f32 %v3923, %v4031
      %v4063 = vadd.f32 %v3924, %v4031
      %v4064 = vadd.f32 %v3925, %v4031
      %v4065 = vadd.f32 %v3926, %v4031
      %v4066 = vadd.f32 %v3927, %v4031
      %v4067 = vadd.f32 %v3928, %v4031
      %v4068 = vadd.f32 %v3929, %v4031
      %v4069 = vadd.f32 %v3930, %v4031
      %v4070 = vadd.f32 %v3931, %v4031
      %v4071 = vadd.f32 %v3932, %v4031
      %v4072 = vadd.f32 %v3933, %v4031
      %v4073 = vadd.f32 %v3934, %v4031
      %v4074 = vadd.f32 %v3935, %v4031
      %v4075 = vadd.f32 %v3936, %v4031
      %v4076 = vadd.f32 %v3937, %v4031
      %v4077 = vadd.f32 %v3938, %v4031
      %v4078 = vadd.f32 %v3939, %v4031
      %v4079 = vadd.f32 %v3940, %v4031
      %v4080 = vadd.f32 %v3941, %v4031
      %v4081 = vadd.f32 %v3942, %v4031
      %v4082 = vadd.f32 %v3943, %v4031
      %v4083 = vadd.f32 %v3944, %v4031
      %v4084 = vadd.f32 %v3945, %v4031
      %v4085 = vadd.f32 %v3946, %v4031
      %v4086 = vadd.f32 %v3947, %v4031
      %v4087 = vadd.f32 %v3948, %v4031
      %v4088 = vadd.f32 %v3949, %v4031
      %v4089 = vadd.f32 %v3950, %v4031
      %v4090 = vadd.f32 %v3951, %v4031
      %v4091 = vadd.f32 %v3952, %v4031
      %v4092 = vadd.f32 %v3953, %v4031
      %v4093 = vadd.f32 %v3954, %v4031
      %v4094 = vadd.f32 %v3955, %v4031
      %v4095 = vadd.f32 %v3956, %v4031
      %v4096 = vadd.f32 %v3957, %v4031
      %v4097 = vadd.f32 %v3958, %v4031
      %v4098 = vadd.f32 %v3959, %v4031
      %v4099 = vadd.f32 %v3960, %v4031
      %v4100 = vadd.f32 %v3961, %v4031
      %v4101 = vadd.f32 %v3962, %v4031
      %v4102 = vadd.f32 %v3963, %v4031
      %v4103 = vadd.f32 %v3964, %v4031
      %v4104 = vadd.f32 %v3965, %v4031
      %v4105 = vadd.f32 %v3966, %v4031
      %v4106 = vadd.f32 %v3967, %v4031
      %v4107 = vadd.f32 %v3968, %v4031
      %v4108 = vadd.f32 %v3969, %v4031
      %v4109 = vadd.f32 %v3970, %v4031
      %v4110 = vadd.f32 %v3971, %v4031
      %v4111 = vadd.f32 %v3972, %v4031
      %v4112 = vadd.f32 %v3973, %v4031
      %v4113 = vadd.f32 %v3974, %v4031
      %v4114 = vadd.f32 %v3975, %v4031
      %v4115 = vadd.f32 %v3976, %v4031
      %v4116 = vadd.f32 %v3977, %v4031
      %v4117 = vadd.f32 %v3978, %v4031
      %v4118 = vadd.f32 %v3979, %v4031
      %v4119 = vadd.f32 %v3980, %v4031
      %v4120 = vadd.f32 %v3981, %v4031
      %v4121 = vadd.f32 %v3982, %v4031
      %v4122 = vadd.f32 %v3983, %v4031
      %v4123 = vadd.f32 %v3984, %v4031
      %v4124 = vadd.f32 %v3985, %v4031
      %v4125 = vadd.f32 %v3986, %v4031
      %v4126 = vadd.f32 %v3987, %v4031
      %v4127 = vadd.f32 %v3988, %v4031
      %v4128 = vadd.f32 %v3989, %v4031
      %v4129 = vadd.f32 %v3990, %v4031
      %v4130 = vadd.f32 %v3991, %v4031
      %v4131 = vadd.f32 %v3992, %v4031
      %v4132 = vadd.f32 %v3993, %v4031
      %v4133 = vadd.f32 %v3994, %v4031
      %v4134 = vadd.f32 %v3995, %v4031
      %v4135 = vadd.f32 %v3996, %v4031
      %v4136 = vadd.f32 %v3997, %v4031
      %v4137 = vadd.f32 %v3998, %v4031
      %v4138 = vadd.f32 %v3999, %v4031
      %v4139 = vadd.f32 %v4000, %v4031
      %v4140 = vadd.f32 %v4001, %v4031
      %v4141 = vadd.f32 %v4002, %v4031
      %v4142 = vadd.f32 %v4003, %v4031
      %v4143 = vadd.f32 %v4004, %v4031
      %v4144 = vadd.f32 %v4005, %v4031
      %v4145 = vadd.f32 %v4006, %v4031
      %v4146 = vadd.f32 %v4007, %v4031
      %v4147 = vadd.f32 %v4008, %v4031
      %v4148 = vadd.f32 %v4009, %v4031
      %v4149 = vadd.f32 %v4010, %v4031
      %v4150 = vadd.f32 %v4011, %v4031
      %v4151 = vadd.f32 %v4012, %v4031
      %v4152 = vadd.f32 %v4013, %v4031
      %v4153 = vadd.f32 %v4014, %v4031
      %v4154 = vadd.f32 %v4015, %v4031
      %v4155 = vadd.f32 %v4016, %v4031
      %v4156 = vadd.f32 %v4017, %v4031
      %v4157 = vadd.f32 %v4018, %v4031
      %v4158 = vadd.f32 %v4019, %v4031
      %v4159 = vadd.f32 %v4020, %v4031
      %v4160 = vadd.f32 %v4021, %v4031
      %v4161 = vadd.f32 %v4022, %v4031
      %v4162 = vadd.f32 %v4023, %v4031
      %v4163 = vadd.f32 %v4024, %v4031
      %v4164 = vadd.f32 %v4025, %v4031
      %v4165 = vmax.f32 %v4033, -30.0
      %v4166 = vmax.f32 %v4034, -30.0
      %v4167 = vmax.f32 %v4035, -30.0
      %v4168 = vmax.f32 %v4036, -30.0
      %v4169 = vmax.f32 %v4037, -30.0
      %v4170 = vmax.f32 %v4038, -30.0
      %v4171 = vmax.f32 %v4039, -30.0
      %v4172 = vmax.f32 %v4040, -30.0
      %v4173 = vmax.f32 %v4041, -30.0
      %v4174 = vmax.f32 %v4042, -30.0
      %v4175 = vmax.f32 %v4043, -30.0
      %v4176 = vmax.f32 %v4044, -30.0
      %v4177 = vmax.f32 %v4045, -30.0
      %v4178 = vmax.f32 %v4046, -30.0
      %v4179 = vmax.f32 %v4047, -30.0
      %v4180 = vmax.f32 %v4048, -30.0
      %v4181 = vmax.f32 %v4049, -30.0
      %v4182 = vmax.f32 %v4050, -30.0
      %v4183 = vmax.f32 %v4051, -30.0
      %v4184 = vmax.f32 %v4052, -30.0
      %v4185 = vmax.f32 %v4053, -30.0
      %v4186 = vmax.f32 %v4054, -30.0
      %v4187 = vmax.f32 %v4055, -30.0
      %v4188 = vmax.f32 %v4056, -30.0
      %v4189 = vmax.f32 %v4057, -30.0
      %v4190 = vmax.f32 %v4058, -30.0
      %v4191 = vmax.f32 %v4059, -30.0
      %v4192 = vmax.f32 %v4060, -30.0
      %v4193 = vmax.f32 %v4061, -30.0
      %v4194 = vmax.f32 %v4062, -30.0
      %v4195 = vmax.f32 %v4063, -30.0
      %v4196 = vmax.f32 %v4064, -30.0
      %v4197 = vmax.f32 %v4065, -30.0
      %v4198 = vmax.f32 %v4066, -30.0
      %v4199 = vmax.f32 %v4067, -30.0
      %v4200 = vmax.f32 %v4068, -30.0
      %v4201 = vmax.f32 %v4069, -30.0
      %v4202 = vmax.f32 %v4070, -30.0
      %v4203 = vmax.f32 %v4071, -30.0
      %v4204 = vmax.f32 %v4072, -30.0
      %v4205 = vmax.f32 %v4073, -30.0
      %v4206 = vmax.f32 %v4074, -30.0
      %v4207 = vmax.f32 %v4075, -30.0
      %v4208 = vmax.f32 %v4076, -30.0
      %v4209 = vmax.f32 %v4077, -30.0
      %v4210 = vmax.f32 %v4078, -30.0
      %v4211 = vmax.f32 %v4079, -30.0
      %v4212 = vmax.f32 %v4080, -30.0
      %v4213 = vmax.f32 %v4081, -30.0
      %v4214 = vmax.f32 %v4082, -30.0
      %v4215 = vmax.f32 %v4083, -30.0
      %v4216 = vmax.f32 %v4084, -30.0
      %v4217 = vmax.f32 %v4085, -30.0
      %v4218 = vmax.f32 %v4086, -30.0
      %v4219 = vmax.f32 %v4087, -30.0
      %v4220 = vmax.f32 %v4088, -30.0
      %v4221 = vmax.f32 %v4089, -30.0
      %v4222 = vmax.f32 %v4090, -30.0
      %v4223 = vmax.f32 %v4091, -30.0
      %v4224 = vmax.f32 %v4092, -30.0
      %v4225 = vmax.f32 %v4093, -30.0
      %v4226 = vmax.f32 %v4094, -30.0
      %v4227 = vmax.f32 %v4095, -30.0
      %v4228 = vmax.f32 %v4096, -30.0
      %v4229 = vmax.f32 %v4097, -30.0
      %v4230 = vmax.f32 %v4098, -30.0
      %v4231 = vmax.f32 %v4099, -30.0
      %v4232 = vmax.f32 %v4100, -30.0
      %v4233 = vmax.f32 %v4101, -30.0
      %v4234 = vmax.f32 %v4102, -30.0
      %v4235 = vmax.f32 %v4103, -30.0
      %v4236 = vmax.f32 %v4104, -30.0
      %v4237 = vmax.f32 %v4105, -30.0
      %v4238 = vmax.f32 %v4106, -30.0
      %v4239 = vmax.f32 %v4107, -30.0
      %v4240 = vmax.f32 %v4108, -30.0
      %v4241 = vmax.f32 %v4109, -30.0
      %v4242 = vmax.f32 %v4110, -30.0
      %v4243 = vmax.f32 %v4111, -30.0
      %v4244 = vmax.f32 %v4112, -30.0
      %v4245 = vmax.f32 %v4113, -30.0
      %v4246 = vmax.f32 %v4114, -30.0
      %v4247 = vmax.f32 %v4115, -30.0
      %v4248 = vmax.f32 %v4116, -30.0
      %v4249 = vmax.f32 %v4117, -30.0
      %v4250 = vmax.f32 %v4118, -30.0
      %v4251 = vmax.f32 %v4119, -30.0
      %v4252 = vmax.f32 %v4120, -30.0
      %v4253 = vmax.f32 %v4121, -30.0
      %v4254 = vmax.f32 %v4122, -30.0
      %v4255 = vmax.f32 %v4123, -30.0
      %v4256 = vmax.f32 %v4124, -30.0
      %v4257 = vmax.f32 %v4125, -30.0
      %v4258 = vmax.f32 %v4126, -30.0
      %v4259 = vmax.f32 %v4127, -30.0
      %v4260 = vmax.f32 %v4128, -30.0
      %v4261 = vmax.f32 %v4129, -30.0
      %v4262 = vmax.f32 %v4130, -30.0
      %v4263 = vmax.f32 %v4131, -30.0
      %v4264 = vmax.f32 %v4132, -30.0
      %v4265 = vmax.f32 %v4133, -30.0
      %v4266 = vmax.f32 %v4134, -30.0
      %v4267 = vmax.f32 %v4135, -30.0
      %v4268 = vmax.f32 %v4136, -30.0
      %v4269 = vmax.f32 %v4137, -30.0
      %v4270 = vmax.f32 %v4138, -30.0
      %v4271 = vmax.f32 %v4139, -30.0
      %v4272 = vmax.f32 %v4140, -30.0
      %v4273 = vmax.f32 %v4141, -30.0
      %v4274 = vmax.f32 %v4142, -30.0
      %v4275 = vmax.f32 %v4143, -30.0
      %v4276 = vmax.f32 %v4144, -30.0
      %v4277 = vmax.f32 %v4145, -30.0
      %v4278 = vmax.f32 %v4146, -30.0
      %v4279 = vmax.f32 %v4147, -30.0
      %v4280 = vmax.f32 %v4148, -30.0
      %v4281 = vmax.f32 %v4149, -30.0
      %v4282 = vmax.f32 %v4150, -30.0
      %v4283 = vmax.f32 %v4151, -30.0
      %v4284 = vmax.f32 %v4152, -30.0
      %v4285 = vmax.f32 %v4153, -30.0
      %v4286 = vmax.f32 %v4154, -30.0
      %v4287 = vmax.f32 %v4155, -30.0
      %v4288 = vmax.f32 %v4156, -30.0
      %v4289 = vmax.f32 %v4157, -30.0
      %v4290 = vmax.f32 %v4158, -30.0
      %v4291 = vmax.f32 %v4159, -30.0
      %v4292 = vmax.f32 %v4160, -30.0
      %v4293 = vmax.f32 %v4161, -30.0
      %v4294 = vmax.f32 %v4162, -30.0
      %v4295 = vmax.f32 %v4163, -30.0
      %v4296 = vmax.f32 %v4164, -30.0
      %v4297 = vmin.f32 %v4165, 30.0
      %v4298 = vmin.f32 %v4166, 30.0
      %v4299 = vmin.f32 %v4167, 30.0
      %v4300 = vmin.f32 %v4168, 30.0
      %v4301 = vmin.f32 %v4169, 30.0
      %v4302 = vmin.f32 %v4170, 30.0
      %v4303 = vmin.f32 %v4171, 30.0
      %v4304 = vmin.f32 %v4172, 30.0
      %v4305 = vmin.f32 %v4173, 30.0
      %v4306 = vmin.f32 %v4174, 30.0
      %v4307 = vmin.f32 %v4175, 30.0
      %v4308 = vmin.f32 %v4176, 30.0
      %v4309 = vmin.f32 %v4177, 30.0
      %v4310 = vmin.f32 %v4178, 30.0
      %v4311 = vmin.f32 %v4179, 30.0
      %v4312 = vmin.f32 %v4180, 30.0
      %v4313 = vmin.f32 %v4181, 30.0
      %v4314 = vmin.f32 %v4182, 30.0
      %v4315 = vmin.f32 %v4183, 30.0
      %v4316 = vmin.f32 %v4184, 30.0
      %v4317 = vmin.f32 %v4185, 30.0
      %v4318 = vmin.f32 %v4186, 30.0
      %v4319 = vmin.f32 %v4187, 30.0
      %v4320 = vmin.f32 %v4188, 30.0
      %v4321 = vmin.f32 %v4189, 30.0
      %v4322 = vmin.f32 %v4190, 30.0
      %v4323 = vmin.f32 %v4191, 30.0
      %v4324 = vmin.f32 %v4192, 30.0
      %v4325 = vmin.f32 %v4193, 30.0
      %v4326 = vmin.f32 %v4194, 30.0
      %v4327 = vmin.f32 %v4195, 30.0
      %v4328 = vmin.f32 %v4196, 30.0
      %v4329 = vmin.f32 %v4197, 30.0
      %v4330 = vmin.f32 %v4198, 30.0
      %v4331 = vmin.f32 %v4199, 30.0
      %v4332 = vmin.f32 %v4200, 30.0
      %v4333 = vmin.f32 %v4201, 30.0
      %v4334 = vmin.f32 %v4202, 30.0
      %v4335 = vmin.f32 %v4203, 30.0
      %v4336 = vmin.f32 %v4204, 30.0
      %v4337 = vmin.f32 %v4205, 30.0
      %v4338 = vmin.f32 %v4206, 30.0
      %v4339 = vmin.f32 %v4207, 30.0
      %v4340 = vmin.f32 %v4208, 30.0
      %v4341 = vmin.f32 %v4209, 30.0
      %v4342 = vmin.f32 %v4210, 30.0
      %v4343 = vmin.f32 %v4211, 30.0
      %v4344 = vmin.f32 %v4212, 30.0
      %v4345 = vmin.f32 %v4213, 30.0
      %v4346 = vmin.f32 %v4214, 30.0
      %v4347 = vmin.f32 %v4215, 30.0
      %v4348 = vmin.f32 %v4216, 30.0
      %v4349 = vmin.f32 %v4217, 30.0
      %v4350 = vmin.f32 %v4218, 30.0
      %v4351 = vmin.f32 %v4219, 30.0
      %v4352 = vmin.f32 %v4220, 30.0
      %v4353 = vmin.f32 %v4221, 30.0
      %v4354 = vmin.f32 %v4222, 30.0
      %v4355 = vmin.f32 %v4223, 30.0
      %v4356 = vmin.f32 %v4224, 30.0
      %v4357 = vmin.f32 %v4225, 30.0
      %v4358 = vmin.f32 %v4226, 30.0
      %v4359 = vmin.f32 %v4227, 30.0
      %v4360 = vmin.f32 %v4228, 30.0
      %v4361 = vmin.f32 %v4229, 30.0
      %v4362 = vmin.f32 %v4230, 30.0
      %v4363 = vmin.f32 %v4231, 30.0
      %v4364 = vmin.f32 %v4232, 30.0
      %v4365 = vmin.f32 %v4233, 30.0
      %v4366 = vmin.f32 %v4234, 30.0
      %v4367 = vmin.f32 %v4235, 30.0
      %v4368 = vmin.f32 %v4236, 30.0
      %v4369 = vmin.f32 %v4237, 30.0
      %v4370 = vmin.f32 %v4238, 30.0
      %v4371 = vmin.f32 %v4239, 30.0
      %v4372 = vmin.f32 %v4240, 30.0
      %v4373 = vmin.f32 %v4241, 30.0
      %v4374 = vmin.f32 %v4242, 30.0
      %v4375 = vmin.f32 %v4243, 30.0
      %v4376 = vmin.f32 %v4244, 30.0
      %v4377 = vmin.f32 %v4245, 30.0
      %v4378 = vmin.f32 %v4246, 30.0
      %v4379 = vmin.f32 %v4247, 30.0
      %v4380 = vmin.f32 %v4248, 30.0
      %v4381 = vmin.f32 %v4249, 30.0
      %v4382 = vmin.f32 %v4250, 30.0
      %v4383 = vmin.f32 %v4251, 30.0
      %v4384 = vmin.f32 %v4252, 30.0
      %v4385 = vmin.f32 %v4253, 30.0
      %v4386 = vmin.f32 %v4254, 30.0
      %v4387 = vmin.f32 %v4255, 30.0
      %v4388 = vmin.f32 %v4256, 30.0
      %v4389 = vmin.f32 %v4257, 30.0
      %v4390 = vmin.f32 %v4258, 30.0
      %v4391 = vmin.f32 %v4259, 30.0
      %v4392 = vmin.f32 %v4260, 30.0
      %v4393 = vmin.f32 %v4261, 30.0
      %v4394 = vmin.f32 %v4262, 30.0
      %v4395 = vmin.f32 %v4263, 30.0
      %v4396 = vmin.f32 %v4264, 30.0
      %v4397 = vmin.f32 %v4265, 30.0
      %v4398 = vmin.f32 %v4266, 30.0
      %v4399 = vmin.f32 %v4267, 30.0
      %v4400 = vmin.f32 %v4268, 30.0
      %v4401 = vmin.f32 %v4269, 30.0
      %v4402 = vmin.f32 %v4270, 30.0
      %v4403 = vmin.f32 %v4271, 30.0
      %v4404 = vmin.f32 %v4272, 30.0
      %v4405 = vmin.f32 %v4273, 30.0
      %v4406 = vmin.f32 %v4274, 30.0
      %v4407 = vmin.f32 %v4275, 30.0
      %v4408 = vmin.f32 %v4276, 30.0
      %v4409 = vmin.f32 %v4277, 30.0
      %v4410 = vmin.f32 %v4278, 30.0
      %v4411 = vmin.f32 %v4279, 30.0
      %v4412 = vmin.f32 %v4280, 30.0
      %v4413 = vmin.f32 %v4281, 30.0
      %v4414 = vmin.f32 %v4282, 30.0
      %v4415 = vmin.f32 %v4283, 30.0
      %v4416 = vmin.f32 %v4284, 30.0
      %v4417 = vmin.f32 %v4285, 30.0
      %v4418 = vmin.f32 %v4286, 30.0
      %v4419 = vmin.f32 %v4287, 30.0
      %v4420 = vmin.f32 %v4288, 30.0
      %v4421 = vmin.f32 %v4289, 30.0
      %v4422 = vmin.f32 %v4290, 30.0
      %v4423 = vmin.f32 %v4291, 30.0
      %v4424 = vmin.f32 %v4292, 30.0
      %v4425 = vmin.f32 %v4293, 30.0
      %v4426 = vmin.f32 %v4294, 30.0
      %v4427 = vmin.f32 %v4295, 30.0
      %v4428 = vmin.f32 %v4296, 30.0
      %v4429 = vsub.f32 0.0, %v4297
      %v4430 = vsub.f32 0.0, %v4298
      %v4431 = vsub.f32 0.0, %v4299
      %v4432 = vsub.f32 0.0, %v4300
      %v4433 = vsub.f32 0.0, %v4301
      %v4434 = vsub.f32 0.0, %v4302
      %v4435 = vsub.f32 0.0, %v4303
      %v4436 = vsub.f32 0.0, %v4304
      %v4437 = vsub.f32 0.0, %v4305
      %v4438 = vsub.f32 0.0, %v4306
      %v4439 = vsub.f32 0.0, %v4307
      %v4440 = vsub.f32 0.0, %v4308
      %v4441 = vsub.f32 0.0, %v4309
      %v4442 = vsub.f32 0.0, %v4310
      %v4443 = vsub.f32 0.0, %v4311
      %v4444 = vsub.f32 0.0, %v4312
      %v4445 = vsub.f32 0.0, %v4313
      %v4446 = vsub.f32 0.0, %v4314
      %v4447 = vsub.f32 0.0, %v4315
      %v4448 = vsub.f32 0.0, %v4316
      %v4449 = vsub.f32 0.0, %v4317
      %v4450 = vsub.f32 0.0, %v4318
      %v4451 = vsub.f32 0.0, %v4319
      %v4452 = vsub.f32 0.0, %v4320
      %v4453 = vsub.f32 0.0, %v4321
      %v4454 = vsub.f32 0.0, %v4322
      %v4455 = vsub.f32 0.0, %v4323
      %v4456 = vsub.f32 0.0, %v4324
      %v4457 = vsub.f32 0.0, %v4325
      %v4458 = vsub.f32 0.0, %v4326
      %v4459 = vsub.f32 0.0, %v4327
      %v4460 = vsub.f32 0.0, %v4328
      %v4461 = vsub.f32 0.0, %v4329
      %v4462 = vsub.f32 0.0, %v4330
      %v4463 = vsub.f32 0.0, %v4331
      %v4464 = vsub.f32 0.0, %v4332
      %v4465 = vsub.f32 0.0, %v4333
      %v4466 = vsub.f32 0.0, %v4334
      %v4467 = vsub.f32 0.0, %v4335
      %v4468 = vsub.f32 0.0, %v4336
      %v4469 = vsub.f32 0.0, %v4337
      %v4470 = vsub.f32 0.0, %v4338
      %v4471 = vsub.f32 0.0, %v4339
      %v4472 = vsub.f32 0.0, %v4340
      %v4473 = vsub.f32 0.0, %v4341
      %v4474 = vsub.f32 0.0, %v4342
      %v4475 = vsub.f32 0.0, %v4343
      %v4476 = vsub.f32 0.0, %v4344
      %v4477 = vsub.f32 0.0, %v4345
      %v4478 = vsub.f32 0.0, %v4346
      %v4479 = vsub.f32 0.0, %v4347
      %v4480 = vsub.f32 0.0, %v4348
      %v4481 = vsub.f32 0.0, %v4349
      %v4482 = vsub.f32 0.0, %v4350
      %v4483 = vsub.f32 0.0, %v4351
      %v4484 = vsub.f32 0.0, %v4352
      %v4485 = vsub.f32 0.0, %v4353
      %v4486 = vsub.f32 0.0, %v4354
      %v4487 = vsub.f32 0.0, %v4355
      %v4488 = vsub.f32 0.0, %v4356
      %v4489 = vsub.f32 0.0, %v4357
      %v4490 = vsub.f32 0.0, %v4358
      %v4491 = vsub.f32 0.0, %v4359
      %v4492 = vsub.f32 0.0, %v4360
      %v4493 = vsub.f32 0.0, %v4361
      %v4494 = vsub.f32 0.0, %v4362
      %v4495 = vsub.f32 0.0, %v4363
      %v4496 = vsub.f32 0.0, %v4364
      %v4497 = vsub.f32 0.0, %v4365
      %v4498 = vsub.f32 0.0, %v4366
      %v4499 = vsub.f32 0.0, %v4367
      %v4500 = vsub.f32 0.0, %v4368
      %v4501 = vsub.f32 0.0, %v4369
      %v4502 = vsub.f32 0.0, %v4370
      %v4503 = vsub.f32 0.0, %v4371
      %v4504 = vsub.f32 0.0, %v4372
      %v4505 = vsub.f32 0.0, %v4373
      %v4506 = vsub.f32 0.0, %v4374
      %v4507 = vsub.f32 0.0, %v4375
      %v4508 = vsub.f32 0.0, %v4376
      %v4509 = vsub.f32 0.0, %v4377
      %v4510 = vsub.f32 0.0, %v4378
      %v4511 = vsub.f32 0.0, %v4379
      %v4512 = vsub.f32 0.0, %v4380
      %v4513 = vsub.f32 0.0, %v4381
      %v4514 = vsub.f32 0.0, %v4382
      %v4515 = vsub.f32 0.0, %v4383
      %v4516 = vsub.f32 0.0, %v4384
      %v4517 = vsub.f32 0.0, %v4385
      %v4518 = vsub.f32 0.0, %v4386
      %v4519 = vsub.f32 0.0, %v4387
      %v4520 = vsub.f32 0.0, %v4388
      %v4521 = vsub.f32 0.0, %v4389
      %v4522 = vsub.f32 0.0, %v4390
      %v4523 = vsub.f32 0.0, %v4391
      %v4524 = vsub.f32 0.0, %v4392
      %v4525 = vsub.f32 0.0, %v4393
      %v4526 = vsub.f32 0.0, %v4394
      %v4527 = vsub.f32 0.0, %v4395
      %v4528 = vsub.f32 0.0, %v4396
      %v4529 = vsub.f32 0.0, %v4397
      %v4530 = vsub.f32 0.0, %v4398
      %v4531 = vsub.f32 0.0, %v4399
      %v4532 = vsub.f32 0.0, %v4400
      %v4533 = vsub.f32 0.0, %v4401
      %v4534 = vsub.f32 0.0, %v4402
      %v4535 = vsub.f32 0.0, %v4403
      %v4536 = vsub.f32 0.0, %v4404
      %v4537 = vsub.f32 0.0, %v4405
      %v4538 = vsub.f32 0.0, %v4406
      %v4539 = vsub.f32 0.0, %v4407
      %v4540 = vsub.f32 0.0, %v4408
      %v4541 = vsub.f32 0.0, %v4409
      %v4542 = vsub.f32 0.0, %v4410
      %v4543 = vsub.f32 0.0, %v4411
      %v4544 = vsub.f32 0.0, %v4412
      %v4545 = vsub.f32 0.0, %v4413
      %v4546 = vsub.f32 0.0, %v4414
      %v4547 = vsub.f32 0.0, %v4415
      %v4548 = vsub.f32 0.0, %v4416
      %v4549 = vsub.f32 0.0, %v4417
      %v4550 = vsub.f32 0.0, %v4418
      %v4551 = vsub.f32 0.0, %v4419
      %v4552 = vsub.f32 0.0, %v4420
      %v4553 = vsub.f32 0.0, %v4421
      %v4554 = vsub.f32 0.0, %v4422
      %v4555 = vsub.f32 0.0, %v4423
      %v4556 = vsub.f32 0.0, %v4424
      %v4557 = vsub.f32 0.0, %v4425
      %v4558 = vsub.f32 0.0, %v4426
      %v4559 = vsub.f32 0.0, %v4427
      %v4560 = vsub.f32 0.0, %v4428
      %v4561 = vmul.f32 %v4429, 1.442695
      %v4562 = vpow.pop %v4561
      %v4563 = vmul.f32 %v4430, 1.442695
      %v4564 = vpow.pop %v4563
      %v4565 = vmul.f32 %v4431, 1.442695
      %v4566 = vpow.pop %v4565
      %v4567 = vmul.f32 %v4432, 1.442695
      %v4568 = vpow.pop %v4567
      %v4569 = vmul.f32 %v4433, 1.442695
      %v4570 = vpow.pop %v4569
      %v4571 = vmul.f32 %v4434, 1.442695
      %v4572 = vpow.pop %v4571
      %v4573 = vmul.f32 %v4435, 1.442695
      %v4574 = vpow.pop %v4573
      %v4575 = vmul.f32 %v4436, 1.442695
      %v4576 = vpow.pop %v4575
      %v4577 = vmul.f32 %v4437, 1.442695
      %v4578 = vpow.pop %v4577
      %v4579 = vmul.f32 %v4438, 1.442695
      %v4580 = vpow.pop %v4579
      %v4581 = vmul.f32 %v4439, 1.442695
      %v4582 = vpow.pop %v4581
      %v4583 = vmul.f32 %v4440, 1.442695
      %v4584 = vpow.pop %v4583
      %v4585 = vmul.f32 %v4441, 1.442695
      %v4586 = vpow.pop %v4585
      %v4587 = vmul.f32 %v4442, 1.442695
      %v4588 = vpow.pop %v4587
      %v4589 = vmul.f32 %v4443, 1.442695
      %v4590 = vpow.pop %v4589
      %v4591 = vmul.f32 %v4444, 1.442695
      %v4592 = vpow.pop %v4591
      %v4593 = vmul.f32 %v4445, 1.442695
      %v4594 = vpow.pop %v4593
      %v4595 = vmul.f32 %v4446, 1.442695
      %v4596 = vpow.pop %v4595
      %v4597 = vmul.f32 %v4447, 1.442695
      %v4598 = vpow.pop %v4597
      %v4599 = vmul.f32 %v4448, 1.442695
      %v4600 = vpow.pop %v4599
      %v4601 = vmul.f32 %v4449, 1.442695
      %v4602 = vpow.pop %v4601
      %v4603 = vmul.f32 %v4450, 1.442695
      %v4604 = vpow.pop %v4603
      %v4605 = vmul.f32 %v4451, 1.442695
      %v4606 = vpow.pop %v4605
      %v4607 = vmul.f32 %v4452, 1.442695
      %v4608 = vpow.pop %v4607
      %v4609 = vmul.f32 %v4453, 1.442695
      %v4610 = vpow.pop %v4609
      %v4611 = vmul.f32 %v4454, 1.442695
      %v4612 = vpow.pop %v4611
      %v4613 = vmul.f32 %v4455, 1.442695
      %v4614 = vpow.pop %v4613
      %v4615 = vmul.f32 %v4456, 1.442695
      %v4616 = vpow.pop %v4615
      %v4617 = vmul.f32 %v4457, 1.442695
      %v4618 = vpow.pop %v4617
      %v4619 = vmul.f32 %v4458, 1.442695
      %v4620 = vpow.pop %v4619
      %v4621 = vmul.f32 %v4459, 1.442695
      %v4622 = vpow.pop %v4621
      %v4623 = vmul.f32 %v4460, 1.442695
      %v4624 = vpow.pop %v4623
      %v4625 = vmul.f32 %v4461, 1.442695
      %v4626 = vpow.pop %v4625
      %v4627 = vmul.f32 %v4462, 1.442695
      %v4628 = vpow.pop %v4627
      %v4629 = vmul.f32 %v4463, 1.442695
      %v4630 = vpow.pop %v4629
      %v4631 = vmul.f32 %v4464, 1.442695
      %v4632 = vpow.pop %v4631
      %v4633 = vmul.f32 %v4465, 1.442695
      %v4634 = vpow.pop %v4633
      %v4635 = vmul.f32 %v4466, 1.442695
      %v4636 = vpow.pop %v4635
      %v4637 = vmul.f32 %v4467, 1.442695
      %v4638 = vpow.pop %v4637
      %v4639 = vmul.f32 %v4468, 1.442695
      %v4640 = vpow.pop %v4639
      %v4641 = vmul.f32 %v4469, 1.442695
      %v4642 = vpow.pop %v4641
      %v4643 = vmul.f32 %v4470, 1.442695
      %v4644 = vpow.pop %v4643
      %v4645 = vmul.f32 %v4471, 1.442695
      %v4646 = vpow.pop %v4645
      %v4647 = vmul.f32 %v4472, 1.442695
      %v4648 = vpow.pop %v4647
      %v4649 = vmul.f32 %v4473, 1.442695
      %v4650 = vpow.pop %v4649
      %v4651 = vmul.f32 %v4474, 1.442695
      %v4652 = vpow.pop %v4651
      %v4653 = vmul.f32 %v4475, 1.442695
      %v4654 = vpow.pop %v4653
      %v4655 = vmul.f32 %v4476, 1.442695
      %v4656 = vpow.pop %v4655
      %v4657 = vmul.f32 %v4477, 1.442695
      %v4658 = vpow.pop %v4657
      %v4659 = vmul.f32 %v4478, 1.442695
      %v4660 = vpow.pop %v4659
      %v4661 = vmul.f32 %v4479, 1.442695
      %v4662 = vpow.pop %v4661
      %v4663 = vmul.f32 %v4480, 1.442695
      %v4664 = vpow.pop %v4663
      %v4665 = vmul.f32 %v4481, 1.442695
      %v4666 = vpow.pop %v4665
      %v4667 = vmul.f32 %v4482, 1.442695
      %v4668 = vpow.pop %v4667
      %v4669 = vmul.f32 %v4483, 1.442695
      %v4670 = vpow.pop %v4669
      %v4671 = vmul.f32 %v4484, 1.442695
      %v4672 = vpow.pop %v4671
      %v4673 = vmul.f32 %v4485, 1.442695
      %v4674 = vpow.pop %v4673
      %v4675 = vmul.f32 %v4486, 1.442695
      %v4676 = vpow.pop %v4675
      %v4677 = vmul.f32 %v4487, 1.442695
      %v4678 = vpow.pop %v4677
      %v4679 = vmul.f32 %v4488, 1.442695
      %v4680 = vpow.pop %v4679
      %v4681 = vmul.f32 %v4489, 1.442695
      %v4682 = vpow.pop %v4681
      %v4683 = vmul.f32 %v4490, 1.442695
      %v4684 = vpow.pop %v4683
      %v4685 = vmul.f32 %v4491, 1.442695
      %v4686 = vpow.pop %v4685
      %v4687 = vmul.f32 %v4492, 1.442695
      %v4688 = vpow.pop %v4687
      %v4689 = vmul.f32 %v4493, 1.442695
      %v4690 = vpow.pop %v4689
      %v4691 = vmul.f32 %v4494, 1.442695
      %v4692 = vpow.pop %v4691
      %v4693 = vmul.f32 %v4495, 1.442695
      %v4694 = vpow.pop %v4693
      %v4695 = vmul.f32 %v4496, 1.442695
      %v4696 = vpow.pop %v4695
      %v4697 = vmul.f32 %v4497, 1.442695
      %v4698 = vpow.pop %v4697
      %v4699 = vmul.f32 %v4498, 1.442695
      %v4700 = vpow.pop %v4699
      %v4701 = vmul.f32 %v4499, 1.442695
      %v4702 = vpow.pop %v4701
      %v4703 = vmul.f32 %v4500, 1.442695
      %v4704 = vpow.pop %v4703
      %v4705 = vmul.f32 %v4501, 1.442695
      %v4706 = vpow.pop %v4705
      %v4707 = vmul.f32 %v4502, 1.442695
      %v4708 = vpow.pop %v4707
      %v4709 = vmul.f32 %v4503, 1.442695
      %v4710 = vpow.pop %v4709
      %v4711 = vmul.f32 %v4504, 1.442695
      %v4712 = vpow.pop %v4711
      %v4713 = vmul.f32 %v4505, 1.442695
      %v4714 = vpow.pop %v4713
      %v4715 = vmul.f32 %v4506, 1.442695
      %v4716 = vpow.pop %v4715
      %v4717 = vmul.f32 %v4507, 1.442695
      %v4718 = vpow.pop %v4717
      %v4719 = vmul.f32 %v4508, 1.442695
      %v4720 = vpow.pop %v4719
      %v4721 = vmul.f32 %v4509, 1.442695
      %v4722 = vpow.pop %v4721
      %v4723 = vmul.f32 %v4510, 1.442695
      %v4724 = vpow.pop %v4723
      %v4725 = vmul.f32 %v4511, 1.442695
      %v4726 = vpow.pop %v4725
      %v4727 = vmul.f32 %v4512, 1.442695
      %v4728 = vpow.pop %v4727
      %v4729 = vmul.f32 %v4513, 1.442695
      %v4730 = vpow.pop %v4729
      %v4731 = vmul.f32 %v4514, 1.442695
      %v4732 = vpow.pop %v4731
      %v4733 = vmul.f32 %v4515, 1.442695
      %v4734 = vpow.pop %v4733
      %v4735 = vmul.f32 %v4516, 1.442695
      %v4736 = vpow.pop %v4735
      %v4737 = vmul.f32 %v4517, 1.442695
      %v4738 = vpow.pop %v4737
      %v4739 = vmul.f32 %v4518, 1.442695
      %v4740 = vpow.pop %v4739
      %v4741 = vmul.f32 %v4519, 1.442695
      %v4742 = vpow.pop %v4741
      %v4743 = vmul.f32 %v4520, 1.442695
      %v4744 = vpow.pop %v4743
      %v4745 = vmul.f32 %v4521, 1.442695
      %v4746 = vpow.pop %v4745
      %v4747 = vmul.f32 %v4522, 1.442695
      %v4748 = vpow.pop %v4747
      %v4749 = vmul.f32 %v4523, 1.442695
      %v4750 = vpow.pop %v4749
      %v4751 = vmul.f32 %v4524, 1.442695
      %v4752 = vpow.pop %v4751
      %v4753 = vmul.f32 %v4525, 1.442695
      %v4754 = vpow.pop %v4753
      %v4755 = vmul.f32 %v4526, 1.442695
      %v4756 = vpow.pop %v4755
      %v4757 = vmul.f32 %v4527, 1.442695
      %v4758 = vpow.pop %v4757
      %v4759 = vmul.f32 %v4528, 1.442695
      %v4760 = vpow.pop %v4759
      %v4761 = vmul.f32 %v4529, 1.442695
      %v4762 = vpow.pop %v4761
      %v4763 = vmul.f32 %v4530, 1.442695
      %v4764 = vpow.pop %v4763
      %v4765 = vmul.f32 %v4531, 1.442695
      %v4766 = vpow.pop %v4765
      %v4767 = vmul.f32 %v4532, 1.442695
      %v4768 = vpow.pop %v4767
      %v4769 = vmul.f32 %v4533, 1.442695
      %v4770 = vpow.pop %v4769
      %v4771 = vmul.f32 %v4534, 1.442695
      %v4772 = vpow.pop %v4771
      %v4773 = vmul.f32 %v4535, 1.442695
      %v4774 = vpow.pop %v4773
      %v4775 = vmul.f32 %v4536, 1.442695
      %v4776 = vpow.pop %v4775
      %v4777 = vmul.f32 %v4537, 1.442695
      %v4778 = vpow.pop %v4777
      %v4779 = vmul.f32 %v4538, 1.442695
      %v4780 = vpow.pop %v4779
      %v4781 = vmul.f32 %v4539, 1.442695
      %v4782 = vpow.pop %v4781
      %v4783 = vmul.f32 %v4540, 1.442695
      %v4784 = vpow.pop %v4783
      %v4785 = vmul.f32 %v4541, 1.442695
      %v4786 = vpow.pop %v4785
      %v4787 = vmul.f32 %v4542, 1.442695
      %v4788 = vpow.pop %v4787
      %v4789 = vmul.f32 %v4543, 1.442695
      %v4790 = vpow.pop %v4789
      %v4791 = vmul.f32 %v4544, 1.442695
      %v4792 = vpow.pop %v4791
      %v4793 = vmul.f32 %v4545, 1.442695
      %v4794 = vpow.pop %v4793
      %v4795 = vmul.f32 %v4546, 1.442695
      %v4796 = vpow.pop %v4795
      %v4797 = vmul.f32 %v4547, 1.442695
      %v4798 = vpow.pop %v4797
      %v4799 = vmul.f32 %v4548, 1.442695
      %v4800 = vpow.pop %v4799
      %v4801 = vmul.f32 %v4549, 1.442695
      %v4802 = vpow.pop %v4801
      %v4803 = vmul.f32 %v4550, 1.442695
      %v4804 = vpow.pop %v4803
      %v4805 = vmul.f32 %v4551, 1.442695
      %v4806 = vpow.pop %v4805
      %v4807 = vmul.f32 %v4552, 1.442695
      %v4808 = vpow.pop %v4807
      %v4809 = vmul.f32 %v4553, 1.442695
      %v4810 = vpow.pop %v4809
      %v4811 = vmul.f32 %v4554, 1.442695
      %v4812 = vpow.pop %v4811
      %v4813 = vmul.f32 %v4555, 1.442695
      %v4814 = vpow.pop %v4813
      %v4815 = vmul.f32 %v4556, 1.442695
      %v4816 = vpow.pop %v4815
      %v4817 = vmul.f32 %v4557, 1.442695
      %v4818 = vpow.pop %v4817
      %v4819 = vmul.f32 %v4558, 1.442695
      %v4820 = vpow.pop %v4819
      %v4821 = vmul.f32 %v4559, 1.442695
      %v4822 = vpow.pop %v4821
      %v4823 = vmul.f32 %v4560, 1.442695
      %v4824 = vpow.pop %v4823
      %v4825 = vadd.f32 %v4562, 1.0
      %v4826 = vadd.f32 %v4564, 1.0
      %v4827 = vadd.f32 %v4566, 1.0
      %v4828 = vadd.f32 %v4568, 1.0
      %v4829 = vadd.f32 %v4570, 1.0
      %v4830 = vadd.f32 %v4572, 1.0
      %v4831 = vadd.f32 %v4574, 1.0
      %v4832 = vadd.f32 %v4576, 1.0
      %v4833 = vadd.f32 %v4578, 1.0
      %v4834 = vadd.f32 %v4580, 1.0
      %v4835 = vadd.f32 %v4582, 1.0
      %v4836 = vadd.f32 %v4584, 1.0
      %v4837 = vadd.f32 %v4586, 1.0
      %v4838 = vadd.f32 %v4588, 1.0
      %v4839 = vadd.f32 %v4590, 1.0
      %v4840 = vadd.f32 %v4592, 1.0
      %v4841 = vadd.f32 %v4594, 1.0
      %v4842 = vadd.f32 %v4596, 1.0
      %v4843 = vadd.f32 %v4598, 1.0
      %v4844 = vadd.f32 %v4600, 1.0
      %v4845 = vadd.f32 %v4602, 1.0
      %v4846 = vadd.f32 %v4604, 1.0
      %v4847 = vadd.f32 %v4606, 1.0
      %v4848 = vadd.f32 %v4608, 1.0
      %v4849 = vadd.f32 %v4610, 1.0
      %v4850 = vadd.f32 %v4612, 1.0
      %v4851 = vadd.f32 %v4614, 1.0
      %v4852 = vadd.f32 %v4616, 1.0
      %v4853 = vadd.f32 %v4618, 1.0
      %v4854 = vadd.f32 %v4620, 1.0
      %v4855 = vadd.f32 %v4622, 1.0
      %v4856 = vadd.f32 %v4624, 1.0
      %v4857 = vadd.f32 %v4626, 1.0
      %v4858 = vadd.f32 %v4628, 1.0
      %v4859 = vadd.f32 %v4630, 1.0
      %v4860 = vadd.f32 %v4632, 1.0
      %v4861 = vadd.f32 %v4634, 1.0
      %v4862 = vadd.f32 %v4636, 1.0
      %v4863 = vadd.f32 %v4638, 1.0
      %v4864 = vadd.f32 %v4640, 1.0
      %v4865 = vadd.f32 %v4642, 1.0
      %v4866 = vadd.f32 %v4644, 1.0
      %v4867 = vadd.f32 %v4646, 1.0
      %v4868 = vadd.f32 %v4648, 1.0
      %v4869 = vadd.f32 %v4650, 1.0
      %v4870 = vadd.f32 %v4652, 1.0
      %v4871 = vadd.f32 %v4654, 1.0
      %v4872 = vadd.f32 %v4656, 1.0
      %v4873 = vadd.f32 %v4658, 1.0
      %v4874 = vadd.f32 %v4660, 1.0
      %v4875 = vadd.f32 %v4662, 1.0
      %v4876 = vadd.f32 %v4664, 1.0
      %v4877 = vadd.f32 %v4666, 1.0
      %v4878 = vadd.f32 %v4668, 1.0
      %v4879 = vadd.f32 %v4670, 1.0
      %v4880 = vadd.f32 %v4672, 1.0
      %v4881 = vadd.f32 %v4674, 1.0
      %v4882 = vadd.f32 %v4676, 1.0
      %v4883 = vadd.f32 %v4678, 1.0
      %v4884 = vadd.f32 %v4680, 1.0
      %v4885 = vadd.f32 %v4682, 1.0
      %v4886 = vadd.f32 %v4684, 1.0
      %v4887 = vadd.f32 %v4686, 1.0
      %v4888 = vadd.f32 %v4688, 1.0
      %v4889 = vadd.f32 %v4690, 1.0
      %v4890 = vadd.f32 %v4692, 1.0
      %v4891 = vadd.f32 %v4694, 1.0
      %v4892 = vadd.f32 %v4696, 1.0
      %v4893 = vadd.f32 %v4698, 1.0
      %v4894 = vadd.f32 %v4700, 1.0
      %v4895 = vadd.f32 %v4702, 1.0
      %v4896 = vadd.f32 %v4704, 1.0
      %v4897 = vadd.f32 %v4706, 1.0
      %v4898 = vadd.f32 %v4708, 1.0
      %v4899 = vadd.f32 %v4710, 1.0
      %v4900 = vadd.f32 %v4712, 1.0
      %v4901 = vadd.f32 %v4714, 1.0
      %v4902 = vadd.f32 %v4716, 1.0
      %v4903 = vadd.f32 %v4718, 1.0
      %v4904 = vadd.f32 %v4720, 1.0
      %v4905 = vadd.f32 %v4722, 1.0
      %v4906 = vadd.f32 %v4724, 1.0
      %v4907 = vadd.f32 %v4726, 1.0
      %v4908 = vadd.f32 %v4728, 1.0
      %v4909 = vadd.f32 %v4730, 1.0
      %v4910 = vadd.f32 %v4732, 1.0
      %v4911 = vadd.f32 %v4734, 1.0
      %v4912 = vadd.f32 %v4736, 1.0
      %v4913 = vadd.f32 %v4738, 1.0
      %v4914 = vadd.f32 %v4740, 1.0
      %v4915 = vadd.f32 %v4742, 1.0
      %v4916 = vadd.f32 %v4744, 1.0
      %v4917 = vadd.f32 %v4746, 1.0
      %v4918 = vadd.f32 %v4748, 1.0
      %v4919 = vadd.f32 %v4750, 1.0
      %v4920 = vadd.f32 %v4752, 1.0
      %v4921 = vadd.f32 %v4754, 1.0
      %v4922 = vadd.f32 %v4756, 1.0
      %v4923 = vadd.f32 %v4758, 1.0
      %v4924 = vadd.f32 %v4760, 1.0
      %v4925 = vadd.f32 %v4762, 1.0
      %v4926 = vadd.f32 %v4764, 1.0
      %v4927 = vadd.f32 %v4766, 1.0
      %v4928 = vadd.f32 %v4768, 1.0
      %v4929 = vadd.f32 %v4770, 1.0
      %v4930 = vadd.f32 %v4772, 1.0
      %v4931 = vadd.f32 %v4774, 1.0
      %v4932 = vadd.f32 %v4776, 1.0
      %v4933 = vadd.f32 %v4778, 1.0
      %v4934 = vadd.f32 %v4780, 1.0
      %v4935 = vadd.f32 %v4782, 1.0
      %v4936 = vadd.f32 %v4784, 1.0
      %v4937 = vadd.f32 %v4786, 1.0
      %v4938 = vadd.f32 %v4788, 1.0
      %v4939 = vadd.f32 %v4790, 1.0
      %v4940 = vadd.f32 %v4792, 1.0
      %v4941 = vadd.f32 %v4794, 1.0
      %v4942 = vadd.f32 %v4796, 1.0
      %v4943 = vadd.f32 %v4798, 1.0
      %v4944 = vadd.f32 %v4800, 1.0
      %v4945 = vadd.f32 %v4802, 1.0
      %v4946 = vadd.f32 %v4804, 1.0
      %v4947 = vadd.f32 %v4806, 1.0
      %v4948 = vadd.f32 %v4808, 1.0
      %v4949 = vadd.f32 %v4810, 1.0
      %v4950 = vadd.f32 %v4812, 1.0
      %v4951 = vadd.f32 %v4814, 1.0
      %v4952 = vadd.f32 %v4816, 1.0
      %v4953 = vadd.f32 %v4818, 1.0
      %v4954 = vadd.f32 %v4820, 1.0
      %v4955 = vadd.f32 %v4822, 1.0
      %v4956 = vadd.f32 %v4824, 1.0
      %v4957 = vrcp.pop %v4825
      %v4958 = vmul.f32 1.0, %v4957
      %v4959 = vrcp.pop %v4826
      %v4960 = vmul.f32 1.0, %v4959
      %v4961 = vrcp.pop %v4827
      %v4962 = vmul.f32 1.0, %v4961
      %v4963 = vrcp.pop %v4828
      %v4964 = vmul.f32 1.0, %v4963
      %v4965 = vrcp.pop %v4829
      %v4966 = vmul.f32 1.0, %v4965
      %v4967 = vrcp.pop %v4830
      %v4968 = vmul.f32 1.0, %v4967
      %v4969 = vrcp.pop %v4831
      %v4970 = vmul.f32 1.0, %v4969
      %v4971 = vrcp.pop %v4832
      %v4972 = vmul.f32 1.0, %v4971
      %v4973 = vrcp.pop %v4833
      %v4974 = vmul.f32 1.0, %v4973
      %v4975 = vrcp.pop %v4834
      %v4976 = vmul.f32 1.0, %v4975
      %v4977 = vrcp.pop %v4835
      %v4978 = vmul.f32 1.0, %v4977
      %v4979 = vrcp.pop %v4836
      %v4980 = vmul.f32 1.0, %v4979
      %v4981 = vrcp.pop %v4837
      %v4982 = vmul.f32 1.0, %v4981
      %v4983 = vrcp.pop %v4838
      %v4984 = vmul.f32 1.0, %v4983
      %v4985 = vrcp.pop %v4839
      %v4986 = vmul.f32 1.0, %v4985
      %v4987 = vrcp.pop %v4840
      %v4988 = vmul.f32 1.0, %v4987
      %v4989 = vrcp.pop %v4841
      %v4990 = vmul.f32 1.0, %v4989
      %v4991 = vrcp.pop %v4842
      %v4992 = vmul.f32 1.0, %v4991
      %v4993 = vrcp.pop %v4843
      %v4994 = vmul.f32 1.0, %v4993
      %v4995 = vrcp.pop %v4844
      %v4996 = vmul.f32 1.0, %v4995
      %v4997 = vrcp.pop %v4845
      %v4998 = vmul.f32 1.0, %v4997
      %v4999 = vrcp.pop %v4846
      %v5000 = vmul.f32 1.0, %v4999
      %v5001 = vrcp.pop %v4847
      %v5002 = vmul.f32 1.0, %v5001
      %v5003 = vrcp.pop %v4848
      %v5004 = vmul.f32 1.0, %v5003
      %v5005 = vrcp.pop %v4849
      %v5006 = vmul.f32 1.0, %v5005
      %v5007 = vrcp.pop %v4850
      %v5008 = vmul.f32 1.0, %v5007
      %v5009 = vrcp.pop %v4851
      %v5010 = vmul.f32 1.0, %v5009
      %v5011 = vrcp.pop %v4852
      %v5012 = vmul.f32 1.0, %v5011
      %v5013 = vrcp.pop %v4853
      %v5014 = vmul.f32 1.0, %v5013
      %v5015 = vrcp.pop %v4854
      %v5016 = vmul.f32 1.0, %v5015
      %v5017 = vrcp.pop %v4855
      %v5018 = vmul.f32 1.0, %v5017
      %v5019 = vrcp.pop %v4856
      %v5020 = vmul.f32 1.0, %v5019
      %v5021 = vrcp.pop %v4857
      %v5022 = vmul.f32 1.0, %v5021
      %v5023 = vrcp.pop %v4858
      %v5024 = vmul.f32 1.0, %v5023
      %v5025 = vrcp.pop %v4859
      %v5026 = vmul.f32 1.0, %v5025
      %v5027 = vrcp.pop %v4860
      %v5028 = vmul.f32 1.0, %v5027
      %v5029 = vrcp.pop %v4861
      %v5030 = vmul.f32 1.0, %v5029
      %v5031 = vrcp.pop %v4862
      %v5032 = vmul.f32 1.0, %v5031
      %v5033 = vrcp.pop %v4863
      %v5034 = vmul.f32 1.0, %v5033
      %v5035 = vrcp.pop %v4864
      %v5036 = vmul.f32 1.0, %v5035
      %v5037 = vrcp.pop %v4865
      %v5038 = vmul.f32 1.0, %v5037
      %v5039 = vrcp.pop %v4866
      %v5040 = vmul.f32 1.0, %v5039
      %v5041 = vrcp.pop %v4867
      %v5042 = vmul.f32 1.0, %v5041
      %v5043 = vrcp.pop %v4868
      %v5044 = vmul.f32 1.0, %v5043
      %v5045 = vrcp.pop %v4869
      %v5046 = vmul.f32 1.0, %v5045
      %v5047 = vrcp.pop %v4870
      %v5048 = vmul.f32 1.0, %v5047
      %v5049 = vrcp.pop %v4871
      %v5050 = vmul.f32 1.0, %v5049
      %v5051 = vrcp.pop %v4872
      %v5052 = vmul.f32 1.0, %v5051
      %v5053 = vrcp.pop %v4873
      %v5054 = vmul.f32 1.0, %v5053
      %v5055 = vrcp.pop %v4874
      %v5056 = vmul.f32 1.0, %v5055
      %v5057 = vrcp.pop %v4875
      %v5058 = vmul.f32 1.0, %v5057
      %v5059 = vrcp.pop %v4876
      %v5060 = vmul.f32 1.0, %v5059
      %v5061 = vrcp.pop %v4877
      %v5062 = vmul.f32 1.0, %v5061
      %v5063 = vrcp.pop %v4878
      %v5064 = vmul.f32 1.0, %v5063
      %v5065 = vrcp.pop %v4879
      %v5066 = vmul.f32 1.0, %v5065
      %v5067 = vrcp.pop %v4880
      %v5068 = vmul.f32 1.0, %v5067
      %v5069 = vrcp.pop %v4881
      %v5070 = vmul.f32 1.0, %v5069
      %v5071 = vrcp.pop %v4882
      %v5072 = vmul.f32 1.0, %v5071
      %v5073 = vrcp.pop %v4883
      %v5074 = vmul.f32 1.0, %v5073
      %v5075 = vrcp.pop %v4884
      %v5076 = vmul.f32 1.0, %v5075
      %v5077 = vrcp.pop %v4885
      %v5078 = vmul.f32 1.0, %v5077
      %v5079 = vrcp.pop %v4886
      %v5080 = vmul.f32 1.0, %v5079
      %v5081 = vrcp.pop %v4887
      %v5082 = vmul.f32 1.0, %v5081
      %v5083 = vrcp.pop %v4888
      %v5084 = vmul.f32 1.0, %v5083
      %v5085 = vrcp.pop %v4889
      %v5086 = vmul.f32 1.0, %v5085
      %v5087 = vrcp.pop %v4890
      %v5088 = vmul.f32 1.0, %v5087
      %v5089 = vrcp.pop %v4891
      %v5090 = vmul.f32 1.0, %v5089
      %v5091 = vrcp.pop %v4892
      %v5092 = vmul.f32 1.0, %v5091
      %v5093 = vrcp.pop %v4893
      %v5094 = vmul.f32 1.0, %v5093
      %v5095 = vrcp.pop %v4894
      %v5096 = vmul.f32 1.0, %v5095
      %v5097 = vrcp.pop %v4895
      %v5098 = vmul.f32 1.0, %v5097
      %v5099 = vrcp.pop %v4896
      %v5100 = vmul.f32 1.0, %v5099
      %v5101 = vrcp.pop %v4897
      %v5102 = vmul.f32 1.0, %v5101
      %v5103 = vrcp.pop %v4898
      %v5104 = vmul.f32 1.0, %v5103
      %v5105 = vrcp.pop %v4899
      %v5106 = vmul.f32 1.0, %v5105
      %v5107 = vrcp.pop %v4900
      %v5108 = vmul.f32 1.0, %v5107
      %v5109 = vrcp.pop %v4901
      %v5110 = vmul.f32 1.0, %v5109
      %v5111 = vrcp.pop %v4902
      %v5112 = vmul.f32 1.0, %v5111
      %v5113 = vrcp.pop %v4903
      %v5114 = vmul.f32 1.0, %v5113
      %v5115 = vrcp.pop %v4904
      %v5116 = vmul.f32 1.0, %v5115
      %v5117 = vrcp.pop %v4905
      %v5118 = vmul.f32 1.0, %v5117
      %v5119 = vrcp.pop %v4906
      %v5120 = vmul.f32 1.0, %v5119
      %v5121 = vrcp.pop %v4907
      %v5122 = vmul.f32 1.0, %v5121
      %v5123 = vrcp.pop %v4908
      %v5124 = vmul.f32 1.0, %v5123
      %v5125 = vrcp.pop %v4909
      %v5126 = vmul.f32 1.0, %v5125
      %v5127 = vrcp.pop %v4910
      %v5128 = vmul.f32 1.0, %v5127
      %v5129 = vrcp.pop %v4911
      %v5130 = vmul.f32 1.0, %v5129
      %v5131 = vrcp.pop %v4912
      %v5132 = vmul.f32 1.0, %v5131
      %v5133 = vrcp.pop %v4913
      %v5134 = vmul.f32 1.0, %v5133
      %v5135 = vrcp.pop %v4914
      %v5136 = vmul.f32 1.0, %v5135
      %v5137 = vrcp.pop %v4915
      %v5138 = vmul.f32 1.0, %v5137
      %v5139 = vrcp.pop %v4916
      %v5140 = vmul.f32 1.0, %v5139
      %v5141 = vrcp.pop %v4917
      %v5142 = vmul.f32 1.0, %v5141
      %v5143 = vrcp.pop %v4918
      %v5144 = vmul.f32 1.0, %v5143
      %v5145 = vrcp.pop %v4919
      %v5146 = vmul.f32 1.0, %v5145
      %v5147 = vrcp.pop %v4920
      %v5148 = vmul.f32 1.0, %v5147
      %v5149 = vrcp.pop %v4921
      %v5150 = vmul.f32 1.0, %v5149
      %v5151 = vrcp.pop %v4922
      %v5152 = vmul.f32 1.0, %v5151
      %v5153 = vrcp.pop %v4923
      %v5154 = vmul.f32 1.0, %v5153
      %v5155 = vrcp.pop %v4924
      %v5156 = vmul.f32 1.0, %v5155
      %v5157 = vrcp.pop %v4925
      %v5158 = vmul.f32 1.0, %v5157
      %v5159 = vrcp.pop %v4926
      %v5160 = vmul.f32 1.0, %v5159
      %v5161 = vrcp.pop %v4927
      %v5162 = vmul.f32 1.0, %v5161
      %v5163 = vrcp.pop %v4928
      %v5164 = vmul.f32 1.0, %v5163
      %v5165 = vrcp.pop %v4929
      %v5166 = vmul.f32 1.0, %v5165
      %v5167 = vrcp.pop %v4930
      %v5168 = vmul.f32 1.0, %v5167
      %v5169 = vrcp.pop %v4931
      %v5170 = vmul.f32 1.0, %v5169
      %v5171 = vrcp.pop %v4932
      %v5172 = vmul.f32 1.0, %v5171
      %v5173 = vrcp.pop %v4933
      %v5174 = vmul.f32 1.0, %v5173
      %v5175 = vrcp.pop %v4934
      %v5176 = vmul.f32 1.0, %v5175
      %v5177 = vrcp.pop %v4935
      %v5178 = vmul.f32 1.0, %v5177
      %v5179 = vrcp.pop %v4936
      %v5180 = vmul.f32 1.0, %v5179
      %v5181 = vrcp.pop %v4937
      %v5182 = vmul.f32 1.0, %v5181
      %v5183 = vrcp.pop %v4938
      %v5184 = vmul.f32 1.0, %v5183
      %v5185 = vrcp.pop %v4939
      %v5186 = vmul.f32 1.0, %v5185
      %v5187 = vrcp.pop %v4940
      %v5188 = vmul.f32 1.0, %v5187
      %v5189 = vrcp.pop %v4941
      %v5190 = vmul.f32 1.0, %v5189
      %v5191 = vrcp.pop %v4942
      %v5192 = vmul.f32 1.0, %v5191
      %v5193 = vrcp.pop %v4943
      %v5194 = vmul.f32 1.0, %v5193
      %v5195 = vrcp.pop %v4944
      %v5196 = vmul.f32 1.0, %v5195
      %v5197 = vrcp.pop %v4945
      %v5198 = vmul.f32 1.0, %v5197
      %v5199 = vrcp.pop %v4946
      %v5200 = vmul.f32 1.0, %v5199
      %v5201 = vrcp.pop %v4947
      %v5202 = vmul.f32 1.0, %v5201
      %v5203 = vrcp.pop %v4948
      %v5204 = vmul.f32 1.0, %v5203
      %v5205 = vrcp.pop %v4949
      %v5206 = vmul.f32 1.0, %v5205
      %v5207 = vrcp.pop %v4950
      %v5208 = vmul.f32 1.0, %v5207
      %v5209 = vrcp.pop %v4951
      %v5210 = vmul.f32 1.0, %v5209
      %v5211 = vrcp.pop %v4952
      %v5212 = vmul.f32 1.0, %v5211
      %v5213 = vrcp.pop %v4953
      %v5214 = vmul.f32 1.0, %v5213
      %v5215 = vrcp.pop %v4954
      %v5216 = vmul.f32 1.0, %v5215
      %v5217 = vrcp.pop %v4955
      %v5218 = vmul.f32 1.0, %v5217
      %v5219 = vrcp.pop %v4956
      %v5220 = vmul.f32 1.0, %v5219
      %5221 = vst [vmem:[%s251] sm:$0xff] %v4958
      %5222 = vst [vmem:[%s251 + $0x8] sm:$0xff] %v4960
      %5223 = vst [vmem:[%s251 + $0x10] sm:$0xff] %v4962
      %5224 = vst [vmem:[%s251 + $0x18] sm:$0xff] %v4964
      %5225 = vst [vmem:[%s251 + $0x20] sm:$0xff] %v4966
      %5226 = vst [vmem:[%s251 + $0x28] sm:$0xff] %v4968
      %5227 = vst [vmem:[%s251 + $0x30] sm:$0xff] %v4970
      %5228 = vst [vmem:[%s251 + $0x38] sm:$0xff] %v4972
      %5229 = vst [vmem:[%s251 + $0x40] sm:$0xff] %v4974
      %5230 = vst [vmem:[%s251 + $0x48] sm:$0xff] %v4976
      %5231 = vst [vmem:[%s251 + $0x50] sm:$0xff] %v4978
      %5232 = vst [vmem:[%s251 + $0x58] sm:$0xff] %v4980
      %5233 = vst [vmem:[%s251 + $0x60] sm:$0xff] %v4982
      %5234 = vst [vmem:[%s251 + $0x68] sm:$0xff] %v4984
      %5235 = vst [vmem:[%s251 + $0x70] sm:$0xff] %v4986
      %5236 = vst [vmem:[%s251 + $0x78] sm:$0xff] %v4988
      %5237 = vst [vmem:[%s251 + $0x80] sm:$0xff] %v4990
      %5238 = vst [vmem:[%s251 + $0x88] sm:$0xff] %v4992
      %5239 = vst [vmem:[%s251 + $0x90] sm:$0xff] %v4994
      %5240 = vst [vmem:[%s251 + $0x98] sm:$0xff] %v4996
      %5241 = vst [vmem:[%s251 + $0xa0] sm:$0xff] %v4998
      %5242 = vst [vmem:[%s251 + $0xa8] sm:$0xff] %v5000
      %5243 = vst [vmem:[%s251 + $0xb0] sm:$0xff] %v5002
      %5244 = vst [vmem:[%s251 + $0xb8] sm:$0xff] %v5004
      %5245 = vst [vmem:[%s251 + $0xc0] sm:$0xff] %v5006
      %5246 = vst [vmem:[%s251 + $0xc8] sm:$0xff] %v5008
      %5247 = vst [vmem:[%s251 + $0xd0] sm:$0xff] %v5010
      %5248 = vst [vmem:[%s251 + $0xd8] sm:$0xff] %v5012
      %5249 = vst [vmem:[%s251 + $0xe0] sm:$0xff] %v5014
      %5250 = vst [vmem:[%s251 + $0xe8] sm:$0xff] %v5016
      %5251 = vst [vmem:[%s251 + $0xf0] sm:$0xff] %v5018
      %5252 = vst [vmem:[%s251 + $0xf8] sm:$0xff] %v5020
      %5253 = vst [vmem:[%s251 + $0x100] sm:$0xff] %v5022
      %5254 = vst [vmem:[%s251 + $0x108] sm:$0xff] %v5024
      %5255 = vst [vmem:[%s251 + $0x110] sm:$0xff] %v5026
      %5256 = vst [vmem:[%s251 + $0x118] sm:$0xff] %v5028
      %5257 = vst [vmem:[%s251 + $0x120] sm:$0xff] %v5030
      %5258 = vst [vmem:[%s251 + $0x128] sm:$0xff] %v5032
      %5259 = vst [vmem:[%s251 + $0x130] sm:$0xff] %v5034
      %5260 = vst [vmem:[%s251 + $0x138] sm:$0xff] %v5036
      %5261 = vst [vmem:[%s251 + $0x140] sm:$0xff] %v5038
      %5262 = vst [vmem:[%s251 + $0x148] sm:$0xff] %v5040
      %5263 = vst [vmem:[%s251 + $0x150] sm:$0xff] %v5042
      %5264 = vst [vmem:[%s251 + $0x158] sm:$0xff] %v5044
      %5265 = vst [vmem:[%s251 + $0x160] sm:$0xff] %v5046
      %5266 = vst [vmem:[%s251 + $0x168] sm:$0xff] %v5048
      %5267 = vst [vmem:[%s251 + $0x170] sm:$0xff] %v5050
      %5268 = vst [vmem:[%s251 + $0x178] sm:$0xff] %v5052
      %5269 = vst [vmem:[%s251 + $0x180] sm:$0xff] %v5054
      %5270 = vst [vmem:[%s251 + $0x188] sm:$0xff] %v5056
      %5271 = vst [vmem:[%s251 + $0x190] sm:$0xff] %v5058
      %5272 = vst [vmem:[%s251 + $0x198] sm:$0xff] %v5060
      %5273 = vst [vmem:[%s251 + $0x1a0] sm:$0xff] %v5062
      %5274 = vst [vmem:[%s251 + $0x1a8] sm:$0xff] %v5064
      %5275 = vst [vmem:[%s251 + $0x1b0] sm:$0xff] %v5066
      %5276 = vst [vmem:[%s251 + $0x1b8] sm:$0xff] %v5068
      %5277 = vst [vmem:[%s251 + $0x1c0] sm:$0xff] %v5070
      %5278 = vst [vmem:[%s251 + $0x1c8] sm:$0xff] %v5072
      %5279 = vst [vmem:[%s251 + $0x1d0] sm:$0xff] %v5074
      %5280 = vst [vmem:[%s251 + $0x1d8] sm:$0xff] %v5076
      %5281 = vst [vmem:[%s251 + $0x1e0] sm:$0xff] %v5078
      %5282 = vst [vmem:[%s251 + $0x1e8] sm:$0xff] %v5080
      %5283 = vst [vmem:[%s251 + $0x1f0] sm:$0xff] %v5082
      %5284 = vst [vmem:[%s251 + $0x1f8] sm:$0xff] %v5084
      %5285 = vst [vmem:[%s251 + $0x200] sm:$0xff] %v5086
      %5286 = vst [vmem:[%s251 + $0x208] sm:$0xff] %v5088
      %5287 = vst [vmem:[%s251 + $0x210] sm:$0xff] %v5090
      %5288 = vst [vmem:[%s251 + $0x218] sm:$0xff] %v5092
      %5289 = vst [vmem:[%s251 + $0x220] sm:$0xff] %v5094
      %5290 = vst [vmem:[%s251 + $0x228] sm:$0xff] %v5096
      %5291 = vst [vmem:[%s251 + $0x230] sm:$0xff] %v5098
      %5292 = vst [vmem:[%s251 + $0x238] sm:$0xff] %v5100
      %5293 = vst [vmem:[%s251 + $0x240] sm:$0xff] %v5102
      %5294 = vst [vmem:[%s251 + $0x248] sm:$0xff] %v5104
      %5295 = vst [vmem:[%s251 + $0x250] sm:$0xff] %v5106
      %5296 = vst [vmem:[%s251 + $0x258] sm:$0xff] %v5108
      %5297 = vst [vmem:[%s251 + $0x260] sm:$0xff] %v5110
      %5298 = vst [vmem:[%s251 + $0x268] sm:$0xff] %v5112
      %5299 = vst [vmem:[%s251 + $0x270] sm:$0xff] %v5114
      %5300 = vst [vmem:[%s251 + $0x278] sm:$0xff] %v5116
      %5301 = vst [vmem:[%s251 + $0x280] sm:$0xff] %v5118
      %5302 = vst [vmem:[%s251 + $0x288] sm:$0xff] %v5120
      %5303 = vst [vmem:[%s251 + $0x290] sm:$0xff] %v5122
      %5304 = vst [vmem:[%s251 + $0x298] sm:$0xff] %v5124
      %5305 = vst [vmem:[%s251 + $0x2a0] sm:$0xff] %v5126
      %5306 = vst [vmem:[%s251 + $0x2a8] sm:$0xff] %v5128
      %5307 = vst [vmem:[%s251 + $0x2b0] sm:$0xff] %v5130
      %5308 = vst [vmem:[%s251 + $0x2b8] sm:$0xff] %v5132
      %5309 = vst [vmem:[%s251 + $0x2c0] sm:$0xff] %v5134
      %5310 = vst [vmem:[%s251 + $0x2c8] sm:$0xff] %v5136
      %5311 = vst [vmem:[%s251 + $0x2d0] sm:$0xff] %v5138
      %5312 = vst [vmem:[%s251 + $0x2d8] sm:$0xff] %v5140
      %5313 = vst [vmem:[%s251 + $0x2e0] sm:$0xff] %v5142
      %5314 = vst [vmem:[%s251 + $0x2e8] sm:$0xff] %v5144
      %5315 = vst [vmem:[%s251 + $0x2f0] sm:$0xff] %v5146
      %5316 = vst [vmem:[%s251 + $0x2f8] sm:$0xff] %v5148
      %5317 = vst [vmem:[%s251 + $0x300] sm:$0xff] %v5150
      %5318 = vst [vmem:[%s251 + $0x308] sm:$0xff] %v5152
      %5319 = vst [vmem:[%s251 + $0x310] sm:$0xff] %v5154
      %5320 = vst [vmem:[%s251 + $0x318] sm:$0xff] %v5156
      %5321 = vst [vmem:[%s251 + $0x320] sm:$0xff] %v5158
      %5322 = vst [vmem:[%s251 + $0x328] sm:$0xff] %v5160
      %5323 = vst [vmem:[%s251 + $0x330] sm:$0xff] %v5162
      %5324 = vst [vmem:[%s251 + $0x338] sm:$0xff] %v5164
      %5325 = vst [vmem:[%s251 + $0x340] sm:$0xff] %v5166
      %5326 = vst [vmem:[%s251 + $0x348] sm:$0xff] %v5168
      %5327 = vst [vmem:[%s251 + $0x350] sm:$0xff] %v5170
      %5328 = vst [vmem:[%s251 + $0x358] sm:$0xff] %v5172
      %5329 = vst [vmem:[%s251 + $0x360] sm:$0xff] %v5174
      %5330 = vst [vmem:[%s251 + $0x368] sm:$0xff] %v5176
      %5331 = vst [vmem:[%s251 + $0x370] sm:$0xff] %v5178
      %5332 = vst [vmem:[%s251 + $0x378] sm:$0xff] %v5180
      %5333 = vst [vmem:[%s251 + $0x380] sm:$0xff] %v5182
      %5334 = vst [vmem:[%s251 + $0x388] sm:$0xff] %v5184
      %5335 = vst [vmem:[%s251 + $0x390] sm:$0xff] %v5186
      %5336 = vst [vmem:[%s251 + $0x398] sm:$0xff] %v5188
      %5337 = vst [vmem:[%s251 + $0x3a0] sm:$0xff] %v5190
      %5338 = vst [vmem:[%s251 + $0x3a8] sm:$0xff] %v5192
      %5339 = vst [vmem:[%s251 + $0x3b0] sm:$0xff] %v5194
      %5340 = vst [vmem:[%s251 + $0x3b8] sm:$0xff] %v5196
      %5341 = vst [vmem:[%s251 + $0x3c0] sm:$0xff] %v5198
      %5342 = vst [vmem:[%s251 + $0x3c8] sm:$0xff] %v5200
      %5343 = vst [vmem:[%s251 + $0x3d0] sm:$0xff] %v5202
      %5344 = vst [vmem:[%s251 + $0x3d8] sm:$0xff] %v5204
      %5345 = vst [vmem:[%s251 + $0x3e0] sm:$0xff] %v5206
      %5346 = vst [vmem:[%s251 + $0x3e8] sm:$0xff] %v5208
      %5347 = vst [vmem:[%s251 + $0x3f0] sm:$0xff] %v5210
      %5348 = vst [vmem:[%s251 + $0x3f8] sm:$0xff] %v5212
      %5349 = vst [vmem:[%s251 + $0x400] sm:$0xff] %v5214
      %5350 = vst [vmem:[%s251 + $0x408] sm:$0xff] %v5216
      %5351 = vst [vmem:[%s251 + $0x410] sm:$0xff] %v5218
      %5352 = vst [vmem:[%s251 + $0x418] sm:$0xff] %v5220
      %p5353 = scmp.lt.s32.totalorder %s17, 1
      %s5354 = scalar_select %p5353, %s17, 1
      %s5355 = smul.addr %s5354, 132
      %s5356 = smul.addr %s5355, 8
      %s5357 = scalar_lea.vmem %s6, %s5356
      // Predicated region
      $region45: #{decoder_forward.7} parent=43 // pred_check
        %p5358 = pneg %p166
      $region46: #{decoder_forward.7} parent=43 // pred_check_branch
        %5360 = sbr.rel (%p5358) target = $region48
      $region47: #{decoder_forward.7} parent=43 // pred_region
        _
      $region48: #{decoder_forward.7} parent=43 // pred_fallthru
        _
    $region44: #{decoder_forward.7} parent=5 // pred_fallthru
      _
    %p5361 = scmp.le.s32.totalorder 2, %s12
    // Predicated region
    $region49: #{decoder_forward.7} parent=5 // pred_check
      %p5362 = pneg %p5361
    $region50: #{decoder_forward.7} parent=5 // pred_check_branch
      %5364 = sbr.rel (%p5362) target = $region52
    $region51: #{decoder_forward.7} parent=5 // pred_region
      %s5365 = ssub.s32 %s12, 2
      // Predicated region
      $region53: #{decoder_forward.7} parent=51 // pred_check
        %p5366 = pneg %p172
      $region54: #{decoder_forward.7} parent=51 // pred_check_branch
        %5368 = sbr.rel (%p5366) target = $region56
      $region55: #{decoder_forward.7} parent=51 // pred_region
        %p5369 = scmp.lt.s32.totalorder %s18, 1
        %s5370 = scalar_select %p5369, %s18, 1
        %s5371 = smul.addr %s5370, 132
        %s5372 = smul.addr %s5371, 8
        %s5373 = scalar_lea.vmem %s6, %s5372
      $region56: #{decoder_forward.7} parent=51 // pred_fallthru
        _
    $region52: #{decoder_forward.7} parent=5 // pred_fallthru
      _
  $region6: #{decoder_forward.7} parent=0 // loop_footer
    %s16 = sadd.s32 1, %s12
  $region7: #{decoder_forward.7} parent=0 // loop_footer_branch
    %11 = sbr.rel target = $region3
  $region8: #{decoder_forward.7} parent=0 // loop_exit
    _

</llo_original>
